<compile_context>
chip_gen: v7x
topology: tpu7x:2x2x1
jax: 0.10.0
libtpu: 0.0.40
codegen_flags: <defaults>
</compile_context>

<pallas_src>
import functools

import jax
import jax.numpy as jnp
from jax.experimental import pallas as pl
from jax.experimental.pallas import tpu as pltpu

D_IN, D_H1, D_H2, D_H3 = 2048, 1024, 1024, 512
LANE = 128
SUBLANE = 8


def _round_up(n, m):
    return ((n + m - 1) // m) * m


def _classify_kernel(x_ref,
                     w1_ref, b1_ref,
                     w2_ref, b2_ref,
                     w3_ref, b3_ref,
                     w4_ref, b4_ref,
                     o_ref):
    """Fused 4-layer MLP: (Linear + ReLU) x3 + Linear, all on the MXU.

    Weights arrive pre-transposed to [in, out] in bf16; every matmul
    accumulates in f32. Dropout layers are identity at inference (eval mode).
    """
    x = x_ref[...].astype(jnp.bfloat16)

    h1 = jnp.dot(x, w1_ref[...], preferred_element_type=jnp.float32)
    h1 = jnp.maximum(h1 + b1_ref[...], 0.0)            # fc1 + ReLU (drop1 p=0)

    h2 = jnp.dot(h1.astype(jnp.bfloat16), w2_ref[...],
                 preferred_element_type=jnp.float32)
    h2 = jnp.maximum(h2 + b2_ref[...], 0.0)            # fc2 + ReLU (drop2 eval)

    h3 = jnp.dot(h2.astype(jnp.bfloat16), w3_ref[...],
                 preferred_element_type=jnp.float32)
    h3 = jnp.maximum(h3 + b3_ref[...], 0.0)            # fc3 + ReLU (drop3 eval)

    out = jnp.dot(h3.astype(jnp.bfloat16), w4_ref[...],
                  preferred_element_type=jnp.float32)
    o_ref[...] = (out + b4_ref[...]).astype(o_ref.dtype)


def prepare_params(params, class_num):
    """One-time (load-time) parameter prep — NOT in the per-call jitted path.

    * PyTorch [out, in] f32 -> kernel [in, out] bf16 (transpose + cast once)
    * biases kept f32, shaped [1, out] for broadcasting
    * fc4 weight/bias padded to a multiple of 128 output lanes
    """
    c_pad = _round_up(max(class_num, LANE), LANE)

    def w_t(w):
        return jnp.asarray(w, jnp.float32).T.astype(jnp.bfloat16)

    def b_row(b):
        return jnp.asarray(b, jnp.float32)[None, :]

    w4 = jnp.pad(w_t(params["fc4_w"]), ((0, 0), (0, c_pad - class_num)))
    b4 = jnp.pad(jnp.asarray(params["fc4_b"], jnp.float32),
                 (0, c_pad - class_num))[None, :]

    return dict(
        w1=w_t(params["fc1_w"]), b1=b_row(params["fc1_b"]),
        w2=w_t(params["fc2_w"]), b2=b_row(params["fc2_b"]),
        w3=w_t(params["fc3_w"]), b3=b_row(params["fc3_b"]),
        w4=w4, b4=b4,
    )


@functools.partial(jax.jit, static_argnames=("class_num",))
def classify_forward(x, prep, *, class_num):
    """x: [B, 2048] f32; prep: output of prepare_params. Returns [B, class_num] f32."""
    B = x.shape[0]
    c_pad = prep["w4"].shape[1]

    # Batch tiling: weights stay resident across batch tiles (index_map (0,0));
    # the batch axis is "parallel" so it can shard across TensorCores.
    TB = 256 if B > 256 else _round_up(B, SUBLANE)
    B_pad = _round_up(B, TB)
    if B_pad != B:
        x = jnp.pad(x, ((0, B_pad - B), (0, 0)))
    grid = (B_pad // TB,)

    def weight_spec(shape):
        return pl.BlockSpec(shape, lambda i: (0, 0))

    n_w_elems = D_IN * D_H1 + D_H1 * D_H2 + D_H2 * D_H3 + D_H3 * c_pad
    cost = pl.CostEstimate(
        flops=2 * B_pad * n_w_elems,
        transcendentals=0,
        bytes_accessed=(2 * n_w_elems                        # bf16 weights
                        + 4 * (D_H1 + D_H2 + D_H3 + c_pad)   # f32 biases
                        + 4 * B_pad * (D_IN + c_pad)),       # x in + out
    )

    out = pl.pallas_call(
        _classify_kernel,
        out_shape=jax.ShapeDtypeStruct((B_pad, c_pad), jnp.float32),
        grid_spec=pltpu.PrefetchScalarGridSpec(
            num_scalar_prefetch=0,
            grid=grid,
            in_specs=[
                pl.BlockSpec((TB, D_IN), lambda i: (i, 0)),
                weight_spec((D_IN, D_H1)), weight_spec((1, D_H1)),
                weight_spec((D_H1, D_H2)), weight_spec((1, D_H2)),
                weight_spec((D_H2, D_H3)), weight_spec((1, D_H3)),
                weight_spec((D_H3, c_pad)), weight_spec((1, c_pad)),
            ],
            out_specs=pl.BlockSpec((TB, c_pad), lambda i: (i, 0)),
        ),
        compiler_params=pltpu.CompilerParams(
            dimension_semantics=("parallel",),
            # bf16 weights double-buffered ~= 15 MiB + activation tiles:
            # fits v7x's 64 MiB physical VMEM and v5e/v6e with headroom.
            vmem_limit_bytes=40 * 1024 * 1024,
        ),
        cost_estimate=cost,
    )(x, prep["w1"], prep["b1"], prep["w2"], prep["b2"],
      prep["w3"], prep["b3"], prep["w4"], prep["b4"])

    return out[:B, :class_num]


def init_params(key, class_num):
    """Deterministic synthetic init matching nn.Linear shapes (PyTorch layout)."""
    ks = jax.random.split(key, 8)

    def lin(kw, kb, out_f, in_f):
        bound = 1.0 / jnp.sqrt(in_f)
        w = jax.random.uniform(kw, (out_f, in_f), jnp.float32, -bound, bound)
        b = jax.random.uniform(kb, (out_f,), jnp.float32, -bound, bound)
        return w, b

    w1, b1 = lin(ks[0], ks[1], 1024, 2048)
    w2, b2 = lin(ks[2], ks[3], 1024, 1024)
    w3, b3 = lin(ks[4], ks[5], 512, 1024)
    w4, b4 = lin(ks[6], ks[7], class_num, 512)
    return dict(fc1_w=w1, fc1_b=b1, fc2_w=w2, fc2_b=b2,
                fc3_w=w3, fc3_b=b3, fc4_w=w4, fc4_b=b4)


def reference_forward(x, params):
    """Pure-JAX f32 reference replicating the PyTorch forward (eval mode)."""
    h = jnp.maximum(x @ params["fc1_w"].T + params["fc1_b"], 0.0)
    h = jnp.maximum(h @ params["fc2_w"].T + params["fc2_b"], 0.0)
    h = jnp.maximum(h @ params["fc3_w"].T + params["fc3_b"], 0.0)
    return h @ params["fc4_w"].T + params["fc4_b"]


if __name__ == "__main__":
    CLASS_NUM = 16
    BATCH = 8

    key = jax.random.PRNGKey(0)
    k_x, k_p = jax.random.split(key)
    x = jax.random.normal(k_x, (BATCH, D_IN), jnp.float32)
    params = init_params(k_p, CLASS_NUM)

    # One-time parameter prep (transpose / bf16 cast / pad) outside the jitted
    # per-call forward.
    prep = prepare_params(params, CLASS_NUM)

    out = classify_forward(x, prep, class_num=CLASS_NUM)
    out = jax.block_until_ready(out)

    ref = reference_forward(x, params)
    assert out.shape == (BATCH, CLASS_NUM), out.shape
    # Tolerance loosened for bf16 weight/activation streaming (f32 accumulate).
    assert jnp.allclose(out, ref, atol=5e-2, rtol=5e-2), (
        float(jnp.max(jnp.abs(out - ref))))

    print("KERNEL_OK")
</pallas_src>

<mosaic_0001>
module attributes {stable_mosaic.version = 11 : i64} {
  func.func @_classify_kernel(%arg0: i32, %arg1: memref<8x2048xf32, #tpu.memory_space<vmem>>, %arg2: memref<2048x1024xbf16, #tpu.memory_space<vmem>>, %arg3: memref<1x1024xf32, #tpu.memory_space<vmem>>, %arg4: memref<1024x1024xbf16, #tpu.memory_space<vmem>>, %arg5: memref<1x1024xf32, #tpu.memory_space<vmem>>, %arg6: memref<1024x512xbf16, #tpu.memory_space<vmem>>, %arg7: memref<1x512xf32, #tpu.memory_space<vmem>>, %arg8: memref<512x128xbf16, #tpu.memory_space<vmem>>, %arg9: memref<1x128xf32, #tpu.memory_space<vmem>>, %arg10: memref<8x128xf32, #tpu.memory_space<vmem>>) attributes {dimension_semantics = [#tpu.dimension_semantics<parallel>], iteration_bounds = array<i64: 1>, scalar_prefetch = 0 : i64, scratch_operands = 0 : i64, tpu.core_type = #tpu.core_type<tc>, window_params = [{transform_indices = @transform_0, window_bounds = array<i64: 8, 2048>}, {pipeline_mode = #tpu.pipeline_mode<synchronous>, transform_indices = @transform_1, window_bounds = array<i64: 2048, 1024>}, {pipeline_mode = #tpu.pipeline_mode<synchronous>, transform_indices = @transform_2, window_bounds = array<i64: 1, 1024>}, {pipeline_mode = #tpu.pipeline_mode<synchronous>, transform_indices = @transform_3, window_bounds = array<i64: 1024, 1024>}, {pipeline_mode = #tpu.pipeline_mode<synchronous>, transform_indices = @transform_4, window_bounds = array<i64: 1, 1024>}, {pipeline_mode = #tpu.pipeline_mode<synchronous>, transform_indices = @transform_5, window_bounds = array<i64: 1024, 512>}, {pipeline_mode = #tpu.pipeline_mode<synchronous>, transform_indices = @transform_6, window_bounds = array<i64: 1, 512>}, {pipeline_mode = #tpu.pipeline_mode<synchronous>, transform_indices = @transform_7, window_bounds = array<i64: 512, 128>}, {pipeline_mode = #tpu.pipeline_mode<synchronous>, transform_indices = @transform_8, window_bounds = array<i64: 1, 128>}, {transform_indices = @transform_9, window_bounds = array<i64: 8, 128>}]} {
    %c0 = arith.constant 0 : index
    %c0_0 = arith.constant 0 : index
    %0 = vector.load %arg1[%c0, %c0_0] : memref<8x2048xf32, #tpu.memory_space<vmem>>, vector<8x2048xf32>
    %1 = arith.truncf %0 : vector<8x2048xf32> to vector<8x2048xbf16>
    %c0_1 = arith.constant 0 : index
    %c0_2 = arith.constant 0 : index
    %2 = vector.load %arg2[%c0_1, %c0_2] : memref<2048x1024xbf16, #tpu.memory_space<vmem>>, vector<2048x1024xbf16>
    %cst = arith.constant dense<0.000000e+00> : vector<8x1024xf32>
    %3 = tpu.matmul %1, %2, %cst {dimension_numbers = #tpu.dot_dimension_numbers<[1], [0], [0], [1], [0, 0, 1, 1], [], []>} : vector<8x2048xbf16>, vector<2048x1024xbf16>, vector<8x1024xf32> -> vector<8x1024xf32>
    %c0_3 = arith.constant 0 : index
    %c0_4 = arith.constant 0 : index
    %4 = vector.load %arg3[%c0_3, %c0_4] : memref<1x1024xf32, #tpu.memory_space<vmem>>, vector<1x1024xf32>
    %5 = vector.broadcast %4 : vector<1x1024xf32> to vector<8x1024xf32>
    %6 = arith.addf %3, %5 : vector<8x1024xf32>
    %cst_5 = arith.constant 0.000000e+00 : f32
    %7 = vector.broadcast %cst_5 : f32 to vector<8x1024xf32>
    %8 = arith.maximumf %6, %7 : vector<8x1024xf32>
    %9 = arith.truncf %8 : vector<8x1024xf32> to vector<8x1024xbf16>
    %c0_6 = arith.constant 0 : index
    %c0_7 = arith.constant 0 : index
    %10 = vector.load %arg4[%c0_6, %c0_7] : memref<1024x1024xbf16, #tpu.memory_space<vmem>>, vector<1024x1024xbf16>
    %cst_8 = arith.constant dense<0.000000e+00> : vector<8x1024xf32>
    %11 = tpu.matmul %9, %10, %cst_8 {dimension_numbers = #tpu.dot_dimension_numbers<[1], [0], [0], [1], [0, 0, 1, 1], [], []>} : vector<8x1024xbf16>, vector<1024x1024xbf16>, vector<8x1024xf32> -> vector<8x1024xf32>
    %c0_9 = arith.constant 0 : index
    %c0_10 = arith.constant 0 : index
    %12 = vector.load %arg5[%c0_9, %c0_10] : memref<1x1024xf32, #tpu.memory_space<vmem>>, vector<1x1024xf32>
    %13 = vector.broadcast %12 : vector<1x1024xf32> to vector<8x1024xf32>
    %14 = arith.addf %11, %13 : vector<8x1024xf32>
    %cst_11 = arith.constant 0.000000e+00 : f32
    %15 = vector.broadcast %cst_11 : f32 to vector<8x1024xf32>
    %16 = arith.maximumf %14, %15 : vector<8x1024xf32>
    %17 = arith.truncf %16 : vector<8x1024xf32> to vector<8x1024xbf16>
    %c0_12 = arith.constant 0 : index
    %c0_13 = arith.constant 0 : index
    %18 = vector.load %arg6[%c0_12, %c0_13] : memref<1024x512xbf16, #tpu.memory_space<vmem>>, vector<1024x512xbf16>
    %cst_14 = arith.constant dense<0.000000e+00> : vector<8x512xf32>
    %19 = tpu.matmul %17, %18, %cst_14 {dimension_numbers = #tpu.dot_dimension_numbers<[1], [0], [0], [1], [0, 0, 1, 1], [], []>} : vector<8x1024xbf16>, vector<1024x512xbf16>, vector<8x512xf32> -> vector<8x512xf32>
    %c0_15 = arith.constant 0 : index
    %c0_16 = arith.constant 0 : index
    %20 = vector.load %arg7[%c0_15, %c0_16] : memref<1x512xf32, #tpu.memory_space<vmem>>, vector<1x512xf32>
    %21 = vector.broadcast %20 : vector<1x512xf32> to vector<8x512xf32>
    %22 = arith.addf %19, %21 : vector<8x512xf32>
    %cst_17 = arith.constant 0.000000e+00 : f32
    %23 = vector.broadcast %cst_17 : f32 to vector<8x512xf32>
    %24 = arith.maximumf %22, %23 : vector<8x512xf32>
    %25 = arith.truncf %24 : vector<8x512xf32> to vector<8x512xbf16>
    %c0_18 = arith.constant 0 : index
    %c0_19 = arith.constant 0 : index
    %26 = vector.load %arg8[%c0_18, %c0_19] : memref<512x128xbf16, #tpu.memory_space<vmem>>, vector<512x128xbf16>
    %cst_20 = arith.constant dense<0.000000e+00> : vector<8x128xf32>
    %27 = tpu.matmul %25, %26, %cst_20 {dimension_numbers = #tpu.dot_dimension_numbers<[1], [0], [0], [1], [0, 0, 1, 1], [], []>} : vector<8x512xbf16>, vector<512x128xbf16>, vector<8x128xf32> -> vector<8x128xf32>
    %c0_21 = arith.constant 0 : index
    %c0_22 = arith.constant 0 : index
    %28 = vector.load %arg9[%c0_21, %c0_22] : memref<1x128xf32, #tpu.memory_space<vmem>>, vector<1x128xf32>
    %29 = vector.broadcast %28 : vector<1x128xf32> to vector<8x128xf32>
    %30 = arith.addf %27, %29 : vector<8x128xf32>
    %c0_23 = arith.constant 0 : index
    %c0_24 = arith.constant 0 : index
    %31 = vector.load %arg10[%c0_23, %c0_24] : memref<8x128xf32, #tpu.memory_space<vmem>>, vector<8x128xf32>
    tpu.vector_store %arg10[%c0_23, %c0_24], %30 {strides = array<i32>} : memref<8x128xf32, #tpu.memory_space<vmem>>, vector<8x128xf32>,
    return
  }
  func.func @transform_0(%arg0: i32) -> (i32, i32) {
    %c0_i32 = arith.constant 0 : i32
    %c0_i32_0 = arith.constant 0 : i32
    return %arg0, %c0_i32 : i32, i32
  }
  func.func @transform_1(%arg0: i32) -> (i32, i32) {
    %c0_i32 = arith.constant 0 : i32
    %c0_i32_0 = arith.constant 0 : i32
    %c0_i32_1 = arith.constant 0 : i32
    return %c0_i32, %c0_i32_0 : i32, i32
  }
  func.func @transform_2(%arg0: i32) -> (i32, i32) {
    %c0_i32 = arith.constant 0 : i32
    %c0_i32_0 = arith.constant 0 : i32
    %c0_i32_1 = arith.constant 0 : i32
    return %c0_i32, %c0_i32_0 : i32, i32
  }
  func.func @transform_3(%arg0: i32) -> (i32, i32) {
    %c0_i32 = arith.constant 0 : i32
    %c0_i32_0 = arith.constant 0 : i32
    %c0_i32_1 = arith.constant 0 : i32
    return %c0_i32, %c0_i32_0 : i32, i32
  }
  func.func @transform_4(%arg0: i32) -> (i32, i32) {
    %c0_i32 = arith.constant 0 : i32
    %c0_i32_0 = arith.constant 0 : i32
    %c0_i32_1 = arith.constant 0 : i32
    return %c0_i32, %c0_i32_0 : i32, i32
  }
  func.func @transform_5(%arg0: i32) -> (i32, i32) {
    %c0_i32 = arith.constant 0 : i32
    %c0_i32_0 = arith.constant 0 : i32
    %c0_i32_1 = arith.constant 0 : i32
    return %c0_i32, %c0_i32_0 : i32, i32
  }
  func.func @transform_6(%arg0: i32) -> (i32, i32) {
    %c0_i32 = arith.constant 0 : i32
    %c0_i32_0 = arith.constant 0 : i32
    %c0_i32_1 = arith.constant 0 : i32
    return %c0_i32, %c0_i32_0 : i32, i32
  }
  func.func @transform_7(%arg0: i32) -> (i32, i32) {
    %c0_i32 = arith.constant 0 : i32
    %c0_i32_0 = arith.constant 0 : i32
    %c0_i32_1 = arith.constant 0 : i32
    return %c0_i32, %c0_i32_0 : i32, i32
  }
  func.func @transform_8(%arg0: i32) -> (i32, i32) {
    %c0_i32 = arith.constant 0 : i32
    %c0_i32_0 = arith.constant 0 : i32
    %c0_i32_1 = arith.constant 0 : i32
    return %c0_i32, %c0_i32_0 : i32, i32
  }
  func.func @transform_9(%arg0: i32) -> (i32, i32) {
    %c0_i32 = arith.constant 0 : i32
    %c0_i32_0 = arith.constant 0 : i32
    return %arg0, %c0_i32 : i32, i32
  }
}

</mosaic_0001>

<llo_original>
// kernel: classify_forward.1
$region0: #{classify_forward.1}
  #allocation0 [shape = 'u32[]', space=smem, size = 0x4, offset = 0x4, fixed_abs, tag = 'smem constant byte address 0x4 - core index']
  #allocation1 [shape = 'u32[144,128]{1,0:T(1,128)}', space=vmem, size = 0x12000, scoped, tag = 'internal scratch']
  %s0 = inlined_call_operand.hbm [shape: f32[8,2048], index: 0, kind: input, shape index: {}]
  %s1 = inlined_call_operand.hbm [shape: bf16[2048,1024], index: 1, kind: input, shape index: {}]
  %s2 = inlined_call_operand.hbm [shape: f32[1,1024], index: 2, kind: input, shape index: {}]
  %s3 = inlined_call_operand.hbm [shape: bf16[1024,1024], index: 3, kind: input, shape index: {}]
  %s4 = inlined_call_operand.hbm [shape: f32[1,1024], index: 4, kind: input, shape index: {}]
  %s5 = inlined_call_operand.hbm [shape: bf16[1024,512], index: 5, kind: input, shape index: {}]
  %s6 = inlined_call_operand.hbm [shape: f32[1,512], index: 6, kind: input, shape index: {}]
  %s7 = inlined_call_operand.hbm [shape: bf16[512,128], index: 7, kind: input, shape index: {}]
  %s8 = inlined_call_operand.hbm [shape: f32[1,128], index: 8, kind: input, shape index: {}]
  %s9 = inlined_call_operand.hbm [shape: f32[8,128], index: 9, kind: output, shape index: {}]
  %s10 = sld [smem:[#allocation0]]
  $region82: #{classify_forward.1} parent=0
    _
  %s12 = ssub.s32 1, %s10
  %s13 = scalar_select 0, %s12, %s10
  $region1: #{classify_forward.1} parent=0
    #allocation2 [shape = 'u8[65536]{0}', space=vmem, size = 0x10000, scoped, tag = 'input window, operand 0, single buffered']
    #allocation3 [shape = 's32[1]{0}', space=sflag, size = 0x4, scoped, tag = 'scoped memory for classify_forward.1']
    #allocation4 [shape = 's32[1]{0}', space=sflag, size = 0x4, scoped, tag = 'scoped memory for classify_forward.1']
    #allocation5 [shape = 'u8[4194304]{0}', space=vmem, size = 0x400000, scoped, tag = 'input window, operand 1, single buffered']
    #allocation6 [shape = 's32[1]{0}', space=sflag, size = 0x4, scoped, tag = 'scoped memory for classify_forward.1']
    #allocation7 [shape = 'u8[4096]{0}', space=vmem, size = 0x1000, scoped, tag = 'input window, operand 2, single buffered']
    #allocation8 [shape = 'u8[2097152]{0}', space=vmem, size = 0x200000, scoped, tag = 'input window, operand 3, single buffered']
    #allocation9 [shape = 's32[1]{0}', space=sflag, size = 0x4, scoped, tag = 'scoped memory for classify_forward.1']
    #allocation10 [shape = 'u8[4096]{0}', space=vmem, size = 0x1000, scoped, tag = 'input window, operand 4, single buffered']
    #allocation11 [shape = 'u8[1048576]{0}', space=vmem, size = 0x100000, scoped, tag = 'input window, operand 5, single buffered']
    #allocation12 [shape = 's32[1]{0}', space=sflag, size = 0x4, scoped, tag = 'scoped memory for classify_forward.1']
    #allocation13 [shape = 'u8[2048]{0}', space=vmem, size = 0x800, scoped, tag = 'input window, operand 6, single buffered']
    #allocation14 [shape = 'u8[131072]{0}', space=vmem, size = 0x20000, scoped, tag = 'input window, operand 7, single buffered']
    #allocation15 [shape = 's32[1]{0}', space=sflag, size = 0x4, scoped, tag = 'scoped memory for classify_forward.1']
    #allocation16 [shape = 'u8[512]{0}', space=vmem, size = 0x400, scoped, tag = 'input window, operand 8, single buffered']
    #allocation17 [shape = 'u8[4096]{0}', space=vmem, size = 0x1000, scoped, tag = 'output window, operand 0, single buffered']
    %14 = vsyncpa [#allocation3], 0
    %15 = vsyncpa [#allocation6], 0
    %16 = vsyncpa [#allocation9], 0
    %17 = vsyncpa [#allocation12], 0
    %18 = vsyncpa [#allocation15], 0
    %19 = vsyncpa [#allocation4], 0
    // Predicated region
    $region2: #{classify_forward.1} parent=1 // pred_check
      _
    $region3: #{classify_forward.1} parent=1 // pred_check_branch
      %21 = sbr.rel (0) target = $region5
    $region4: #{classify_forward.1} parent=1 // pred_region
      %s23 = ssub.s32 2048, 2048
      %24 = vsyncadd [#allocation3], %s23
      %s26 = sshll.u32 [#allocation2], 4
      %s27 = int_to_ptr.vmem [resolvable:$true] %s26
      %29 = dma.hbm_to_vmem [thread:$0]  %s0, 2048, %s27, [#allocation3]
    $region5: #{classify_forward.1} parent=1 // pred_fallthru
      _
    // Predicated region
    $region6: #{classify_forward.1} parent=1 // pred_check
      _
    $region7: #{classify_forward.1} parent=1 // pred_check_branch
      %31 = sbr.rel (0) target = $region9
    $region8: #{classify_forward.1} parent=1 // pred_region
      %s33 = ssub.s32 131072, 131072
      %34 = vsyncadd [#allocation6], %s33
      %s35 = sshll.u32 [#allocation5], 4
      %s36 = int_to_ptr.vmem [resolvable:$true] %s35
      %41 = dma.hbm_to_vmem [thread:$0]  %s1, 131072, %s36, [#allocation6], 512, 512, 32
    $region9: #{classify_forward.1} parent=1 // pred_fallthru
      _
    // Predicated region
    $region10: #{classify_forward.1} parent=1 // pred_check
      _
    $region11: #{classify_forward.1} parent=1 // pred_check_branch
      %43 = sbr.rel (0) target = $region13
    $region12: #{classify_forward.1} parent=1 // pred_region
      %s45 = ssub.s32 128, 128
      %46 = vsyncadd [#allocation6], %s45
      %s48 = sshll.u32 [#allocation7], 4
      %s49 = int_to_ptr.vmem [resolvable:$true] %s48
      %51 = dma.hbm_to_vmem [thread:$0]  %s2, 128, %s49, [#allocation6]
    $region13: #{classify_forward.1} parent=1 // pred_fallthru
      _
    // Predicated region
    $region14: #{classify_forward.1} parent=1 // pred_check
      _
    $region15: #{classify_forward.1} parent=1 // pred_check_branch
      %53 = sbr.rel (0) target = $region17
    $region16: #{classify_forward.1} parent=1 // pred_region
      %s55 = ssub.s32 65536, 65536
      %56 = vsyncadd [#allocation9], %s55
      %s57 = sshll.u32 [#allocation8], 4
      %s58 = int_to_ptr.vmem [resolvable:$true] %s57
      %63 = dma.hbm_to_vmem [thread:$0]  %s3, 65536, %s58, [#allocation9], 512, 512, 32
    $region17: #{classify_forward.1} parent=1 // pred_fallthru
      _
    // Predicated region
    $region18: #{classify_forward.1} parent=1 // pred_check
      _
    $region19: #{classify_forward.1} parent=1 // pred_check_branch
      %65 = sbr.rel (0) target = $region21
    $region20: #{classify_forward.1} parent=1 // pred_region
      %s67 = ssub.s32 128, 128
      %68 = vsyncadd [#allocation9], %s67
      %s70 = sshll.u32 [#allocation10], 4
      %s71 = int_to_ptr.vmem [resolvable:$true] %s70
      %73 = dma.hbm_to_vmem [thread:$0]  %s4, 128, %s71, [#allocation9]
    $region21: #{classify_forward.1} parent=1 // pred_fallthru
      _
    // Predicated region
    $region22: #{classify_forward.1} parent=1 // pred_check
      _
    $region23: #{classify_forward.1} parent=1 // pred_check_branch
      %75 = sbr.rel (0) target = $region25
    $region24: #{classify_forward.1} parent=1 // pred_region
      %s77 = ssub.s32 32768, 32768
      %78 = vsyncadd [#allocation12], %s77
      %s79 = sshll.u32 [#allocation11], 4
      %s80 = int_to_ptr.vmem [resolvable:$true] %s79
      %85 = dma.hbm_to_vmem [thread:$0]  %s5, 32768, %s80, [#allocation12], 256, 256, 16
    $region25: #{classify_forward.1} parent=1 // pred_fallthru
      _
    // Predicated region
    $region26: #{classify_forward.1} parent=1 // pred_check
      _
    $region27: #{classify_forward.1} parent=1 // pred_check_branch
      %87 = sbr.rel (0) target = $region29
    $region28: #{classify_forward.1} parent=1 // pred_region
      %s89 = ssub.s32 64, 64
      %90 = vsyncadd [#allocation12], %s89
      %s92 = sshll.u32 [#allocation13], 4
      %s93 = int_to_ptr.vmem [resolvable:$true] %s92
      %95 = dma.hbm_to_vmem [thread:$0]  %s6, 64, %s93, [#allocation12]
    $region29: #{classify_forward.1} parent=1 // pred_fallthru
      _
    // Predicated region
    $region30: #{classify_forward.1} parent=1 // pred_check
      _
    $region31: #{classify_forward.1} parent=1 // pred_check_branch
      %97 = sbr.rel (0) target = $region33
    $region32: #{classify_forward.1} parent=1 // pred_region
      %s99 = ssub.s32 4096, 4096
      %100 = vsyncadd [#allocation15], %s99
      %s101 = sshll.u32 [#allocation14], 4
      %s102 = int_to_ptr.vmem [resolvable:$true] %s101
      %107 = dma.hbm_to_vmem [thread:$0]  %s7, 4096, %s102, [#allocation15], 64, 64, 4
    $region33: #{classify_forward.1} parent=1 // pred_fallthru
      _
    // Predicated region
    $region34: #{classify_forward.1} parent=1 // pred_check
      _
    $region35: #{classify_forward.1} parent=1 // pred_check_branch
      %109 = sbr.rel (0) target = $region37
    $region36: #{classify_forward.1} parent=1 // pred_region
      %s111 = ssub.s32 16, 16
      %112 = vsyncadd [#allocation15], %s111
      %s114 = sshll.u32 [#allocation16], 4
      %s115 = int_to_ptr.vmem [resolvable:$true] %s114
      %117 = dma.hbm_to_vmem [thread:$0]  %s8, 16, %s115, [#allocation15]
    $region37: #{classify_forward.1} parent=1 // pred_fallthru
      _
    // Predicated region
    $region38: #{classify_forward.1} parent=1 // pred_check
      _
    $region39: #{classify_forward.1} parent=1 // pred_check_branch
      %119 = sbr.rel (0) target = $region41
    $region40: #{classify_forward.1} parent=1 // pred_region
      %120 = dma.done [#allocation3], 2048
    $region41: #{classify_forward.1} parent=1 // pred_fallthru
      _
    // Predicated region
    $region42: #{classify_forward.1} parent=1 // pred_check
      _
    $region43: #{classify_forward.1} parent=1 // pred_check_branch
      %122 = sbr.rel (0) target = $region45
    $region44: #{classify_forward.1} parent=1 // pred_region
      %123 = dma.done [#allocation6], 131072
    $region45: #{classify_forward.1} parent=1 // pred_fallthru
      _
    // Predicated region
    $region46: #{classify_forward.1} parent=1 // pred_check
      _
    $region47: #{classify_forward.1} parent=1 // pred_check_branch
      %125 = sbr.rel (0) target = $region49
    $region48: #{classify_forward.1} parent=1 // pred_region
      %126 = dma.done [#allocation6], 128
    $region49: #{classify_forward.1} parent=1 // pred_fallthru
      _
    // Predicated region
    $region50: #{classify_forward.1} parent=1 // pred_check
      _
    $region51: #{classify_forward.1} parent=1 // pred_check_branch
      %128 = sbr.rel (0) target = $region53
    $region52: #{classify_forward.1} parent=1 // pred_region
      %129 = dma.done [#allocation9], 65536
    $region53: #{classify_forward.1} parent=1 // pred_fallthru
      _
    // Predicated region
    $region54: #{classify_forward.1} parent=1 // pred_check
      _
    $region55: #{classify_forward.1} parent=1 // pred_check_branch
      %131 = sbr.rel (0) target = $region57
    $region56: #{classify_forward.1} parent=1 // pred_region
      %132 = dma.done [#allocation9], 128
    $region57: #{classify_forward.1} parent=1 // pred_fallthru
      _
    // Predicated region
    $region58: #{classify_forward.1} parent=1 // pred_check
      _
    $region59: #{classify_forward.1} parent=1 // pred_check_branch
      %134 = sbr.rel (0) target = $region61
    $region60: #{classify_forward.1} parent=1 // pred_region
      %135 = dma.done [#allocation12], 32768
    $region61: #{classify_forward.1} parent=1 // pred_fallthru
      _
    // Predicated region
    $region62: #{classify_forward.1} parent=1 // pred_check
      _
    $region63: #{classify_forward.1} parent=1 // pred_check_branch
      %137 = sbr.rel (0) target = $region65
    $region64: #{classify_forward.1} parent=1 // pred_region
      %138 = dma.done [#allocation12], 64
    $region65: #{classify_forward.1} parent=1 // pred_fallthru
      _
    // Predicated region
    $region66: #{classify_forward.1} parent=1 // pred_check
      _
    $region67: #{classify_forward.1} parent=1 // pred_check_branch
      %140 = sbr.rel (0) target = $region69
    $region68: #{classify_forward.1} parent=1 // pred_region
      %141 = dma.done [#allocation15], 4096
    $region69: #{classify_forward.1} parent=1 // pred_fallthru
      _
    // Predicated region
    $region70: #{classify_forward.1} parent=1 // pred_check
      _
    $region71: #{classify_forward.1} parent=1 // pred_check_branch
      %143 = sbr.rel (0) target = $region73
    $region72: #{classify_forward.1} parent=1 // pred_region
      %144 = dma.done [#allocation15], 16
    $region73: #{classify_forward.1} parent=1 // pred_fallthru
      _
    %v146 = vld [vmem:[#allocation2] sm:$0xff]
    %v147 = vld [vmem:[#allocation2 + $0x8] sm:$0xff]
    %v148 = vld [vmem:[#allocation2 + $0x10] sm:$0xff]
    %v149 = vld [vmem:[#allocation2 + $0x18] sm:$0xff]
    %v150 = vld [vmem:[#allocation2 + $0x20] sm:$0xff]
    %v151 = vld [vmem:[#allocation2 + $0x28] sm:$0xff]
    %v152 = vld [vmem:[#allocation2 + $0x30] sm:$0xff]
    %v153 = vld [vmem:[#allocation2 + $0x38] sm:$0xff]
    %v154 = vld [vmem:[#allocation2 + $0x40] sm:$0xff]
    %v155 = vld [vmem:[#allocation2 + $0x48] sm:$0xff]
    %v156 = vld [vmem:[#allocation2 + $0x50] sm:$0xff]
    %v157 = vld [vmem:[#allocation2 + $0x58] sm:$0xff]
    %v158 = vld [vmem:[#allocation2 + $0x60] sm:$0xff]
    %v159 = vld [vmem:[#allocation2 + $0x68] sm:$0xff]
    %v160 = vld [vmem:[#allocation2 + $0x70] sm:$0xff]
    %v161 = vld [vmem:[#allocation2 + $0x78] sm:$0xff]
    %v162 = vpack.c.bf16 %v146, %v146
    %v163 = vpack.c.bf16 %v147, %v147
    %v164 = vpack.c.bf16 %v148, %v148
    %v165 = vpack.c.bf16 %v149, %v149
    %v166 = vpack.c.bf16 %v150, %v150
    %v167 = vpack.c.bf16 %v151, %v151
    %v168 = vpack.c.bf16 %v152, %v152
    %v169 = vpack.c.bf16 %v153, %v153
    %v170 = vpack.c.bf16 %v154, %v154
    %v171 = vpack.c.bf16 %v155, %v155
    %v172 = vpack.c.bf16 %v156, %v156
    %v173 = vpack.c.bf16 %v157, %v157
    %v174 = vpack.c.bf16 %v158, %v158
    %v175 = vpack.c.bf16 %v159, %v159
    %v176 = vpack.c.bf16 %v160, %v160
    %v177 = vpack.c.bf16 %v161, %v161
    %v178 = vld [vmem:[#allocation5] sm:$0xff]
    %v179 = vld [vmem:[#allocation5 + $0x8] sm:$0xff]
    %v180 = vld [vmem:[#allocation5 + $0x10] sm:$0xff]
    %v181 = vld [vmem:[#allocation5 + $0x18] sm:$0xff]
    %v182 = vld [vmem:[#allocation5 + $0x20] sm:$0xff]
    %v183 = vld [vmem:[#allocation5 + $0x28] sm:$0xff]
    %v184 = vld [vmem:[#allocation5 + $0x30] sm:$0xff]
    %v185 = vld [vmem:[#allocation5 + $0x38] sm:$0xff]
    %v186 = vld [vmem:[#allocation5 + $0x40] sm:$0xff]
    %v187 = vld [vmem:[#allocation5 + $0x48] sm:$0xff]
    %v188 = vld [vmem:[#allocation5 + $0x50] sm:$0xff]
    %v189 = vld [vmem:[#allocation5 + $0x58] sm:$0xff]
    %v190 = vld [vmem:[#allocation5 + $0x60] sm:$0xff]
    %v191 = vld [vmem:[#allocation5 + $0x68] sm:$0xff]
    %v192 = vld [vmem:[#allocation5 + $0x70] sm:$0xff]
    %v193 = vld [vmem:[#allocation5 + $0x78] sm:$0xff]
    %v194 = vld [vmem:[#allocation5 + $0x80] sm:$0xff]
    %v195 = vld [vmem:[#allocation5 + $0x88] sm:$0xff]
    %v196 = vld [vmem:[#allocation5 + $0x90] sm:$0xff]
    %v197 = vld [vmem:[#allocation5 + $0x98] sm:$0xff]
    %v198 = vld [vmem:[#allocation5 + $0xa0] sm:$0xff]
    %v199 = vld [vmem:[#allocation5 + $0xa8] sm:$0xff]
    %v200 = vld [vmem:[#allocation5 + $0xb0] sm:$0xff]
    %v201 = vld [vmem:[#allocation5 + $0xb8] sm:$0xff]
    %v202 = vld [vmem:[#allocation5 + $0xc0] sm:$0xff]
    %v203 = vld [vmem:[#allocation5 + $0xc8] sm:$0xff]
    %v204 = vld [vmem:[#allocation5 + $0xd0] sm:$0xff]
    %v205 = vld [vmem:[#allocation5 + $0xd8] sm:$0xff]
    %v206 = vld [vmem:[#allocation5 + $0xe0] sm:$0xff]
    %v207 = vld [vmem:[#allocation5 + $0xe8] sm:$0xff]
    %v208 = vld [vmem:[#allocation5 + $0xf0] sm:$0xff]
    %v209 = vld [vmem:[#allocation5 + $0xf8] sm:$0xff]
    %v210 = vld [vmem:[#allocation5 + $0x100] sm:$0xff]
    %v211 = vld [vmem:[#allocation5 + $0x108] sm:$0xff]
    %v212 = vld [vmem:[#allocation5 + $0x110] sm:$0xff]
    %v213 = vld [vmem:[#allocation5 + $0x118] sm:$0xff]
    %v214 = vld [vmem:[#allocation5 + $0x120] sm:$0xff]
    %v215 = vld [vmem:[#allocation5 + $0x128] sm:$0xff]
    %v216 = vld [vmem:[#allocation5 + $0x130] sm:$0xff]
    %v217 = vld [vmem:[#allocation5 + $0x138] sm:$0xff]
    %v218 = vld [vmem:[#allocation5 + $0x140] sm:$0xff]
    %v219 = vld [vmem:[#allocation5 + $0x148] sm:$0xff]
    %v220 = vld [vmem:[#allocation5 + $0x150] sm:$0xff]
    %v221 = vld [vmem:[#allocation5 + $0x158] sm:$0xff]
    %v222 = vld [vmem:[#allocation5 + $0x160] sm:$0xff]
    %v223 = vld [vmem:[#allocation5 + $0x168] sm:$0xff]
    %v224 = vld [vmem:[#allocation5 + $0x170] sm:$0xff]
    %v225 = vld [vmem:[#allocation5 + $0x178] sm:$0xff]
    %v226 = vld [vmem:[#allocation5 + $0x180] sm:$0xff]
    %v227 = vld [vmem:[#allocation5 + $0x188] sm:$0xff]
    %v228 = vld [vmem:[#allocation5 + $0x190] sm:$0xff]
    %v229 = vld [vmem:[#allocation5 + $0x198] sm:$0xff]
    %v230 = vld [vmem:[#allocation5 + $0x1a0] sm:$0xff]
    %v231 = vld [vmem:[#allocation5 + $0x1a8] sm:$0xff]
    %v232 = vld [vmem:[#allocation5 + $0x1b0] sm:$0xff]
    %v233 = vld [vmem:[#allocation5 + $0x1b8] sm:$0xff]
    %v234 = vld [vmem:[#allocation5 + $0x1c0] sm:$0xff]
    %v235 = vld [vmem:[#allocation5 + $0x1c8] sm:$0xff]
    %v236 = vld [vmem:[#allocation5 + $0x1d0] sm:$0xff]
    %v237 = vld [vmem:[#allocation5 + $0x1d8] sm:$0xff]
    %v238 = vld [vmem:[#allocation5 + $0x1e0] sm:$0xff]
    %v239 = vld [vmem:[#allocation5 + $0x1e8] sm:$0xff]
    %v240 = vld [vmem:[#allocation5 + $0x1f0] sm:$0xff]
    %v241 = vld [vmem:[#allocation5 + $0x1f8] sm:$0xff]
    %v242 = vld [vmem:[#allocation5 + $0x200] sm:$0xff]
    %v243 = vld [vmem:[#allocation5 + $0x208] sm:$0xff]
    %v244 = vld [vmem:[#allocation5 + $0x210] sm:$0xff]
    %v245 = vld [vmem:[#allocation5 + $0x218] sm:$0xff]
    %v246 = vld [vmem:[#allocation5 + $0x220] sm:$0xff]
    %v247 = vld [vmem:[#allocation5 + $0x228] sm:$0xff]
    %v248 = vld [vmem:[#allocation5 + $0x230] sm:$0xff]
    %v249 = vld [vmem:[#allocation5 + $0x238] sm:$0xff]
    %v250 = vld [vmem:[#allocation5 + $0x240] sm:$0xff]
    %v251 = vld [vmem:[#allocation5 + $0x248] sm:$0xff]
    %v252 = vld [vmem:[#allocation5 + $0x250] sm:$0xff]
    %v253 = vld [vmem:[#allocation5 + $0x258] sm:$0xff]
    %v254 = vld [vmem:[#allocation5 + $0x260] sm:$0xff]
    %v255 = vld [vmem:[#allocation5 + $0x268] sm:$0xff]
    %v256 = vld [vmem:[#allocation5 + $0x270] sm:$0xff]
    %v257 = vld [vmem:[#allocation5 + $0x278] sm:$0xff]
    %v258 = vld [vmem:[#allocation5 + $0x280] sm:$0xff]
    %v259 = vld [vmem:[#allocation5 + $0x288] sm:$0xff]
    %v260 = vld [vmem:[#allocation5 + $0x290] sm:$0xff]
    %v261 = vld [vmem:[#allocation5 + $0x298] sm:$0xff]
    %v262 = vld [vmem:[#allocation5 + $0x2a0] sm:$0xff]
    %v263 = vld [vmem:[#allocation5 + $0x2a8] sm:$0xff]
    %v264 = vld [vmem:[#allocation5 + $0x2b0] sm:$0xff]
    %v265 = vld [vmem:[#allocation5 + $0x2b8] sm:$0xff]
    %v266 = vld [vmem:[#allocation5 + $0x2c0] sm:$0xff]
    %v267 = vld [vmem:[#allocation5 + $0x2c8] sm:$0xff]
    %v268 = vld [vmem:[#allocation5 + $0x2d0] sm:$0xff]
    %v269 = vld [vmem:[#allocation5 + $0x2d8] sm:$0xff]
    %v270 = vld [vmem:[#allocation5 + $0x2e0] sm:$0xff]
    %v271 = vld [vmem:[#allocation5 + $0x2e8] sm:$0xff]
    %v272 = vld [vmem:[#allocation5 + $0x2f0] sm:$0xff]
    %v273 = vld [vmem:[#allocation5 + $0x2f8] sm:$0xff]
    %v274 = vld [vmem:[#allocation5 + $0x300] sm:$0xff]
    %v275 = vld [vmem:[#allocation5 + $0x308] sm:$0xff]
    %v276 = vld [vmem:[#allocation5 + $0x310] sm:$0xff]
    %v277 = vld [vmem:[#allocation5 + $0x318] sm:$0xff]
    %v278 = vld [vmem:[#allocation5 + $0x320] sm:$0xff]
    %v279 = vld [vmem:[#allocation5 + $0x328] sm:$0xff]
    %v280 = vld [vmem:[#allocation5 + $0x330] sm:$0xff]
    %v281 = vld [vmem:[#allocation5 + $0x338] sm:$0xff]
    %v282 = vld [vmem:[#allocation5 + $0x340] sm:$0xff]
    %v283 = vld [vmem:[#allocation5 + $0x348] sm:$0xff]
    %v284 = vld [vmem:[#allocation5 + $0x350] sm:$0xff]
    %v285 = vld [vmem:[#allocation5 + $0x358] sm:$0xff]
    %v286 = vld [vmem:[#allocation5 + $0x360] sm:$0xff]
    %v287 = vld [vmem:[#allocation5 + $0x368] sm:$0xff]
    %v288 = vld [vmem:[#allocation5 + $0x370] sm:$0xff]
    %v289 = vld [vmem:[#allocation5 + $0x378] sm:$0xff]
    %v290 = vld [vmem:[#allocation5 + $0x380] sm:$0xff]
    %v291 = vld [vmem:[#allocation5 + $0x388] sm:$0xff]
    %v292 = vld [vmem:[#allocation5 + $0x390] sm:$0xff]
    %v293 = vld [vmem:[#allocation5 + $0x398] sm:$0xff]
    %v294 = vld [vmem:[#allocation5 + $0x3a0] sm:$0xff]
    %v295 = vld [vmem:[#allocation5 + $0x3a8] sm:$0xff]
    %v296 = vld [vmem:[#allocation5 + $0x3b0] sm:$0xff]
    %v297 = vld [vmem:[#allocation5 + $0x3b8] sm:$0xff]
    %v298 = vld [vmem:[#allocation5 + $0x3c0] sm:$0xff]
    %v299 = vld [vmem:[#allocation5 + $0x3c8] sm:$0xff]
    %v300 = vld [vmem:[#allocation5 + $0x3d0] sm:$0xff]
    %v301 = vld [vmem:[#allocation5 + $0x3d8] sm:$0xff]
    %v302 = vld [vmem:[#allocation5 + $0x3e0] sm:$0xff]
    %v303 = vld [vmem:[#allocation5 + $0x3e8] sm:$0xff]
    %v304 = vld [vmem:[#allocation5 + $0x3f0] sm:$0xff]
    %v305 = vld [vmem:[#allocation5 + $0x3f8] sm:$0xff]
    %v306 = vld [vmem:[#allocation5 + $0x400] sm:$0xff]
    %v307 = vld [vmem:[#allocation5 + $0x408] sm:$0xff]
    %v308 = vld [vmem:[#allocation5 + $0x410] sm:$0xff]
    %v309 = vld [vmem:[#allocation5 + $0x418] sm:$0xff]
    %v310 = vld [vmem:[#allocation5 + $0x420] sm:$0xff]
    %v311 = vld [vmem:[#allocation5 + $0x428] sm:$0xff]
    %v312 = vld [vmem:[#allocation5 + $0x430] sm:$0xff]
    %v313 = vld [vmem:[#allocation5 + $0x438] sm:$0xff]
    %v314 = vld [vmem:[#allocation5 + $0x440] sm:$0xff]
    %v315 = vld [vmem:[#allocation5 + $0x448] sm:$0xff]
    %v316 = vld [vmem:[#allocation5 + $0x450] sm:$0xff]
    %v317 = vld [vmem:[#allocation5 + $0x458] sm:$0xff]
    %v318 = vld [vmem:[#allocation5 + $0x460] sm:$0xff]
    %v319 = vld [vmem:[#allocation5 + $0x468] sm:$0xff]
    %v320 = vld [vmem:[#allocation5 + $0x470] sm:$0xff]
    %v321 = vld [vmem:[#allocation5 + $0x478] sm:$0xff]
    %v322 = vld [vmem:[#allocation5 + $0x480] sm:$0xff]
    %v323 = vld [vmem:[#allocation5 + $0x488] sm:$0xff]
    %v324 = vld [vmem:[#allocation5 + $0x490] sm:$0xff]
    %v325 = vld [vmem:[#allocation5 + $0x498] sm:$0xff]
    %v326 = vld [vmem:[#allocation5 + $0x4a0] sm:$0xff]
    %v327 = vld [vmem:[#allocation5 + $0x4a8] sm:$0xff]
    %v328 = vld [vmem:[#allocation5 + $0x4b0] sm:$0xff]
    %v329 = vld [vmem:[#allocation5 + $0x4b8] sm:$0xff]
    %v330 = vld [vmem:[#allocation5 + $0x4c0] sm:$0xff]
    %v331 = vld [vmem:[#allocation5 + $0x4c8] sm:$0xff]
    %v332 = vld [vmem:[#allocation5 + $0x4d0] sm:$0xff]
    %v333 = vld [vmem:[#allocation5 + $0x4d8] sm:$0xff]
    %v334 = vld [vmem:[#allocation5 + $0x4e0] sm:$0xff]
    %v335 = vld [vmem:[#allocation5 + $0x4e8] sm:$0xff]
    %v336 = vld [vmem:[#allocation5 + $0x4f0] sm:$0xff]
    %v337 = vld [vmem:[#allocation5 + $0x4f8] sm:$0xff]
    %v338 = vld [vmem:[#allocation5 + $0x500] sm:$0xff]
    %v339 = vld [vmem:[#allocation5 + $0x508] sm:$0xff]
    %v340 = vld [vmem:[#allocation5 + $0x510] sm:$0xff]
    %v341 = vld [vmem:[#allocation5 + $0x518] sm:$0xff]
    %v342 = vld [vmem:[#allocation5 + $0x520] sm:$0xff]
    %v343 = vld [vmem:[#allocation5 + $0x528] sm:$0xff]
    %v344 = vld [vmem:[#allocation5 + $0x530] sm:$0xff]
    %v345 = vld [vmem:[#allocation5 + $0x538] sm:$0xff]
    %v346 = vld [vmem:[#allocation5 + $0x540] sm:$0xff]
    %v347 = vld [vmem:[#allocation5 + $0x548] sm:$0xff]
    %v348 = vld [vmem:[#allocation5 + $0x550] sm:$0xff]
    %v349 = vld [vmem:[#allocation5 + $0x558] sm:$0xff]
    %v350 = vld [vmem:[#allocation5 + $0x560] sm:$0xff]
    %v351 = vld [vmem:[#allocation5 + $0x568] sm:$0xff]
    %v352 = vld [vmem:[#allocation5 + $0x570] sm:$0xff]
    %v353 = vld [vmem:[#allocation5 + $0x578] sm:$0xff]
    %v354 = vld [vmem:[#allocation5 + $0x580] sm:$0xff]
    %v355 = vld [vmem:[#allocation5 + $0x588] sm:$0xff]
    %v356 = vld [vmem:[#allocation5 + $0x590] sm:$0xff]
    %v357 = vld [vmem:[#allocation5 + $0x598] sm:$0xff]
    %v358 = vld [vmem:[#allocation5 + $0x5a0] sm:$0xff]
    %v359 = vld [vmem:[#allocation5 + $0x5a8] sm:$0xff]
    %v360 = vld [vmem:[#allocation5 + $0x5b0] sm:$0xff]
    %v361 = vld [vmem:[#allocation5 + $0x5b8] sm:$0xff]
    %v362 = vld [vmem:[#allocation5 + $0x5c0] sm:$0xff]
    %v363 = vld [vmem:[#allocation5 + $0x5c8] sm:$0xff]
    %v364 = vld [vmem:[#allocation5 + $0x5d0] sm:$0xff]
    %v365 = vld [vmem:[#allocation5 + $0x5d8] sm:$0xff]
    %v366 = vld [vmem:[#allocation5 + $0x5e0] sm:$0xff]
    %v367 = vld [vmem:[#allocation5 + $0x5e8] sm:$0xff]
    %v368 = vld [vmem:[#allocation5 + $0x5f0] sm:$0xff]
    %v369 = vld [vmem:[#allocation5 + $0x5f8] sm:$0xff]
    %v370 = vld [vmem:[#allocation5 + $0x600] sm:$0xff]
    %v371 = vld [vmem:[#allocation5 + $0x608] sm:$0xff]
    %v372 = vld [vmem:[#allocation5 + $0x610] sm:$0xff]
    %v373 = vld [vmem:[#allocation5 + $0x618] sm:$0xff]
    %v374 = vld [vmem:[#allocation5 + $0x620] sm:$0xff]
    %v375 = vld [vmem:[#allocation5 + $0x628] sm:$0xff]
    %v376 = vld [vmem:[#allocation5 + $0x630] sm:$0xff]
    %v377 = vld [vmem:[#allocation5 + $0x638] sm:$0xff]
    %v378 = vld [vmem:[#allocation5 + $0x640] sm:$0xff]
    %v379 = vld [vmem:[#allocation5 + $0x648] sm:$0xff]
    %v380 = vld [vmem:[#allocation5 + $0x650] sm:$0xff]
    %v381 = vld [vmem:[#allocation5 + $0x658] sm:$0xff]
    %v382 = vld [vmem:[#allocation5 + $0x660] sm:$0xff]
    %v383 = vld [vmem:[#allocation5 + $0x668] sm:$0xff]
    %v384 = vld [vmem:[#allocation5 + $0x670] sm:$0xff]
    %v385 = vld [vmem:[#allocation5 + $0x678] sm:$0xff]
    %v386 = vld [vmem:[#allocation5 + $0x680] sm:$0xff]
    %v387 = vld [vmem:[#allocation5 + $0x688] sm:$0xff]
    %v388 = vld [vmem:[#allocation5 + $0x690] sm:$0xff]
    %v389 = vld [vmem:[#allocation5 + $0x698] sm:$0xff]
    %v390 = vld [vmem:[#allocation5 + $0x6a0] sm:$0xff]
    %v391 = vld [vmem:[#allocation5 + $0x6a8] sm:$0xff]
    %v392 = vld [vmem:[#allocation5 + $0x6b0] sm:$0xff]
    %v393 = vld [vmem:[#allocation5 + $0x6b8] sm:$0xff]
    %v394 = vld [vmem:[#allocation5 + $0x6c0] sm:$0xff]
    %v395 = vld [vmem:[#allocation5 + $0x6c8] sm:$0xff]
    %v396 = vld [vmem:[#allocation5 + $0x6d0] sm:$0xff]
    %v397 = vld [vmem:[#allocation5 + $0x6d8] sm:$0xff]
    %v398 = vld [vmem:[#allocation5 + $0x6e0] sm:$0xff]
    %v399 = vld [vmem:[#allocation5 + $0x6e8] sm:$0xff]
    %v400 = vld [vmem:[#allocation5 + $0x6f0] sm:$0xff]
    %v401 = vld [vmem:[#allocation5 + $0x6f8] sm:$0xff]
    %v402 = vld [vmem:[#allocation5 + $0x700] sm:$0xff]
    %v403 = vld [vmem:[#allocation5 + $0x708] sm:$0xff]
    %v404 = vld [vmem:[#allocation5 + $0x710] sm:$0xff]
    %v405 = vld [vmem:[#allocation5 + $0x718] sm:$0xff]
    %v406 = vld [vmem:[#allocation5 + $0x720] sm:$0xff]
    %v407 = vld [vmem:[#allocation5 + $0x728] sm:$0xff]
    %v408 = vld [vmem:[#allocation5 + $0x730] sm:$0xff]
    %v409 = vld [vmem:[#allocation5 + $0x738] sm:$0xff]
    %v410 = vld [vmem:[#allocation5 + $0x740] sm:$0xff]
    %v411 = vld [vmem:[#allocation5 + $0x748] sm:$0xff]
    %v412 = vld [vmem:[#allocation5 + $0x750] sm:$0xff]
    %v413 = vld [vmem:[#allocation5 + $0x758] sm:$0xff]
    %v414 = vld [vmem:[#allocation5 + $0x760] sm:$0xff]
    %v415 = vld [vmem:[#allocation5 + $0x768] sm:$0xff]
    %v416 = vld [vmem:[#allocation5 + $0x770] sm:$0xff]
    %v417 = vld [vmem:[#allocation5 + $0x778] sm:$0xff]
    %v418 = vld [vmem:[#allocation5 + $0x780] sm:$0xff]
    %v419 = vld [vmem:[#allocation5 + $0x788] sm:$0xff]
    %v420 = vld [vmem:[#allocation5 + $0x790] sm:$0xff]
    %v421 = vld [vmem:[#allocation5 + $0x798] sm:$0xff]
    %v422 = vld [vmem:[#allocation5 + $0x7a0] sm:$0xff]
    %v423 = vld [vmem:[#allocation5 + $0x7a8] sm:$0xff]
    %v424 = vld [vmem:[#allocation5 + $0x7b0] sm:$0xff]
    %v425 = vld [vmem:[#allocation5 + $0x7b8] sm:$0xff]
    %v426 = vld [vmem:[#allocation5 + $0x7c0] sm:$0xff]
    %v427 = vld [vmem:[#allocation5 + $0x7c8] sm:$0xff]
    %v428 = vld [vmem:[#allocation5 + $0x7d0] sm:$0xff]
    %v429 = vld [vmem:[#allocation5 + $0x7d8] sm:$0xff]
    %v430 = vld [vmem:[#allocation5 + $0x7e0] sm:$0xff]
    %v431 = vld [vmem:[#allocation5 + $0x7e8] sm:$0xff]
    %v432 = vld [vmem:[#allocation5 + $0x7f0] sm:$0xff]
    %v433 = vld [vmem:[#allocation5 + $0x7f8] sm:$0xff]
    %v434 = vld [vmem:[#allocation5 + $0x800] sm:$0xff]
    %v435 = vld [vmem:[#allocation5 + $0x808] sm:$0xff]
    %v436 = vld [vmem:[#allocation5 + $0x810] sm:$0xff]
    %v437 = vld [vmem:[#allocation5 + $0x818] sm:$0xff]
    %v438 = vld [vmem:[#allocation5 + $0x820] sm:$0xff]
    %v439 = vld [vmem:[#allocation5 + $0x828] sm:$0xff]
    %v440 = vld [vmem:[#allocation5 + $0x830] sm:$0xff]
    %v441 = vld [vmem:[#allocation5 + $0x838] sm:$0xff]
    %v442 = vld [vmem:[#allocation5 + $0x840] sm:$0xff]
    %v443 = vld [vmem:[#allocation5 + $0x848] sm:$0xff]
    %v444 = vld [vmem:[#allocation5 + $0x850] sm:$0xff]
    %v445 = vld [vmem:[#allocation5 + $0x858] sm:$0xff]
    %v446 = vld [vmem:[#allocation5 + $0x860] sm:$0xff]
    %v447 = vld [vmem:[#allocation5 + $0x868] sm:$0xff]
    %v448 = vld [vmem:[#allocation5 + $0x870] sm:$0xff]
    %v449 = vld [vmem:[#allocation5 + $0x878] sm:$0xff]
    %v450 = vld [vmem:[#allocation5 + $0x880] sm:$0xff]
    %v451 = vld [vmem:[#allocation5 + $0x888] sm:$0xff]
    %v452 = vld [vmem:[#allocation5 + $0x890] sm:$0xff]
    %v453 = vld [vmem:[#allocation5 + $0x898] sm:$0xff]
    %v454 = vld [vmem:[#allocation5 + $0x8a0] sm:$0xff]
    %v455 = vld [vmem:[#allocation5 + $0x8a8] sm:$0xff]
    %v456 = vld [vmem:[#allocation5 + $0x8b0] sm:$0xff]
    %v457 = vld [vmem:[#allocation5 + $0x8b8] sm:$0xff]
    %v458 = vld [vmem:[#allocation5 + $0x8c0] sm:$0xff]
    %v459 = vld [vmem:[#allocation5 + $0x8c8] sm:$0xff]
    %v460 = vld [vmem:[#allocation5 + $0x8d0] sm:$0xff]
    %v461 = vld [vmem:[#allocation5 + $0x8d8] sm:$0xff]
    %v462 = vld [vmem:[#allocation5 + $0x8e0] sm:$0xff]
    %v463 = vld [vmem:[#allocation5 + $0x8e8] sm:$0xff]
    %v464 = vld [vmem:[#allocation5 + $0x8f0] sm:$0xff]
    %v465 = vld [vmem:[#allocation5 + $0x8f8] sm:$0xff]
    %v466 = vld [vmem:[#allocation5 + $0x900] sm:$0xff]
    %v467 = vld [vmem:[#allocation5 + $0x908] sm:$0xff]
    %v468 = vld [vmem:[#allocation5 + $0x910] sm:$0xff]
    %v469 = vld [vmem:[#allocation5 + $0x918] sm:$0xff]
    %v470 = vld [vmem:[#allocation5 + $0x920] sm:$0xff]
    %v471 = vld [vmem:[#allocation5 + $0x928] sm:$0xff]
    %v472 = vld [vmem:[#allocation5 + $0x930] sm:$0xff]
    %v473 = vld [vmem:[#allocation5 + $0x938] sm:$0xff]
    %v474 = vld [vmem:[#allocation5 + $0x940] sm:$0xff]
    %v475 = vld [vmem:[#allocation5 + $0x948] sm:$0xff]
    %v476 = vld [vmem:[#allocation5 + $0x950] sm:$0xff]
    %v477 = vld [vmem:[#allocation5 + $0x958] sm:$0xff]
    %v478 = vld [vmem:[#allocation5 + $0x960] sm:$0xff]
    %v479 = vld [vmem:[#allocation5 + $0x968] sm:$0xff]
    %v480 = vld [vmem:[#allocation5 + $0x970] sm:$0xff]
    %v481 = vld [vmem:[#allocation5 + $0x978] sm:$0xff]
    %v482 = vld [vmem:[#allocation5 + $0x980] sm:$0xff]
    %v483 = vld [vmem:[#allocation5 + $0x988] sm:$0xff]
    %v484 = vld [vmem:[#allocation5 + $0x990] sm:$0xff]
    %v485 = vld [vmem:[#allocation5 + $0x998] sm:$0xff]
    %v486 = vld [vmem:[#allocation5 + $0x9a0] sm:$0xff]
    %v487 = vld [vmem:[#allocation5 + $0x9a8] sm:$0xff]
    %v488 = vld [vmem:[#allocation5 + $0x9b0] sm:$0xff]
    %v489 = vld [vmem:[#allocation5 + $0x9b8] sm:$0xff]
    %v490 = vld [vmem:[#allocation5 + $0x9c0] sm:$0xff]
    %v491 = vld [vmem:[#allocation5 + $0x9c8] sm:$0xff]
    %v492 = vld [vmem:[#allocation5 + $0x9d0] sm:$0xff]
    %v493 = vld [vmem:[#allocation5 + $0x9d8] sm:$0xff]
    %v494 = vld [vmem:[#allocation5 + $0x9e0] sm:$0xff]
    %v495 = vld [vmem:[#allocation5 + $0x9e8] sm:$0xff]
    %v496 = vld [vmem:[#allocation5 + $0x9f0] sm:$0xff]
    %v497 = vld [vmem:[#allocation5 + $0x9f8] sm:$0xff]
    %v498 = vld [vmem:[#allocation5 + $0xa00] sm:$0xff]
    %v499 = vld [vmem:[#allocation5 + $0xa08] sm:$0xff]
    %v500 = vld [vmem:[#allocation5 + $0xa10] sm:$0xff]
    %v501 = vld [vmem:[#allocation5 + $0xa18] sm:$0xff]
    %v502 = vld [vmem:[#allocation5 + $0xa20] sm:$0xff]
    %v503 = vld [vmem:[#allocation5 + $0xa28] sm:$0xff]
    %v504 = vld [vmem:[#allocation5 + $0xa30] sm:$0xff]
    %v505 = vld [vmem:[#allocation5 + $0xa38] sm:$0xff]
    %v506 = vld [vmem:[#allocation5 + $0xa40] sm:$0xff]
    %v507 = vld [vmem:[#allocation5 + $0xa48] sm:$0xff]
    %v508 = vld [vmem:[#allocation5 + $0xa50] sm:$0xff]
    %v509 = vld [vmem:[#allocation5 + $0xa58] sm:$0xff]
    %v510 = vld [vmem:[#allocation5 + $0xa60] sm:$0xff]
    %v511 = vld [vmem:[#allocation5 + $0xa68] sm:$0xff]
    %v512 = vld [vmem:[#allocation5 + $0xa70] sm:$0xff]
    %v513 = vld [vmem:[#allocation5 + $0xa78] sm:$0xff]
    %v514 = vld [vmem:[#allocation5 + $0xa80] sm:$0xff]
    %v515 = vld [vmem:[#allocation5 + $0xa88] sm:$0xff]
    %v516 = vld [vmem:[#allocation5 + $0xa90] sm:$0xff]
    %v517 = vld [vmem:[#allocation5 + $0xa98] sm:$0xff]
    %v518 = vld [vmem:[#allocation5 + $0xaa0] sm:$0xff]
    %v519 = vld [vmem:[#allocation5 + $0xaa8] sm:$0xff]
    %v520 = vld [vmem:[#allocation5 + $0xab0] sm:$0xff]
    %v521 = vld [vmem:[#allocation5 + $0xab8] sm:$0xff]
    %v522 = vld [vmem:[#allocation5 + $0xac0] sm:$0xff]
    %v523 = vld [vmem:[#allocation5 + $0xac8] sm:$0xff]
    %v524 = vld [vmem:[#allocation5 + $0xad0] sm:$0xff]
    %v525 = vld [vmem:[#allocation5 + $0xad8] sm:$0xff]
    %v526 = vld [vmem:[#allocation5 + $0xae0] sm:$0xff]
    %v527 = vld [vmem:[#allocation5 + $0xae8] sm:$0xff]
    %v528 = vld [vmem:[#allocation5 + $0xaf0] sm:$0xff]
    %v529 = vld [vmem:[#allocation5 + $0xaf8] sm:$0xff]
    %v530 = vld [vmem:[#allocation5 + $0xb00] sm:$0xff]
    %v531 = vld [vmem:[#allocation5 + $0xb08] sm:$0xff]
    %v532 = vld [vmem:[#allocation5 + $0xb10] sm:$0xff]
    %v533 = vld [vmem:[#allocation5 + $0xb18] sm:$0xff]
    %v534 = vld [vmem:[#allocation5 + $0xb20] sm:$0xff]
    %v535 = vld [vmem:[#allocation5 + $0xb28] sm:$0xff]
    %v536 = vld [vmem:[#allocation5 + $0xb30] sm:$0xff]
    %v537 = vld [vmem:[#allocation5 + $0xb38] sm:$0xff]
    %v538 = vld [vmem:[#allocation5 + $0xb40] sm:$0xff]
    %v539 = vld [vmem:[#allocation5 + $0xb48] sm:$0xff]
    %v540 = vld [vmem:[#allocation5 + $0xb50] sm:$0xff]
    %v541 = vld [vmem:[#allocation5 + $0xb58] sm:$0xff]
    %v542 = vld [vmem:[#allocation5 + $0xb60] sm:$0xff]
    %v543 = vld [vmem:[#allocation5 + $0xb68] sm:$0xff]
    %v544 = vld [vmem:[#allocation5 + $0xb70] sm:$0xff]
    %v545 = vld [vmem:[#allocation5 + $0xb78] sm:$0xff]
    %v546 = vld [vmem:[#allocation5 + $0xb80] sm:$0xff]
    %v547 = vld [vmem:[#allocation5 + $0xb88] sm:$0xff]
    %v548 = vld [vmem:[#allocation5 + $0xb90] sm:$0xff]
    %v549 = vld [vmem:[#allocation5 + $0xb98] sm:$0xff]
    %v550 = vld [vmem:[#allocation5 + $0xba0] sm:$0xff]
    %v551 = vld [vmem:[#allocation5 + $0xba8] sm:$0xff]
    %v552 = vld [vmem:[#allocation5 + $0xbb0] sm:$0xff]
    %v553 = vld [vmem:[#allocation5 + $0xbb8] sm:$0xff]
    %v554 = vld [vmem:[#allocation5 + $0xbc0] sm:$0xff]
    %v555 = vld [vmem:[#allocation5 + $0xbc8] sm:$0xff]
    %v556 = vld [vmem:[#allocation5 + $0xbd0] sm:$0xff]
    %v557 = vld [vmem:[#allocation5 + $0xbd8] sm:$0xff]
    %v558 = vld [vmem:[#allocation5 + $0xbe0] sm:$0xff]
    %v559 = vld [vmem:[#allocation5 + $0xbe8] sm:$0xff]
    %v560 = vld [vmem:[#allocation5 + $0xbf0] sm:$0xff]
    %v561 = vld [vmem:[#allocation5 + $0xbf8] sm:$0xff]
    %v562 = vld [vmem:[#allocation5 + $0xc00] sm:$0xff]
    %v563 = vld [vmem:[#allocation5 + $0xc08] sm:$0xff]
    %v564 = vld [vmem:[#allocation5 + $0xc10] sm:$0xff]
    %v565 = vld [vmem:[#allocation5 + $0xc18] sm:$0xff]
    %v566 = vld [vmem:[#allocation5 + $0xc20] sm:$0xff]
    %v567 = vld [vmem:[#allocation5 + $0xc28] sm:$0xff]
    %v568 = vld [vmem:[#allocation5 + $0xc30] sm:$0xff]
    %v569 = vld [vmem:[#allocation5 + $0xc38] sm:$0xff]
    %v570 = vld [vmem:[#allocation5 + $0xc40] sm:$0xff]
    %v571 = vld [vmem:[#allocation5 + $0xc48] sm:$0xff]
    %v572 = vld [vmem:[#allocation5 + $0xc50] sm:$0xff]
    %v573 = vld [vmem:[#allocation5 + $0xc58] sm:$0xff]
    %v574 = vld [vmem:[#allocation5 + $0xc60] sm:$0xff]
    %v575 = vld [vmem:[#allocation5 + $0xc68] sm:$0xff]
    %v576 = vld [vmem:[#allocation5 + $0xc70] sm:$0xff]
    %v577 = vld [vmem:[#allocation5 + $0xc78] sm:$0xff]
    %v578 = vld [vmem:[#allocation5 + $0xc80] sm:$0xff]
    %v579 = vld [vmem:[#allocation5 + $0xc88] sm:$0xff]
    %v580 = vld [vmem:[#allocation5 + $0xc90] sm:$0xff]
    %v581 = vld [vmem:[#allocation5 + $0xc98] sm:$0xff]
    %v582 = vld [vmem:[#allocation5 + $0xca0] sm:$0xff]
    %v583 = vld [vmem:[#allocation5 + $0xca8] sm:$0xff]
    %v584 = vld [vmem:[#allocation5 + $0xcb0] sm:$0xff]
    %v585 = vld [vmem:[#allocation5 + $0xcb8] sm:$0xff]
    %v586 = vld [vmem:[#allocation5 + $0xcc0] sm:$0xff]
    %v587 = vld [vmem:[#allocation5 + $0xcc8] sm:$0xff]
    %v588 = vld [vmem:[#allocation5 + $0xcd0] sm:$0xff]
    %v589 = vld [vmem:[#allocation5 + $0xcd8] sm:$0xff]
    %v590 = vld [vmem:[#allocation5 + $0xce0] sm:$0xff]
    %v591 = vld [vmem:[#allocation5 + $0xce8] sm:$0xff]
    %v592 = vld [vmem:[#allocation5 + $0xcf0] sm:$0xff]
    %v593 = vld [vmem:[#allocation5 + $0xcf8] sm:$0xff]
    %v594 = vld [vmem:[#allocation5 + $0xd00] sm:$0xff]
    %v595 = vld [vmem:[#allocation5 + $0xd08] sm:$0xff]
    %v596 = vld [vmem:[#allocation5 + $0xd10] sm:$0xff]
    %v597 = vld [vmem:[#allocation5 + $0xd18] sm:$0xff]
    %v598 = vld [vmem:[#allocation5 + $0xd20] sm:$0xff]
    %v599 = vld [vmem:[#allocation5 + $0xd28] sm:$0xff]
    %v600 = vld [vmem:[#allocation5 + $0xd30] sm:$0xff]
    %v601 = vld [vmem:[#allocation5 + $0xd38] sm:$0xff]
    %v602 = vld [vmem:[#allocation5 + $0xd40] sm:$0xff]
    %v603 = vld [vmem:[#allocation5 + $0xd48] sm:$0xff]
    %v604 = vld [vmem:[#allocation5 + $0xd50] sm:$0xff]
    %v605 = vld [vmem:[#allocation5 + $0xd58] sm:$0xff]
    %v606 = vld [vmem:[#allocation5 + $0xd60] sm:$0xff]
    %v607 = vld [vmem:[#allocation5 + $0xd68] sm:$0xff]
    %v608 = vld [vmem:[#allocation5 + $0xd70] sm:$0xff]
    %v609 = vld [vmem:[#allocation5 + $0xd78] sm:$0xff]
    %v610 = vld [vmem:[#allocation5 + $0xd80] sm:$0xff]
    %v611 = vld [vmem:[#allocation5 + $0xd88] sm:$0xff]
    %v612 = vld [vmem:[#allocation5 + $0xd90] sm:$0xff]
    %v613 = vld [vmem:[#allocation5 + $0xd98] sm:$0xff]
    %v614 = vld [vmem:[#allocation5 + $0xda0] sm:$0xff]
    %v615 = vld [vmem:[#allocation5 + $0xda8] sm:$0xff]
    %v616 = vld [vmem:[#allocation5 + $0xdb0] sm:$0xff]
    %v617 = vld [vmem:[#allocation5 + $0xdb8] sm:$0xff]
    %v618 = vld [vmem:[#allocation5 + $0xdc0] sm:$0xff]
    %v619 = vld [vmem:[#allocation5 + $0xdc8] sm:$0xff]
    %v620 = vld [vmem:[#allocation5 + $0xdd0] sm:$0xff]
    %v621 = vld [vmem:[#allocation5 + $0xdd8] sm:$0xff]
    %v622 = vld [vmem:[#allocation5 + $0xde0] sm:$0xff]
    %v623 = vld [vmem:[#allocation5 + $0xde8] sm:$0xff]
    %v624 = vld [vmem:[#allocation5 + $0xdf0] sm:$0xff]
    %v625 = vld [vmem:[#allocation5 + $0xdf8] sm:$0xff]
    %v626 = vld [vmem:[#allocation5 + $0xe00] sm:$0xff]
    %v627 = vld [vmem:[#allocation5 + $0xe08] sm:$0xff]
    %v628 = vld [vmem:[#allocation5 + $0xe10] sm:$0xff]
    %v629 = vld [vmem:[#allocation5 + $0xe18] sm:$0xff]
    %v630 = vld [vmem:[#allocation5 + $0xe20] sm:$0xff]
    %v631 = vld [vmem:[#allocation5 + $0xe28] sm:$0xff]
    %v632 = vld [vmem:[#allocation5 + $0xe30] sm:$0xff]
    %v633 = vld [vmem:[#allocation5 + $0xe38] sm:$0xff]
    %v634 = vld [vmem:[#allocation5 + $0xe40] sm:$0xff]
    %v635 = vld [vmem:[#allocation5 + $0xe48] sm:$0xff]
    %v636 = vld [vmem:[#allocation5 + $0xe50] sm:$0xff]
    %v637 = vld [vmem:[#allocation5 + $0xe58] sm:$0xff]
    %v638 = vld [vmem:[#allocation5 + $0xe60] sm:$0xff]
    %v639 = vld [vmem:[#allocation5 + $0xe68] sm:$0xff]
    %v640 = vld [vmem:[#allocation5 + $0xe70] sm:$0xff]
    %v641 = vld [vmem:[#allocation5 + $0xe78] sm:$0xff]
    %v642 = vld [vmem:[#allocation5 + $0xe80] sm:$0xff]
    %v643 = vld [vmem:[#allocation5 + $0xe88] sm:$0xff]
    %v644 = vld [vmem:[#allocation5 + $0xe90] sm:$0xff]
    %v645 = vld [vmem:[#allocation5 + $0xe98] sm:$0xff]
    %v646 = vld [vmem:[#allocation5 + $0xea0] sm:$0xff]
    %v647 = vld [vmem:[#allocation5 + $0xea8] sm:$0xff]
    %v648 = vld [vmem:[#allocation5 + $0xeb0] sm:$0xff]
    %v649 = vld [vmem:[#allocation5 + $0xeb8] sm:$0xff]
    %v650 = vld [vmem:[#allocation5 + $0xec0] sm:$0xff]
    %v651 = vld [vmem:[#allocation5 + $0xec8] sm:$0xff]
    %v652 = vld [vmem:[#allocation5 + $0xed0] sm:$0xff]
    %v653 = vld [vmem:[#allocation5 + $0xed8] sm:$0xff]
    %v654 = vld [vmem:[#allocation5 + $0xee0] sm:$0xff]
    %v655 = vld [vmem:[#allocation5 + $0xee8] sm:$0xff]
    %v656 = vld [vmem:[#allocation5 + $0xef0] sm:$0xff]
    %v657 = vld [vmem:[#allocation5 + $0xef8] sm:$0xff]
    %v658 = vld [vmem:[#allocation5 + $0xf00] sm:$0xff]
    %v659 = vld [vmem:[#allocation5 + $0xf08] sm:$0xff]
    %v660 = vld [vmem:[#allocation5 + $0xf10] sm:$0xff]
    %v661 = vld [vmem:[#allocation5 + $0xf18] sm:$0xff]
    %v662 = vld [vmem:[#allocation5 + $0xf20] sm:$0xff]
    %v663 = vld [vmem:[#allocation5 + $0xf28] sm:$0xff]
    %v664 = vld [vmem:[#allocation5 + $0xf30] sm:$0xff]
    %v665 = vld [vmem:[#allocation5 + $0xf38] sm:$0xff]
    %v666 = vld [vmem:[#allocation5 + $0xf40] sm:$0xff]
    %v667 = vld [vmem:[#allocation5 + $0xf48] sm:$0xff]
    %v668 = vld [vmem:[#allocation5 + $0xf50] sm:$0xff]
    %v669 = vld [vmem:[#allocation5 + $0xf58] sm:$0xff]
    %v670 = vld [vmem:[#allocation5 + $0xf60] sm:$0xff]
    %v671 = vld [vmem:[#allocation5 + $0xf68] sm:$0xff]
    %v672 = vld [vmem:[#allocation5 + $0xf70] sm:$0xff]
    %v673 = vld [vmem:[#allocation5 + $0xf78] sm:$0xff]
    %v674 = vld [vmem:[#allocation5 + $0xf80] sm:$0xff]
    %v675 = vld [vmem:[#allocation5 + $0xf88] sm:$0xff]
    %v676 = vld [vmem:[#allocation5 + $0xf90] sm:$0xff]
    %v677 = vld [vmem:[#allocation5 + $0xf98] sm:$0xff]
    %v678 = vld [vmem:[#allocation5 + $0xfa0] sm:$0xff]
    %v679 = vld [vmem:[#allocation5 + $0xfa8] sm:$0xff]
    %v680 = vld [vmem:[#allocation5 + $0xfb0] sm:$0xff]
    %v681 = vld [vmem:[#allocation5 + $0xfb8] sm:$0xff]
    %v682 = vld [vmem:[#allocation5 + $0xfc0] sm:$0xff]
    %v683 = vld [vmem:[#allocation5 + $0xfc8] sm:$0xff]
    %v684 = vld [vmem:[#allocation5 + $0xfd0] sm:$0xff]
    %v685 = vld [vmem:[#allocation5 + $0xfd8] sm:$0xff]
    %v686 = vld [vmem:[#allocation5 + $0xfe0] sm:$0xff]
    %v687 = vld [vmem:[#allocation5 + $0xfe8] sm:$0xff]
    %v688 = vld [vmem:[#allocation5 + $0xff0] sm:$0xff]
    %v689 = vld [vmem:[#allocation5 + $0xff8] sm:$0xff]
    %v690 = vld [vmem:[#allocation5 + $0x1000] sm:$0xff]
    %v691 = vld [vmem:[#allocation5 + $0x1008] sm:$0xff]
    %v692 = vld [vmem:[#allocation5 + $0x1010] sm:$0xff]
    %v693 = vld [vmem:[#allocation5 + $0x1018] sm:$0xff]
    %v694 = vld [vmem:[#allocation5 + $0x1020] sm:$0xff]
    %v695 = vld [vmem:[#allocation5 + $0x1028] sm:$0xff]
    %v696 = vld [vmem:[#allocation5 + $0x1030] sm:$0xff]
    %v697 = vld [vmem:[#allocation5 + $0x1038] sm:$0xff]
    %v698 = vld [vmem:[#allocation5 + $0x1040] sm:$0xff]
    %v699 = vld [vmem:[#allocation5 + $0x1048] sm:$0xff]
    %v700 = vld [vmem:[#allocation5 + $0x1050] sm:$0xff]
    %v701 = vld [vmem:[#allocation5 + $0x1058] sm:$0xff]
    %v702 = vld [vmem:[#allocation5 + $0x1060] sm:$0xff]
    %v703 = vld [vmem:[#allocation5 + $0x1068] sm:$0xff]
    %v704 = vld [vmem:[#allocation5 + $0x1070] sm:$0xff]
    %v705 = vld [vmem:[#allocation5 + $0x1078] sm:$0xff]
    %v706 = vld [vmem:[#allocation5 + $0x1080] sm:$0xff]
    %v707 = vld [vmem:[#allocation5 + $0x1088] sm:$0xff]
    %v708 = vld [vmem:[#allocation5 + $0x1090] sm:$0xff]
    %v709 = vld [vmem:[#allocation5 + $0x1098] sm:$0xff]
    %v710 = vld [vmem:[#allocation5 + $0x10a0] sm:$0xff]
    %v711 = vld [vmem:[#allocation5 + $0x10a8] sm:$0xff]
    %v712 = vld [vmem:[#allocation5 + $0x10b0] sm:$0xff]
    %v713 = vld [vmem:[#allocation5 + $0x10b8] sm:$0xff]
    %v714 = vld [vmem:[#allocation5 + $0x10c0] sm:$0xff]
    %v715 = vld [vmem:[#allocation5 + $0x10c8] sm:$0xff]
    %v716 = vld [vmem:[#allocation5 + $0x10d0] sm:$0xff]
    %v717 = vld [vmem:[#allocation5 + $0x10d8] sm:$0xff]
    %v718 = vld [vmem:[#allocation5 + $0x10e0] sm:$0xff]
    %v719 = vld [vmem:[#allocation5 + $0x10e8] sm:$0xff]
    %v720 = vld [vmem:[#allocation5 + $0x10f0] sm:$0xff]
    %v721 = vld [vmem:[#allocation5 + $0x10f8] sm:$0xff]
    %v722 = vld [vmem:[#allocation5 + $0x1100] sm:$0xff]
    %v723 = vld [vmem:[#allocation5 + $0x1108] sm:$0xff]
    %v724 = vld [vmem:[#allocation5 + $0x1110] sm:$0xff]
    %v725 = vld [vmem:[#allocation5 + $0x1118] sm:$0xff]
    %v726 = vld [vmem:[#allocation5 + $0x1120] sm:$0xff]
    %v727 = vld [vmem:[#allocation5 + $0x1128] sm:$0xff]
    %v728 = vld [vmem:[#allocation5 + $0x1130] sm:$0xff]
    %v729 = vld [vmem:[#allocation5 + $0x1138] sm:$0xff]
    %v730 = vld [vmem:[#allocation5 + $0x1140] sm:$0xff]
    %v731 = vld [vmem:[#allocation5 + $0x1148] sm:$0xff]
    %v732 = vld [vmem:[#allocation5 + $0x1150] sm:$0xff]
    %v733 = vld [vmem:[#allocation5 + $0x1158] sm:$0xff]
    %v734 = vld [vmem:[#allocation5 + $0x1160] sm:$0xff]
    %v735 = vld [vmem:[#allocation5 + $0x1168] sm:$0xff]
    %v736 = vld [vmem:[#allocation5 + $0x1170] sm:$0xff]
    %v737 = vld [vmem:[#allocation5 + $0x1178] sm:$0xff]
    %v738 = vld [vmem:[#allocation5 + $0x1180] sm:$0xff]
    %v739 = vld [vmem:[#allocation5 + $0x1188] sm:$0xff]
    %v740 = vld [vmem:[#allocation5 + $0x1190] sm:$0xff]
    %v741 = vld [vmem:[#allocation5 + $0x1198] sm:$0xff]
    %v742 = vld [vmem:[#allocation5 + $0x11a0] sm:$0xff]
    %v743 = vld [vmem:[#allocation5 + $0x11a8] sm:$0xff]
    %v744 = vld [vmem:[#allocation5 + $0x11b0] sm:$0xff]
    %v745 = vld [vmem:[#allocation5 + $0x11b8] sm:$0xff]
    %v746 = vld [vmem:[#allocation5 + $0x11c0] sm:$0xff]
    %v747 = vld [vmem:[#allocation5 + $0x11c8] sm:$0xff]
    %v748 = vld [vmem:[#allocation5 + $0x11d0] sm:$0xff]
    %v749 = vld [vmem:[#allocation5 + $0x11d8] sm:$0xff]
    %v750 = vld [vmem:[#allocation5 + $0x11e0] sm:$0xff]
    %v751 = vld [vmem:[#allocation5 + $0x11e8] sm:$0xff]
    %v752 = vld [vmem:[#allocation5 + $0x11f0] sm:$0xff]
    %v753 = vld [vmem:[#allocation5 + $0x11f8] sm:$0xff]
    %v754 = vld [vmem:[#allocation5 + $0x1200] sm:$0xff]
    %v755 = vld [vmem:[#allocation5 + $0x1208] sm:$0xff]
    %v756 = vld [vmem:[#allocation5 + $0x1210] sm:$0xff]
    %v757 = vld [vmem:[#allocation5 + $0x1218] sm:$0xff]
    %v758 = vld [vmem:[#allocation5 + $0x1220] sm:$0xff]
    %v759 = vld [vmem:[#allocation5 + $0x1228] sm:$0xff]
    %v760 = vld [vmem:[#allocation5 + $0x1230] sm:$0xff]
    %v761 = vld [vmem:[#allocation5 + $0x1238] sm:$0xff]
    %v762 = vld [vmem:[#allocation5 + $0x1240] sm:$0xff]
    %v763 = vld [vmem:[#allocation5 + $0x1248] sm:$0xff]
    %v764 = vld [vmem:[#allocation5 + $0x1250] sm:$0xff]
    %v765 = vld [vmem:[#allocation5 + $0x1258] sm:$0xff]
    %v766 = vld [vmem:[#allocation5 + $0x1260] sm:$0xff]
    %v767 = vld [vmem:[#allocation5 + $0x1268] sm:$0xff]
    %v768 = vld [vmem:[#allocation5 + $0x1270] sm:$0xff]
    %v769 = vld [vmem:[#allocation5 + $0x1278] sm:$0xff]
    %v770 = vld [vmem:[#allocation5 + $0x1280] sm:$0xff]
    %v771 = vld [vmem:[#allocation5 + $0x1288] sm:$0xff]
    %v772 = vld [vmem:[#allocation5 + $0x1290] sm:$0xff]
    %v773 = vld [vmem:[#allocation5 + $0x1298] sm:$0xff]
    %v774 = vld [vmem:[#allocation5 + $0x12a0] sm:$0xff]
    %v775 = vld [vmem:[#allocation5 + $0x12a8] sm:$0xff]
    %v776 = vld [vmem:[#allocation5 + $0x12b0] sm:$0xff]
    %v777 = vld [vmem:[#allocation5 + $0x12b8] sm:$0xff]
    %v778 = vld [vmem:[#allocation5 + $0x12c0] sm:$0xff]
    %v779 = vld [vmem:[#allocation5 + $0x12c8] sm:$0xff]
    %v780 = vld [vmem:[#allocation5 + $0x12d0] sm:$0xff]
    %v781 = vld [vmem:[#allocation5 + $0x12d8] sm:$0xff]
    %v782 = vld [vmem:[#allocation5 + $0x12e0] sm:$0xff]
    %v783 = vld [vmem:[#allocation5 + $0x12e8] sm:$0xff]
    %v784 = vld [vmem:[#allocation5 + $0x12f0] sm:$0xff]
    %v785 = vld [vmem:[#allocation5 + $0x12f8] sm:$0xff]
    %v786 = vld [vmem:[#allocation5 + $0x1300] sm:$0xff]
    %v787 = vld [vmem:[#allocation5 + $0x1308] sm:$0xff]
    %v788 = vld [vmem:[#allocation5 + $0x1310] sm:$0xff]
    %v789 = vld [vmem:[#allocation5 + $0x1318] sm:$0xff]
    %v790 = vld [vmem:[#allocation5 + $0x1320] sm:$0xff]
    %v791 = vld [vmem:[#allocation5 + $0x1328] sm:$0xff]
    %v792 = vld [vmem:[#allocation5 + $0x1330] sm:$0xff]
    %v793 = vld [vmem:[#allocation5 + $0x1338] sm:$0xff]
    %v794 = vld [vmem:[#allocation5 + $0x1340] sm:$0xff]
    %v795 = vld [vmem:[#allocation5 + $0x1348] sm:$0xff]
    %v796 = vld [vmem:[#allocation5 + $0x1350] sm:$0xff]
    %v797 = vld [vmem:[#allocation5 + $0x1358] sm:$0xff]
    %v798 = vld [vmem:[#allocation5 + $0x1360] sm:$0xff]
    %v799 = vld [vmem:[#allocation5 + $0x1368] sm:$0xff]
    %v800 = vld [vmem:[#allocation5 + $0x1370] sm:$0xff]
    %v801 = vld [vmem:[#allocation5 + $0x1378] sm:$0xff]
    %v802 = vld [vmem:[#allocation5 + $0x1380] sm:$0xff]
    %v803 = vld [vmem:[#allocation5 + $0x1388] sm:$0xff]
    %v804 = vld [vmem:[#allocation5 + $0x1390] sm:$0xff]
    %v805 = vld [vmem:[#allocation5 + $0x1398] sm:$0xff]
    %v806 = vld [vmem:[#allocation5 + $0x13a0] sm:$0xff]
    %v807 = vld [vmem:[#allocation5 + $0x13a8] sm:$0xff]
    %v808 = vld [vmem:[#allocation5 + $0x13b0] sm:$0xff]
    %v809 = vld [vmem:[#allocation5 + $0x13b8] sm:$0xff]
    %v810 = vld [vmem:[#allocation5 + $0x13c0] sm:$0xff]
    %v811 = vld [vmem:[#allocation5 + $0x13c8] sm:$0xff]
    %v812 = vld [vmem:[#allocation5 + $0x13d0] sm:$0xff]
    %v813 = vld [vmem:[#allocation5 + $0x13d8] sm:$0xff]
    %v814 = vld [vmem:[#allocation5 + $0x13e0] sm:$0xff]
    %v815 = vld [vmem:[#allocation5 + $0x13e8] sm:$0xff]
    %v816 = vld [vmem:[#allocation5 + $0x13f0] sm:$0xff]
    %v817 = vld [vmem:[#allocation5 + $0x13f8] sm:$0xff]
    %v818 = vld [vmem:[#allocation5 + $0x1400] sm:$0xff]
    %v819 = vld [vmem:[#allocation5 + $0x1408] sm:$0xff]
    %v820 = vld [vmem:[#allocation5 + $0x1410] sm:$0xff]
    %v821 = vld [vmem:[#allocation5 + $0x1418] sm:$0xff]
    %v822 = vld [vmem:[#allocation5 + $0x1420] sm:$0xff]
    %v823 = vld [vmem:[#allocation5 + $0x1428] sm:$0xff]
    %v824 = vld [vmem:[#allocation5 + $0x1430] sm:$0xff]
    %v825 = vld [vmem:[#allocation5 + $0x1438] sm:$0xff]
    %v826 = vld [vmem:[#allocation5 + $0x1440] sm:$0xff]
    %v827 = vld [vmem:[#allocation5 + $0x1448] sm:$0xff]
    %v828 = vld [vmem:[#allocation5 + $0x1450] sm:$0xff]
    %v829 = vld [vmem:[#allocation5 + $0x1458] sm:$0xff]
    %v830 = vld [vmem:[#allocation5 + $0x1460] sm:$0xff]
    %v831 = vld [vmem:[#allocation5 + $0x1468] sm:$0xff]
    %v832 = vld [vmem:[#allocation5 + $0x1470] sm:$0xff]
    %v833 = vld [vmem:[#allocation5 + $0x1478] sm:$0xff]
    %v834 = vld [vmem:[#allocation5 + $0x1480] sm:$0xff]
    %v835 = vld [vmem:[#allocation5 + $0x1488] sm:$0xff]
    %v836 = vld [vmem:[#allocation5 + $0x1490] sm:$0xff]
    %v837 = vld [vmem:[#allocation5 + $0x1498] sm:$0xff]
    %v838 = vld [vmem:[#allocation5 + $0x14a0] sm:$0xff]
    %v839 = vld [vmem:[#allocation5 + $0x14a8] sm:$0xff]
    %v840 = vld [vmem:[#allocation5 + $0x14b0] sm:$0xff]
    %v841 = vld [vmem:[#allocation5 + $0x14b8] sm:$0xff]
    %v842 = vld [vmem:[#allocation5 + $0x14c0] sm:$0xff]
    %v843 = vld [vmem:[#allocation5 + $0x14c8] sm:$0xff]
    %v844 = vld [vmem:[#allocation5 + $0x14d0] sm:$0xff]
    %v845 = vld [vmem:[#allocation5 + $0x14d8] sm:$0xff]
    %v846 = vld [vmem:[#allocation5 + $0x14e0] sm:$0xff]
    %v847 = vld [vmem:[#allocation5 + $0x14e8] sm:$0xff]
    %v848 = vld [vmem:[#allocation5 + $0x14f0] sm:$0xff]
    %v849 = vld [vmem:[#allocation5 + $0x14f8] sm:$0xff]
    %v850 = vld [vmem:[#allocation5 + $0x1500] sm:$0xff]
    %v851 = vld [vmem:[#allocation5 + $0x1508] sm:$0xff]
    %v852 = vld [vmem:[#allocation5 + $0x1510] sm:$0xff]
    %v853 = vld [vmem:[#allocation5 + $0x1518] sm:$0xff]
    %v854 = vld [vmem:[#allocation5 + $0x1520] sm:$0xff]
    %v855 = vld [vmem:[#allocation5 + $0x1528] sm:$0xff]
    %v856 = vld [vmem:[#allocation5 + $0x1530] sm:$0xff]
    %v857 = vld [vmem:[#allocation5 + $0x1538] sm:$0xff]
    %v858 = vld [vmem:[#allocation5 + $0x1540] sm:$0xff]
    %v859 = vld [vmem:[#allocation5 + $0x1548] sm:$0xff]
    %v860 = vld [vmem:[#allocation5 + $0x1550] sm:$0xff]
    %v861 = vld [vmem:[#allocation5 + $0x1558] sm:$0xff]
    %v862 = vld [vmem:[#allocation5 + $0x1560] sm:$0xff]
    %v863 = vld [vmem:[#allocation5 + $0x1568] sm:$0xff]
    %v864 = vld [vmem:[#allocation5 + $0x1570] sm:$0xff]
    %v865 = vld [vmem:[#allocation5 + $0x1578] sm:$0xff]
    %v866 = vld [vmem:[#allocation5 + $0x1580] sm:$0xff]
    %v867 = vld [vmem:[#allocation5 + $0x1588] sm:$0xff]
    %v868 = vld [vmem:[#allocation5 + $0x1590] sm:$0xff]
    %v869 = vld [vmem:[#allocation5 + $0x1598] sm:$0xff]
    %v870 = vld [vmem:[#allocation5 + $0x15a0] sm:$0xff]
    %v871 = vld [vmem:[#allocation5 + $0x15a8] sm:$0xff]
    %v872 = vld [vmem:[#allocation5 + $0x15b0] sm:$0xff]
    %v873 = vld [vmem:[#allocation5 + $0x15b8] sm:$0xff]
    %v874 = vld [vmem:[#allocation5 + $0x15c0] sm:$0xff]
    %v875 = vld [vmem:[#allocation5 + $0x15c8] sm:$0xff]
    %v876 = vld [vmem:[#allocation5 + $0x15d0] sm:$0xff]
    %v877 = vld [vmem:[#allocation5 + $0x15d8] sm:$0xff]
    %v878 = vld [vmem:[#allocation5 + $0x15e0] sm:$0xff]
    %v879 = vld [vmem:[#allocation5 + $0x15e8] sm:$0xff]
    %v880 = vld [vmem:[#allocation5 + $0x15f0] sm:$0xff]
    %v881 = vld [vmem:[#allocation5 + $0x15f8] sm:$0xff]
    %v882 = vld [vmem:[#allocation5 + $0x1600] sm:$0xff]
    %v883 = vld [vmem:[#allocation5 + $0x1608] sm:$0xff]
    %v884 = vld [vmem:[#allocation5 + $0x1610] sm:$0xff]
    %v885 = vld [vmem:[#allocation5 + $0x1618] sm:$0xff]
    %v886 = vld [vmem:[#allocation5 + $0x1620] sm:$0xff]
    %v887 = vld [vmem:[#allocation5 + $0x1628] sm:$0xff]
    %v888 = vld [vmem:[#allocation5 + $0x1630] sm:$0xff]
    %v889 = vld [vmem:[#allocation5 + $0x1638] sm:$0xff]
    %v890 = vld [vmem:[#allocation5 + $0x1640] sm:$0xff]
    %v891 = vld [vmem:[#allocation5 + $0x1648] sm:$0xff]
    %v892 = vld [vmem:[#allocation5 + $0x1650] sm:$0xff]
    %v893 = vld [vmem:[#allocation5 + $0x1658] sm:$0xff]
    %v894 = vld [vmem:[#allocation5 + $0x1660] sm:$0xff]
    %v895 = vld [vmem:[#allocation5 + $0x1668] sm:$0xff]
    %v896 = vld [vmem:[#allocation5 + $0x1670] sm:$0xff]
    %v897 = vld [vmem:[#allocation5 + $0x1678] sm:$0xff]
    %v898 = vld [vmem:[#allocation5 + $0x1680] sm:$0xff]
    %v899 = vld [vmem:[#allocation5 + $0x1688] sm:$0xff]
    %v900 = vld [vmem:[#allocation5 + $0x1690] sm:$0xff]
    %v901 = vld [vmem:[#allocation5 + $0x1698] sm:$0xff]
    %v902 = vld [vmem:[#allocation5 + $0x16a0] sm:$0xff]
    %v903 = vld [vmem:[#allocation5 + $0x16a8] sm:$0xff]
    %v904 = vld [vmem:[#allocation5 + $0x16b0] sm:$0xff]
    %v905 = vld [vmem:[#allocation5 + $0x16b8] sm:$0xff]
    %v906 = vld [vmem:[#allocation5 + $0x16c0] sm:$0xff]
    %v907 = vld [vmem:[#allocation5 + $0x16c8] sm:$0xff]
    %v908 = vld [vmem:[#allocation5 + $0x16d0] sm:$0xff]
    %v909 = vld [vmem:[#allocation5 + $0x16d8] sm:$0xff]
    %v910 = vld [vmem:[#allocation5 + $0x16e0] sm:$0xff]
    %v911 = vld [vmem:[#allocation5 + $0x16e8] sm:$0xff]
    %v912 = vld [vmem:[#allocation5 + $0x16f0] sm:$0xff]
    %v913 = vld [vmem:[#allocation5 + $0x16f8] sm:$0xff]
    %v914 = vld [vmem:[#allocation5 + $0x1700] sm:$0xff]
    %v915 = vld [vmem:[#allocation5 + $0x1708] sm:$0xff]
    %v916 = vld [vmem:[#allocation5 + $0x1710] sm:$0xff]
    %v917 = vld [vmem:[#allocation5 + $0x1718] sm:$0xff]
    %v918 = vld [vmem:[#allocation5 + $0x1720] sm:$0xff]
    %v919 = vld [vmem:[#allocation5 + $0x1728] sm:$0xff]
    %v920 = vld [vmem:[#allocation5 + $0x1730] sm:$0xff]
    %v921 = vld [vmem:[#allocation5 + $0x1738] sm:$0xff]
    %v922 = vld [vmem:[#allocation5 + $0x1740] sm:$0xff]
    %v923 = vld [vmem:[#allocation5 + $0x1748] sm:$0xff]
    %v924 = vld [vmem:[#allocation5 + $0x1750] sm:$0xff]
    %v925 = vld [vmem:[#allocation5 + $0x1758] sm:$0xff]
    %v926 = vld [vmem:[#allocation5 + $0x1760] sm:$0xff]
    %v927 = vld [vmem:[#allocation5 + $0x1768] sm:$0xff]
    %v928 = vld [vmem:[#allocation5 + $0x1770] sm:$0xff]
    %v929 = vld [vmem:[#allocation5 + $0x1778] sm:$0xff]
    %v930 = vld [vmem:[#allocation5 + $0x1780] sm:$0xff]
    %v931 = vld [vmem:[#allocation5 + $0x1788] sm:$0xff]
    %v932 = vld [vmem:[#allocation5 + $0x1790] sm:$0xff]
    %v933 = vld [vmem:[#allocation5 + $0x1798] sm:$0xff]
    %v934 = vld [vmem:[#allocation5 + $0x17a0] sm:$0xff]
    %v935 = vld [vmem:[#allocation5 + $0x17a8] sm:$0xff]
    %v936 = vld [vmem:[#allocation5 + $0x17b0] sm:$0xff]
    %v937 = vld [vmem:[#allocation5 + $0x17b8] sm:$0xff]
    %v938 = vld [vmem:[#allocation5 + $0x17c0] sm:$0xff]
    %v939 = vld [vmem:[#allocation5 + $0x17c8] sm:$0xff]
    %v940 = vld [vmem:[#allocation5 + $0x17d0] sm:$0xff]
    %v941 = vld [vmem:[#allocation5 + $0x17d8] sm:$0xff]
    %v942 = vld [vmem:[#allocation5 + $0x17e0] sm:$0xff]
    %v943 = vld [vmem:[#allocation5 + $0x17e8] sm:$0xff]
    %v944 = vld [vmem:[#allocation5 + $0x17f0] sm:$0xff]
    %v945 = vld [vmem:[#allocation5 + $0x17f8] sm:$0xff]
    %v946 = vld [vmem:[#allocation5 + $0x1800] sm:$0xff]
    %v947 = vld [vmem:[#allocation5 + $0x1808] sm:$0xff]
    %v948 = vld [vmem:[#allocation5 + $0x1810] sm:$0xff]
    %v949 = vld [vmem:[#allocation5 + $0x1818] sm:$0xff]
    %v950 = vld [vmem:[#allocation5 + $0x1820] sm:$0xff]
    %v951 = vld [vmem:[#allocation5 + $0x1828] sm:$0xff]
    %v952 = vld [vmem:[#allocation5 + $0x1830] sm:$0xff]
    %v953 = vld [vmem:[#allocation5 + $0x1838] sm:$0xff]
    %v954 = vld [vmem:[#allocation5 + $0x1840] sm:$0xff]
    %v955 = vld [vmem:[#allocation5 + $0x1848] sm:$0xff]
    %v956 = vld [vmem:[#allocation5 + $0x1850] sm:$0xff]
    %v957 = vld [vmem:[#allocation5 + $0x1858] sm:$0xff]
    %v958 = vld [vmem:[#allocation5 + $0x1860] sm:$0xff]
    %v959 = vld [vmem:[#allocation5 + $0x1868] sm:$0xff]
    %v960 = vld [vmem:[#allocation5 + $0x1870] sm:$0xff]
    %v961 = vld [vmem:[#allocation5 + $0x1878] sm:$0xff]
    %v962 = vld [vmem:[#allocation5 + $0x1880] sm:$0xff]
    %v963 = vld [vmem:[#allocation5 + $0x1888] sm:$0xff]
    %v964 = vld [vmem:[#allocation5 + $0x1890] sm:$0xff]
    %v965 = vld [vmem:[#allocation5 + $0x1898] sm:$0xff]
    %v966 = vld [vmem:[#allocation5 + $0x18a0] sm:$0xff]
    %v967 = vld [vmem:[#allocation5 + $0x18a8] sm:$0xff]
    %v968 = vld [vmem:[#allocation5 + $0x18b0] sm:$0xff]
    %v969 = vld [vmem:[#allocation5 + $0x18b8] sm:$0xff]
    %v970 = vld [vmem:[#allocation5 + $0x18c0] sm:$0xff]
    %v971 = vld [vmem:[#allocation5 + $0x18c8] sm:$0xff]
    %v972 = vld [vmem:[#allocation5 + $0x18d0] sm:$0xff]
    %v973 = vld [vmem:[#allocation5 + $0x18d8] sm:$0xff]
    %v974 = vld [vmem:[#allocation5 + $0x18e0] sm:$0xff]
    %v975 = vld [vmem:[#allocation5 + $0x18e8] sm:$0xff]
    %v976 = vld [vmem:[#allocation5 + $0x18f0] sm:$0xff]
    %v977 = vld [vmem:[#allocation5 + $0x18f8] sm:$0xff]
    %v978 = vld [vmem:[#allocation5 + $0x1900] sm:$0xff]
    %v979 = vld [vmem:[#allocation5 + $0x1908] sm:$0xff]
    %v980 = vld [vmem:[#allocation5 + $0x1910] sm:$0xff]
    %v981 = vld [vmem:[#allocation5 + $0x1918] sm:$0xff]
    %v982 = vld [vmem:[#allocation5 + $0x1920] sm:$0xff]
    %v983 = vld [vmem:[#allocation5 + $0x1928] sm:$0xff]
    %v984 = vld [vmem:[#allocation5 + $0x1930] sm:$0xff]
    %v985 = vld [vmem:[#allocation5 + $0x1938] sm:$0xff]
    %v986 = vld [vmem:[#allocation5 + $0x1940] sm:$0xff]
    %v987 = vld [vmem:[#allocation5 + $0x1948] sm:$0xff]
    %v988 = vld [vmem:[#allocation5 + $0x1950] sm:$0xff]
    %v989 = vld [vmem:[#allocation5 + $0x1958] sm:$0xff]
    %v990 = vld [vmem:[#allocation5 + $0x1960] sm:$0xff]
    %v991 = vld [vmem:[#allocation5 + $0x1968] sm:$0xff]
    %v992 = vld [vmem:[#allocation5 + $0x1970] sm:$0xff]
    %v993 = vld [vmem:[#allocation5 + $0x1978] sm:$0xff]
    %v994 = vld [vmem:[#allocation5 + $0x1980] sm:$0xff]
    %v995 = vld [vmem:[#allocation5 + $0x1988] sm:$0xff]
    %v996 = vld [vmem:[#allocation5 + $0x1990] sm:$0xff]
    %v997 = vld [vmem:[#allocation5 + $0x1998] sm:$0xff]
    %v998 = vld [vmem:[#allocation5 + $0x19a0] sm:$0xff]
    %v999 = vld [vmem:[#allocation5 + $0x19a8] sm:$0xff]
    %v1000 = vld [vmem:[#allocation5 + $0x19b0] sm:$0xff]
    %v1001 = vld [vmem:[#allocation5 + $0x19b8] sm:$0xff]
    %v1002 = vld [vmem:[#allocation5 + $0x19c0] sm:$0xff]
    %v1003 = vld [vmem:[#allocation5 + $0x19c8] sm:$0xff]
    %v1004 = vld [vmem:[#allocation5 + $0x19d0] sm:$0xff]
    %v1005 = vld [vmem:[#allocation5 + $0x19d8] sm:$0xff]
    %v1006 = vld [vmem:[#allocation5 + $0x19e0] sm:$0xff]
    %v1007 = vld [vmem:[#allocation5 + $0x19e8] sm:$0xff]
    %v1008 = vld [vmem:[#allocation5 + $0x19f0] sm:$0xff]
    %v1009 = vld [vmem:[#allocation5 + $0x19f8] sm:$0xff]
    %v1010 = vld [vmem:[#allocation5 + $0x1a00] sm:$0xff]
    %v1011 = vld [vmem:[#allocation5 + $0x1a08] sm:$0xff]
    %v1012 = vld [vmem:[#allocation5 + $0x1a10] sm:$0xff]
    %v1013 = vld [vmem:[#allocation5 + $0x1a18] sm:$0xff]
    %v1014 = vld [vmem:[#allocation5 + $0x1a20] sm:$0xff]
    %v1015 = vld [vmem:[#allocation5 + $0x1a28] sm:$0xff]
    %v1016 = vld [vmem:[#allocation5 + $0x1a30] sm:$0xff]
    %v1017 = vld [vmem:[#allocation5 + $0x1a38] sm:$0xff]
    %v1018 = vld [vmem:[#allocation5 + $0x1a40] sm:$0xff]
    %v1019 = vld [vmem:[#allocation5 + $0x1a48] sm:$0xff]
    %v1020 = vld [vmem:[#allocation5 + $0x1a50] sm:$0xff]
    %v1021 = vld [vmem:[#allocation5 + $0x1a58] sm:$0xff]
    %v1022 = vld [vmem:[#allocation5 + $0x1a60] sm:$0xff]
    %v1023 = vld [vmem:[#allocation5 + $0x1a68] sm:$0xff]
    %v1024 = vld [vmem:[#allocation5 + $0x1a70] sm:$0xff]
    %v1025 = vld [vmem:[#allocation5 + $0x1a78] sm:$0xff]
    %v1026 = vld [vmem:[#allocation5 + $0x1a80] sm:$0xff]
    %v1027 = vld [vmem:[#allocation5 + $0x1a88] sm:$0xff]
    %v1028 = vld [vmem:[#allocation5 + $0x1a90] sm:$0xff]
    %v1029 = vld [vmem:[#allocation5 + $0x1a98] sm:$0xff]
    %v1030 = vld [vmem:[#allocation5 + $0x1aa0] sm:$0xff]
    %v1031 = vld [vmem:[#allocation5 + $0x1aa8] sm:$0xff]
    %v1032 = vld [vmem:[#allocation5 + $0x1ab0] sm:$0xff]
    %v1033 = vld [vmem:[#allocation5 + $0x1ab8] sm:$0xff]
    %v1034 = vld [vmem:[#allocation5 + $0x1ac0] sm:$0xff]
    %v1035 = vld [vmem:[#allocation5 + $0x1ac8] sm:$0xff]
    %v1036 = vld [vmem:[#allocation5 + $0x1ad0] sm:$0xff]
    %v1037 = vld [vmem:[#allocation5 + $0x1ad8] sm:$0xff]
    %v1038 = vld [vmem:[#allocation5 + $0x1ae0] sm:$0xff]
    %v1039 = vld [vmem:[#allocation5 + $0x1ae8] sm:$0xff]
    %v1040 = vld [vmem:[#allocation5 + $0x1af0] sm:$0xff]
    %v1041 = vld [vmem:[#allocation5 + $0x1af8] sm:$0xff]
    %v1042 = vld [vmem:[#allocation5 + $0x1b00] sm:$0xff]
    %v1043 = vld [vmem:[#allocation5 + $0x1b08] sm:$0xff]
    %v1044 = vld [vmem:[#allocation5 + $0x1b10] sm:$0xff]
    %v1045 = vld [vmem:[#allocation5 + $0x1b18] sm:$0xff]
    %v1046 = vld [vmem:[#allocation5 + $0x1b20] sm:$0xff]
    %v1047 = vld [vmem:[#allocation5 + $0x1b28] sm:$0xff]
    %v1048 = vld [vmem:[#allocation5 + $0x1b30] sm:$0xff]
    %v1049 = vld [vmem:[#allocation5 + $0x1b38] sm:$0xff]
    %v1050 = vld [vmem:[#allocation5 + $0x1b40] sm:$0xff]
    %v1051 = vld [vmem:[#allocation5 + $0x1b48] sm:$0xff]
    %v1052 = vld [vmem:[#allocation5 + $0x1b50] sm:$0xff]
    %v1053 = vld [vmem:[#allocation5 + $0x1b58] sm:$0xff]
    %v1054 = vld [vmem:[#allocation5 + $0x1b60] sm:$0xff]
    %v1055 = vld [vmem:[#allocation5 + $0x1b68] sm:$0xff]
    %v1056 = vld [vmem:[#allocation5 + $0x1b70] sm:$0xff]
    %v1057 = vld [vmem:[#allocation5 + $0x1b78] sm:$0xff]
    %v1058 = vld [vmem:[#allocation5 + $0x1b80] sm:$0xff]
    %v1059 = vld [vmem:[#allocation5 + $0x1b88] sm:$0xff]
    %v1060 = vld [vmem:[#allocation5 + $0x1b90] sm:$0xff]
    %v1061 = vld [vmem:[#allocation5 + $0x1b98] sm:$0xff]
    %v1062 = vld [vmem:[#allocation5 + $0x1ba0] sm:$0xff]
    %v1063 = vld [vmem:[#allocation5 + $0x1ba8] sm:$0xff]
    %v1064 = vld [vmem:[#allocation5 + $0x1bb0] sm:$0xff]
    %v1065 = vld [vmem:[#allocation5 + $0x1bb8] sm:$0xff]
    %v1066 = vld [vmem:[#allocation5 + $0x1bc0] sm:$0xff]
    %v1067 = vld [vmem:[#allocation5 + $0x1bc8] sm:$0xff]
    %v1068 = vld [vmem:[#allocation5 + $0x1bd0] sm:$0xff]
    %v1069 = vld [vmem:[#allocation5 + $0x1bd8] sm:$0xff]
    %v1070 = vld [vmem:[#allocation5 + $0x1be0] sm:$0xff]
    %v1071 = vld [vmem:[#allocation5 + $0x1be8] sm:$0xff]
    %v1072 = vld [vmem:[#allocation5 + $0x1bf0] sm:$0xff]
    %v1073 = vld [vmem:[#allocation5 + $0x1bf8] sm:$0xff]
    %v1074 = vld [vmem:[#allocation5 + $0x1c00] sm:$0xff]
    %v1075 = vld [vmem:[#allocation5 + $0x1c08] sm:$0xff]
    %v1076 = vld [vmem:[#allocation5 + $0x1c10] sm:$0xff]
    %v1077 = vld [vmem:[#allocation5 + $0x1c18] sm:$0xff]
    %v1078 = vld [vmem:[#allocation5 + $0x1c20] sm:$0xff]
    %v1079 = vld [vmem:[#allocation5 + $0x1c28] sm:$0xff]
    %v1080 = vld [vmem:[#allocation5 + $0x1c30] sm:$0xff]
    %v1081 = vld [vmem:[#allocation5 + $0x1c38] sm:$0xff]
    %v1082 = vld [vmem:[#allocation5 + $0x1c40] sm:$0xff]
    %v1083 = vld [vmem:[#allocation5 + $0x1c48] sm:$0xff]
    %v1084 = vld [vmem:[#allocation5 + $0x1c50] sm:$0xff]
    %v1085 = vld [vmem:[#allocation5 + $0x1c58] sm:$0xff]
    %v1086 = vld [vmem:[#allocation5 + $0x1c60] sm:$0xff]
    %v1087 = vld [vmem:[#allocation5 + $0x1c68] sm:$0xff]
    %v1088 = vld [vmem:[#allocation5 + $0x1c70] sm:$0xff]
    %v1089 = vld [vmem:[#allocation5 + $0x1c78] sm:$0xff]
    %v1090 = vld [vmem:[#allocation5 + $0x1c80] sm:$0xff]
    %v1091 = vld [vmem:[#allocation5 + $0x1c88] sm:$0xff]
    %v1092 = vld [vmem:[#allocation5 + $0x1c90] sm:$0xff]
    %v1093 = vld [vmem:[#allocation5 + $0x1c98] sm:$0xff]
    %v1094 = vld [vmem:[#allocation5 + $0x1ca0] sm:$0xff]
    %v1095 = vld [vmem:[#allocation5 + $0x1ca8] sm:$0xff]
    %v1096 = vld [vmem:[#allocation5 + $0x1cb0] sm:$0xff]
    %v1097 = vld [vmem:[#allocation5 + $0x1cb8] sm:$0xff]
    %v1098 = vld [vmem:[#allocation5 + $0x1cc0] sm:$0xff]
    %v1099 = vld [vmem:[#allocation5 + $0x1cc8] sm:$0xff]
    %v1100 = vld [vmem:[#allocation5 + $0x1cd0] sm:$0xff]
    %v1101 = vld [vmem:[#allocation5 + $0x1cd8] sm:$0xff]
    %v1102 = vld [vmem:[#allocation5 + $0x1ce0] sm:$0xff]
    %v1103 = vld [vmem:[#allocation5 + $0x1ce8] sm:$0xff]
    %v1104 = vld [vmem:[#allocation5 + $0x1cf0] sm:$0xff]
    %v1105 = vld [vmem:[#allocation5 + $0x1cf8] sm:$0xff]
    %v1106 = vld [vmem:[#allocation5 + $0x1d00] sm:$0xff]
    %v1107 = vld [vmem:[#allocation5 + $0x1d08] sm:$0xff]
    %v1108 = vld [vmem:[#allocation5 + $0x1d10] sm:$0xff]
    %v1109 = vld [vmem:[#allocation5 + $0x1d18] sm:$0xff]
    %v1110 = vld [vmem:[#allocation5 + $0x1d20] sm:$0xff]
    %v1111 = vld [vmem:[#allocation5 + $0x1d28] sm:$0xff]
    %v1112 = vld [vmem:[#allocation5 + $0x1d30] sm:$0xff]
    %v1113 = vld [vmem:[#allocation5 + $0x1d38] sm:$0xff]
    %v1114 = vld [vmem:[#allocation5 + $0x1d40] sm:$0xff]
    %v1115 = vld [vmem:[#allocation5 + $0x1d48] sm:$0xff]
    %v1116 = vld [vmem:[#allocation5 + $0x1d50] sm:$0xff]
    %v1117 = vld [vmem:[#allocation5 + $0x1d58] sm:$0xff]
    %v1118 = vld [vmem:[#allocation5 + $0x1d60] sm:$0xff]
    %v1119 = vld [vmem:[#allocation5 + $0x1d68] sm:$0xff]
    %v1120 = vld [vmem:[#allocation5 + $0x1d70] sm:$0xff]
    %v1121 = vld [vmem:[#allocation5 + $0x1d78] sm:$0xff]
    %v1122 = vld [vmem:[#allocation5 + $0x1d80] sm:$0xff]
    %v1123 = vld [vmem:[#allocation5 + $0x1d88] sm:$0xff]
    %v1124 = vld [vmem:[#allocation5 + $0x1d90] sm:$0xff]
    %v1125 = vld [vmem:[#allocation5 + $0x1d98] sm:$0xff]
    %v1126 = vld [vmem:[#allocation5 + $0x1da0] sm:$0xff]
    %v1127 = vld [vmem:[#allocation5 + $0x1da8] sm:$0xff]
    %v1128 = vld [vmem:[#allocation5 + $0x1db0] sm:$0xff]
    %v1129 = vld [vmem:[#allocation5 + $0x1db8] sm:$0xff]
    %v1130 = vld [vmem:[#allocation5 + $0x1dc0] sm:$0xff]
    %v1131 = vld [vmem:[#allocation5 + $0x1dc8] sm:$0xff]
    %v1132 = vld [vmem:[#allocation5 + $0x1dd0] sm:$0xff]
    %v1133 = vld [vmem:[#allocation5 + $0x1dd8] sm:$0xff]
    %v1134 = vld [vmem:[#allocation5 + $0x1de0] sm:$0xff]
    %v1135 = vld [vmem:[#allocation5 + $0x1de8] sm:$0xff]
    %v1136 = vld [vmem:[#allocation5 + $0x1df0] sm:$0xff]
    %v1137 = vld [vmem:[#allocation5 + $0x1df8] sm:$0xff]
    %v1138 = vld [vmem:[#allocation5 + $0x1e00] sm:$0xff]
    %v1139 = vld [vmem:[#allocation5 + $0x1e08] sm:$0xff]
    %v1140 = vld [vmem:[#allocation5 + $0x1e10] sm:$0xff]
    %v1141 = vld [vmem:[#allocation5 + $0x1e18] sm:$0xff]
    %v1142 = vld [vmem:[#allocation5 + $0x1e20] sm:$0xff]
    %v1143 = vld [vmem:[#allocation5 + $0x1e28] sm:$0xff]
    %v1144 = vld [vmem:[#allocation5 + $0x1e30] sm:$0xff]
    %v1145 = vld [vmem:[#allocation5 + $0x1e38] sm:$0xff]
    %v1146 = vld [vmem:[#allocation5 + $0x1e40] sm:$0xff]
    %v1147 = vld [vmem:[#allocation5 + $0x1e48] sm:$0xff]
    %v1148 = vld [vmem:[#allocation5 + $0x1e50] sm:$0xff]
    %v1149 = vld [vmem:[#allocation5 + $0x1e58] sm:$0xff]
    %v1150 = vld [vmem:[#allocation5 + $0x1e60] sm:$0xff]
    %v1151 = vld [vmem:[#allocation5 + $0x1e68] sm:$0xff]
    %v1152 = vld [vmem:[#allocation5 + $0x1e70] sm:$0xff]
    %v1153 = vld [vmem:[#allocation5 + $0x1e78] sm:$0xff]
    %v1154 = vld [vmem:[#allocation5 + $0x1e80] sm:$0xff]
    %v1155 = vld [vmem:[#allocation5 + $0x1e88] sm:$0xff]
    %v1156 = vld [vmem:[#allocation5 + $0x1e90] sm:$0xff]
    %v1157 = vld [vmem:[#allocation5 + $0x1e98] sm:$0xff]
    %v1158 = vld [vmem:[#allocation5 + $0x1ea0] sm:$0xff]
    %v1159 = vld [vmem:[#allocation5 + $0x1ea8] sm:$0xff]
    %v1160 = vld [vmem:[#allocation5 + $0x1eb0] sm:$0xff]
    %v1161 = vld [vmem:[#allocation5 + $0x1eb8] sm:$0xff]
    %v1162 = vld [vmem:[#allocation5 + $0x1ec0] sm:$0xff]
    %v1163 = vld [vmem:[#allocation5 + $0x1ec8] sm:$0xff]
    %v1164 = vld [vmem:[#allocation5 + $0x1ed0] sm:$0xff]
    %v1165 = vld [vmem:[#allocation5 + $0x1ed8] sm:$0xff]
    %v1166 = vld [vmem:[#allocation5 + $0x1ee0] sm:$0xff]
    %v1167 = vld [vmem:[#allocation5 + $0x1ee8] sm:$0xff]
    %v1168 = vld [vmem:[#allocation5 + $0x1ef0] sm:$0xff]
    %v1169 = vld [vmem:[#allocation5 + $0x1ef8] sm:$0xff]
    %v1170 = vld [vmem:[#allocation5 + $0x1f00] sm:$0xff]
    %v1171 = vld [vmem:[#allocation5 + $0x1f08] sm:$0xff]
    %v1172 = vld [vmem:[#allocation5 + $0x1f10] sm:$0xff]
    %v1173 = vld [vmem:[#allocation5 + $0x1f18] sm:$0xff]
    %v1174 = vld [vmem:[#allocation5 + $0x1f20] sm:$0xff]
    %v1175 = vld [vmem:[#allocation5 + $0x1f28] sm:$0xff]
    %v1176 = vld [vmem:[#allocation5 + $0x1f30] sm:$0xff]
    %v1177 = vld [vmem:[#allocation5 + $0x1f38] sm:$0xff]
    %v1178 = vld [vmem:[#allocation5 + $0x1f40] sm:$0xff]
    %v1179 = vld [vmem:[#allocation5 + $0x1f48] sm:$0xff]
    %v1180 = vld [vmem:[#allocation5 + $0x1f50] sm:$0xff]
    %v1181 = vld [vmem:[#allocation5 + $0x1f58] sm:$0xff]
    %v1182 = vld [vmem:[#allocation5 + $0x1f60] sm:$0xff]
    %v1183 = vld [vmem:[#allocation5 + $0x1f68] sm:$0xff]
    %v1184 = vld [vmem:[#allocation5 + $0x1f70] sm:$0xff]
    %v1185 = vld [vmem:[#allocation5 + $0x1f78] sm:$0xff]
    %v1186 = vld [vmem:[#allocation5 + $0x1f80] sm:$0xff]
    %v1187 = vld [vmem:[#allocation5 + $0x1f88] sm:$0xff]
    %v1188 = vld [vmem:[#allocation5 + $0x1f90] sm:$0xff]
    %v1189 = vld [vmem:[#allocation5 + $0x1f98] sm:$0xff]
    %v1190 = vld [vmem:[#allocation5 + $0x1fa0] sm:$0xff]
    %v1191 = vld [vmem:[#allocation5 + $0x1fa8] sm:$0xff]
    %v1192 = vld [vmem:[#allocation5 + $0x1fb0] sm:$0xff]
    %v1193 = vld [vmem:[#allocation5 + $0x1fb8] sm:$0xff]
    %v1194 = vld [vmem:[#allocation5 + $0x1fc0] sm:$0xff]
    %v1195 = vld [vmem:[#allocation5 + $0x1fc8] sm:$0xff]
    %v1196 = vld [vmem:[#allocation5 + $0x1fd0] sm:$0xff]
    %v1197 = vld [vmem:[#allocation5 + $0x1fd8] sm:$0xff]
    %v1198 = vld [vmem:[#allocation5 + $0x1fe0] sm:$0xff]
    %v1199 = vld [vmem:[#allocation5 + $0x1fe8] sm:$0xff]
    %v1200 = vld [vmem:[#allocation5 + $0x1ff0] sm:$0xff]
    %v1201 = vld [vmem:[#allocation5 + $0x1ff8] sm:$0xff]
    %v1202 = vld [vmem:[#allocation7] sm:$0xff]
    %v1204 = vlaneseq
    %v1205 = vshrl.u32 %v1204, 7
    %v1206 = vsub.s32 0, %v1205
    %v1207 = vrot.slane %v1202, %v1206
    %v1208 = vlaneseq
    %v1209 = vshrl.u32 %v1208, 7
    %v1210 = vsub.s32 1, %v1209
    %v1211 = vrot.slane %v1202, %v1210
    %v1212 = vlaneseq
    %v1213 = vshrl.u32 %v1212, 7
    %v1214 = vsub.s32 2, %v1213
    %v1215 = vrot.slane %v1202, %v1214
    %v1216 = vlaneseq
    %v1217 = vshrl.u32 %v1216, 7
    %v1218 = vsub.s32 3, %v1217
    %v1219 = vrot.slane %v1202, %v1218
    %v1220 = vlaneseq
    %v1221 = vshrl.u32 %v1220, 7
    %v1222 = vsub.s32 4, %v1221
    %v1223 = vrot.slane %v1202, %v1222
    %v1224 = vlaneseq
    %v1225 = vshrl.u32 %v1224, 7
    %v1226 = vsub.s32 5, %v1225
    %v1227 = vrot.slane %v1202, %v1226
    %v1228 = vlaneseq
    %v1229 = vshrl.u32 %v1228, 7
    %v1230 = vsub.s32 6, %v1229
    %v1231 = vrot.slane %v1202, %v1230
    %v1232 = vlaneseq
    %v1233 = vshrl.u32 %v1232, 7
    %v1234 = vsub.s32 7, %v1233
    %v1235 = vrot.slane %v1202, %v1234
    %v2268 = vunpack.c.l.b16 %v178
    %v2269 = vunpack.c.h.b16 %v178
    %v2270 = vunpack.c.l.b16 %v179
    %v2271 = vunpack.c.h.b16 %v179
    %v2272 = vunpack.c.l.b16 %v180
    %v2273 = vunpack.c.h.b16 %v180
    %v2274 = vunpack.c.l.b16 %v181
    %v2275 = vunpack.c.h.b16 %v181
    %v2276 = vunpack.c.l.b16 %v182
    %v2277 = vunpack.c.h.b16 %v182
    %v2278 = vunpack.c.l.b16 %v183
    %v2279 = vunpack.c.h.b16 %v183
    %v2280 = vunpack.c.l.b16 %v184
    %v2281 = vunpack.c.h.b16 %v184
    %v2282 = vunpack.c.l.b16 %v185
    %v2283 = vunpack.c.h.b16 %v185
    %v2284 = vunpack.c.l.b16 %v186
    %v2285 = vunpack.c.h.b16 %v186
    %v2286 = vunpack.c.l.b16 %v187
    %v2287 = vunpack.c.h.b16 %v187
    %v2288 = vunpack.c.l.b16 %v188
    %v2289 = vunpack.c.h.b16 %v188
    %v2290 = vunpack.c.l.b16 %v189
    %v2291 = vunpack.c.h.b16 %v189
    %v2292 = vunpack.c.l.b16 %v190
    %v2293 = vunpack.c.h.b16 %v190
    %v2294 = vunpack.c.l.b16 %v191
    %v2295 = vunpack.c.h.b16 %v191
    %v2296 = vunpack.c.l.b16 %v192
    %v2297 = vunpack.c.h.b16 %v192
    %v2298 = vunpack.c.l.b16 %v193
    %v2299 = vunpack.c.h.b16 %v193
    %v2300 = vunpack.c.l.b16 %v194
    %v2301 = vunpack.c.h.b16 %v194
    %v2302 = vunpack.c.l.b16 %v195
    %v2303 = vunpack.c.h.b16 %v195
    %v2304 = vunpack.c.l.b16 %v196
    %v2305 = vunpack.c.h.b16 %v196
    %v2306 = vunpack.c.l.b16 %v197
    %v2307 = vunpack.c.h.b16 %v197
    %v2308 = vunpack.c.l.b16 %v198
    %v2309 = vunpack.c.h.b16 %v198
    %v2310 = vunpack.c.l.b16 %v199
    %v2311 = vunpack.c.h.b16 %v199
    %v2312 = vunpack.c.l.b16 %v200
    %v2313 = vunpack.c.h.b16 %v200
    %v2314 = vunpack.c.l.b16 %v201
    %v2315 = vunpack.c.h.b16 %v201
    %v2316 = vunpack.c.l.b16 %v202
    %v2317 = vunpack.c.h.b16 %v202
    %v2318 = vunpack.c.l.b16 %v203
    %v2319 = vunpack.c.h.b16 %v203
    %v2320 = vunpack.c.l.b16 %v204
    %v2321 = vunpack.c.h.b16 %v204
    %v2322 = vunpack.c.l.b16 %v205
    %v2323 = vunpack.c.h.b16 %v205
    %v2324 = vunpack.c.l.b16 %v206
    %v2325 = vunpack.c.h.b16 %v206
    %v2326 = vunpack.c.l.b16 %v207
    %v2327 = vunpack.c.h.b16 %v207
    %v2328 = vunpack.c.l.b16 %v208
    %v2329 = vunpack.c.h.b16 %v208
    %v2330 = vunpack.c.l.b16 %v209
    %v2331 = vunpack.c.h.b16 %v209
    %v2332 = vunpack.c.l.b16 %v210
    %v2333 = vunpack.c.h.b16 %v210
    %v2334 = vunpack.c.l.b16 %v211
    %v2335 = vunpack.c.h.b16 %v211
    %v2336 = vunpack.c.l.b16 %v212
    %v2337 = vunpack.c.h.b16 %v212
    %v2338 = vunpack.c.l.b16 %v213
    %v2339 = vunpack.c.h.b16 %v213
    %v2340 = vunpack.c.l.b16 %v214
    %v2341 = vunpack.c.h.b16 %v214
    %v2342 = vunpack.c.l.b16 %v215
    %v2343 = vunpack.c.h.b16 %v215
    %v2344 = vunpack.c.l.b16 %v216
    %v2345 = vunpack.c.h.b16 %v216
    %v2346 = vunpack.c.l.b16 %v217
    %v2347 = vunpack.c.h.b16 %v217
    %v2348 = vunpack.c.l.b16 %v218
    %v2349 = vunpack.c.h.b16 %v218
    %v2350 = vunpack.c.l.b16 %v219
    %v2351 = vunpack.c.h.b16 %v219
    %v2352 = vunpack.c.l.b16 %v220
    %v2353 = vunpack.c.h.b16 %v220
    %v2354 = vunpack.c.l.b16 %v221
    %v2355 = vunpack.c.h.b16 %v221
    %v2356 = vunpack.c.l.b16 %v222
    %v2357 = vunpack.c.h.b16 %v222
    %v2358 = vunpack.c.l.b16 %v223
    %v2359 = vunpack.c.h.b16 %v223
    %v2360 = vunpack.c.l.b16 %v224
    %v2361 = vunpack.c.h.b16 %v224
    %v2362 = vunpack.c.l.b16 %v225
    %v2363 = vunpack.c.h.b16 %v225
    %v2364 = vunpack.c.l.b16 %v226
    %v2365 = vunpack.c.h.b16 %v226
    %v2366 = vunpack.c.l.b16 %v227
    %v2367 = vunpack.c.h.b16 %v227
    %v2368 = vunpack.c.l.b16 %v228
    %v2369 = vunpack.c.h.b16 %v228
    %v2370 = vunpack.c.l.b16 %v229
    %v2371 = vunpack.c.h.b16 %v229
    %v2372 = vunpack.c.l.b16 %v230
    %v2373 = vunpack.c.h.b16 %v230
    %v2374 = vunpack.c.l.b16 %v231
    %v2375 = vunpack.c.h.b16 %v231
    %v2376 = vunpack.c.l.b16 %v232
    %v2377 = vunpack.c.h.b16 %v232
    %v2378 = vunpack.c.l.b16 %v233
    %v2379 = vunpack.c.h.b16 %v233
    %v2380 = vunpack.c.l.b16 %v234
    %v2381 = vunpack.c.h.b16 %v234
    %v2382 = vunpack.c.l.b16 %v235
    %v2383 = vunpack.c.h.b16 %v235
    %v2384 = vunpack.c.l.b16 %v236
    %v2385 = vunpack.c.h.b16 %v236
    %v2386 = vunpack.c.l.b16 %v237
    %v2387 = vunpack.c.h.b16 %v237
    %v2388 = vunpack.c.l.b16 %v238
    %v2389 = vunpack.c.h.b16 %v238
    %v2390 = vunpack.c.l.b16 %v239
    %v2391 = vunpack.c.h.b16 %v239
    %v2392 = vunpack.c.l.b16 %v240
    %v2393 = vunpack.c.h.b16 %v240
    %v2394 = vunpack.c.l.b16 %v241
    %v2395 = vunpack.c.h.b16 %v241
    %v2396 = vunpack.c.l.b16 %v242
    %v2397 = vunpack.c.h.b16 %v242
    %v2398 = vunpack.c.l.b16 %v243
    %v2399 = vunpack.c.h.b16 %v243
    %v2400 = vunpack.c.l.b16 %v244
    %v2401 = vunpack.c.h.b16 %v244
    %v2402 = vunpack.c.l.b16 %v245
    %v2403 = vunpack.c.h.b16 %v245
    %v2404 = vunpack.c.l.b16 %v246
    %v2405 = vunpack.c.h.b16 %v246
    %v2406 = vunpack.c.l.b16 %v247
    %v2407 = vunpack.c.h.b16 %v247
    %v2408 = vunpack.c.l.b16 %v248
    %v2409 = vunpack.c.h.b16 %v248
    %v2410 = vunpack.c.l.b16 %v249
    %v2411 = vunpack.c.h.b16 %v249
    %v2412 = vunpack.c.l.b16 %v250
    %v2413 = vunpack.c.h.b16 %v250
    %v2414 = vunpack.c.l.b16 %v251
    %v2415 = vunpack.c.h.b16 %v251
    %v2416 = vunpack.c.l.b16 %v252
    %v2417 = vunpack.c.h.b16 %v252
    %v2418 = vunpack.c.l.b16 %v253
    %v2419 = vunpack.c.h.b16 %v253
    %v2420 = vunpack.c.l.b16 %v254
    %v2421 = vunpack.c.h.b16 %v254
    %v2422 = vunpack.c.l.b16 %v255
    %v2423 = vunpack.c.h.b16 %v255
    %v2424 = vunpack.c.l.b16 %v256
    %v2425 = vunpack.c.h.b16 %v256
    %v2426 = vunpack.c.l.b16 %v257
    %v2427 = vunpack.c.h.b16 %v257
    %v2428 = vunpack.c.l.b16 %v258
    %v2429 = vunpack.c.h.b16 %v258
    %v2430 = vunpack.c.l.b16 %v259
    %v2431 = vunpack.c.h.b16 %v259
    %v2432 = vunpack.c.l.b16 %v260
    %v2433 = vunpack.c.h.b16 %v260
    %v2434 = vunpack.c.l.b16 %v261
    %v2435 = vunpack.c.h.b16 %v261
    %v2436 = vunpack.c.l.b16 %v262
    %v2437 = vunpack.c.h.b16 %v262
    %v2438 = vunpack.c.l.b16 %v263
    %v2439 = vunpack.c.h.b16 %v263
    %v2440 = vunpack.c.l.b16 %v264
    %v2441 = vunpack.c.h.b16 %v264
    %v2442 = vunpack.c.l.b16 %v265
    %v2443 = vunpack.c.h.b16 %v265
    %v2444 = vunpack.c.l.b16 %v266
    %v2445 = vunpack.c.h.b16 %v266
    %v2446 = vunpack.c.l.b16 %v267
    %v2447 = vunpack.c.h.b16 %v267
    %v2448 = vunpack.c.l.b16 %v268
    %v2449 = vunpack.c.h.b16 %v268
    %v2450 = vunpack.c.l.b16 %v269
    %v2451 = vunpack.c.h.b16 %v269
    %v2452 = vunpack.c.l.b16 %v270
    %v2453 = vunpack.c.h.b16 %v270
    %v2454 = vunpack.c.l.b16 %v271
    %v2455 = vunpack.c.h.b16 %v271
    %v2456 = vunpack.c.l.b16 %v272
    %v2457 = vunpack.c.h.b16 %v272
    %v2458 = vunpack.c.l.b16 %v273
    %v2459 = vunpack.c.h.b16 %v273
    %v2460 = vunpack.c.l.b16 %v274
    %v2461 = vunpack.c.h.b16 %v274
    %v2462 = vunpack.c.l.b16 %v275
    %v2463 = vunpack.c.h.b16 %v275
    %v2464 = vunpack.c.l.b16 %v276
    %v2465 = vunpack.c.h.b16 %v276
    %v2466 = vunpack.c.l.b16 %v277
    %v2467 = vunpack.c.h.b16 %v277
    %v2468 = vunpack.c.l.b16 %v278
    %v2469 = vunpack.c.h.b16 %v278
    %v2470 = vunpack.c.l.b16 %v279
    %v2471 = vunpack.c.h.b16 %v279
    %v2472 = vunpack.c.l.b16 %v280
    %v2473 = vunpack.c.h.b16 %v280
    %v2474 = vunpack.c.l.b16 %v281
    %v2475 = vunpack.c.h.b16 %v281
    %v2476 = vunpack.c.l.b16 %v282
    %v2477 = vunpack.c.h.b16 %v282
    %v2478 = vunpack.c.l.b16 %v283
    %v2479 = vunpack.c.h.b16 %v283
    %v2480 = vunpack.c.l.b16 %v284
    %v2481 = vunpack.c.h.b16 %v284
    %v2482 = vunpack.c.l.b16 %v285
    %v2483 = vunpack.c.h.b16 %v285
    %v2484 = vunpack.c.l.b16 %v286
    %v2485 = vunpack.c.h.b16 %v286
    %v2486 = vunpack.c.l.b16 %v287
    %v2487 = vunpack.c.h.b16 %v287
    %v2488 = vunpack.c.l.b16 %v288
    %v2489 = vunpack.c.h.b16 %v288
    %v2490 = vunpack.c.l.b16 %v289
    %v2491 = vunpack.c.h.b16 %v289
    %v2492 = vunpack.c.l.b16 %v290
    %v2493 = vunpack.c.h.b16 %v290
    %v2494 = vunpack.c.l.b16 %v291
    %v2495 = vunpack.c.h.b16 %v291
    %v2496 = vunpack.c.l.b16 %v292
    %v2497 = vunpack.c.h.b16 %v292
    %v2498 = vunpack.c.l.b16 %v293
    %v2499 = vunpack.c.h.b16 %v293
    %v2500 = vunpack.c.l.b16 %v294
    %v2501 = vunpack.c.h.b16 %v294
    %v2502 = vunpack.c.l.b16 %v295
    %v2503 = vunpack.c.h.b16 %v295
    %v2504 = vunpack.c.l.b16 %v296
    %v2505 = vunpack.c.h.b16 %v296
    %v2506 = vunpack.c.l.b16 %v297
    %v2507 = vunpack.c.h.b16 %v297
    %v2508 = vunpack.c.l.b16 %v298
    %v2509 = vunpack.c.h.b16 %v298
    %v2510 = vunpack.c.l.b16 %v299
    %v2511 = vunpack.c.h.b16 %v299
    %v2512 = vunpack.c.l.b16 %v300
    %v2513 = vunpack.c.h.b16 %v300
    %v2514 = vunpack.c.l.b16 %v301
    %v2515 = vunpack.c.h.b16 %v301
    %v2516 = vunpack.c.l.b16 %v302
    %v2517 = vunpack.c.h.b16 %v302
    %v2518 = vunpack.c.l.b16 %v303
    %v2519 = vunpack.c.h.b16 %v303
    %v2520 = vunpack.c.l.b16 %v304
    %v2521 = vunpack.c.h.b16 %v304
    %v2522 = vunpack.c.l.b16 %v305
    %v2523 = vunpack.c.h.b16 %v305
    %v2524 = vunpack.c.l.b16 %v306
    %v2525 = vunpack.c.h.b16 %v306
    %v2526 = vunpack.c.l.b16 %v307
    %v2527 = vunpack.c.h.b16 %v307
    %v2528 = vunpack.c.l.b16 %v308
    %v2529 = vunpack.c.h.b16 %v308
    %v2530 = vunpack.c.l.b16 %v309
    %v2531 = vunpack.c.h.b16 %v309
    %v2532 = vunpack.c.l.b16 %v310
    %v2533 = vunpack.c.h.b16 %v310
    %v2534 = vunpack.c.l.b16 %v311
    %v2535 = vunpack.c.h.b16 %v311
    %v2536 = vunpack.c.l.b16 %v312
    %v2537 = vunpack.c.h.b16 %v312
    %v2538 = vunpack.c.l.b16 %v313
    %v2539 = vunpack.c.h.b16 %v313
    %v2540 = vunpack.c.l.b16 %v314
    %v2541 = vunpack.c.h.b16 %v314
    %v2542 = vunpack.c.l.b16 %v315
    %v2543 = vunpack.c.h.b16 %v315
    %v2544 = vunpack.c.l.b16 %v316
    %v2545 = vunpack.c.h.b16 %v316
    %v2546 = vunpack.c.l.b16 %v317
    %v2547 = vunpack.c.h.b16 %v317
    %v2548 = vunpack.c.l.b16 %v318
    %v2549 = vunpack.c.h.b16 %v318
    %v2550 = vunpack.c.l.b16 %v319
    %v2551 = vunpack.c.h.b16 %v319
    %v2552 = vunpack.c.l.b16 %v320
    %v2553 = vunpack.c.h.b16 %v320
    %v2554 = vunpack.c.l.b16 %v321
    %v2555 = vunpack.c.h.b16 %v321
    %v2556 = vunpack.c.l.b16 %v322
    %v2557 = vunpack.c.h.b16 %v322
    %v2558 = vunpack.c.l.b16 %v323
    %v2559 = vunpack.c.h.b16 %v323
    %v2560 = vunpack.c.l.b16 %v324
    %v2561 = vunpack.c.h.b16 %v324
    %v2562 = vunpack.c.l.b16 %v325
    %v2563 = vunpack.c.h.b16 %v325
    %v2564 = vunpack.c.l.b16 %v326
    %v2565 = vunpack.c.h.b16 %v326
    %v2566 = vunpack.c.l.b16 %v327
    %v2567 = vunpack.c.h.b16 %v327
    %v2568 = vunpack.c.l.b16 %v328
    %v2569 = vunpack.c.h.b16 %v328
    %v2570 = vunpack.c.l.b16 %v329
    %v2571 = vunpack.c.h.b16 %v329
    %v2572 = vunpack.c.l.b16 %v330
    %v2573 = vunpack.c.h.b16 %v330
    %v2574 = vunpack.c.l.b16 %v331
    %v2575 = vunpack.c.h.b16 %v331
    %v2576 = vunpack.c.l.b16 %v332
    %v2577 = vunpack.c.h.b16 %v332
    %v2578 = vunpack.c.l.b16 %v333
    %v2579 = vunpack.c.h.b16 %v333
    %v2580 = vunpack.c.l.b16 %v334
    %v2581 = vunpack.c.h.b16 %v334
    %v2582 = vunpack.c.l.b16 %v335
    %v2583 = vunpack.c.h.b16 %v335
    %v2584 = vunpack.c.l.b16 %v336
    %v2585 = vunpack.c.h.b16 %v336
    %v2586 = vunpack.c.l.b16 %v337
    %v2587 = vunpack.c.h.b16 %v337
    %v2588 = vunpack.c.l.b16 %v338
    %v2589 = vunpack.c.h.b16 %v338
    %v2590 = vunpack.c.l.b16 %v339
    %v2591 = vunpack.c.h.b16 %v339
    %v2592 = vunpack.c.l.b16 %v340
    %v2593 = vunpack.c.h.b16 %v340
    %v2594 = vunpack.c.l.b16 %v341
    %v2595 = vunpack.c.h.b16 %v341
    %v2596 = vunpack.c.l.b16 %v342
    %v2597 = vunpack.c.h.b16 %v342
    %v2598 = vunpack.c.l.b16 %v343
    %v2599 = vunpack.c.h.b16 %v343
    %v2600 = vunpack.c.l.b16 %v344
    %v2601 = vunpack.c.h.b16 %v344
    %v2602 = vunpack.c.l.b16 %v345
    %v2603 = vunpack.c.h.b16 %v345
    %v2604 = vunpack.c.l.b16 %v346
    %v2605 = vunpack.c.h.b16 %v346
    %v2606 = vunpack.c.l.b16 %v347
    %v2607 = vunpack.c.h.b16 %v347
    %v2608 = vunpack.c.l.b16 %v348
    %v2609 = vunpack.c.h.b16 %v348
    %v2610 = vunpack.c.l.b16 %v349
    %v2611 = vunpack.c.h.b16 %v349
    %v2612 = vunpack.c.l.b16 %v350
    %v2613 = vunpack.c.h.b16 %v350
    %v2614 = vunpack.c.l.b16 %v351
    %v2615 = vunpack.c.h.b16 %v351
    %v2616 = vunpack.c.l.b16 %v352
    %v2617 = vunpack.c.h.b16 %v352
    %v2618 = vunpack.c.l.b16 %v353
    %v2619 = vunpack.c.h.b16 %v353
    %v2620 = vunpack.c.l.b16 %v354
    %v2621 = vunpack.c.h.b16 %v354
    %v2622 = vunpack.c.l.b16 %v355
    %v2623 = vunpack.c.h.b16 %v355
    %v2624 = vunpack.c.l.b16 %v356
    %v2625 = vunpack.c.h.b16 %v356
    %v2626 = vunpack.c.l.b16 %v357
    %v2627 = vunpack.c.h.b16 %v357
    %v2628 = vunpack.c.l.b16 %v358
    %v2629 = vunpack.c.h.b16 %v358
    %v2630 = vunpack.c.l.b16 %v359
    %v2631 = vunpack.c.h.b16 %v359
    %v2632 = vunpack.c.l.b16 %v360
    %v2633 = vunpack.c.h.b16 %v360
    %v2634 = vunpack.c.l.b16 %v361
    %v2635 = vunpack.c.h.b16 %v361
    %v2636 = vunpack.c.l.b16 %v362
    %v2637 = vunpack.c.h.b16 %v362
    %v2638 = vunpack.c.l.b16 %v363
    %v2639 = vunpack.c.h.b16 %v363
    %v2640 = vunpack.c.l.b16 %v364
    %v2641 = vunpack.c.h.b16 %v364
    %v2642 = vunpack.c.l.b16 %v365
    %v2643 = vunpack.c.h.b16 %v365
    %v2644 = vunpack.c.l.b16 %v366
    %v2645 = vunpack.c.h.b16 %v366
    %v2646 = vunpack.c.l.b16 %v367
    %v2647 = vunpack.c.h.b16 %v367
    %v2648 = vunpack.c.l.b16 %v368
    %v2649 = vunpack.c.h.b16 %v368
    %v2650 = vunpack.c.l.b16 %v369
    %v2651 = vunpack.c.h.b16 %v369
    %v2652 = vunpack.c.l.b16 %v370
    %v2653 = vunpack.c.h.b16 %v370
    %v2654 = vunpack.c.l.b16 %v371
    %v2655 = vunpack.c.h.b16 %v371
    %v2656 = vunpack.c.l.b16 %v372
    %v2657 = vunpack.c.h.b16 %v372
    %v2658 = vunpack.c.l.b16 %v373
    %v2659 = vunpack.c.h.b16 %v373
    %v2660 = vunpack.c.l.b16 %v374
    %v2661 = vunpack.c.h.b16 %v374
    %v2662 = vunpack.c.l.b16 %v375
    %v2663 = vunpack.c.h.b16 %v375
    %v2664 = vunpack.c.l.b16 %v376
    %v2665 = vunpack.c.h.b16 %v376
    %v2666 = vunpack.c.l.b16 %v377
    %v2667 = vunpack.c.h.b16 %v377
    %v2668 = vunpack.c.l.b16 %v378
    %v2669 = vunpack.c.h.b16 %v378
    %v2670 = vunpack.c.l.b16 %v379
    %v2671 = vunpack.c.h.b16 %v379
    %v2672 = vunpack.c.l.b16 %v380
    %v2673 = vunpack.c.h.b16 %v380
    %v2674 = vunpack.c.l.b16 %v381
    %v2675 = vunpack.c.h.b16 %v381
    %v2676 = vunpack.c.l.b16 %v382
    %v2677 = vunpack.c.h.b16 %v382
    %v2678 = vunpack.c.l.b16 %v383
    %v2679 = vunpack.c.h.b16 %v383
    %v2680 = vunpack.c.l.b16 %v384
    %v2681 = vunpack.c.h.b16 %v384
    %v2682 = vunpack.c.l.b16 %v385
    %v2683 = vunpack.c.h.b16 %v385
    %v2684 = vunpack.c.l.b16 %v386
    %v2685 = vunpack.c.h.b16 %v386
    %v2686 = vunpack.c.l.b16 %v387
    %v2687 = vunpack.c.h.b16 %v387
    %v2688 = vunpack.c.l.b16 %v388
    %v2689 = vunpack.c.h.b16 %v388
    %v2690 = vunpack.c.l.b16 %v389
    %v2691 = vunpack.c.h.b16 %v389
    %v2692 = vunpack.c.l.b16 %v390
    %v2693 = vunpack.c.h.b16 %v390
    %v2694 = vunpack.c.l.b16 %v391
    %v2695 = vunpack.c.h.b16 %v391
    %v2696 = vunpack.c.l.b16 %v392
    %v2697 = vunpack.c.h.b16 %v392
    %v2698 = vunpack.c.l.b16 %v393
    %v2699 = vunpack.c.h.b16 %v393
    %v2700 = vunpack.c.l.b16 %v394
    %v2701 = vunpack.c.h.b16 %v394
    %v2702 = vunpack.c.l.b16 %v395
    %v2703 = vunpack.c.h.b16 %v395
    %v2704 = vunpack.c.l.b16 %v396
    %v2705 = vunpack.c.h.b16 %v396
    %v2706 = vunpack.c.l.b16 %v397
    %v2707 = vunpack.c.h.b16 %v397
    %v2708 = vunpack.c.l.b16 %v398
    %v2709 = vunpack.c.h.b16 %v398
    %v2710 = vunpack.c.l.b16 %v399
    %v2711 = vunpack.c.h.b16 %v399
    %v2712 = vunpack.c.l.b16 %v400
    %v2713 = vunpack.c.h.b16 %v400
    %v2714 = vunpack.c.l.b16 %v401
    %v2715 = vunpack.c.h.b16 %v401
    %v2716 = vunpack.c.l.b16 %v402
    %v2717 = vunpack.c.h.b16 %v402
    %v2718 = vunpack.c.l.b16 %v403
    %v2719 = vunpack.c.h.b16 %v403
    %v2720 = vunpack.c.l.b16 %v404
    %v2721 = vunpack.c.h.b16 %v404
    %v2722 = vunpack.c.l.b16 %v405
    %v2723 = vunpack.c.h.b16 %v405
    %v2724 = vunpack.c.l.b16 %v406
    %v2725 = vunpack.c.h.b16 %v406
    %v2726 = vunpack.c.l.b16 %v407
    %v2727 = vunpack.c.h.b16 %v407
    %v2728 = vunpack.c.l.b16 %v408
    %v2729 = vunpack.c.h.b16 %v408
    %v2730 = vunpack.c.l.b16 %v409
    %v2731 = vunpack.c.h.b16 %v409
    %v2732 = vunpack.c.l.b16 %v410
    %v2733 = vunpack.c.h.b16 %v410
    %v2734 = vunpack.c.l.b16 %v411
    %v2735 = vunpack.c.h.b16 %v411
    %v2736 = vunpack.c.l.b16 %v412
    %v2737 = vunpack.c.h.b16 %v412
    %v2738 = vunpack.c.l.b16 %v413
    %v2739 = vunpack.c.h.b16 %v413
    %v2740 = vunpack.c.l.b16 %v414
    %v2741 = vunpack.c.h.b16 %v414
    %v2742 = vunpack.c.l.b16 %v415
    %v2743 = vunpack.c.h.b16 %v415
    %v2744 = vunpack.c.l.b16 %v416
    %v2745 = vunpack.c.h.b16 %v416
    %v2746 = vunpack.c.l.b16 %v417
    %v2747 = vunpack.c.h.b16 %v417
    %v2748 = vunpack.c.l.b16 %v418
    %v2749 = vunpack.c.h.b16 %v418
    %v2750 = vunpack.c.l.b16 %v419
    %v2751 = vunpack.c.h.b16 %v419
    %v2752 = vunpack.c.l.b16 %v420
    %v2753 = vunpack.c.h.b16 %v420
    %v2754 = vunpack.c.l.b16 %v421
    %v2755 = vunpack.c.h.b16 %v421
    %v2756 = vunpack.c.l.b16 %v422
    %v2757 = vunpack.c.h.b16 %v422
    %v2758 = vunpack.c.l.b16 %v423
    %v2759 = vunpack.c.h.b16 %v423
    %v2760 = vunpack.c.l.b16 %v424
    %v2761 = vunpack.c.h.b16 %v424
    %v2762 = vunpack.c.l.b16 %v425
    %v2763 = vunpack.c.h.b16 %v425
    %v2764 = vunpack.c.l.b16 %v426
    %v2765 = vunpack.c.h.b16 %v426
    %v2766 = vunpack.c.l.b16 %v427
    %v2767 = vunpack.c.h.b16 %v427
    %v2768 = vunpack.c.l.b16 %v428
    %v2769 = vunpack.c.h.b16 %v428
    %v2770 = vunpack.c.l.b16 %v429
    %v2771 = vunpack.c.h.b16 %v429
    %v2772 = vunpack.c.l.b16 %v430
    %v2773 = vunpack.c.h.b16 %v430
    %v2774 = vunpack.c.l.b16 %v431
    %v2775 = vunpack.c.h.b16 %v431
    %v2776 = vunpack.c.l.b16 %v432
    %v2777 = vunpack.c.h.b16 %v432
    %v2778 = vunpack.c.l.b16 %v433
    %v2779 = vunpack.c.h.b16 %v433
    %v2780 = vunpack.c.l.b16 %v434
    %v2781 = vunpack.c.h.b16 %v434
    %v2782 = vunpack.c.l.b16 %v435
    %v2783 = vunpack.c.h.b16 %v435
    %v2784 = vunpack.c.l.b16 %v436
    %v2785 = vunpack.c.h.b16 %v436
    %v2786 = vunpack.c.l.b16 %v437
    %v2787 = vunpack.c.h.b16 %v437
    %v2788 = vunpack.c.l.b16 %v438
    %v2789 = vunpack.c.h.b16 %v438
    %v2790 = vunpack.c.l.b16 %v439
    %v2791 = vunpack.c.h.b16 %v439
    %v2792 = vunpack.c.l.b16 %v440
    %v2793 = vunpack.c.h.b16 %v440
    %v2794 = vunpack.c.l.b16 %v441
    %v2795 = vunpack.c.h.b16 %v441
    %v2796 = vunpack.c.l.b16 %v442
    %v2797 = vunpack.c.h.b16 %v442
    %v2798 = vunpack.c.l.b16 %v443
    %v2799 = vunpack.c.h.b16 %v443
    %v2800 = vunpack.c.l.b16 %v444
    %v2801 = vunpack.c.h.b16 %v444
    %v2802 = vunpack.c.l.b16 %v445
    %v2803 = vunpack.c.h.b16 %v445
    %v2804 = vunpack.c.l.b16 %v446
    %v2805 = vunpack.c.h.b16 %v446
    %v2806 = vunpack.c.l.b16 %v447
    %v2807 = vunpack.c.h.b16 %v447
    %v2808 = vunpack.c.l.b16 %v448
    %v2809 = vunpack.c.h.b16 %v448
    %v2810 = vunpack.c.l.b16 %v449
    %v2811 = vunpack.c.h.b16 %v449
    %v2812 = vunpack.c.l.b16 %v450
    %v2813 = vunpack.c.h.b16 %v450
    %v2814 = vunpack.c.l.b16 %v451
    %v2815 = vunpack.c.h.b16 %v451
    %v2816 = vunpack.c.l.b16 %v452
    %v2817 = vunpack.c.h.b16 %v452
    %v2818 = vunpack.c.l.b16 %v453
    %v2819 = vunpack.c.h.b16 %v453
    %v2820 = vunpack.c.l.b16 %v454
    %v2821 = vunpack.c.h.b16 %v454
    %v2822 = vunpack.c.l.b16 %v455
    %v2823 = vunpack.c.h.b16 %v455
    %v2824 = vunpack.c.l.b16 %v456
    %v2825 = vunpack.c.h.b16 %v456
    %v2826 = vunpack.c.l.b16 %v457
    %v2827 = vunpack.c.h.b16 %v457
    %v2828 = vunpack.c.l.b16 %v458
    %v2829 = vunpack.c.h.b16 %v458
    %v2830 = vunpack.c.l.b16 %v459
    %v2831 = vunpack.c.h.b16 %v459
    %v2832 = vunpack.c.l.b16 %v460
    %v2833 = vunpack.c.h.b16 %v460
    %v2834 = vunpack.c.l.b16 %v461
    %v2835 = vunpack.c.h.b16 %v461
    %v2836 = vunpack.c.l.b16 %v462
    %v2837 = vunpack.c.h.b16 %v462
    %v2838 = vunpack.c.l.b16 %v463
    %v2839 = vunpack.c.h.b16 %v463
    %v2840 = vunpack.c.l.b16 %v464
    %v2841 = vunpack.c.h.b16 %v464
    %v2842 = vunpack.c.l.b16 %v465
    %v2843 = vunpack.c.h.b16 %v465
    %v2844 = vunpack.c.l.b16 %v466
    %v2845 = vunpack.c.h.b16 %v466
    %v2846 = vunpack.c.l.b16 %v467
    %v2847 = vunpack.c.h.b16 %v467
    %v2848 = vunpack.c.l.b16 %v468
    %v2849 = vunpack.c.h.b16 %v468
    %v2850 = vunpack.c.l.b16 %v469
    %v2851 = vunpack.c.h.b16 %v469
    %v2852 = vunpack.c.l.b16 %v470
    %v2853 = vunpack.c.h.b16 %v470
    %v2854 = vunpack.c.l.b16 %v471
    %v2855 = vunpack.c.h.b16 %v471
    %v2856 = vunpack.c.l.b16 %v472
    %v2857 = vunpack.c.h.b16 %v472
    %v2858 = vunpack.c.l.b16 %v473
    %v2859 = vunpack.c.h.b16 %v473
    %v2860 = vunpack.c.l.b16 %v474
    %v2861 = vunpack.c.h.b16 %v474
    %v2862 = vunpack.c.l.b16 %v475
    %v2863 = vunpack.c.h.b16 %v475
    %v2864 = vunpack.c.l.b16 %v476
    %v2865 = vunpack.c.h.b16 %v476
    %v2866 = vunpack.c.l.b16 %v477
    %v2867 = vunpack.c.h.b16 %v477
    %v2868 = vunpack.c.l.b16 %v478
    %v2869 = vunpack.c.h.b16 %v478
    %v2870 = vunpack.c.l.b16 %v479
    %v2871 = vunpack.c.h.b16 %v479
    %v2872 = vunpack.c.l.b16 %v480
    %v2873 = vunpack.c.h.b16 %v480
    %v2874 = vunpack.c.l.b16 %v481
    %v2875 = vunpack.c.h.b16 %v481
    %v2876 = vunpack.c.l.b16 %v482
    %v2877 = vunpack.c.h.b16 %v482
    %v2878 = vunpack.c.l.b16 %v483
    %v2879 = vunpack.c.h.b16 %v483
    %v2880 = vunpack.c.l.b16 %v484
    %v2881 = vunpack.c.h.b16 %v484
    %v2882 = vunpack.c.l.b16 %v485
    %v2883 = vunpack.c.h.b16 %v485
    %v2884 = vunpack.c.l.b16 %v486
    %v2885 = vunpack.c.h.b16 %v486
    %v2886 = vunpack.c.l.b16 %v487
    %v2887 = vunpack.c.h.b16 %v487
    %v2888 = vunpack.c.l.b16 %v488
    %v2889 = vunpack.c.h.b16 %v488
    %v2890 = vunpack.c.l.b16 %v489
    %v2891 = vunpack.c.h.b16 %v489
    %v2892 = vunpack.c.l.b16 %v490
    %v2893 = vunpack.c.h.b16 %v490
    %v2894 = vunpack.c.l.b16 %v491
    %v2895 = vunpack.c.h.b16 %v491
    %v2896 = vunpack.c.l.b16 %v492
    %v2897 = vunpack.c.h.b16 %v492
    %v2898 = vunpack.c.l.b16 %v493
    %v2899 = vunpack.c.h.b16 %v493
    %v2900 = vunpack.c.l.b16 %v494
    %v2901 = vunpack.c.h.b16 %v494
    %v2902 = vunpack.c.l.b16 %v495
    %v2903 = vunpack.c.h.b16 %v495
    %v2904 = vunpack.c.l.b16 %v496
    %v2905 = vunpack.c.h.b16 %v496
    %v2906 = vunpack.c.l.b16 %v497
    %v2907 = vunpack.c.h.b16 %v497
    %v2908 = vunpack.c.l.b16 %v498
    %v2909 = vunpack.c.h.b16 %v498
    %v2910 = vunpack.c.l.b16 %v499
    %v2911 = vunpack.c.h.b16 %v499
    %v2912 = vunpack.c.l.b16 %v500
    %v2913 = vunpack.c.h.b16 %v500
    %v2914 = vunpack.c.l.b16 %v501
    %v2915 = vunpack.c.h.b16 %v501
    %v2916 = vunpack.c.l.b16 %v502
    %v2917 = vunpack.c.h.b16 %v502
    %v2918 = vunpack.c.l.b16 %v503
    %v2919 = vunpack.c.h.b16 %v503
    %v2920 = vunpack.c.l.b16 %v504
    %v2921 = vunpack.c.h.b16 %v504
    %v2922 = vunpack.c.l.b16 %v505
    %v2923 = vunpack.c.h.b16 %v505
    %v2924 = vunpack.c.l.b16 %v506
    %v2925 = vunpack.c.h.b16 %v506
    %v2926 = vunpack.c.l.b16 %v507
    %v2927 = vunpack.c.h.b16 %v507
    %v2928 = vunpack.c.l.b16 %v508
    %v2929 = vunpack.c.h.b16 %v508
    %v2930 = vunpack.c.l.b16 %v509
    %v2931 = vunpack.c.h.b16 %v509
    %v2932 = vunpack.c.l.b16 %v510
    %v2933 = vunpack.c.h.b16 %v510
    %v2934 = vunpack.c.l.b16 %v511
    %v2935 = vunpack.c.h.b16 %v511
    %v2936 = vunpack.c.l.b16 %v512
    %v2937 = vunpack.c.h.b16 %v512
    %v2938 = vunpack.c.l.b16 %v513
    %v2939 = vunpack.c.h.b16 %v513
    %v2940 = vunpack.c.l.b16 %v514
    %v2941 = vunpack.c.h.b16 %v514
    %v2942 = vunpack.c.l.b16 %v515
    %v2943 = vunpack.c.h.b16 %v515
    %v2944 = vunpack.c.l.b16 %v516
    %v2945 = vunpack.c.h.b16 %v516
    %v2946 = vunpack.c.l.b16 %v517
    %v2947 = vunpack.c.h.b16 %v517
    %v2948 = vunpack.c.l.b16 %v518
    %v2949 = vunpack.c.h.b16 %v518
    %v2950 = vunpack.c.l.b16 %v519
    %v2951 = vunpack.c.h.b16 %v519
    %v2952 = vunpack.c.l.b16 %v520
    %v2953 = vunpack.c.h.b16 %v520
    %v2954 = vunpack.c.l.b16 %v521
    %v2955 = vunpack.c.h.b16 %v521
    %v2956 = vunpack.c.l.b16 %v522
    %v2957 = vunpack.c.h.b16 %v522
    %v2958 = vunpack.c.l.b16 %v523
    %v2959 = vunpack.c.h.b16 %v523
    %v2960 = vunpack.c.l.b16 %v524
    %v2961 = vunpack.c.h.b16 %v524
    %v2962 = vunpack.c.l.b16 %v525
    %v2963 = vunpack.c.h.b16 %v525
    %v2964 = vunpack.c.l.b16 %v526
    %v2965 = vunpack.c.h.b16 %v526
    %v2966 = vunpack.c.l.b16 %v527
    %v2967 = vunpack.c.h.b16 %v527
    %v2968 = vunpack.c.l.b16 %v528
    %v2969 = vunpack.c.h.b16 %v528
    %v2970 = vunpack.c.l.b16 %v529
    %v2971 = vunpack.c.h.b16 %v529
    %v2972 = vunpack.c.l.b16 %v530
    %v2973 = vunpack.c.h.b16 %v530
    %v2974 = vunpack.c.l.b16 %v531
    %v2975 = vunpack.c.h.b16 %v531
    %v2976 = vunpack.c.l.b16 %v532
    %v2977 = vunpack.c.h.b16 %v532
    %v2978 = vunpack.c.l.b16 %v533
    %v2979 = vunpack.c.h.b16 %v533
    %v2980 = vunpack.c.l.b16 %v534
    %v2981 = vunpack.c.h.b16 %v534
    %v2982 = vunpack.c.l.b16 %v535
    %v2983 = vunpack.c.h.b16 %v535
    %v2984 = vunpack.c.l.b16 %v536
    %v2985 = vunpack.c.h.b16 %v536
    %v2986 = vunpack.c.l.b16 %v537
    %v2987 = vunpack.c.h.b16 %v537
    %v2988 = vunpack.c.l.b16 %v538
    %v2989 = vunpack.c.h.b16 %v538
    %v2990 = vunpack.c.l.b16 %v539
    %v2991 = vunpack.c.h.b16 %v539
    %v2992 = vunpack.c.l.b16 %v540
    %v2993 = vunpack.c.h.b16 %v540
    %v2994 = vunpack.c.l.b16 %v541
    %v2995 = vunpack.c.h.b16 %v541
    %v2996 = vunpack.c.l.b16 %v542
    %v2997 = vunpack.c.h.b16 %v542
    %v2998 = vunpack.c.l.b16 %v543
    %v2999 = vunpack.c.h.b16 %v543
    %v3000 = vunpack.c.l.b16 %v544
    %v3001 = vunpack.c.h.b16 %v544
    %v3002 = vunpack.c.l.b16 %v545
    %v3003 = vunpack.c.h.b16 %v545
    %v3004 = vunpack.c.l.b16 %v546
    %v3005 = vunpack.c.h.b16 %v546
    %v3006 = vunpack.c.l.b16 %v547
    %v3007 = vunpack.c.h.b16 %v547
    %v3008 = vunpack.c.l.b16 %v548
    %v3009 = vunpack.c.h.b16 %v548
    %v3010 = vunpack.c.l.b16 %v549
    %v3011 = vunpack.c.h.b16 %v549
    %v3012 = vunpack.c.l.b16 %v550
    %v3013 = vunpack.c.h.b16 %v550
    %v3014 = vunpack.c.l.b16 %v551
    %v3015 = vunpack.c.h.b16 %v551
    %v3016 = vunpack.c.l.b16 %v552
    %v3017 = vunpack.c.h.b16 %v552
    %v3018 = vunpack.c.l.b16 %v553
    %v3019 = vunpack.c.h.b16 %v553
    %v3020 = vunpack.c.l.b16 %v554
    %v3021 = vunpack.c.h.b16 %v554
    %v3022 = vunpack.c.l.b16 %v555
    %v3023 = vunpack.c.h.b16 %v555
    %v3024 = vunpack.c.l.b16 %v556
    %v3025 = vunpack.c.h.b16 %v556
    %v3026 = vunpack.c.l.b16 %v557
    %v3027 = vunpack.c.h.b16 %v557
    %v3028 = vunpack.c.l.b16 %v558
    %v3029 = vunpack.c.h.b16 %v558
    %v3030 = vunpack.c.l.b16 %v559
    %v3031 = vunpack.c.h.b16 %v559
    %v3032 = vunpack.c.l.b16 %v560
    %v3033 = vunpack.c.h.b16 %v560
    %v3034 = vunpack.c.l.b16 %v561
    %v3035 = vunpack.c.h.b16 %v561
    %v3036 = vunpack.c.l.b16 %v562
    %v3037 = vunpack.c.h.b16 %v562
    %v3038 = vunpack.c.l.b16 %v563
    %v3039 = vunpack.c.h.b16 %v563
    %v3040 = vunpack.c.l.b16 %v564
    %v3041 = vunpack.c.h.b16 %v564
    %v3042 = vunpack.c.l.b16 %v565
    %v3043 = vunpack.c.h.b16 %v565
    %v3044 = vunpack.c.l.b16 %v566
    %v3045 = vunpack.c.h.b16 %v566
    %v3046 = vunpack.c.l.b16 %v567
    %v3047 = vunpack.c.h.b16 %v567
    %v3048 = vunpack.c.l.b16 %v568
    %v3049 = vunpack.c.h.b16 %v568
    %v3050 = vunpack.c.l.b16 %v569
    %v3051 = vunpack.c.h.b16 %v569
    %v3052 = vunpack.c.l.b16 %v570
    %v3053 = vunpack.c.h.b16 %v570
    %v3054 = vunpack.c.l.b16 %v571
    %v3055 = vunpack.c.h.b16 %v571
    %v3056 = vunpack.c.l.b16 %v572
    %v3057 = vunpack.c.h.b16 %v572
    %v3058 = vunpack.c.l.b16 %v573
    %v3059 = vunpack.c.h.b16 %v573
    %v3060 = vunpack.c.l.b16 %v574
    %v3061 = vunpack.c.h.b16 %v574
    %v3062 = vunpack.c.l.b16 %v575
    %v3063 = vunpack.c.h.b16 %v575
    %v3064 = vunpack.c.l.b16 %v576
    %v3065 = vunpack.c.h.b16 %v576
    %v3066 = vunpack.c.l.b16 %v577
    %v3067 = vunpack.c.h.b16 %v577
    %v3068 = vunpack.c.l.b16 %v578
    %v3069 = vunpack.c.h.b16 %v578
    %v3070 = vunpack.c.l.b16 %v579
    %v3071 = vunpack.c.h.b16 %v579
    %v3072 = vunpack.c.l.b16 %v580
    %v3073 = vunpack.c.h.b16 %v580
    %v3074 = vunpack.c.l.b16 %v581
    %v3075 = vunpack.c.h.b16 %v581
    %v3076 = vunpack.c.l.b16 %v582
    %v3077 = vunpack.c.h.b16 %v582
    %v3078 = vunpack.c.l.b16 %v583
    %v3079 = vunpack.c.h.b16 %v583
    %v3080 = vunpack.c.l.b16 %v584
    %v3081 = vunpack.c.h.b16 %v584
    %v3082 = vunpack.c.l.b16 %v585
    %v3083 = vunpack.c.h.b16 %v585
    %v3084 = vunpack.c.l.b16 %v586
    %v3085 = vunpack.c.h.b16 %v586
    %v3086 = vunpack.c.l.b16 %v587
    %v3087 = vunpack.c.h.b16 %v587
    %v3088 = vunpack.c.l.b16 %v588
    %v3089 = vunpack.c.h.b16 %v588
    %v3090 = vunpack.c.l.b16 %v589
    %v3091 = vunpack.c.h.b16 %v589
    %v3092 = vunpack.c.l.b16 %v590
    %v3093 = vunpack.c.h.b16 %v590
    %v3094 = vunpack.c.l.b16 %v591
    %v3095 = vunpack.c.h.b16 %v591
    %v3096 = vunpack.c.l.b16 %v592
    %v3097 = vunpack.c.h.b16 %v592
    %v3098 = vunpack.c.l.b16 %v593
    %v3099 = vunpack.c.h.b16 %v593
    %v3100 = vunpack.c.l.b16 %v594
    %v3101 = vunpack.c.h.b16 %v594
    %v3102 = vunpack.c.l.b16 %v595
    %v3103 = vunpack.c.h.b16 %v595
    %v3104 = vunpack.c.l.b16 %v596
    %v3105 = vunpack.c.h.b16 %v596
    %v3106 = vunpack.c.l.b16 %v597
    %v3107 = vunpack.c.h.b16 %v597
    %v3108 = vunpack.c.l.b16 %v598
    %v3109 = vunpack.c.h.b16 %v598
    %v3110 = vunpack.c.l.b16 %v599
    %v3111 = vunpack.c.h.b16 %v599
    %v3112 = vunpack.c.l.b16 %v600
    %v3113 = vunpack.c.h.b16 %v600
    %v3114 = vunpack.c.l.b16 %v601
    %v3115 = vunpack.c.h.b16 %v601
    %v3116 = vunpack.c.l.b16 %v602
    %v3117 = vunpack.c.h.b16 %v602
    %v3118 = vunpack.c.l.b16 %v603
    %v3119 = vunpack.c.h.b16 %v603
    %v3120 = vunpack.c.l.b16 %v604
    %v3121 = vunpack.c.h.b16 %v604
    %v3122 = vunpack.c.l.b16 %v605
    %v3123 = vunpack.c.h.b16 %v605
    %v3124 = vunpack.c.l.b16 %v606
    %v3125 = vunpack.c.h.b16 %v606
    %v3126 = vunpack.c.l.b16 %v607
    %v3127 = vunpack.c.h.b16 %v607
    %v3128 = vunpack.c.l.b16 %v608
    %v3129 = vunpack.c.h.b16 %v608
    %v3130 = vunpack.c.l.b16 %v609
    %v3131 = vunpack.c.h.b16 %v609
    %v3132 = vunpack.c.l.b16 %v610
    %v3133 = vunpack.c.h.b16 %v610
    %v3134 = vunpack.c.l.b16 %v611
    %v3135 = vunpack.c.h.b16 %v611
    %v3136 = vunpack.c.l.b16 %v612
    %v3137 = vunpack.c.h.b16 %v612
    %v3138 = vunpack.c.l.b16 %v613
    %v3139 = vunpack.c.h.b16 %v613
    %v3140 = vunpack.c.l.b16 %v614
    %v3141 = vunpack.c.h.b16 %v614
    %v3142 = vunpack.c.l.b16 %v615
    %v3143 = vunpack.c.h.b16 %v615
    %v3144 = vunpack.c.l.b16 %v616
    %v3145 = vunpack.c.h.b16 %v616
    %v3146 = vunpack.c.l.b16 %v617
    %v3147 = vunpack.c.h.b16 %v617
    %v3148 = vunpack.c.l.b16 %v618
    %v3149 = vunpack.c.h.b16 %v618
    %v3150 = vunpack.c.l.b16 %v619
    %v3151 = vunpack.c.h.b16 %v619
    %v3152 = vunpack.c.l.b16 %v620
    %v3153 = vunpack.c.h.b16 %v620
    %v3154 = vunpack.c.l.b16 %v621
    %v3155 = vunpack.c.h.b16 %v621
    %v3156 = vunpack.c.l.b16 %v622
    %v3157 = vunpack.c.h.b16 %v622
    %v3158 = vunpack.c.l.b16 %v623
    %v3159 = vunpack.c.h.b16 %v623
    %v3160 = vunpack.c.l.b16 %v624
    %v3161 = vunpack.c.h.b16 %v624
    %v3162 = vunpack.c.l.b16 %v625
    %v3163 = vunpack.c.h.b16 %v625
    %v3164 = vunpack.c.l.b16 %v626
    %v3165 = vunpack.c.h.b16 %v626
    %v3166 = vunpack.c.l.b16 %v627
    %v3167 = vunpack.c.h.b16 %v627
    %v3168 = vunpack.c.l.b16 %v628
    %v3169 = vunpack.c.h.b16 %v628
    %v3170 = vunpack.c.l.b16 %v629
    %v3171 = vunpack.c.h.b16 %v629
    %v3172 = vunpack.c.l.b16 %v630
    %v3173 = vunpack.c.h.b16 %v630
    %v3174 = vunpack.c.l.b16 %v631
    %v3175 = vunpack.c.h.b16 %v631
    %v3176 = vunpack.c.l.b16 %v632
    %v3177 = vunpack.c.h.b16 %v632
    %v3178 = vunpack.c.l.b16 %v633
    %v3179 = vunpack.c.h.b16 %v633
    %v3180 = vunpack.c.l.b16 %v634
    %v3181 = vunpack.c.h.b16 %v634
    %v3182 = vunpack.c.l.b16 %v635
    %v3183 = vunpack.c.h.b16 %v635
    %v3184 = vunpack.c.l.b16 %v636
    %v3185 = vunpack.c.h.b16 %v636
    %v3186 = vunpack.c.l.b16 %v637
    %v3187 = vunpack.c.h.b16 %v637
    %v3188 = vunpack.c.l.b16 %v638
    %v3189 = vunpack.c.h.b16 %v638
    %v3190 = vunpack.c.l.b16 %v639
    %v3191 = vunpack.c.h.b16 %v639
    %v3192 = vunpack.c.l.b16 %v640
    %v3193 = vunpack.c.h.b16 %v640
    %v3194 = vunpack.c.l.b16 %v641
    %v3195 = vunpack.c.h.b16 %v641
    %v3196 = vunpack.c.l.b16 %v642
    %v3197 = vunpack.c.h.b16 %v642
    %v3198 = vunpack.c.l.b16 %v643
    %v3199 = vunpack.c.h.b16 %v643
    %v3200 = vunpack.c.l.b16 %v644
    %v3201 = vunpack.c.h.b16 %v644
    %v3202 = vunpack.c.l.b16 %v645
    %v3203 = vunpack.c.h.b16 %v645
    %v3204 = vunpack.c.l.b16 %v646
    %v3205 = vunpack.c.h.b16 %v646
    %v3206 = vunpack.c.l.b16 %v647
    %v3207 = vunpack.c.h.b16 %v647
    %v3208 = vunpack.c.l.b16 %v648
    %v3209 = vunpack.c.h.b16 %v648
    %v3210 = vunpack.c.l.b16 %v649
    %v3211 = vunpack.c.h.b16 %v649
    %v3212 = vunpack.c.l.b16 %v650
    %v3213 = vunpack.c.h.b16 %v650
    %v3214 = vunpack.c.l.b16 %v651
    %v3215 = vunpack.c.h.b16 %v651
    %v3216 = vunpack.c.l.b16 %v652
    %v3217 = vunpack.c.h.b16 %v652
    %v3218 = vunpack.c.l.b16 %v653
    %v3219 = vunpack.c.h.b16 %v653
    %v3220 = vunpack.c.l.b16 %v654
    %v3221 = vunpack.c.h.b16 %v654
    %v3222 = vunpack.c.l.b16 %v655
    %v3223 = vunpack.c.h.b16 %v655
    %v3224 = vunpack.c.l.b16 %v656
    %v3225 = vunpack.c.h.b16 %v656
    %v3226 = vunpack.c.l.b16 %v657
    %v3227 = vunpack.c.h.b16 %v657
    %v3228 = vunpack.c.l.b16 %v658
    %v3229 = vunpack.c.h.b16 %v658
    %v3230 = vunpack.c.l.b16 %v659
    %v3231 = vunpack.c.h.b16 %v659
    %v3232 = vunpack.c.l.b16 %v660
    %v3233 = vunpack.c.h.b16 %v660
    %v3234 = vunpack.c.l.b16 %v661
    %v3235 = vunpack.c.h.b16 %v661
    %v3236 = vunpack.c.l.b16 %v662
    %v3237 = vunpack.c.h.b16 %v662
    %v3238 = vunpack.c.l.b16 %v663
    %v3239 = vunpack.c.h.b16 %v663
    %v3240 = vunpack.c.l.b16 %v664
    %v3241 = vunpack.c.h.b16 %v664
    %v3242 = vunpack.c.l.b16 %v665
    %v3243 = vunpack.c.h.b16 %v665
    %v3244 = vunpack.c.l.b16 %v666
    %v3245 = vunpack.c.h.b16 %v666
    %v3246 = vunpack.c.l.b16 %v667
    %v3247 = vunpack.c.h.b16 %v667
    %v3248 = vunpack.c.l.b16 %v668
    %v3249 = vunpack.c.h.b16 %v668
    %v3250 = vunpack.c.l.b16 %v669
    %v3251 = vunpack.c.h.b16 %v669
    %v3252 = vunpack.c.l.b16 %v670
    %v3253 = vunpack.c.h.b16 %v670
    %v3254 = vunpack.c.l.b16 %v671
    %v3255 = vunpack.c.h.b16 %v671
    %v3256 = vunpack.c.l.b16 %v672
    %v3257 = vunpack.c.h.b16 %v672
    %v3258 = vunpack.c.l.b16 %v673
    %v3259 = vunpack.c.h.b16 %v673
    %v3260 = vunpack.c.l.b16 %v674
    %v3261 = vunpack.c.h.b16 %v674
    %v3262 = vunpack.c.l.b16 %v675
    %v3263 = vunpack.c.h.b16 %v675
    %v3264 = vunpack.c.l.b16 %v676
    %v3265 = vunpack.c.h.b16 %v676
    %v3266 = vunpack.c.l.b16 %v677
    %v3267 = vunpack.c.h.b16 %v677
    %v3268 = vunpack.c.l.b16 %v678
    %v3269 = vunpack.c.h.b16 %v678
    %v3270 = vunpack.c.l.b16 %v679
    %v3271 = vunpack.c.h.b16 %v679
    %v3272 = vunpack.c.l.b16 %v680
    %v3273 = vunpack.c.h.b16 %v680
    %v3274 = vunpack.c.l.b16 %v681
    %v3275 = vunpack.c.h.b16 %v681
    %v3276 = vunpack.c.l.b16 %v682
    %v3277 = vunpack.c.h.b16 %v682
    %v3278 = vunpack.c.l.b16 %v683
    %v3279 = vunpack.c.h.b16 %v683
    %v3280 = vunpack.c.l.b16 %v684
    %v3281 = vunpack.c.h.b16 %v684
    %v3282 = vunpack.c.l.b16 %v685
    %v3283 = vunpack.c.h.b16 %v685
    %v3284 = vunpack.c.l.b16 %v686
    %v3285 = vunpack.c.h.b16 %v686
    %v3286 = vunpack.c.l.b16 %v687
    %v3287 = vunpack.c.h.b16 %v687
    %v3288 = vunpack.c.l.b16 %v688
    %v3289 = vunpack.c.h.b16 %v688
    %v3290 = vunpack.c.l.b16 %v689
    %v3291 = vunpack.c.h.b16 %v689
    %v3292 = vunpack.c.l.b16 %v690
    %v3293 = vunpack.c.h.b16 %v690
    %v3294 = vunpack.c.l.b16 %v691
    %v3295 = vunpack.c.h.b16 %v691
    %v3296 = vunpack.c.l.b16 %v692
    %v3297 = vunpack.c.h.b16 %v692
    %v3298 = vunpack.c.l.b16 %v693
    %v3299 = vunpack.c.h.b16 %v693
    %v3300 = vunpack.c.l.b16 %v694
    %v3301 = vunpack.c.h.b16 %v694
    %v3302 = vunpack.c.l.b16 %v695
    %v3303 = vunpack.c.h.b16 %v695
    %v3304 = vunpack.c.l.b16 %v696
    %v3305 = vunpack.c.h.b16 %v696
    %v3306 = vunpack.c.l.b16 %v697
    %v3307 = vunpack.c.h.b16 %v697
    %v3308 = vunpack.c.l.b16 %v698
    %v3309 = vunpack.c.h.b16 %v698
    %v3310 = vunpack.c.l.b16 %v699
    %v3311 = vunpack.c.h.b16 %v699
    %v3312 = vunpack.c.l.b16 %v700
    %v3313 = vunpack.c.h.b16 %v700
    %v3314 = vunpack.c.l.b16 %v701
    %v3315 = vunpack.c.h.b16 %v701
    %v3316 = vunpack.c.l.b16 %v702
    %v3317 = vunpack.c.h.b16 %v702
    %v3318 = vunpack.c.l.b16 %v703
    %v3319 = vunpack.c.h.b16 %v703
    %v3320 = vunpack.c.l.b16 %v704
    %v3321 = vunpack.c.h.b16 %v704
    %v3322 = vunpack.c.l.b16 %v705
    %v3323 = vunpack.c.h.b16 %v705
    %v3324 = vunpack.c.l.b16 %v706
    %v3325 = vunpack.c.h.b16 %v706
    %v3326 = vunpack.c.l.b16 %v707
    %v3327 = vunpack.c.h.b16 %v707
    %v3328 = vunpack.c.l.b16 %v708
    %v3329 = vunpack.c.h.b16 %v708
    %v3330 = vunpack.c.l.b16 %v709
    %v3331 = vunpack.c.h.b16 %v709
    %v3332 = vunpack.c.l.b16 %v710
    %v3333 = vunpack.c.h.b16 %v710
    %v3334 = vunpack.c.l.b16 %v711
    %v3335 = vunpack.c.h.b16 %v711
    %v3336 = vunpack.c.l.b16 %v712
    %v3337 = vunpack.c.h.b16 %v712
    %v3338 = vunpack.c.l.b16 %v713
    %v3339 = vunpack.c.h.b16 %v713
    %v3340 = vunpack.c.l.b16 %v714
    %v3341 = vunpack.c.h.b16 %v714
    %v3342 = vunpack.c.l.b16 %v715
    %v3343 = vunpack.c.h.b16 %v715
    %v3344 = vunpack.c.l.b16 %v716
    %v3345 = vunpack.c.h.b16 %v716
    %v3346 = vunpack.c.l.b16 %v717
    %v3347 = vunpack.c.h.b16 %v717
    %v3348 = vunpack.c.l.b16 %v718
    %v3349 = vunpack.c.h.b16 %v718
    %v3350 = vunpack.c.l.b16 %v719
    %v3351 = vunpack.c.h.b16 %v719
    %v3352 = vunpack.c.l.b16 %v720
    %v3353 = vunpack.c.h.b16 %v720
    %v3354 = vunpack.c.l.b16 %v721
    %v3355 = vunpack.c.h.b16 %v721
    %v3356 = vunpack.c.l.b16 %v722
    %v3357 = vunpack.c.h.b16 %v722
    %v3358 = vunpack.c.l.b16 %v723
    %v3359 = vunpack.c.h.b16 %v723
    %v3360 = vunpack.c.l.b16 %v724
    %v3361 = vunpack.c.h.b16 %v724
    %v3362 = vunpack.c.l.b16 %v725
    %v3363 = vunpack.c.h.b16 %v725
    %v3364 = vunpack.c.l.b16 %v726
    %v3365 = vunpack.c.h.b16 %v726
    %v3366 = vunpack.c.l.b16 %v727
    %v3367 = vunpack.c.h.b16 %v727
    %v3368 = vunpack.c.l.b16 %v728
    %v3369 = vunpack.c.h.b16 %v728
    %v3370 = vunpack.c.l.b16 %v729
    %v3371 = vunpack.c.h.b16 %v729
    %v3372 = vunpack.c.l.b16 %v730
    %v3373 = vunpack.c.h.b16 %v730
    %v3374 = vunpack.c.l.b16 %v731
    %v3375 = vunpack.c.h.b16 %v731
    %v3376 = vunpack.c.l.b16 %v732
    %v3377 = vunpack.c.h.b16 %v732
    %v3378 = vunpack.c.l.b16 %v733
    %v3379 = vunpack.c.h.b16 %v733
    %v3380 = vunpack.c.l.b16 %v734
    %v3381 = vunpack.c.h.b16 %v734
    %v3382 = vunpack.c.l.b16 %v735
    %v3383 = vunpack.c.h.b16 %v735
    %v3384 = vunpack.c.l.b16 %v736
    %v3385 = vunpack.c.h.b16 %v736
    %v3386 = vunpack.c.l.b16 %v737
    %v3387 = vunpack.c.h.b16 %v737
    %v3388 = vunpack.c.l.b16 %v738
    %v3389 = vunpack.c.h.b16 %v738
    %v3390 = vunpack.c.l.b16 %v739
    %v3391 = vunpack.c.h.b16 %v739
    %v3392 = vunpack.c.l.b16 %v740
    %v3393 = vunpack.c.h.b16 %v740
    %v3394 = vunpack.c.l.b16 %v741
    %v3395 = vunpack.c.h.b16 %v741
    %v3396 = vunpack.c.l.b16 %v742
    %v3397 = vunpack.c.h.b16 %v742
    %v3398 = vunpack.c.l.b16 %v743
    %v3399 = vunpack.c.h.b16 %v743
    %v3400 = vunpack.c.l.b16 %v744
    %v3401 = vunpack.c.h.b16 %v744
    %v3402 = vunpack.c.l.b16 %v745
    %v3403 = vunpack.c.h.b16 %v745
    %v3404 = vunpack.c.l.b16 %v746
    %v3405 = vunpack.c.h.b16 %v746
    %v3406 = vunpack.c.l.b16 %v747
    %v3407 = vunpack.c.h.b16 %v747
    %v3408 = vunpack.c.l.b16 %v748
    %v3409 = vunpack.c.h.b16 %v748
    %v3410 = vunpack.c.l.b16 %v749
    %v3411 = vunpack.c.h.b16 %v749
    %v3412 = vunpack.c.l.b16 %v750
    %v3413 = vunpack.c.h.b16 %v750
    %v3414 = vunpack.c.l.b16 %v751
    %v3415 = vunpack.c.h.b16 %v751
    %v3416 = vunpack.c.l.b16 %v752
    %v3417 = vunpack.c.h.b16 %v752
    %v3418 = vunpack.c.l.b16 %v753
    %v3419 = vunpack.c.h.b16 %v753
    %v3420 = vunpack.c.l.b16 %v754
    %v3421 = vunpack.c.h.b16 %v754
    %v3422 = vunpack.c.l.b16 %v755
    %v3423 = vunpack.c.h.b16 %v755
    %v3424 = vunpack.c.l.b16 %v756
    %v3425 = vunpack.c.h.b16 %v756
    %v3426 = vunpack.c.l.b16 %v757
    %v3427 = vunpack.c.h.b16 %v757
    %v3428 = vunpack.c.l.b16 %v758
    %v3429 = vunpack.c.h.b16 %v758
    %v3430 = vunpack.c.l.b16 %v759
    %v3431 = vunpack.c.h.b16 %v759
    %v3432 = vunpack.c.l.b16 %v760
    %v3433 = vunpack.c.h.b16 %v760
    %v3434 = vunpack.c.l.b16 %v761
    %v3435 = vunpack.c.h.b16 %v761
    %v3436 = vunpack.c.l.b16 %v762
    %v3437 = vunpack.c.h.b16 %v762
    %v3438 = vunpack.c.l.b16 %v763
    %v3439 = vunpack.c.h.b16 %v763
    %v3440 = vunpack.c.l.b16 %v764
    %v3441 = vunpack.c.h.b16 %v764
    %v3442 = vunpack.c.l.b16 %v765
    %v3443 = vunpack.c.h.b16 %v765
    %v3444 = vunpack.c.l.b16 %v766
    %v3445 = vunpack.c.h.b16 %v766
    %v3446 = vunpack.c.l.b16 %v767
    %v3447 = vunpack.c.h.b16 %v767
    %v3448 = vunpack.c.l.b16 %v768
    %v3449 = vunpack.c.h.b16 %v768
    %v3450 = vunpack.c.l.b16 %v769
    %v3451 = vunpack.c.h.b16 %v769
    %v3452 = vunpack.c.l.b16 %v770
    %v3453 = vunpack.c.h.b16 %v770
    %v3454 = vunpack.c.l.b16 %v771
    %v3455 = vunpack.c.h.b16 %v771
    %v3456 = vunpack.c.l.b16 %v772
    %v3457 = vunpack.c.h.b16 %v772
    %v3458 = vunpack.c.l.b16 %v773
    %v3459 = vunpack.c.h.b16 %v773
    %v3460 = vunpack.c.l.b16 %v774
    %v3461 = vunpack.c.h.b16 %v774
    %v3462 = vunpack.c.l.b16 %v775
    %v3463 = vunpack.c.h.b16 %v775
    %v3464 = vunpack.c.l.b16 %v776
    %v3465 = vunpack.c.h.b16 %v776
    %v3466 = vunpack.c.l.b16 %v777
    %v3467 = vunpack.c.h.b16 %v777
    %v3468 = vunpack.c.l.b16 %v778
    %v3469 = vunpack.c.h.b16 %v778
    %v3470 = vunpack.c.l.b16 %v779
    %v3471 = vunpack.c.h.b16 %v779
    %v3472 = vunpack.c.l.b16 %v780
    %v3473 = vunpack.c.h.b16 %v780
    %v3474 = vunpack.c.l.b16 %v781
    %v3475 = vunpack.c.h.b16 %v781
    %v3476 = vunpack.c.l.b16 %v782
    %v3477 = vunpack.c.h.b16 %v782
    %v3478 = vunpack.c.l.b16 %v783
    %v3479 = vunpack.c.h.b16 %v783
    %v3480 = vunpack.c.l.b16 %v784
    %v3481 = vunpack.c.h.b16 %v784
    %v3482 = vunpack.c.l.b16 %v785
    %v3483 = vunpack.c.h.b16 %v785
    %v3484 = vunpack.c.l.b16 %v786
    %v3485 = vunpack.c.h.b16 %v786
    %v3486 = vunpack.c.l.b16 %v787
    %v3487 = vunpack.c.h.b16 %v787
    %v3488 = vunpack.c.l.b16 %v788
    %v3489 = vunpack.c.h.b16 %v788
    %v3490 = vunpack.c.l.b16 %v789
    %v3491 = vunpack.c.h.b16 %v789
    %v3492 = vunpack.c.l.b16 %v790
    %v3493 = vunpack.c.h.b16 %v790
    %v3494 = vunpack.c.l.b16 %v791
    %v3495 = vunpack.c.h.b16 %v791
    %v3496 = vunpack.c.l.b16 %v792
    %v3497 = vunpack.c.h.b16 %v792
    %v3498 = vunpack.c.l.b16 %v793
    %v3499 = vunpack.c.h.b16 %v793
    %v3500 = vunpack.c.l.b16 %v794
    %v3501 = vunpack.c.h.b16 %v794
    %v3502 = vunpack.c.l.b16 %v795
    %v3503 = vunpack.c.h.b16 %v795
    %v3504 = vunpack.c.l.b16 %v796
    %v3505 = vunpack.c.h.b16 %v796
    %v3506 = vunpack.c.l.b16 %v797
    %v3507 = vunpack.c.h.b16 %v797
    %v3508 = vunpack.c.l.b16 %v798
    %v3509 = vunpack.c.h.b16 %v798
    %v3510 = vunpack.c.l.b16 %v799
    %v3511 = vunpack.c.h.b16 %v799
    %v3512 = vunpack.c.l.b16 %v800
    %v3513 = vunpack.c.h.b16 %v800
    %v3514 = vunpack.c.l.b16 %v801
    %v3515 = vunpack.c.h.b16 %v801
    %v3516 = vunpack.c.l.b16 %v802
    %v3517 = vunpack.c.h.b16 %v802
    %v3518 = vunpack.c.l.b16 %v803
    %v3519 = vunpack.c.h.b16 %v803
    %v3520 = vunpack.c.l.b16 %v804
    %v3521 = vunpack.c.h.b16 %v804
    %v3522 = vunpack.c.l.b16 %v805
    %v3523 = vunpack.c.h.b16 %v805
    %v3524 = vunpack.c.l.b16 %v806
    %v3525 = vunpack.c.h.b16 %v806
    %v3526 = vunpack.c.l.b16 %v807
    %v3527 = vunpack.c.h.b16 %v807
    %v3528 = vunpack.c.l.b16 %v808
    %v3529 = vunpack.c.h.b16 %v808
    %v3530 = vunpack.c.l.b16 %v809
    %v3531 = vunpack.c.h.b16 %v809
    %v3532 = vunpack.c.l.b16 %v810
    %v3533 = vunpack.c.h.b16 %v810
    %v3534 = vunpack.c.l.b16 %v811
    %v3535 = vunpack.c.h.b16 %v811
    %v3536 = vunpack.c.l.b16 %v812
    %v3537 = vunpack.c.h.b16 %v812
    %v3538 = vunpack.c.l.b16 %v813
    %v3539 = vunpack.c.h.b16 %v813
    %v3540 = vunpack.c.l.b16 %v814
    %v3541 = vunpack.c.h.b16 %v814
    %v3542 = vunpack.c.l.b16 %v815
    %v3543 = vunpack.c.h.b16 %v815
    %v3544 = vunpack.c.l.b16 %v816
    %v3545 = vunpack.c.h.b16 %v816
    %v3546 = vunpack.c.l.b16 %v817
    %v3547 = vunpack.c.h.b16 %v817
    %v3548 = vunpack.c.l.b16 %v818
    %v3549 = vunpack.c.h.b16 %v818
    %v3550 = vunpack.c.l.b16 %v819
    %v3551 = vunpack.c.h.b16 %v819
    %v3552 = vunpack.c.l.b16 %v820
    %v3553 = vunpack.c.h.b16 %v820
    %v3554 = vunpack.c.l.b16 %v821
    %v3555 = vunpack.c.h.b16 %v821
    %v3556 = vunpack.c.l.b16 %v822
    %v3557 = vunpack.c.h.b16 %v822
    %v3558 = vunpack.c.l.b16 %v823
    %v3559 = vunpack.c.h.b16 %v823
    %v3560 = vunpack.c.l.b16 %v824
    %v3561 = vunpack.c.h.b16 %v824
    %v3562 = vunpack.c.l.b16 %v825
    %v3563 = vunpack.c.h.b16 %v825
    %v3564 = vunpack.c.l.b16 %v826
    %v3565 = vunpack.c.h.b16 %v826
    %v3566 = vunpack.c.l.b16 %v827
    %v3567 = vunpack.c.h.b16 %v827
    %v3568 = vunpack.c.l.b16 %v828
    %v3569 = vunpack.c.h.b16 %v828
    %v3570 = vunpack.c.l.b16 %v829
    %v3571 = vunpack.c.h.b16 %v829
    %v3572 = vunpack.c.l.b16 %v830
    %v3573 = vunpack.c.h.b16 %v830
    %v3574 = vunpack.c.l.b16 %v831
    %v3575 = vunpack.c.h.b16 %v831
    %v3576 = vunpack.c.l.b16 %v832
    %v3577 = vunpack.c.h.b16 %v832
    %v3578 = vunpack.c.l.b16 %v833
    %v3579 = vunpack.c.h.b16 %v833
    %v3580 = vunpack.c.l.b16 %v834
    %v3581 = vunpack.c.h.b16 %v834
    %v3582 = vunpack.c.l.b16 %v835
    %v3583 = vunpack.c.h.b16 %v835
    %v3584 = vunpack.c.l.b16 %v836
    %v3585 = vunpack.c.h.b16 %v836
    %v3586 = vunpack.c.l.b16 %v837
    %v3587 = vunpack.c.h.b16 %v837
    %v3588 = vunpack.c.l.b16 %v838
    %v3589 = vunpack.c.h.b16 %v838
    %v3590 = vunpack.c.l.b16 %v839
    %v3591 = vunpack.c.h.b16 %v839
    %v3592 = vunpack.c.l.b16 %v840
    %v3593 = vunpack.c.h.b16 %v840
    %v3594 = vunpack.c.l.b16 %v841
    %v3595 = vunpack.c.h.b16 %v841
    %v3596 = vunpack.c.l.b16 %v842
    %v3597 = vunpack.c.h.b16 %v842
    %v3598 = vunpack.c.l.b16 %v843
    %v3599 = vunpack.c.h.b16 %v843
    %v3600 = vunpack.c.l.b16 %v844
    %v3601 = vunpack.c.h.b16 %v844
    %v3602 = vunpack.c.l.b16 %v845
    %v3603 = vunpack.c.h.b16 %v845
    %v3604 = vunpack.c.l.b16 %v846
    %v3605 = vunpack.c.h.b16 %v846
    %v3606 = vunpack.c.l.b16 %v847
    %v3607 = vunpack.c.h.b16 %v847
    %v3608 = vunpack.c.l.b16 %v848
    %v3609 = vunpack.c.h.b16 %v848
    %v3610 = vunpack.c.l.b16 %v849
    %v3611 = vunpack.c.h.b16 %v849
    %v3612 = vunpack.c.l.b16 %v850
    %v3613 = vunpack.c.h.b16 %v850
    %v3614 = vunpack.c.l.b16 %v851
    %v3615 = vunpack.c.h.b16 %v851
    %v3616 = vunpack.c.l.b16 %v852
    %v3617 = vunpack.c.h.b16 %v852
    %v3618 = vunpack.c.l.b16 %v853
    %v3619 = vunpack.c.h.b16 %v853
    %v3620 = vunpack.c.l.b16 %v854
    %v3621 = vunpack.c.h.b16 %v854
    %v3622 = vunpack.c.l.b16 %v855
    %v3623 = vunpack.c.h.b16 %v855
    %v3624 = vunpack.c.l.b16 %v856
    %v3625 = vunpack.c.h.b16 %v856
    %v3626 = vunpack.c.l.b16 %v857
    %v3627 = vunpack.c.h.b16 %v857
    %v3628 = vunpack.c.l.b16 %v858
    %v3629 = vunpack.c.h.b16 %v858
    %v3630 = vunpack.c.l.b16 %v859
    %v3631 = vunpack.c.h.b16 %v859
    %v3632 = vunpack.c.l.b16 %v860
    %v3633 = vunpack.c.h.b16 %v860
    %v3634 = vunpack.c.l.b16 %v861
    %v3635 = vunpack.c.h.b16 %v861
    %v3636 = vunpack.c.l.b16 %v862
    %v3637 = vunpack.c.h.b16 %v862
    %v3638 = vunpack.c.l.b16 %v863
    %v3639 = vunpack.c.h.b16 %v863
    %v3640 = vunpack.c.l.b16 %v864
    %v3641 = vunpack.c.h.b16 %v864
    %v3642 = vunpack.c.l.b16 %v865
    %v3643 = vunpack.c.h.b16 %v865
    %v3644 = vunpack.c.l.b16 %v866
    %v3645 = vunpack.c.h.b16 %v866
    %v3646 = vunpack.c.l.b16 %v867
    %v3647 = vunpack.c.h.b16 %v867
    %v3648 = vunpack.c.l.b16 %v868
    %v3649 = vunpack.c.h.b16 %v868
    %v3650 = vunpack.c.l.b16 %v869
    %v3651 = vunpack.c.h.b16 %v869
    %v3652 = vunpack.c.l.b16 %v870
    %v3653 = vunpack.c.h.b16 %v870
    %v3654 = vunpack.c.l.b16 %v871
    %v3655 = vunpack.c.h.b16 %v871
    %v3656 = vunpack.c.l.b16 %v872
    %v3657 = vunpack.c.h.b16 %v872
    %v3658 = vunpack.c.l.b16 %v873
    %v3659 = vunpack.c.h.b16 %v873
    %v3660 = vunpack.c.l.b16 %v874
    %v3661 = vunpack.c.h.b16 %v874
    %v3662 = vunpack.c.l.b16 %v875
    %v3663 = vunpack.c.h.b16 %v875
    %v3664 = vunpack.c.l.b16 %v876
    %v3665 = vunpack.c.h.b16 %v876
    %v3666 = vunpack.c.l.b16 %v877
    %v3667 = vunpack.c.h.b16 %v877
    %v3668 = vunpack.c.l.b16 %v878
    %v3669 = vunpack.c.h.b16 %v878
    %v3670 = vunpack.c.l.b16 %v879
    %v3671 = vunpack.c.h.b16 %v879
    %v3672 = vunpack.c.l.b16 %v880
    %v3673 = vunpack.c.h.b16 %v880
    %v3674 = vunpack.c.l.b16 %v881
    %v3675 = vunpack.c.h.b16 %v881
    %v3676 = vunpack.c.l.b16 %v882
    %v3677 = vunpack.c.h.b16 %v882
    %v3678 = vunpack.c.l.b16 %v883
    %v3679 = vunpack.c.h.b16 %v883
    %v3680 = vunpack.c.l.b16 %v884
    %v3681 = vunpack.c.h.b16 %v884
    %v3682 = vunpack.c.l.b16 %v885
    %v3683 = vunpack.c.h.b16 %v885
    %v3684 = vunpack.c.l.b16 %v886
    %v3685 = vunpack.c.h.b16 %v886
    %v3686 = vunpack.c.l.b16 %v887
    %v3687 = vunpack.c.h.b16 %v887
    %v3688 = vunpack.c.l.b16 %v888
    %v3689 = vunpack.c.h.b16 %v888
    %v3690 = vunpack.c.l.b16 %v889
    %v3691 = vunpack.c.h.b16 %v889
    %v3692 = vunpack.c.l.b16 %v890
    %v3693 = vunpack.c.h.b16 %v890
    %v3694 = vunpack.c.l.b16 %v891
    %v3695 = vunpack.c.h.b16 %v891
    %v3696 = vunpack.c.l.b16 %v892
    %v3697 = vunpack.c.h.b16 %v892
    %v3698 = vunpack.c.l.b16 %v893
    %v3699 = vunpack.c.h.b16 %v893
    %v3700 = vunpack.c.l.b16 %v894
    %v3701 = vunpack.c.h.b16 %v894
    %v3702 = vunpack.c.l.b16 %v895
    %v3703 = vunpack.c.h.b16 %v895
    %v3704 = vunpack.c.l.b16 %v896
    %v3705 = vunpack.c.h.b16 %v896
    %v3706 = vunpack.c.l.b16 %v897
    %v3707 = vunpack.c.h.b16 %v897
    %v3708 = vunpack.c.l.b16 %v898
    %v3709 = vunpack.c.h.b16 %v898
    %v3710 = vunpack.c.l.b16 %v899
    %v3711 = vunpack.c.h.b16 %v899
    %v3712 = vunpack.c.l.b16 %v900
    %v3713 = vunpack.c.h.b16 %v900
    %v3714 = vunpack.c.l.b16 %v901
    %v3715 = vunpack.c.h.b16 %v901
    %v3716 = vunpack.c.l.b16 %v902
    %v3717 = vunpack.c.h.b16 %v902
    %v3718 = vunpack.c.l.b16 %v903
    %v3719 = vunpack.c.h.b16 %v903
    %v3720 = vunpack.c.l.b16 %v904
    %v3721 = vunpack.c.h.b16 %v904
    %v3722 = vunpack.c.l.b16 %v905
    %v3723 = vunpack.c.h.b16 %v905
    %v3724 = vunpack.c.l.b16 %v906
    %v3725 = vunpack.c.h.b16 %v906
    %v3726 = vunpack.c.l.b16 %v907
    %v3727 = vunpack.c.h.b16 %v907
    %v3728 = vunpack.c.l.b16 %v908
    %v3729 = vunpack.c.h.b16 %v908
    %v3730 = vunpack.c.l.b16 %v909
    %v3731 = vunpack.c.h.b16 %v909
    %v3732 = vunpack.c.l.b16 %v910
    %v3733 = vunpack.c.h.b16 %v910
    %v3734 = vunpack.c.l.b16 %v911
    %v3735 = vunpack.c.h.b16 %v911
    %v3736 = vunpack.c.l.b16 %v912
    %v3737 = vunpack.c.h.b16 %v912
    %v3738 = vunpack.c.l.b16 %v913
    %v3739 = vunpack.c.h.b16 %v913
    %v3740 = vunpack.c.l.b16 %v914
    %v3741 = vunpack.c.h.b16 %v914
    %v3742 = vunpack.c.l.b16 %v915
    %v3743 = vunpack.c.h.b16 %v915
    %v3744 = vunpack.c.l.b16 %v916
    %v3745 = vunpack.c.h.b16 %v916
    %v3746 = vunpack.c.l.b16 %v917
    %v3747 = vunpack.c.h.b16 %v917
    %v3748 = vunpack.c.l.b16 %v918
    %v3749 = vunpack.c.h.b16 %v918
    %v3750 = vunpack.c.l.b16 %v919
    %v3751 = vunpack.c.h.b16 %v919
    %v3752 = vunpack.c.l.b16 %v920
    %v3753 = vunpack.c.h.b16 %v920
    %v3754 = vunpack.c.l.b16 %v921
    %v3755 = vunpack.c.h.b16 %v921
    %v3756 = vunpack.c.l.b16 %v922
    %v3757 = vunpack.c.h.b16 %v922
    %v3758 = vunpack.c.l.b16 %v923
    %v3759 = vunpack.c.h.b16 %v923
    %v3760 = vunpack.c.l.b16 %v924
    %v3761 = vunpack.c.h.b16 %v924
    %v3762 = vunpack.c.l.b16 %v925
    %v3763 = vunpack.c.h.b16 %v925
    %v3764 = vunpack.c.l.b16 %v926
    %v3765 = vunpack.c.h.b16 %v926
    %v3766 = vunpack.c.l.b16 %v927
    %v3767 = vunpack.c.h.b16 %v927
    %v3768 = vunpack.c.l.b16 %v928
    %v3769 = vunpack.c.h.b16 %v928
    %v3770 = vunpack.c.l.b16 %v929
    %v3771 = vunpack.c.h.b16 %v929
    %v3772 = vunpack.c.l.b16 %v930
    %v3773 = vunpack.c.h.b16 %v930
    %v3774 = vunpack.c.l.b16 %v931
    %v3775 = vunpack.c.h.b16 %v931
    %v3776 = vunpack.c.l.b16 %v932
    %v3777 = vunpack.c.h.b16 %v932
    %v3778 = vunpack.c.l.b16 %v933
    %v3779 = vunpack.c.h.b16 %v933
    %v3780 = vunpack.c.l.b16 %v934
    %v3781 = vunpack.c.h.b16 %v934
    %v3782 = vunpack.c.l.b16 %v935
    %v3783 = vunpack.c.h.b16 %v935
    %v3784 = vunpack.c.l.b16 %v936
    %v3785 = vunpack.c.h.b16 %v936
    %v3786 = vunpack.c.l.b16 %v937
    %v3787 = vunpack.c.h.b16 %v937
    %v3788 = vunpack.c.l.b16 %v938
    %v3789 = vunpack.c.h.b16 %v938
    %v3790 = vunpack.c.l.b16 %v939
    %v3791 = vunpack.c.h.b16 %v939
    %v3792 = vunpack.c.l.b16 %v940
    %v3793 = vunpack.c.h.b16 %v940
    %v3794 = vunpack.c.l.b16 %v941
    %v3795 = vunpack.c.h.b16 %v941
    %v3796 = vunpack.c.l.b16 %v942
    %v3797 = vunpack.c.h.b16 %v942
    %v3798 = vunpack.c.l.b16 %v943
    %v3799 = vunpack.c.h.b16 %v943
    %v3800 = vunpack.c.l.b16 %v944
    %v3801 = vunpack.c.h.b16 %v944
    %v3802 = vunpack.c.l.b16 %v945
    %v3803 = vunpack.c.h.b16 %v945
    %v3804 = vunpack.c.l.b16 %v946
    %v3805 = vunpack.c.h.b16 %v946
    %v3806 = vunpack.c.l.b16 %v947
    %v3807 = vunpack.c.h.b16 %v947
    %v3808 = vunpack.c.l.b16 %v948
    %v3809 = vunpack.c.h.b16 %v948
    %v3810 = vunpack.c.l.b16 %v949
    %v3811 = vunpack.c.h.b16 %v949
    %v3812 = vunpack.c.l.b16 %v950
    %v3813 = vunpack.c.h.b16 %v950
    %v3814 = vunpack.c.l.b16 %v951
    %v3815 = vunpack.c.h.b16 %v951
    %v3816 = vunpack.c.l.b16 %v952
    %v3817 = vunpack.c.h.b16 %v952
    %v3818 = vunpack.c.l.b16 %v953
    %v3819 = vunpack.c.h.b16 %v953
    %v3820 = vunpack.c.l.b16 %v954
    %v3821 = vunpack.c.h.b16 %v954
    %v3822 = vunpack.c.l.b16 %v955
    %v3823 = vunpack.c.h.b16 %v955
    %v3824 = vunpack.c.l.b16 %v956
    %v3825 = vunpack.c.h.b16 %v956
    %v3826 = vunpack.c.l.b16 %v957
    %v3827 = vunpack.c.h.b16 %v957
    %v3828 = vunpack.c.l.b16 %v958
    %v3829 = vunpack.c.h.b16 %v958
    %v3830 = vunpack.c.l.b16 %v959
    %v3831 = vunpack.c.h.b16 %v959
    %v3832 = vunpack.c.l.b16 %v960
    %v3833 = vunpack.c.h.b16 %v960
    %v3834 = vunpack.c.l.b16 %v961
    %v3835 = vunpack.c.h.b16 %v961
    %v3836 = vunpack.c.l.b16 %v962
    %v3837 = vunpack.c.h.b16 %v962
    %v3838 = vunpack.c.l.b16 %v963
    %v3839 = vunpack.c.h.b16 %v963
    %v3840 = vunpack.c.l.b16 %v964
    %v3841 = vunpack.c.h.b16 %v964
    %v3842 = vunpack.c.l.b16 %v965
    %v3843 = vunpack.c.h.b16 %v965
    %v3844 = vunpack.c.l.b16 %v966
    %v3845 = vunpack.c.h.b16 %v966
    %v3846 = vunpack.c.l.b16 %v967
    %v3847 = vunpack.c.h.b16 %v967
    %v3848 = vunpack.c.l.b16 %v968
    %v3849 = vunpack.c.h.b16 %v968
    %v3850 = vunpack.c.l.b16 %v969
    %v3851 = vunpack.c.h.b16 %v969
    %v3852 = vunpack.c.l.b16 %v970
    %v3853 = vunpack.c.h.b16 %v970
    %v3854 = vunpack.c.l.b16 %v971
    %v3855 = vunpack.c.h.b16 %v971
    %v3856 = vunpack.c.l.b16 %v972
    %v3857 = vunpack.c.h.b16 %v972
    %v3858 = vunpack.c.l.b16 %v973
    %v3859 = vunpack.c.h.b16 %v973
    %v3860 = vunpack.c.l.b16 %v974
    %v3861 = vunpack.c.h.b16 %v974
    %v3862 = vunpack.c.l.b16 %v975
    %v3863 = vunpack.c.h.b16 %v975
    %v3864 = vunpack.c.l.b16 %v976
    %v3865 = vunpack.c.h.b16 %v976
    %v3866 = vunpack.c.l.b16 %v977
    %v3867 = vunpack.c.h.b16 %v977
    %v3868 = vunpack.c.l.b16 %v978
    %v3869 = vunpack.c.h.b16 %v978
    %v3870 = vunpack.c.l.b16 %v979
    %v3871 = vunpack.c.h.b16 %v979
    %v3872 = vunpack.c.l.b16 %v980
    %v3873 = vunpack.c.h.b16 %v980
    %v3874 = vunpack.c.l.b16 %v981
    %v3875 = vunpack.c.h.b16 %v981
    %v3876 = vunpack.c.l.b16 %v982
    %v3877 = vunpack.c.h.b16 %v982
    %v3878 = vunpack.c.l.b16 %v983
    %v3879 = vunpack.c.h.b16 %v983
    %v3880 = vunpack.c.l.b16 %v984
    %v3881 = vunpack.c.h.b16 %v984
    %v3882 = vunpack.c.l.b16 %v985
    %v3883 = vunpack.c.h.b16 %v985
    %v3884 = vunpack.c.l.b16 %v986
    %v3885 = vunpack.c.h.b16 %v986
    %v3886 = vunpack.c.l.b16 %v987
    %v3887 = vunpack.c.h.b16 %v987
    %v3888 = vunpack.c.l.b16 %v988
    %v3889 = vunpack.c.h.b16 %v988
    %v3890 = vunpack.c.l.b16 %v989
    %v3891 = vunpack.c.h.b16 %v989
    %v3892 = vunpack.c.l.b16 %v990
    %v3893 = vunpack.c.h.b16 %v990
    %v3894 = vunpack.c.l.b16 %v991
    %v3895 = vunpack.c.h.b16 %v991
    %v3896 = vunpack.c.l.b16 %v992
    %v3897 = vunpack.c.h.b16 %v992
    %v3898 = vunpack.c.l.b16 %v993
    %v3899 = vunpack.c.h.b16 %v993
    %v3900 = vunpack.c.l.b16 %v994
    %v3901 = vunpack.c.h.b16 %v994
    %v3902 = vunpack.c.l.b16 %v995
    %v3903 = vunpack.c.h.b16 %v995
    %v3904 = vunpack.c.l.b16 %v996
    %v3905 = vunpack.c.h.b16 %v996
    %v3906 = vunpack.c.l.b16 %v997
    %v3907 = vunpack.c.h.b16 %v997
    %v3908 = vunpack.c.l.b16 %v998
    %v3909 = vunpack.c.h.b16 %v998
    %v3910 = vunpack.c.l.b16 %v999
    %v3911 = vunpack.c.h.b16 %v999
    %v3912 = vunpack.c.l.b16 %v1000
    %v3913 = vunpack.c.h.b16 %v1000
    %v3914 = vunpack.c.l.b16 %v1001
    %v3915 = vunpack.c.h.b16 %v1001
    %v3916 = vunpack.c.l.b16 %v1002
    %v3917 = vunpack.c.h.b16 %v1002
    %v3918 = vunpack.c.l.b16 %v1003
    %v3919 = vunpack.c.h.b16 %v1003
    %v3920 = vunpack.c.l.b16 %v1004
    %v3921 = vunpack.c.h.b16 %v1004
    %v3922 = vunpack.c.l.b16 %v1005
    %v3923 = vunpack.c.h.b16 %v1005
    %v3924 = vunpack.c.l.b16 %v1006
    %v3925 = vunpack.c.h.b16 %v1006
    %v3926 = vunpack.c.l.b16 %v1007
    %v3927 = vunpack.c.h.b16 %v1007
    %v3928 = vunpack.c.l.b16 %v1008
    %v3929 = vunpack.c.h.b16 %v1008
    %v3930 = vunpack.c.l.b16 %v1009
    %v3931 = vunpack.c.h.b16 %v1009
    %v3932 = vunpack.c.l.b16 %v1010
    %v3933 = vunpack.c.h.b16 %v1010
    %v3934 = vunpack.c.l.b16 %v1011
    %v3935 = vunpack.c.h.b16 %v1011
    %v3936 = vunpack.c.l.b16 %v1012
    %v3937 = vunpack.c.h.b16 %v1012
    %v3938 = vunpack.c.l.b16 %v1013
    %v3939 = vunpack.c.h.b16 %v1013
    %v3940 = vunpack.c.l.b16 %v1014
    %v3941 = vunpack.c.h.b16 %v1014
    %v3942 = vunpack.c.l.b16 %v1015
    %v3943 = vunpack.c.h.b16 %v1015
    %v3944 = vunpack.c.l.b16 %v1016
    %v3945 = vunpack.c.h.b16 %v1016
    %v3946 = vunpack.c.l.b16 %v1017
    %v3947 = vunpack.c.h.b16 %v1017
    %v3948 = vunpack.c.l.b16 %v1018
    %v3949 = vunpack.c.h.b16 %v1018
    %v3950 = vunpack.c.l.b16 %v1019
    %v3951 = vunpack.c.h.b16 %v1019
    %v3952 = vunpack.c.l.b16 %v1020
    %v3953 = vunpack.c.h.b16 %v1020
    %v3954 = vunpack.c.l.b16 %v1021
    %v3955 = vunpack.c.h.b16 %v1021
    %v3956 = vunpack.c.l.b16 %v1022
    %v3957 = vunpack.c.h.b16 %v1022
    %v3958 = vunpack.c.l.b16 %v1023
    %v3959 = vunpack.c.h.b16 %v1023
    %v3960 = vunpack.c.l.b16 %v1024
    %v3961 = vunpack.c.h.b16 %v1024
    %v3962 = vunpack.c.l.b16 %v1025
    %v3963 = vunpack.c.h.b16 %v1025
    %v3964 = vunpack.c.l.b16 %v1026
    %v3965 = vunpack.c.h.b16 %v1026
    %v3966 = vunpack.c.l.b16 %v1027
    %v3967 = vunpack.c.h.b16 %v1027
    %v3968 = vunpack.c.l.b16 %v1028
    %v3969 = vunpack.c.h.b16 %v1028
    %v3970 = vunpack.c.l.b16 %v1029
    %v3971 = vunpack.c.h.b16 %v1029
    %v3972 = vunpack.c.l.b16 %v1030
    %v3973 = vunpack.c.h.b16 %v1030
    %v3974 = vunpack.c.l.b16 %v1031
    %v3975 = vunpack.c.h.b16 %v1031
    %v3976 = vunpack.c.l.b16 %v1032
    %v3977 = vunpack.c.h.b16 %v1032
    %v3978 = vunpack.c.l.b16 %v1033
    %v3979 = vunpack.c.h.b16 %v1033
    %v3980 = vunpack.c.l.b16 %v1034
    %v3981 = vunpack.c.h.b16 %v1034
    %v3982 = vunpack.c.l.b16 %v1035
    %v3983 = vunpack.c.h.b16 %v1035
    %v3984 = vunpack.c.l.b16 %v1036
    %v3985 = vunpack.c.h.b16 %v1036
    %v3986 = vunpack.c.l.b16 %v1037
    %v3987 = vunpack.c.h.b16 %v1037
    %v3988 = vunpack.c.l.b16 %v1038
    %v3989 = vunpack.c.h.b16 %v1038
    %v3990 = vunpack.c.l.b16 %v1039
    %v3991 = vunpack.c.h.b16 %v1039
    %v3992 = vunpack.c.l.b16 %v1040
    %v3993 = vunpack.c.h.b16 %v1040
    %v3994 = vunpack.c.l.b16 %v1041
    %v3995 = vunpack.c.h.b16 %v1041
    %v3996 = vunpack.c.l.b16 %v1042
    %v3997 = vunpack.c.h.b16 %v1042
    %v3998 = vunpack.c.l.b16 %v1043
    %v3999 = vunpack.c.h.b16 %v1043
    %v4000 = vunpack.c.l.b16 %v1044
    %v4001 = vunpack.c.h.b16 %v1044
    %v4002 = vunpack.c.l.b16 %v1045
    %v4003 = vunpack.c.h.b16 %v1045
    %v4004 = vunpack.c.l.b16 %v1046
    %v4005 = vunpack.c.h.b16 %v1046
    %v4006 = vunpack.c.l.b16 %v1047
    %v4007 = vunpack.c.h.b16 %v1047
    %v4008 = vunpack.c.l.b16 %v1048
    %v4009 = vunpack.c.h.b16 %v1048
    %v4010 = vunpack.c.l.b16 %v1049
    %v4011 = vunpack.c.h.b16 %v1049
    %v4012 = vunpack.c.l.b16 %v1050
    %v4013 = vunpack.c.h.b16 %v1050
    %v4014 = vunpack.c.l.b16 %v1051
    %v4015 = vunpack.c.h.b16 %v1051
    %v4016 = vunpack.c.l.b16 %v1052
    %v4017 = vunpack.c.h.b16 %v1052
    %v4018 = vunpack.c.l.b16 %v1053
    %v4019 = vunpack.c.h.b16 %v1053
    %v4020 = vunpack.c.l.b16 %v1054
    %v4021 = vunpack.c.h.b16 %v1054
    %v4022 = vunpack.c.l.b16 %v1055
    %v4023 = vunpack.c.h.b16 %v1055
    %v4024 = vunpack.c.l.b16 %v1056
    %v4025 = vunpack.c.h.b16 %v1056
    %v4026 = vunpack.c.l.b16 %v1057
    %v4027 = vunpack.c.h.b16 %v1057
    %v4028 = vunpack.c.l.b16 %v1058
    %v4029 = vunpack.c.h.b16 %v1058
    %v4030 = vunpack.c.l.b16 %v1059
    %v4031 = vunpack.c.h.b16 %v1059
    %v4032 = vunpack.c.l.b16 %v1060
    %v4033 = vunpack.c.h.b16 %v1060
    %v4034 = vunpack.c.l.b16 %v1061
    %v4035 = vunpack.c.h.b16 %v1061
    %v4036 = vunpack.c.l.b16 %v1062
    %v4037 = vunpack.c.h.b16 %v1062
    %v4038 = vunpack.c.l.b16 %v1063
    %v4039 = vunpack.c.h.b16 %v1063
    %v4040 = vunpack.c.l.b16 %v1064
    %v4041 = vunpack.c.h.b16 %v1064
    %v4042 = vunpack.c.l.b16 %v1065
    %v4043 = vunpack.c.h.b16 %v1065
    %v4044 = vunpack.c.l.b16 %v1066
    %v4045 = vunpack.c.h.b16 %v1066
    %v4046 = vunpack.c.l.b16 %v1067
    %v4047 = vunpack.c.h.b16 %v1067
    %v4048 = vunpack.c.l.b16 %v1068
    %v4049 = vunpack.c.h.b16 %v1068
    %v4050 = vunpack.c.l.b16 %v1069
    %v4051 = vunpack.c.h.b16 %v1069
    %v4052 = vunpack.c.l.b16 %v1070
    %v4053 = vunpack.c.h.b16 %v1070
    %v4054 = vunpack.c.l.b16 %v1071
    %v4055 = vunpack.c.h.b16 %v1071
    %v4056 = vunpack.c.l.b16 %v1072
    %v4057 = vunpack.c.h.b16 %v1072
    %v4058 = vunpack.c.l.b16 %v1073
    %v4059 = vunpack.c.h.b16 %v1073
    %v4060 = vunpack.c.l.b16 %v1074
    %v4061 = vunpack.c.h.b16 %v1074
    %v4062 = vunpack.c.l.b16 %v1075
    %v4063 = vunpack.c.h.b16 %v1075
    %v4064 = vunpack.c.l.b16 %v1076
    %v4065 = vunpack.c.h.b16 %v1076
    %v4066 = vunpack.c.l.b16 %v1077
    %v4067 = vunpack.c.h.b16 %v1077
    %v4068 = vunpack.c.l.b16 %v1078
    %v4069 = vunpack.c.h.b16 %v1078
    %v4070 = vunpack.c.l.b16 %v1079
    %v4071 = vunpack.c.h.b16 %v1079
    %v4072 = vunpack.c.l.b16 %v1080
    %v4073 = vunpack.c.h.b16 %v1080
    %v4074 = vunpack.c.l.b16 %v1081
    %v4075 = vunpack.c.h.b16 %v1081
    %v4076 = vunpack.c.l.b16 %v1082
    %v4077 = vunpack.c.h.b16 %v1082
    %v4078 = vunpack.c.l.b16 %v1083
    %v4079 = vunpack.c.h.b16 %v1083
    %v4080 = vunpack.c.l.b16 %v1084
    %v4081 = vunpack.c.h.b16 %v1084
    %v4082 = vunpack.c.l.b16 %v1085
    %v4083 = vunpack.c.h.b16 %v1085
    %v4084 = vunpack.c.l.b16 %v1086
    %v4085 = vunpack.c.h.b16 %v1086
    %v4086 = vunpack.c.l.b16 %v1087
    %v4087 = vunpack.c.h.b16 %v1087
    %v4088 = vunpack.c.l.b16 %v1088
    %v4089 = vunpack.c.h.b16 %v1088
    %v4090 = vunpack.c.l.b16 %v1089
    %v4091 = vunpack.c.h.b16 %v1089
    %v4092 = vunpack.c.l.b16 %v1090
    %v4093 = vunpack.c.h.b16 %v1090
    %v4094 = vunpack.c.l.b16 %v1091
    %v4095 = vunpack.c.h.b16 %v1091
    %v4096 = vunpack.c.l.b16 %v1092
    %v4097 = vunpack.c.h.b16 %v1092
    %v4098 = vunpack.c.l.b16 %v1093
    %v4099 = vunpack.c.h.b16 %v1093
    %v4100 = vunpack.c.l.b16 %v1094
    %v4101 = vunpack.c.h.b16 %v1094
    %v4102 = vunpack.c.l.b16 %v1095
    %v4103 = vunpack.c.h.b16 %v1095
    %v4104 = vunpack.c.l.b16 %v1096
    %v4105 = vunpack.c.h.b16 %v1096
    %v4106 = vunpack.c.l.b16 %v1097
    %v4107 = vunpack.c.h.b16 %v1097
    %v4108 = vunpack.c.l.b16 %v1098
    %v4109 = vunpack.c.h.b16 %v1098
    %v4110 = vunpack.c.l.b16 %v1099
    %v4111 = vunpack.c.h.b16 %v1099
    %v4112 = vunpack.c.l.b16 %v1100
    %v4113 = vunpack.c.h.b16 %v1100
    %v4114 = vunpack.c.l.b16 %v1101
    %v4115 = vunpack.c.h.b16 %v1101
    %v4116 = vunpack.c.l.b16 %v1102
    %v4117 = vunpack.c.h.b16 %v1102
    %v4118 = vunpack.c.l.b16 %v1103
    %v4119 = vunpack.c.h.b16 %v1103
    %v4120 = vunpack.c.l.b16 %v1104
    %v4121 = vunpack.c.h.b16 %v1104
    %v4122 = vunpack.c.l.b16 %v1105
    %v4123 = vunpack.c.h.b16 %v1105
    %v4124 = vunpack.c.l.b16 %v1106
    %v4125 = vunpack.c.h.b16 %v1106
    %v4126 = vunpack.c.l.b16 %v1107
    %v4127 = vunpack.c.h.b16 %v1107
    %v4128 = vunpack.c.l.b16 %v1108
    %v4129 = vunpack.c.h.b16 %v1108
    %v4130 = vunpack.c.l.b16 %v1109
    %v4131 = vunpack.c.h.b16 %v1109
    %v4132 = vunpack.c.l.b16 %v1110
    %v4133 = vunpack.c.h.b16 %v1110
    %v4134 = vunpack.c.l.b16 %v1111
    %v4135 = vunpack.c.h.b16 %v1111
    %v4136 = vunpack.c.l.b16 %v1112
    %v4137 = vunpack.c.h.b16 %v1112
    %v4138 = vunpack.c.l.b16 %v1113
    %v4139 = vunpack.c.h.b16 %v1113
    %v4140 = vunpack.c.l.b16 %v1114
    %v4141 = vunpack.c.h.b16 %v1114
    %v4142 = vunpack.c.l.b16 %v1115
    %v4143 = vunpack.c.h.b16 %v1115
    %v4144 = vunpack.c.l.b16 %v1116
    %v4145 = vunpack.c.h.b16 %v1116
    %v4146 = vunpack.c.l.b16 %v1117
    %v4147 = vunpack.c.h.b16 %v1117
    %v4148 = vunpack.c.l.b16 %v1118
    %v4149 = vunpack.c.h.b16 %v1118
    %v4150 = vunpack.c.l.b16 %v1119
    %v4151 = vunpack.c.h.b16 %v1119
    %v4152 = vunpack.c.l.b16 %v1120
    %v4153 = vunpack.c.h.b16 %v1120
    %v4154 = vunpack.c.l.b16 %v1121
    %v4155 = vunpack.c.h.b16 %v1121
    %v4156 = vunpack.c.l.b16 %v1122
    %v4157 = vunpack.c.h.b16 %v1122
    %v4158 = vunpack.c.l.b16 %v1123
    %v4159 = vunpack.c.h.b16 %v1123
    %v4160 = vunpack.c.l.b16 %v1124
    %v4161 = vunpack.c.h.b16 %v1124
    %v4162 = vunpack.c.l.b16 %v1125
    %v4163 = vunpack.c.h.b16 %v1125
    %v4164 = vunpack.c.l.b16 %v1126
    %v4165 = vunpack.c.h.b16 %v1126
    %v4166 = vunpack.c.l.b16 %v1127
    %v4167 = vunpack.c.h.b16 %v1127
    %v4168 = vunpack.c.l.b16 %v1128
    %v4169 = vunpack.c.h.b16 %v1128
    %v4170 = vunpack.c.l.b16 %v1129
    %v4171 = vunpack.c.h.b16 %v1129
    %v4172 = vunpack.c.l.b16 %v1130
    %v4173 = vunpack.c.h.b16 %v1130
    %v4174 = vunpack.c.l.b16 %v1131
    %v4175 = vunpack.c.h.b16 %v1131
    %v4176 = vunpack.c.l.b16 %v1132
    %v4177 = vunpack.c.h.b16 %v1132
    %v4178 = vunpack.c.l.b16 %v1133
    %v4179 = vunpack.c.h.b16 %v1133
    %v4180 = vunpack.c.l.b16 %v1134
    %v4181 = vunpack.c.h.b16 %v1134
    %v4182 = vunpack.c.l.b16 %v1135
    %v4183 = vunpack.c.h.b16 %v1135
    %v4184 = vunpack.c.l.b16 %v1136
    %v4185 = vunpack.c.h.b16 %v1136
    %v4186 = vunpack.c.l.b16 %v1137
    %v4187 = vunpack.c.h.b16 %v1137
    %v4188 = vunpack.c.l.b16 %v1138
    %v4189 = vunpack.c.h.b16 %v1138
    %v4190 = vunpack.c.l.b16 %v1139
    %v4191 = vunpack.c.h.b16 %v1139
    %v4192 = vunpack.c.l.b16 %v1140
    %v4193 = vunpack.c.h.b16 %v1140
    %v4194 = vunpack.c.l.b16 %v1141
    %v4195 = vunpack.c.h.b16 %v1141
    %v4196 = vunpack.c.l.b16 %v1142
    %v4197 = vunpack.c.h.b16 %v1142
    %v4198 = vunpack.c.l.b16 %v1143
    %v4199 = vunpack.c.h.b16 %v1143
    %v4200 = vunpack.c.l.b16 %v1144
    %v4201 = vunpack.c.h.b16 %v1144
    %v4202 = vunpack.c.l.b16 %v1145
    %v4203 = vunpack.c.h.b16 %v1145
    %v4204 = vunpack.c.l.b16 %v1146
    %v4205 = vunpack.c.h.b16 %v1146
    %v4206 = vunpack.c.l.b16 %v1147
    %v4207 = vunpack.c.h.b16 %v1147
    %v4208 = vunpack.c.l.b16 %v1148
    %v4209 = vunpack.c.h.b16 %v1148
    %v4210 = vunpack.c.l.b16 %v1149
    %v4211 = vunpack.c.h.b16 %v1149
    %v4212 = vunpack.c.l.b16 %v1150
    %v4213 = vunpack.c.h.b16 %v1150
    %v4214 = vunpack.c.l.b16 %v1151
    %v4215 = vunpack.c.h.b16 %v1151
    %v4216 = vunpack.c.l.b16 %v1152
    %v4217 = vunpack.c.h.b16 %v1152
    %v4218 = vunpack.c.l.b16 %v1153
    %v4219 = vunpack.c.h.b16 %v1153
    %v4220 = vunpack.c.l.b16 %v1154
    %v4221 = vunpack.c.h.b16 %v1154
    %v4222 = vunpack.c.l.b16 %v1155
    %v4223 = vunpack.c.h.b16 %v1155
    %v4224 = vunpack.c.l.b16 %v1156
    %v4225 = vunpack.c.h.b16 %v1156
    %v4226 = vunpack.c.l.b16 %v1157
    %v4227 = vunpack.c.h.b16 %v1157
    %v4228 = vunpack.c.l.b16 %v1158
    %v4229 = vunpack.c.h.b16 %v1158
    %v4230 = vunpack.c.l.b16 %v1159
    %v4231 = vunpack.c.h.b16 %v1159
    %v4232 = vunpack.c.l.b16 %v1160
    %v4233 = vunpack.c.h.b16 %v1160
    %v4234 = vunpack.c.l.b16 %v1161
    %v4235 = vunpack.c.h.b16 %v1161
    %v4236 = vunpack.c.l.b16 %v1162
    %v4237 = vunpack.c.h.b16 %v1162
    %v4238 = vunpack.c.l.b16 %v1163
    %v4239 = vunpack.c.h.b16 %v1163
    %v4240 = vunpack.c.l.b16 %v1164
    %v4241 = vunpack.c.h.b16 %v1164
    %v4242 = vunpack.c.l.b16 %v1165
    %v4243 = vunpack.c.h.b16 %v1165
    %v4244 = vunpack.c.l.b16 %v1166
    %v4245 = vunpack.c.h.b16 %v1166
    %v4246 = vunpack.c.l.b16 %v1167
    %v4247 = vunpack.c.h.b16 %v1167
    %v4248 = vunpack.c.l.b16 %v1168
    %v4249 = vunpack.c.h.b16 %v1168
    %v4250 = vunpack.c.l.b16 %v1169
    %v4251 = vunpack.c.h.b16 %v1169
    %v4252 = vunpack.c.l.b16 %v1170
    %v4253 = vunpack.c.h.b16 %v1170
    %v4254 = vunpack.c.l.b16 %v1171
    %v4255 = vunpack.c.h.b16 %v1171
    %v4256 = vunpack.c.l.b16 %v1172
    %v4257 = vunpack.c.h.b16 %v1172
    %v4258 = vunpack.c.l.b16 %v1173
    %v4259 = vunpack.c.h.b16 %v1173
    %v4260 = vunpack.c.l.b16 %v1174
    %v4261 = vunpack.c.h.b16 %v1174
    %v4262 = vunpack.c.l.b16 %v1175
    %v4263 = vunpack.c.h.b16 %v1175
    %v4264 = vunpack.c.l.b16 %v1176
    %v4265 = vunpack.c.h.b16 %v1176
    %v4266 = vunpack.c.l.b16 %v1177
    %v4267 = vunpack.c.h.b16 %v1177
    %v4268 = vunpack.c.l.b16 %v1178
    %v4269 = vunpack.c.h.b16 %v1178
    %v4270 = vunpack.c.l.b16 %v1179
    %v4271 = vunpack.c.h.b16 %v1179
    %v4272 = vunpack.c.l.b16 %v1180
    %v4273 = vunpack.c.h.b16 %v1180
    %v4274 = vunpack.c.l.b16 %v1181
    %v4275 = vunpack.c.h.b16 %v1181
    %v4276 = vunpack.c.l.b16 %v1182
    %v4277 = vunpack.c.h.b16 %v1182
    %v4278 = vunpack.c.l.b16 %v1183
    %v4279 = vunpack.c.h.b16 %v1183
    %v4280 = vunpack.c.l.b16 %v1184
    %v4281 = vunpack.c.h.b16 %v1184
    %v4282 = vunpack.c.l.b16 %v1185
    %v4283 = vunpack.c.h.b16 %v1185
    %v4284 = vunpack.c.l.b16 %v1186
    %v4285 = vunpack.c.h.b16 %v1186
    %v4286 = vunpack.c.l.b16 %v1187
    %v4287 = vunpack.c.h.b16 %v1187
    %v4288 = vunpack.c.l.b16 %v1188
    %v4289 = vunpack.c.h.b16 %v1188
    %v4290 = vunpack.c.l.b16 %v1189
    %v4291 = vunpack.c.h.b16 %v1189
    %v4292 = vunpack.c.l.b16 %v1190
    %v4293 = vunpack.c.h.b16 %v1190
    %v4294 = vunpack.c.l.b16 %v1191
    %v4295 = vunpack.c.h.b16 %v1191
    %v4296 = vunpack.c.l.b16 %v1192
    %v4297 = vunpack.c.h.b16 %v1192
    %v4298 = vunpack.c.l.b16 %v1193
    %v4299 = vunpack.c.h.b16 %v1193
    %v4300 = vunpack.c.l.b16 %v1194
    %v4301 = vunpack.c.h.b16 %v1194
    %v4302 = vunpack.c.l.b16 %v1195
    %v4303 = vunpack.c.h.b16 %v1195
    %v4304 = vunpack.c.l.b16 %v1196
    %v4305 = vunpack.c.h.b16 %v1196
    %v4306 = vunpack.c.l.b16 %v1197
    %v4307 = vunpack.c.h.b16 %v1197
    %v4308 = vunpack.c.l.b16 %v1198
    %v4309 = vunpack.c.h.b16 %v1198
    %v4310 = vunpack.c.l.b16 %v1199
    %v4311 = vunpack.c.h.b16 %v1199
    %v4312 = vunpack.c.l.b16 %v1200
    %v4313 = vunpack.c.h.b16 %v1200
    %v4314 = vunpack.c.l.b16 %v1201
    %v4315 = vunpack.c.h.b16 %v1201
    %v4316 = vpack.c.b16 %v2276, %v2268
    %v4317 = vpack.c.b16 %v2277, %v2269
    %v4318 = vpack.c.b16 %v2278, %v2270
    %v4319 = vpack.c.b16 %v2279, %v2271
    %v4320 = vpack.c.b16 %v2280, %v2272
    %v4321 = vpack.c.b16 %v2281, %v2273
    %v4322 = vpack.c.b16 %v2282, %v2274
    %v4323 = vpack.c.b16 %v2283, %v2275
    %v4324 = vpack.c.b16 %v2292, %v2284
    %v4325 = vpack.c.b16 %v2293, %v2285
    %v4326 = vpack.c.b16 %v2294, %v2286
    %v4327 = vpack.c.b16 %v2295, %v2287
    %v4328 = vpack.c.b16 %v2296, %v2288
    %v4329 = vpack.c.b16 %v2297, %v2289
    %v4330 = vpack.c.b16 %v2298, %v2290
    %v4331 = vpack.c.b16 %v2299, %v2291
    %v4332 = vpack.c.b16 %v2308, %v2300
    %v4333 = vpack.c.b16 %v2309, %v2301
    %v4334 = vpack.c.b16 %v2310, %v2302
    %v4335 = vpack.c.b16 %v2311, %v2303
    %v4336 = vpack.c.b16 %v2312, %v2304
    %v4337 = vpack.c.b16 %v2313, %v2305
    %v4338 = vpack.c.b16 %v2314, %v2306
    %v4339 = vpack.c.b16 %v2315, %v2307
    %v4340 = vpack.c.b16 %v2324, %v2316
    %v4341 = vpack.c.b16 %v2325, %v2317
    %v4342 = vpack.c.b16 %v2326, %v2318
    %v4343 = vpack.c.b16 %v2327, %v2319
    %v4344 = vpack.c.b16 %v2328, %v2320
    %v4345 = vpack.c.b16 %v2329, %v2321
    %v4346 = vpack.c.b16 %v2330, %v2322
    %v4347 = vpack.c.b16 %v2331, %v2323
    %v4348 = vpack.c.b16 %v2340, %v2332
    %v4349 = vpack.c.b16 %v2341, %v2333
    %v4350 = vpack.c.b16 %v2342, %v2334
    %v4351 = vpack.c.b16 %v2343, %v2335
    %v4352 = vpack.c.b16 %v2344, %v2336
    %v4353 = vpack.c.b16 %v2345, %v2337
    %v4354 = vpack.c.b16 %v2346, %v2338
    %v4355 = vpack.c.b16 %v2347, %v2339
    %v4356 = vpack.c.b16 %v2356, %v2348
    %v4357 = vpack.c.b16 %v2357, %v2349
    %v4358 = vpack.c.b16 %v2358, %v2350
    %v4359 = vpack.c.b16 %v2359, %v2351
    %v4360 = vpack.c.b16 %v2360, %v2352
    %v4361 = vpack.c.b16 %v2361, %v2353
    %v4362 = vpack.c.b16 %v2362, %v2354
    %v4363 = vpack.c.b16 %v2363, %v2355
    %v4364 = vpack.c.b16 %v2372, %v2364
    %v4365 = vpack.c.b16 %v2373, %v2365
    %v4366 = vpack.c.b16 %v2374, %v2366
    %v4367 = vpack.c.b16 %v2375, %v2367
    %v4368 = vpack.c.b16 %v2376, %v2368
    %v4369 = vpack.c.b16 %v2377, %v2369
    %v4370 = vpack.c.b16 %v2378, %v2370
    %v4371 = vpack.c.b16 %v2379, %v2371
    %v4372 = vpack.c.b16 %v2388, %v2380
    %v4373 = vpack.c.b16 %v2389, %v2381
    %v4374 = vpack.c.b16 %v2390, %v2382
    %v4375 = vpack.c.b16 %v2391, %v2383
    %v4376 = vpack.c.b16 %v2392, %v2384
    %v4377 = vpack.c.b16 %v2393, %v2385
    %v4378 = vpack.c.b16 %v2394, %v2386
    %v4379 = vpack.c.b16 %v2395, %v2387
    %v4380 = vpack.c.b16 %v2404, %v2396
    %v4381 = vpack.c.b16 %v2405, %v2397
    %v4382 = vpack.c.b16 %v2406, %v2398
    %v4383 = vpack.c.b16 %v2407, %v2399
    %v4384 = vpack.c.b16 %v2408, %v2400
    %v4385 = vpack.c.b16 %v2409, %v2401
    %v4386 = vpack.c.b16 %v2410, %v2402
    %v4387 = vpack.c.b16 %v2411, %v2403
    %v4388 = vpack.c.b16 %v2420, %v2412
    %v4389 = vpack.c.b16 %v2421, %v2413
    %v4390 = vpack.c.b16 %v2422, %v2414
    %v4391 = vpack.c.b16 %v2423, %v2415
    %v4392 = vpack.c.b16 %v2424, %v2416
    %v4393 = vpack.c.b16 %v2425, %v2417
    %v4394 = vpack.c.b16 %v2426, %v2418
    %v4395 = vpack.c.b16 %v2427, %v2419
    %v4396 = vpack.c.b16 %v2436, %v2428
    %v4397 = vpack.c.b16 %v2437, %v2429
    %v4398 = vpack.c.b16 %v2438, %v2430
    %v4399 = vpack.c.b16 %v2439, %v2431
    %v4400 = vpack.c.b16 %v2440, %v2432
    %v4401 = vpack.c.b16 %v2441, %v2433
    %v4402 = vpack.c.b16 %v2442, %v2434
    %v4403 = vpack.c.b16 %v2443, %v2435
    %v4404 = vpack.c.b16 %v2452, %v2444
    %v4405 = vpack.c.b16 %v2453, %v2445
    %v4406 = vpack.c.b16 %v2454, %v2446
    %v4407 = vpack.c.b16 %v2455, %v2447
    %v4408 = vpack.c.b16 %v2456, %v2448
    %v4409 = vpack.c.b16 %v2457, %v2449
    %v4410 = vpack.c.b16 %v2458, %v2450
    %v4411 = vpack.c.b16 %v2459, %v2451
    %v4412 = vpack.c.b16 %v2468, %v2460
    %v4413 = vpack.c.b16 %v2469, %v2461
    %v4414 = vpack.c.b16 %v2470, %v2462
    %v4415 = vpack.c.b16 %v2471, %v2463
    %v4416 = vpack.c.b16 %v2472, %v2464
    %v4417 = vpack.c.b16 %v2473, %v2465
    %v4418 = vpack.c.b16 %v2474, %v2466
    %v4419 = vpack.c.b16 %v2475, %v2467
    %v4420 = vpack.c.b16 %v2484, %v2476
    %v4421 = vpack.c.b16 %v2485, %v2477
    %v4422 = vpack.c.b16 %v2486, %v2478
    %v4423 = vpack.c.b16 %v2487, %v2479
    %v4424 = vpack.c.b16 %v2488, %v2480
    %v4425 = vpack.c.b16 %v2489, %v2481
    %v4426 = vpack.c.b16 %v2490, %v2482
    %v4427 = vpack.c.b16 %v2491, %v2483
    %v4428 = vpack.c.b16 %v2500, %v2492
    %v4429 = vpack.c.b16 %v2501, %v2493
    %v4430 = vpack.c.b16 %v2502, %v2494
    %v4431 = vpack.c.b16 %v2503, %v2495
    %v4432 = vpack.c.b16 %v2504, %v2496
    %v4433 = vpack.c.b16 %v2505, %v2497
    %v4434 = vpack.c.b16 %v2506, %v2498
    %v4435 = vpack.c.b16 %v2507, %v2499
    %v4436 = vpack.c.b16 %v2516, %v2508
    %v4437 = vpack.c.b16 %v2517, %v2509
    %v4438 = vpack.c.b16 %v2518, %v2510
    %v4439 = vpack.c.b16 %v2519, %v2511
    %v4440 = vpack.c.b16 %v2520, %v2512
    %v4441 = vpack.c.b16 %v2521, %v2513
    %v4442 = vpack.c.b16 %v2522, %v2514
    %v4443 = vpack.c.b16 %v2523, %v2515
    %v4444 = vpack.c.b16 %v2532, %v2524
    %v4445 = vpack.c.b16 %v2533, %v2525
    %v4446 = vpack.c.b16 %v2534, %v2526
    %v4447 = vpack.c.b16 %v2535, %v2527
    %v4448 = vpack.c.b16 %v2536, %v2528
    %v4449 = vpack.c.b16 %v2537, %v2529
    %v4450 = vpack.c.b16 %v2538, %v2530
    %v4451 = vpack.c.b16 %v2539, %v2531
    %v4452 = vpack.c.b16 %v2548, %v2540
    %v4453 = vpack.c.b16 %v2549, %v2541
    %v4454 = vpack.c.b16 %v2550, %v2542
    %v4455 = vpack.c.b16 %v2551, %v2543
    %v4456 = vpack.c.b16 %v2552, %v2544
    %v4457 = vpack.c.b16 %v2553, %v2545
    %v4458 = vpack.c.b16 %v2554, %v2546
    %v4459 = vpack.c.b16 %v2555, %v2547
    %v4460 = vpack.c.b16 %v2564, %v2556
    %v4461 = vpack.c.b16 %v2565, %v2557
    %v4462 = vpack.c.b16 %v2566, %v2558
    %v4463 = vpack.c.b16 %v2567, %v2559
    %v4464 = vpack.c.b16 %v2568, %v2560
    %v4465 = vpack.c.b16 %v2569, %v2561
    %v4466 = vpack.c.b16 %v2570, %v2562
    %v4467 = vpack.c.b16 %v2571, %v2563
    %v4468 = vpack.c.b16 %v2580, %v2572
    %v4469 = vpack.c.b16 %v2581, %v2573
    %v4470 = vpack.c.b16 %v2582, %v2574
    %v4471 = vpack.c.b16 %v2583, %v2575
    %v4472 = vpack.c.b16 %v2584, %v2576
    %v4473 = vpack.c.b16 %v2585, %v2577
    %v4474 = vpack.c.b16 %v2586, %v2578
    %v4475 = vpack.c.b16 %v2587, %v2579
    %v4476 = vpack.c.b16 %v2596, %v2588
    %v4477 = vpack.c.b16 %v2597, %v2589
    %v4478 = vpack.c.b16 %v2598, %v2590
    %v4479 = vpack.c.b16 %v2599, %v2591
    %v4480 = vpack.c.b16 %v2600, %v2592
    %v4481 = vpack.c.b16 %v2601, %v2593
    %v4482 = vpack.c.b16 %v2602, %v2594
    %v4483 = vpack.c.b16 %v2603, %v2595
    %v4484 = vpack.c.b16 %v2612, %v2604
    %v4485 = vpack.c.b16 %v2613, %v2605
    %v4486 = vpack.c.b16 %v2614, %v2606
    %v4487 = vpack.c.b16 %v2615, %v2607
    %v4488 = vpack.c.b16 %v2616, %v2608
    %v4489 = vpack.c.b16 %v2617, %v2609
    %v4490 = vpack.c.b16 %v2618, %v2610
    %v4491 = vpack.c.b16 %v2619, %v2611
    %v4492 = vpack.c.b16 %v2628, %v2620
    %v4493 = vpack.c.b16 %v2629, %v2621
    %v4494 = vpack.c.b16 %v2630, %v2622
    %v4495 = vpack.c.b16 %v2631, %v2623
    %v4496 = vpack.c.b16 %v2632, %v2624
    %v4497 = vpack.c.b16 %v2633, %v2625
    %v4498 = vpack.c.b16 %v2634, %v2626
    %v4499 = vpack.c.b16 %v2635, %v2627
    %v4500 = vpack.c.b16 %v2644, %v2636
    %v4501 = vpack.c.b16 %v2645, %v2637
    %v4502 = vpack.c.b16 %v2646, %v2638
    %v4503 = vpack.c.b16 %v2647, %v2639
    %v4504 = vpack.c.b16 %v2648, %v2640
    %v4505 = vpack.c.b16 %v2649, %v2641
    %v4506 = vpack.c.b16 %v2650, %v2642
    %v4507 = vpack.c.b16 %v2651, %v2643
    %v4508 = vpack.c.b16 %v2660, %v2652
    %v4509 = vpack.c.b16 %v2661, %v2653
    %v4510 = vpack.c.b16 %v2662, %v2654
    %v4511 = vpack.c.b16 %v2663, %v2655
    %v4512 = vpack.c.b16 %v2664, %v2656
    %v4513 = vpack.c.b16 %v2665, %v2657
    %v4514 = vpack.c.b16 %v2666, %v2658
    %v4515 = vpack.c.b16 %v2667, %v2659
    %v4516 = vpack.c.b16 %v2676, %v2668
    %v4517 = vpack.c.b16 %v2677, %v2669
    %v4518 = vpack.c.b16 %v2678, %v2670
    %v4519 = vpack.c.b16 %v2679, %v2671
    %v4520 = vpack.c.b16 %v2680, %v2672
    %v4521 = vpack.c.b16 %v2681, %v2673
    %v4522 = vpack.c.b16 %v2682, %v2674
    %v4523 = vpack.c.b16 %v2683, %v2675
    %v4524 = vpack.c.b16 %v2692, %v2684
    %v4525 = vpack.c.b16 %v2693, %v2685
    %v4526 = vpack.c.b16 %v2694, %v2686
    %v4527 = vpack.c.b16 %v2695, %v2687
    %v4528 = vpack.c.b16 %v2696, %v2688
    %v4529 = vpack.c.b16 %v2697, %v2689
    %v4530 = vpack.c.b16 %v2698, %v2690
    %v4531 = vpack.c.b16 %v2699, %v2691
    %v4532 = vpack.c.b16 %v2708, %v2700
    %v4533 = vpack.c.b16 %v2709, %v2701
    %v4534 = vpack.c.b16 %v2710, %v2702
    %v4535 = vpack.c.b16 %v2711, %v2703
    %v4536 = vpack.c.b16 %v2712, %v2704
    %v4537 = vpack.c.b16 %v2713, %v2705
    %v4538 = vpack.c.b16 %v2714, %v2706
    %v4539 = vpack.c.b16 %v2715, %v2707
    %v4540 = vpack.c.b16 %v2724, %v2716
    %v4541 = vpack.c.b16 %v2725, %v2717
    %v4542 = vpack.c.b16 %v2726, %v2718
    %v4543 = vpack.c.b16 %v2727, %v2719
    %v4544 = vpack.c.b16 %v2728, %v2720
    %v4545 = vpack.c.b16 %v2729, %v2721
    %v4546 = vpack.c.b16 %v2730, %v2722
    %v4547 = vpack.c.b16 %v2731, %v2723
    %v4548 = vpack.c.b16 %v2740, %v2732
    %v4549 = vpack.c.b16 %v2741, %v2733
    %v4550 = vpack.c.b16 %v2742, %v2734
    %v4551 = vpack.c.b16 %v2743, %v2735
    %v4552 = vpack.c.b16 %v2744, %v2736
    %v4553 = vpack.c.b16 %v2745, %v2737
    %v4554 = vpack.c.b16 %v2746, %v2738
    %v4555 = vpack.c.b16 %v2747, %v2739
    %v4556 = vpack.c.b16 %v2756, %v2748
    %v4557 = vpack.c.b16 %v2757, %v2749
    %v4558 = vpack.c.b16 %v2758, %v2750
    %v4559 = vpack.c.b16 %v2759, %v2751
    %v4560 = vpack.c.b16 %v2760, %v2752
    %v4561 = vpack.c.b16 %v2761, %v2753
    %v4562 = vpack.c.b16 %v2762, %v2754
    %v4563 = vpack.c.b16 %v2763, %v2755
    %v4564 = vpack.c.b16 %v2772, %v2764
    %v4565 = vpack.c.b16 %v2773, %v2765
    %v4566 = vpack.c.b16 %v2774, %v2766
    %v4567 = vpack.c.b16 %v2775, %v2767
    %v4568 = vpack.c.b16 %v2776, %v2768
    %v4569 = vpack.c.b16 %v2777, %v2769
    %v4570 = vpack.c.b16 %v2778, %v2770
    %v4571 = vpack.c.b16 %v2779, %v2771
    %v4572 = vpack.c.b16 %v2788, %v2780
    %v4573 = vpack.c.b16 %v2789, %v2781
    %v4574 = vpack.c.b16 %v2790, %v2782
    %v4575 = vpack.c.b16 %v2791, %v2783
    %v4576 = vpack.c.b16 %v2792, %v2784
    %v4577 = vpack.c.b16 %v2793, %v2785
    %v4578 = vpack.c.b16 %v2794, %v2786
    %v4579 = vpack.c.b16 %v2795, %v2787
    %v4580 = vpack.c.b16 %v2804, %v2796
    %v4581 = vpack.c.b16 %v2805, %v2797
    %v4582 = vpack.c.b16 %v2806, %v2798
    %v4583 = vpack.c.b16 %v2807, %v2799
    %v4584 = vpack.c.b16 %v2808, %v2800
    %v4585 = vpack.c.b16 %v2809, %v2801
    %v4586 = vpack.c.b16 %v2810, %v2802
    %v4587 = vpack.c.b16 %v2811, %v2803
    %v4588 = vpack.c.b16 %v2820, %v2812
    %v4589 = vpack.c.b16 %v2821, %v2813
    %v4590 = vpack.c.b16 %v2822, %v2814
    %v4591 = vpack.c.b16 %v2823, %v2815
    %v4592 = vpack.c.b16 %v2824, %v2816
    %v4593 = vpack.c.b16 %v2825, %v2817
    %v4594 = vpack.c.b16 %v2826, %v2818
    %v4595 = vpack.c.b16 %v2827, %v2819
    %v4596 = vpack.c.b16 %v2836, %v2828
    %v4597 = vpack.c.b16 %v2837, %v2829
    %v4598 = vpack.c.b16 %v2838, %v2830
    %v4599 = vpack.c.b16 %v2839, %v2831
    %v4600 = vpack.c.b16 %v2840, %v2832
    %v4601 = vpack.c.b16 %v2841, %v2833
    %v4602 = vpack.c.b16 %v2842, %v2834
    %v4603 = vpack.c.b16 %v2843, %v2835
    %v4604 = vpack.c.b16 %v2852, %v2844
    %v4605 = vpack.c.b16 %v2853, %v2845
    %v4606 = vpack.c.b16 %v2854, %v2846
    %v4607 = vpack.c.b16 %v2855, %v2847
    %v4608 = vpack.c.b16 %v2856, %v2848
    %v4609 = vpack.c.b16 %v2857, %v2849
    %v4610 = vpack.c.b16 %v2858, %v2850
    %v4611 = vpack.c.b16 %v2859, %v2851
    %v4612 = vpack.c.b16 %v2868, %v2860
    %v4613 = vpack.c.b16 %v2869, %v2861
    %v4614 = vpack.c.b16 %v2870, %v2862
    %v4615 = vpack.c.b16 %v2871, %v2863
    %v4616 = vpack.c.b16 %v2872, %v2864
    %v4617 = vpack.c.b16 %v2873, %v2865
    %v4618 = vpack.c.b16 %v2874, %v2866
    %v4619 = vpack.c.b16 %v2875, %v2867
    %v4620 = vpack.c.b16 %v2884, %v2876
    %v4621 = vpack.c.b16 %v2885, %v2877
    %v4622 = vpack.c.b16 %v2886, %v2878
    %v4623 = vpack.c.b16 %v2887, %v2879
    %v4624 = vpack.c.b16 %v2888, %v2880
    %v4625 = vpack.c.b16 %v2889, %v2881
    %v4626 = vpack.c.b16 %v2890, %v2882
    %v4627 = vpack.c.b16 %v2891, %v2883
    %v4628 = vpack.c.b16 %v2900, %v2892
    %v4629 = vpack.c.b16 %v2901, %v2893
    %v4630 = vpack.c.b16 %v2902, %v2894
    %v4631 = vpack.c.b16 %v2903, %v2895
    %v4632 = vpack.c.b16 %v2904, %v2896
    %v4633 = vpack.c.b16 %v2905, %v2897
    %v4634 = vpack.c.b16 %v2906, %v2898
    %v4635 = vpack.c.b16 %v2907, %v2899
    %v4636 = vpack.c.b16 %v2916, %v2908
    %v4637 = vpack.c.b16 %v2917, %v2909
    %v4638 = vpack.c.b16 %v2918, %v2910
    %v4639 = vpack.c.b16 %v2919, %v2911
    %v4640 = vpack.c.b16 %v2920, %v2912
    %v4641 = vpack.c.b16 %v2921, %v2913
    %v4642 = vpack.c.b16 %v2922, %v2914
    %v4643 = vpack.c.b16 %v2923, %v2915
    %v4644 = vpack.c.b16 %v2932, %v2924
    %v4645 = vpack.c.b16 %v2933, %v2925
    %v4646 = vpack.c.b16 %v2934, %v2926
    %v4647 = vpack.c.b16 %v2935, %v2927
    %v4648 = vpack.c.b16 %v2936, %v2928
    %v4649 = vpack.c.b16 %v2937, %v2929
    %v4650 = vpack.c.b16 %v2938, %v2930
    %v4651 = vpack.c.b16 %v2939, %v2931
    %v4652 = vpack.c.b16 %v2948, %v2940
    %v4653 = vpack.c.b16 %v2949, %v2941
    %v4654 = vpack.c.b16 %v2950, %v2942
    %v4655 = vpack.c.b16 %v2951, %v2943
    %v4656 = vpack.c.b16 %v2952, %v2944
    %v4657 = vpack.c.b16 %v2953, %v2945
    %v4658 = vpack.c.b16 %v2954, %v2946
    %v4659 = vpack.c.b16 %v2955, %v2947
    %v4660 = vpack.c.b16 %v2964, %v2956
    %v4661 = vpack.c.b16 %v2965, %v2957
    %v4662 = vpack.c.b16 %v2966, %v2958
    %v4663 = vpack.c.b16 %v2967, %v2959
    %v4664 = vpack.c.b16 %v2968, %v2960
    %v4665 = vpack.c.b16 %v2969, %v2961
    %v4666 = vpack.c.b16 %v2970, %v2962
    %v4667 = vpack.c.b16 %v2971, %v2963
    %v4668 = vpack.c.b16 %v2980, %v2972
    %v4669 = vpack.c.b16 %v2981, %v2973
    %v4670 = vpack.c.b16 %v2982, %v2974
    %v4671 = vpack.c.b16 %v2983, %v2975
    %v4672 = vpack.c.b16 %v2984, %v2976
    %v4673 = vpack.c.b16 %v2985, %v2977
    %v4674 = vpack.c.b16 %v2986, %v2978
    %v4675 = vpack.c.b16 %v2987, %v2979
    %v4676 = vpack.c.b16 %v2996, %v2988
    %v4677 = vpack.c.b16 %v2997, %v2989
    %v4678 = vpack.c.b16 %v2998, %v2990
    %v4679 = vpack.c.b16 %v2999, %v2991
    %v4680 = vpack.c.b16 %v3000, %v2992
    %v4681 = vpack.c.b16 %v3001, %v2993
    %v4682 = vpack.c.b16 %v3002, %v2994
    %v4683 = vpack.c.b16 %v3003, %v2995
    %v4684 = vpack.c.b16 %v3012, %v3004
    %v4685 = vpack.c.b16 %v3013, %v3005
    %v4686 = vpack.c.b16 %v3014, %v3006
    %v4687 = vpack.c.b16 %v3015, %v3007
    %v4688 = vpack.c.b16 %v3016, %v3008
    %v4689 = vpack.c.b16 %v3017, %v3009
    %v4690 = vpack.c.b16 %v3018, %v3010
    %v4691 = vpack.c.b16 %v3019, %v3011
    %v4692 = vpack.c.b16 %v3028, %v3020
    %v4693 = vpack.c.b16 %v3029, %v3021
    %v4694 = vpack.c.b16 %v3030, %v3022
    %v4695 = vpack.c.b16 %v3031, %v3023
    %v4696 = vpack.c.b16 %v3032, %v3024
    %v4697 = vpack.c.b16 %v3033, %v3025
    %v4698 = vpack.c.b16 %v3034, %v3026
    %v4699 = vpack.c.b16 %v3035, %v3027
    %v4700 = vpack.c.b16 %v3044, %v3036
    %v4701 = vpack.c.b16 %v3045, %v3037
    %v4702 = vpack.c.b16 %v3046, %v3038
    %v4703 = vpack.c.b16 %v3047, %v3039
    %v4704 = vpack.c.b16 %v3048, %v3040
    %v4705 = vpack.c.b16 %v3049, %v3041
    %v4706 = vpack.c.b16 %v3050, %v3042
    %v4707 = vpack.c.b16 %v3051, %v3043
    %v4708 = vpack.c.b16 %v3060, %v3052
    %v4709 = vpack.c.b16 %v3061, %v3053
    %v4710 = vpack.c.b16 %v3062, %v3054
    %v4711 = vpack.c.b16 %v3063, %v3055
    %v4712 = vpack.c.b16 %v3064, %v3056
    %v4713 = vpack.c.b16 %v3065, %v3057
    %v4714 = vpack.c.b16 %v3066, %v3058
    %v4715 = vpack.c.b16 %v3067, %v3059
    %v4716 = vpack.c.b16 %v3076, %v3068
    %v4717 = vpack.c.b16 %v3077, %v3069
    %v4718 = vpack.c.b16 %v3078, %v3070
    %v4719 = vpack.c.b16 %v3079, %v3071
    %v4720 = vpack.c.b16 %v3080, %v3072
    %v4721 = vpack.c.b16 %v3081, %v3073
    %v4722 = vpack.c.b16 %v3082, %v3074
    %v4723 = vpack.c.b16 %v3083, %v3075
    %v4724 = vpack.c.b16 %v3092, %v3084
    %v4725 = vpack.c.b16 %v3093, %v3085
    %v4726 = vpack.c.b16 %v3094, %v3086
    %v4727 = vpack.c.b16 %v3095, %v3087
    %v4728 = vpack.c.b16 %v3096, %v3088
    %v4729 = vpack.c.b16 %v3097, %v3089
    %v4730 = vpack.c.b16 %v3098, %v3090
    %v4731 = vpack.c.b16 %v3099, %v3091
    %v4732 = vpack.c.b16 %v3108, %v3100
    %v4733 = vpack.c.b16 %v3109, %v3101
    %v4734 = vpack.c.b16 %v3110, %v3102
    %v4735 = vpack.c.b16 %v3111, %v3103
    %v4736 = vpack.c.b16 %v3112, %v3104
    %v4737 = vpack.c.b16 %v3113, %v3105
    %v4738 = vpack.c.b16 %v3114, %v3106
    %v4739 = vpack.c.b16 %v3115, %v3107
    %v4740 = vpack.c.b16 %v3124, %v3116
    %v4741 = vpack.c.b16 %v3125, %v3117
    %v4742 = vpack.c.b16 %v3126, %v3118
    %v4743 = vpack.c.b16 %v3127, %v3119
    %v4744 = vpack.c.b16 %v3128, %v3120
    %v4745 = vpack.c.b16 %v3129, %v3121
    %v4746 = vpack.c.b16 %v3130, %v3122
    %v4747 = vpack.c.b16 %v3131, %v3123
    %v4748 = vpack.c.b16 %v3140, %v3132
    %v4749 = vpack.c.b16 %v3141, %v3133
    %v4750 = vpack.c.b16 %v3142, %v3134
    %v4751 = vpack.c.b16 %v3143, %v3135
    %v4752 = vpack.c.b16 %v3144, %v3136
    %v4753 = vpack.c.b16 %v3145, %v3137
    %v4754 = vpack.c.b16 %v3146, %v3138
    %v4755 = vpack.c.b16 %v3147, %v3139
    %v4756 = vpack.c.b16 %v3156, %v3148
    %v4757 = vpack.c.b16 %v3157, %v3149
    %v4758 = vpack.c.b16 %v3158, %v3150
    %v4759 = vpack.c.b16 %v3159, %v3151
    %v4760 = vpack.c.b16 %v3160, %v3152
    %v4761 = vpack.c.b16 %v3161, %v3153
    %v4762 = vpack.c.b16 %v3162, %v3154
    %v4763 = vpack.c.b16 %v3163, %v3155
    %v4764 = vpack.c.b16 %v3172, %v3164
    %v4765 = vpack.c.b16 %v3173, %v3165
    %v4766 = vpack.c.b16 %v3174, %v3166
    %v4767 = vpack.c.b16 %v3175, %v3167
    %v4768 = vpack.c.b16 %v3176, %v3168
    %v4769 = vpack.c.b16 %v3177, %v3169
    %v4770 = vpack.c.b16 %v3178, %v3170
    %v4771 = vpack.c.b16 %v3179, %v3171
    %v4772 = vpack.c.b16 %v3188, %v3180
    %v4773 = vpack.c.b16 %v3189, %v3181
    %v4774 = vpack.c.b16 %v3190, %v3182
    %v4775 = vpack.c.b16 %v3191, %v3183
    %v4776 = vpack.c.b16 %v3192, %v3184
    %v4777 = vpack.c.b16 %v3193, %v3185
    %v4778 = vpack.c.b16 %v3194, %v3186
    %v4779 = vpack.c.b16 %v3195, %v3187
    %v4780 = vpack.c.b16 %v3204, %v3196
    %v4781 = vpack.c.b16 %v3205, %v3197
    %v4782 = vpack.c.b16 %v3206, %v3198
    %v4783 = vpack.c.b16 %v3207, %v3199
    %v4784 = vpack.c.b16 %v3208, %v3200
    %v4785 = vpack.c.b16 %v3209, %v3201
    %v4786 = vpack.c.b16 %v3210, %v3202
    %v4787 = vpack.c.b16 %v3211, %v3203
    %v4788 = vpack.c.b16 %v3220, %v3212
    %v4789 = vpack.c.b16 %v3221, %v3213
    %v4790 = vpack.c.b16 %v3222, %v3214
    %v4791 = vpack.c.b16 %v3223, %v3215
    %v4792 = vpack.c.b16 %v3224, %v3216
    %v4793 = vpack.c.b16 %v3225, %v3217
    %v4794 = vpack.c.b16 %v3226, %v3218
    %v4795 = vpack.c.b16 %v3227, %v3219
    %v4796 = vpack.c.b16 %v3236, %v3228
    %v4797 = vpack.c.b16 %v3237, %v3229
    %v4798 = vpack.c.b16 %v3238, %v3230
    %v4799 = vpack.c.b16 %v3239, %v3231
    %v4800 = vpack.c.b16 %v3240, %v3232
    %v4801 = vpack.c.b16 %v3241, %v3233
    %v4802 = vpack.c.b16 %v3242, %v3234
    %v4803 = vpack.c.b16 %v3243, %v3235
    %v4804 = vpack.c.b16 %v3252, %v3244
    %v4805 = vpack.c.b16 %v3253, %v3245
    %v4806 = vpack.c.b16 %v3254, %v3246
    %v4807 = vpack.c.b16 %v3255, %v3247
    %v4808 = vpack.c.b16 %v3256, %v3248
    %v4809 = vpack.c.b16 %v3257, %v3249
    %v4810 = vpack.c.b16 %v3258, %v3250
    %v4811 = vpack.c.b16 %v3259, %v3251
    %v4812 = vpack.c.b16 %v3268, %v3260
    %v4813 = vpack.c.b16 %v3269, %v3261
    %v4814 = vpack.c.b16 %v3270, %v3262
    %v4815 = vpack.c.b16 %v3271, %v3263
    %v4816 = vpack.c.b16 %v3272, %v3264
    %v4817 = vpack.c.b16 %v3273, %v3265
    %v4818 = vpack.c.b16 %v3274, %v3266
    %v4819 = vpack.c.b16 %v3275, %v3267
    %v4820 = vpack.c.b16 %v3284, %v3276
    %v4821 = vpack.c.b16 %v3285, %v3277
    %v4822 = vpack.c.b16 %v3286, %v3278
    %v4823 = vpack.c.b16 %v3287, %v3279
    %v4824 = vpack.c.b16 %v3288, %v3280
    %v4825 = vpack.c.b16 %v3289, %v3281
    %v4826 = vpack.c.b16 %v3290, %v3282
    %v4827 = vpack.c.b16 %v3291, %v3283
    %v4828 = vpack.c.b16 %v3300, %v3292
    %v4829 = vpack.c.b16 %v3301, %v3293
    %v4830 = vpack.c.b16 %v3302, %v3294
    %v4831 = vpack.c.b16 %v3303, %v3295
    %v4832 = vpack.c.b16 %v3304, %v3296
    %v4833 = vpack.c.b16 %v3305, %v3297
    %v4834 = vpack.c.b16 %v3306, %v3298
    %v4835 = vpack.c.b16 %v3307, %v3299
    %v4836 = vpack.c.b16 %v3316, %v3308
    %v4837 = vpack.c.b16 %v3317, %v3309
    %v4838 = vpack.c.b16 %v3318, %v3310
    %v4839 = vpack.c.b16 %v3319, %v3311
    %v4840 = vpack.c.b16 %v3320, %v3312
    %v4841 = vpack.c.b16 %v3321, %v3313
    %v4842 = vpack.c.b16 %v3322, %v3314
    %v4843 = vpack.c.b16 %v3323, %v3315
    %v4844 = vpack.c.b16 %v3332, %v3324
    %v4845 = vpack.c.b16 %v3333, %v3325
    %v4846 = vpack.c.b16 %v3334, %v3326
    %v4847 = vpack.c.b16 %v3335, %v3327
    %v4848 = vpack.c.b16 %v3336, %v3328
    %v4849 = vpack.c.b16 %v3337, %v3329
    %v4850 = vpack.c.b16 %v3338, %v3330
    %v4851 = vpack.c.b16 %v3339, %v3331
    %v4852 = vpack.c.b16 %v3348, %v3340
    %v4853 = vpack.c.b16 %v3349, %v3341
    %v4854 = vpack.c.b16 %v3350, %v3342
    %v4855 = vpack.c.b16 %v3351, %v3343
    %v4856 = vpack.c.b16 %v3352, %v3344
    %v4857 = vpack.c.b16 %v3353, %v3345
    %v4858 = vpack.c.b16 %v3354, %v3346
    %v4859 = vpack.c.b16 %v3355, %v3347
    %v4860 = vpack.c.b16 %v3364, %v3356
    %v4861 = vpack.c.b16 %v3365, %v3357
    %v4862 = vpack.c.b16 %v3366, %v3358
    %v4863 = vpack.c.b16 %v3367, %v3359
    %v4864 = vpack.c.b16 %v3368, %v3360
    %v4865 = vpack.c.b16 %v3369, %v3361
    %v4866 = vpack.c.b16 %v3370, %v3362
    %v4867 = vpack.c.b16 %v3371, %v3363
    %v4868 = vpack.c.b16 %v3380, %v3372
    %v4869 = vpack.c.b16 %v3381, %v3373
    %v4870 = vpack.c.b16 %v3382, %v3374
    %v4871 = vpack.c.b16 %v3383, %v3375
    %v4872 = vpack.c.b16 %v3384, %v3376
    %v4873 = vpack.c.b16 %v3385, %v3377
    %v4874 = vpack.c.b16 %v3386, %v3378
    %v4875 = vpack.c.b16 %v3387, %v3379
    %v4876 = vpack.c.b16 %v3396, %v3388
    %v4877 = vpack.c.b16 %v3397, %v3389
    %v4878 = vpack.c.b16 %v3398, %v3390
    %v4879 = vpack.c.b16 %v3399, %v3391
    %v4880 = vpack.c.b16 %v3400, %v3392
    %v4881 = vpack.c.b16 %v3401, %v3393
    %v4882 = vpack.c.b16 %v3402, %v3394
    %v4883 = vpack.c.b16 %v3403, %v3395
    %v4884 = vpack.c.b16 %v3412, %v3404
    %v4885 = vpack.c.b16 %v3413, %v3405
    %v4886 = vpack.c.b16 %v3414, %v3406
    %v4887 = vpack.c.b16 %v3415, %v3407
    %v4888 = vpack.c.b16 %v3416, %v3408
    %v4889 = vpack.c.b16 %v3417, %v3409
    %v4890 = vpack.c.b16 %v3418, %v3410
    %v4891 = vpack.c.b16 %v3419, %v3411
    %v4892 = vpack.c.b16 %v3428, %v3420
    %v4893 = vpack.c.b16 %v3429, %v3421
    %v4894 = vpack.c.b16 %v3430, %v3422
    %v4895 = vpack.c.b16 %v3431, %v3423
    %v4896 = vpack.c.b16 %v3432, %v3424
    %v4897 = vpack.c.b16 %v3433, %v3425
    %v4898 = vpack.c.b16 %v3434, %v3426
    %v4899 = vpack.c.b16 %v3435, %v3427
    %v4900 = vpack.c.b16 %v3444, %v3436
    %v4901 = vpack.c.b16 %v3445, %v3437
    %v4902 = vpack.c.b16 %v3446, %v3438
    %v4903 = vpack.c.b16 %v3447, %v3439
    %v4904 = vpack.c.b16 %v3448, %v3440
    %v4905 = vpack.c.b16 %v3449, %v3441
    %v4906 = vpack.c.b16 %v3450, %v3442
    %v4907 = vpack.c.b16 %v3451, %v3443
    %v4908 = vpack.c.b16 %v3460, %v3452
    %v4909 = vpack.c.b16 %v3461, %v3453
    %v4910 = vpack.c.b16 %v3462, %v3454
    %v4911 = vpack.c.b16 %v3463, %v3455
    %v4912 = vpack.c.b16 %v3464, %v3456
    %v4913 = vpack.c.b16 %v3465, %v3457
    %v4914 = vpack.c.b16 %v3466, %v3458
    %v4915 = vpack.c.b16 %v3467, %v3459
    %v4916 = vpack.c.b16 %v3476, %v3468
    %v4917 = vpack.c.b16 %v3477, %v3469
    %v4918 = vpack.c.b16 %v3478, %v3470
    %v4919 = vpack.c.b16 %v3479, %v3471
    %v4920 = vpack.c.b16 %v3480, %v3472
    %v4921 = vpack.c.b16 %v3481, %v3473
    %v4922 = vpack.c.b16 %v3482, %v3474
    %v4923 = vpack.c.b16 %v3483, %v3475
    %v4924 = vpack.c.b16 %v3492, %v3484
    %v4925 = vpack.c.b16 %v3493, %v3485
    %v4926 = vpack.c.b16 %v3494, %v3486
    %v4927 = vpack.c.b16 %v3495, %v3487
    %v4928 = vpack.c.b16 %v3496, %v3488
    %v4929 = vpack.c.b16 %v3497, %v3489
    %v4930 = vpack.c.b16 %v3498, %v3490
    %v4931 = vpack.c.b16 %v3499, %v3491
    %v4932 = vpack.c.b16 %v3508, %v3500
    %v4933 = vpack.c.b16 %v3509, %v3501
    %v4934 = vpack.c.b16 %v3510, %v3502
    %v4935 = vpack.c.b16 %v3511, %v3503
    %v4936 = vpack.c.b16 %v3512, %v3504
    %v4937 = vpack.c.b16 %v3513, %v3505
    %v4938 = vpack.c.b16 %v3514, %v3506
    %v4939 = vpack.c.b16 %v3515, %v3507
    %v4940 = vpack.c.b16 %v3524, %v3516
    %v4941 = vpack.c.b16 %v3525, %v3517
    %v4942 = vpack.c.b16 %v3526, %v3518
    %v4943 = vpack.c.b16 %v3527, %v3519
    %v4944 = vpack.c.b16 %v3528, %v3520
    %v4945 = vpack.c.b16 %v3529, %v3521
    %v4946 = vpack.c.b16 %v3530, %v3522
    %v4947 = vpack.c.b16 %v3531, %v3523
    %v4948 = vpack.c.b16 %v3540, %v3532
    %v4949 = vpack.c.b16 %v3541, %v3533
    %v4950 = vpack.c.b16 %v3542, %v3534
    %v4951 = vpack.c.b16 %v3543, %v3535
    %v4952 = vpack.c.b16 %v3544, %v3536
    %v4953 = vpack.c.b16 %v3545, %v3537
    %v4954 = vpack.c.b16 %v3546, %v3538
    %v4955 = vpack.c.b16 %v3547, %v3539
    %v4956 = vpack.c.b16 %v3556, %v3548
    %v4957 = vpack.c.b16 %v3557, %v3549
    %v4958 = vpack.c.b16 %v3558, %v3550
    %v4959 = vpack.c.b16 %v3559, %v3551
    %v4960 = vpack.c.b16 %v3560, %v3552
    %v4961 = vpack.c.b16 %v3561, %v3553
    %v4962 = vpack.c.b16 %v3562, %v3554
    %v4963 = vpack.c.b16 %v3563, %v3555
    %v4964 = vpack.c.b16 %v3572, %v3564
    %v4965 = vpack.c.b16 %v3573, %v3565
    %v4966 = vpack.c.b16 %v3574, %v3566
    %v4967 = vpack.c.b16 %v3575, %v3567
    %v4968 = vpack.c.b16 %v3576, %v3568
    %v4969 = vpack.c.b16 %v3577, %v3569
    %v4970 = vpack.c.b16 %v3578, %v3570
    %v4971 = vpack.c.b16 %v3579, %v3571
    %v4972 = vpack.c.b16 %v3588, %v3580
    %v4973 = vpack.c.b16 %v3589, %v3581
    %v4974 = vpack.c.b16 %v3590, %v3582
    %v4975 = vpack.c.b16 %v3591, %v3583
    %v4976 = vpack.c.b16 %v3592, %v3584
    %v4977 = vpack.c.b16 %v3593, %v3585
    %v4978 = vpack.c.b16 %v3594, %v3586
    %v4979 = vpack.c.b16 %v3595, %v3587
    %v4980 = vpack.c.b16 %v3604, %v3596
    %v4981 = vpack.c.b16 %v3605, %v3597
    %v4982 = vpack.c.b16 %v3606, %v3598
    %v4983 = vpack.c.b16 %v3607, %v3599
    %v4984 = vpack.c.b16 %v3608, %v3600
    %v4985 = vpack.c.b16 %v3609, %v3601
    %v4986 = vpack.c.b16 %v3610, %v3602
    %v4987 = vpack.c.b16 %v3611, %v3603
    %v4988 = vpack.c.b16 %v3620, %v3612
    %v4989 = vpack.c.b16 %v3621, %v3613
    %v4990 = vpack.c.b16 %v3622, %v3614
    %v4991 = vpack.c.b16 %v3623, %v3615
    %v4992 = vpack.c.b16 %v3624, %v3616
    %v4993 = vpack.c.b16 %v3625, %v3617
    %v4994 = vpack.c.b16 %v3626, %v3618
    %v4995 = vpack.c.b16 %v3627, %v3619
    %v4996 = vpack.c.b16 %v3636, %v3628
    %v4997 = vpack.c.b16 %v3637, %v3629
    %v4998 = vpack.c.b16 %v3638, %v3630
    %v4999 = vpack.c.b16 %v3639, %v3631
    %v5000 = vpack.c.b16 %v3640, %v3632
    %v5001 = vpack.c.b16 %v3641, %v3633
    %v5002 = vpack.c.b16 %v3642, %v3634
    %v5003 = vpack.c.b16 %v3643, %v3635
    %v5004 = vpack.c.b16 %v3652, %v3644
    %v5005 = vpack.c.b16 %v3653, %v3645
    %v5006 = vpack.c.b16 %v3654, %v3646
    %v5007 = vpack.c.b16 %v3655, %v3647
    %v5008 = vpack.c.b16 %v3656, %v3648
    %v5009 = vpack.c.b16 %v3657, %v3649
    %v5010 = vpack.c.b16 %v3658, %v3650
    %v5011 = vpack.c.b16 %v3659, %v3651
    %v5012 = vpack.c.b16 %v3668, %v3660
    %v5013 = vpack.c.b16 %v3669, %v3661
    %v5014 = vpack.c.b16 %v3670, %v3662
    %v5015 = vpack.c.b16 %v3671, %v3663
    %v5016 = vpack.c.b16 %v3672, %v3664
    %v5017 = vpack.c.b16 %v3673, %v3665
    %v5018 = vpack.c.b16 %v3674, %v3666
    %v5019 = vpack.c.b16 %v3675, %v3667
    %v5020 = vpack.c.b16 %v3684, %v3676
    %v5021 = vpack.c.b16 %v3685, %v3677
    %v5022 = vpack.c.b16 %v3686, %v3678
    %v5023 = vpack.c.b16 %v3687, %v3679
    %v5024 = vpack.c.b16 %v3688, %v3680
    %v5025 = vpack.c.b16 %v3689, %v3681
    %v5026 = vpack.c.b16 %v3690, %v3682
    %v5027 = vpack.c.b16 %v3691, %v3683
    %v5028 = vpack.c.b16 %v3700, %v3692
    %v5029 = vpack.c.b16 %v3701, %v3693
    %v5030 = vpack.c.b16 %v3702, %v3694
    %v5031 = vpack.c.b16 %v3703, %v3695
    %v5032 = vpack.c.b16 %v3704, %v3696
    %v5033 = vpack.c.b16 %v3705, %v3697
    %v5034 = vpack.c.b16 %v3706, %v3698
    %v5035 = vpack.c.b16 %v3707, %v3699
    %v5036 = vpack.c.b16 %v3716, %v3708
    %v5037 = vpack.c.b16 %v3717, %v3709
    %v5038 = vpack.c.b16 %v3718, %v3710
    %v5039 = vpack.c.b16 %v3719, %v3711
    %v5040 = vpack.c.b16 %v3720, %v3712
    %v5041 = vpack.c.b16 %v3721, %v3713
    %v5042 = vpack.c.b16 %v3722, %v3714
    %v5043 = vpack.c.b16 %v3723, %v3715
    %v5044 = vpack.c.b16 %v3732, %v3724
    %v5045 = vpack.c.b16 %v3733, %v3725
    %v5046 = vpack.c.b16 %v3734, %v3726
    %v5047 = vpack.c.b16 %v3735, %v3727
    %v5048 = vpack.c.b16 %v3736, %v3728
    %v5049 = vpack.c.b16 %v3737, %v3729
    %v5050 = vpack.c.b16 %v3738, %v3730
    %v5051 = vpack.c.b16 %v3739, %v3731
    %v5052 = vpack.c.b16 %v3748, %v3740
    %v5053 = vpack.c.b16 %v3749, %v3741
    %v5054 = vpack.c.b16 %v3750, %v3742
    %v5055 = vpack.c.b16 %v3751, %v3743
    %v5056 = vpack.c.b16 %v3752, %v3744
    %v5057 = vpack.c.b16 %v3753, %v3745
    %v5058 = vpack.c.b16 %v3754, %v3746
    %v5059 = vpack.c.b16 %v3755, %v3747
    %v5060 = vpack.c.b16 %v3764, %v3756
    %v5061 = vpack.c.b16 %v3765, %v3757
    %v5062 = vpack.c.b16 %v3766, %v3758
    %v5063 = vpack.c.b16 %v3767, %v3759
    %v5064 = vpack.c.b16 %v3768, %v3760
    %v5065 = vpack.c.b16 %v3769, %v3761
    %v5066 = vpack.c.b16 %v3770, %v3762
    %v5067 = vpack.c.b16 %v3771, %v3763
    %v5068 = vpack.c.b16 %v3780, %v3772
    %v5069 = vpack.c.b16 %v3781, %v3773
    %v5070 = vpack.c.b16 %v3782, %v3774
    %v5071 = vpack.c.b16 %v3783, %v3775
    %v5072 = vpack.c.b16 %v3784, %v3776
    %v5073 = vpack.c.b16 %v3785, %v3777
    %v5074 = vpack.c.b16 %v3786, %v3778
    %v5075 = vpack.c.b16 %v3787, %v3779
    %v5076 = vpack.c.b16 %v3796, %v3788
    %v5077 = vpack.c.b16 %v3797, %v3789
    %v5078 = vpack.c.b16 %v3798, %v3790
    %v5079 = vpack.c.b16 %v3799, %v3791
    %v5080 = vpack.c.b16 %v3800, %v3792
    %v5081 = vpack.c.b16 %v3801, %v3793
    %v5082 = vpack.c.b16 %v3802, %v3794
    %v5083 = vpack.c.b16 %v3803, %v3795
    %v5084 = vpack.c.b16 %v3812, %v3804
    %v5085 = vpack.c.b16 %v3813, %v3805
    %v5086 = vpack.c.b16 %v3814, %v3806
    %v5087 = vpack.c.b16 %v3815, %v3807
    %v5088 = vpack.c.b16 %v3816, %v3808
    %v5089 = vpack.c.b16 %v3817, %v3809
    %v5090 = vpack.c.b16 %v3818, %v3810
    %v5091 = vpack.c.b16 %v3819, %v3811
    %v5092 = vpack.c.b16 %v3828, %v3820
    %v5093 = vpack.c.b16 %v3829, %v3821
    %v5094 = vpack.c.b16 %v3830, %v3822
    %v5095 = vpack.c.b16 %v3831, %v3823
    %v5096 = vpack.c.b16 %v3832, %v3824
    %v5097 = vpack.c.b16 %v3833, %v3825
    %v5098 = vpack.c.b16 %v3834, %v3826
    %v5099 = vpack.c.b16 %v3835, %v3827
    %v5100 = vpack.c.b16 %v3844, %v3836
    %v5101 = vpack.c.b16 %v3845, %v3837
    %v5102 = vpack.c.b16 %v3846, %v3838
    %v5103 = vpack.c.b16 %v3847, %v3839
    %v5104 = vpack.c.b16 %v3848, %v3840
    %v5105 = vpack.c.b16 %v3849, %v3841
    %v5106 = vpack.c.b16 %v3850, %v3842
    %v5107 = vpack.c.b16 %v3851, %v3843
    %v5108 = vpack.c.b16 %v3860, %v3852
    %v5109 = vpack.c.b16 %v3861, %v3853
    %v5110 = vpack.c.b16 %v3862, %v3854
    %v5111 = vpack.c.b16 %v3863, %v3855
    %v5112 = vpack.c.b16 %v3864, %v3856
    %v5113 = vpack.c.b16 %v3865, %v3857
    %v5114 = vpack.c.b16 %v3866, %v3858
    %v5115 = vpack.c.b16 %v3867, %v3859
    %v5116 = vpack.c.b16 %v3876, %v3868
    %v5117 = vpack.c.b16 %v3877, %v3869
    %v5118 = vpack.c.b16 %v3878, %v3870
    %v5119 = vpack.c.b16 %v3879, %v3871
    %v5120 = vpack.c.b16 %v3880, %v3872
    %v5121 = vpack.c.b16 %v3881, %v3873
    %v5122 = vpack.c.b16 %v3882, %v3874
    %v5123 = vpack.c.b16 %v3883, %v3875
    %v5124 = vpack.c.b16 %v3892, %v3884
    %v5125 = vpack.c.b16 %v3893, %v3885
    %v5126 = vpack.c.b16 %v3894, %v3886
    %v5127 = vpack.c.b16 %v3895, %v3887
    %v5128 = vpack.c.b16 %v3896, %v3888
    %v5129 = vpack.c.b16 %v3897, %v3889
    %v5130 = vpack.c.b16 %v3898, %v3890
    %v5131 = vpack.c.b16 %v3899, %v3891
    %v5132 = vpack.c.b16 %v3908, %v3900
    %v5133 = vpack.c.b16 %v3909, %v3901
    %v5134 = vpack.c.b16 %v3910, %v3902
    %v5135 = vpack.c.b16 %v3911, %v3903
    %v5136 = vpack.c.b16 %v3912, %v3904
    %v5137 = vpack.c.b16 %v3913, %v3905
    %v5138 = vpack.c.b16 %v3914, %v3906
    %v5139 = vpack.c.b16 %v3915, %v3907
    %v5140 = vpack.c.b16 %v3924, %v3916
    %v5141 = vpack.c.b16 %v3925, %v3917
    %v5142 = vpack.c.b16 %v3926, %v3918
    %v5143 = vpack.c.b16 %v3927, %v3919
    %v5144 = vpack.c.b16 %v3928, %v3920
    %v5145 = vpack.c.b16 %v3929, %v3921
    %v5146 = vpack.c.b16 %v3930, %v3922
    %v5147 = vpack.c.b16 %v3931, %v3923
    %v5148 = vpack.c.b16 %v3940, %v3932
    %v5149 = vpack.c.b16 %v3941, %v3933
    %v5150 = vpack.c.b16 %v3942, %v3934
    %v5151 = vpack.c.b16 %v3943, %v3935
    %v5152 = vpack.c.b16 %v3944, %v3936
    %v5153 = vpack.c.b16 %v3945, %v3937
    %v5154 = vpack.c.b16 %v3946, %v3938
    %v5155 = vpack.c.b16 %v3947, %v3939
    %v5156 = vpack.c.b16 %v3956, %v3948
    %v5157 = vpack.c.b16 %v3957, %v3949
    %v5158 = vpack.c.b16 %v3958, %v3950
    %v5159 = vpack.c.b16 %v3959, %v3951
    %v5160 = vpack.c.b16 %v3960, %v3952
    %v5161 = vpack.c.b16 %v3961, %v3953
    %v5162 = vpack.c.b16 %v3962, %v3954
    %v5163 = vpack.c.b16 %v3963, %v3955
    %v5164 = vpack.c.b16 %v3972, %v3964
    %v5165 = vpack.c.b16 %v3973, %v3965
    %v5166 = vpack.c.b16 %v3974, %v3966
    %v5167 = vpack.c.b16 %v3975, %v3967
    %v5168 = vpack.c.b16 %v3976, %v3968
    %v5169 = vpack.c.b16 %v3977, %v3969
    %v5170 = vpack.c.b16 %v3978, %v3970
    %v5171 = vpack.c.b16 %v3979, %v3971
    %v5172 = vpack.c.b16 %v3988, %v3980
    %v5173 = vpack.c.b16 %v3989, %v3981
    %v5174 = vpack.c.b16 %v3990, %v3982
    %v5175 = vpack.c.b16 %v3991, %v3983
    %v5176 = vpack.c.b16 %v3992, %v3984
    %v5177 = vpack.c.b16 %v3993, %v3985
    %v5178 = vpack.c.b16 %v3994, %v3986
    %v5179 = vpack.c.b16 %v3995, %v3987
    %v5180 = vpack.c.b16 %v4004, %v3996
    %v5181 = vpack.c.b16 %v4005, %v3997
    %v5182 = vpack.c.b16 %v4006, %v3998
    %v5183 = vpack.c.b16 %v4007, %v3999
    %v5184 = vpack.c.b16 %v4008, %v4000
    %v5185 = vpack.c.b16 %v4009, %v4001
    %v5186 = vpack.c.b16 %v4010, %v4002
    %v5187 = vpack.c.b16 %v4011, %v4003
    %v5188 = vpack.c.b16 %v4020, %v4012
    %v5189 = vpack.c.b16 %v4021, %v4013
    %v5190 = vpack.c.b16 %v4022, %v4014
    %v5191 = vpack.c.b16 %v4023, %v4015
    %v5192 = vpack.c.b16 %v4024, %v4016
    %v5193 = vpack.c.b16 %v4025, %v4017
    %v5194 = vpack.c.b16 %v4026, %v4018
    %v5195 = vpack.c.b16 %v4027, %v4019
    %v5196 = vpack.c.b16 %v4036, %v4028
    %v5197 = vpack.c.b16 %v4037, %v4029
    %v5198 = vpack.c.b16 %v4038, %v4030
    %v5199 = vpack.c.b16 %v4039, %v4031
    %v5200 = vpack.c.b16 %v4040, %v4032
    %v5201 = vpack.c.b16 %v4041, %v4033
    %v5202 = vpack.c.b16 %v4042, %v4034
    %v5203 = vpack.c.b16 %v4043, %v4035
    %v5204 = vpack.c.b16 %v4052, %v4044
    %v5205 = vpack.c.b16 %v4053, %v4045
    %v5206 = vpack.c.b16 %v4054, %v4046
    %v5207 = vpack.c.b16 %v4055, %v4047
    %v5208 = vpack.c.b16 %v4056, %v4048
    %v5209 = vpack.c.b16 %v4057, %v4049
    %v5210 = vpack.c.b16 %v4058, %v4050
    %v5211 = vpack.c.b16 %v4059, %v4051
    %v5212 = vpack.c.b16 %v4068, %v4060
    %v5213 = vpack.c.b16 %v4069, %v4061
    %v5214 = vpack.c.b16 %v4070, %v4062
    %v5215 = vpack.c.b16 %v4071, %v4063
    %v5216 = vpack.c.b16 %v4072, %v4064
    %v5217 = vpack.c.b16 %v4073, %v4065
    %v5218 = vpack.c.b16 %v4074, %v4066
    %v5219 = vpack.c.b16 %v4075, %v4067
    %v5220 = vpack.c.b16 %v4084, %v4076
    %v5221 = vpack.c.b16 %v4085, %v4077
    %v5222 = vpack.c.b16 %v4086, %v4078
    %v5223 = vpack.c.b16 %v4087, %v4079
    %v5224 = vpack.c.b16 %v4088, %v4080
    %v5225 = vpack.c.b16 %v4089, %v4081
    %v5226 = vpack.c.b16 %v4090, %v4082
    %v5227 = vpack.c.b16 %v4091, %v4083
    %v5228 = vpack.c.b16 %v4100, %v4092
    %v5229 = vpack.c.b16 %v4101, %v4093
    %v5230 = vpack.c.b16 %v4102, %v4094
    %v5231 = vpack.c.b16 %v4103, %v4095
    %v5232 = vpack.c.b16 %v4104, %v4096
    %v5233 = vpack.c.b16 %v4105, %v4097
    %v5234 = vpack.c.b16 %v4106, %v4098
    %v5235 = vpack.c.b16 %v4107, %v4099
    %v5236 = vpack.c.b16 %v4116, %v4108
    %v5237 = vpack.c.b16 %v4117, %v4109
    %v5238 = vpack.c.b16 %v4118, %v4110
    %v5239 = vpack.c.b16 %v4119, %v4111
    %v5240 = vpack.c.b16 %v4120, %v4112
    %v5241 = vpack.c.b16 %v4121, %v4113
    %v5242 = vpack.c.b16 %v4122, %v4114
    %v5243 = vpack.c.b16 %v4123, %v4115
    %v5244 = vpack.c.b16 %v4132, %v4124
    %v5245 = vpack.c.b16 %v4133, %v4125
    %v5246 = vpack.c.b16 %v4134, %v4126
    %v5247 = vpack.c.b16 %v4135, %v4127
    %v5248 = vpack.c.b16 %v4136, %v4128
    %v5249 = vpack.c.b16 %v4137, %v4129
    %v5250 = vpack.c.b16 %v4138, %v4130
    %v5251 = vpack.c.b16 %v4139, %v4131
    %v5252 = vpack.c.b16 %v4148, %v4140
    %v5253 = vpack.c.b16 %v4149, %v4141
    %v5254 = vpack.c.b16 %v4150, %v4142
    %v5255 = vpack.c.b16 %v4151, %v4143
    %v5256 = vpack.c.b16 %v4152, %v4144
    %v5257 = vpack.c.b16 %v4153, %v4145
    %v5258 = vpack.c.b16 %v4154, %v4146
    %v5259 = vpack.c.b16 %v4155, %v4147
    %v5260 = vpack.c.b16 %v4164, %v4156
    %v5261 = vpack.c.b16 %v4165, %v4157
    %v5262 = vpack.c.b16 %v4166, %v4158
    %v5263 = vpack.c.b16 %v4167, %v4159
    %v5264 = vpack.c.b16 %v4168, %v4160
    %v5265 = vpack.c.b16 %v4169, %v4161
    %v5266 = vpack.c.b16 %v4170, %v4162
    %v5267 = vpack.c.b16 %v4171, %v4163
    %v5268 = vpack.c.b16 %v4180, %v4172
    %v5269 = vpack.c.b16 %v4181, %v4173
    %v5270 = vpack.c.b16 %v4182, %v4174
    %v5271 = vpack.c.b16 %v4183, %v4175
    %v5272 = vpack.c.b16 %v4184, %v4176
    %v5273 = vpack.c.b16 %v4185, %v4177
    %v5274 = vpack.c.b16 %v4186, %v4178
    %v5275 = vpack.c.b16 %v4187, %v4179
    %v5276 = vpack.c.b16 %v4196, %v4188
    %v5277 = vpack.c.b16 %v4197, %v4189
    %v5278 = vpack.c.b16 %v4198, %v4190
    %v5279 = vpack.c.b16 %v4199, %v4191
    %v5280 = vpack.c.b16 %v4200, %v4192
    %v5281 = vpack.c.b16 %v4201, %v4193
    %v5282 = vpack.c.b16 %v4202, %v4194
    %v5283 = vpack.c.b16 %v4203, %v4195
    %v5284 = vpack.c.b16 %v4212, %v4204
    %v5285 = vpack.c.b16 %v4213, %v4205
    %v5286 = vpack.c.b16 %v4214, %v4206
    %v5287 = vpack.c.b16 %v4215, %v4207
    %v5288 = vpack.c.b16 %v4216, %v4208
    %v5289 = vpack.c.b16 %v4217, %v4209
    %v5290 = vpack.c.b16 %v4218, %v4210
    %v5291 = vpack.c.b16 %v4219, %v4211
    %v5292 = vpack.c.b16 %v4228, %v4220
    %v5293 = vpack.c.b16 %v4229, %v4221
    %v5294 = vpack.c.b16 %v4230, %v4222
    %v5295 = vpack.c.b16 %v4231, %v4223
    %v5296 = vpack.c.b16 %v4232, %v4224
    %v5297 = vpack.c.b16 %v4233, %v4225
    %v5298 = vpack.c.b16 %v4234, %v4226
    %v5299 = vpack.c.b16 %v4235, %v4227
    %v5300 = vpack.c.b16 %v4244, %v4236
    %v5301 = vpack.c.b16 %v4245, %v4237
    %v5302 = vpack.c.b16 %v4246, %v4238
    %v5303 = vpack.c.b16 %v4247, %v4239
    %v5304 = vpack.c.b16 %v4248, %v4240
    %v5305 = vpack.c.b16 %v4249, %v4241
    %v5306 = vpack.c.b16 %v4250, %v4242
    %v5307 = vpack.c.b16 %v4251, %v4243
    %v5308 = vpack.c.b16 %v4260, %v4252
    %v5309 = vpack.c.b16 %v4261, %v4253
    %v5310 = vpack.c.b16 %v4262, %v4254
    %v5311 = vpack.c.b16 %v4263, %v4255
    %v5312 = vpack.c.b16 %v4264, %v4256
    %v5313 = vpack.c.b16 %v4265, %v4257
    %v5314 = vpack.c.b16 %v4266, %v4258
    %v5315 = vpack.c.b16 %v4267, %v4259
    %v5316 = vpack.c.b16 %v4276, %v4268
    %v5317 = vpack.c.b16 %v4277, %v4269
    %v5318 = vpack.c.b16 %v4278, %v4270
    %v5319 = vpack.c.b16 %v4279, %v4271
    %v5320 = vpack.c.b16 %v4280, %v4272
    %v5321 = vpack.c.b16 %v4281, %v4273
    %v5322 = vpack.c.b16 %v4282, %v4274
    %v5323 = vpack.c.b16 %v4283, %v4275
    %v5324 = vpack.c.b16 %v4292, %v4284
    %v5325 = vpack.c.b16 %v4293, %v4285
    %v5326 = vpack.c.b16 %v4294, %v4286
    %v5327 = vpack.c.b16 %v4295, %v4287
    %v5328 = vpack.c.b16 %v4296, %v4288
    %v5329 = vpack.c.b16 %v4297, %v4289
    %v5330 = vpack.c.b16 %v4298, %v4290
    %v5331 = vpack.c.b16 %v4299, %v4291
    %v5332 = vpack.c.b16 %v4308, %v4300
    %v5333 = vpack.c.b16 %v4309, %v4301
    %v5334 = vpack.c.b16 %v4310, %v4302
    %v5335 = vpack.c.b16 %v4311, %v4303
    %v5336 = vpack.c.b16 %v4312, %v4304
    %v5337 = vpack.c.b16 %v4313, %v4305
    %v5338 = vpack.c.b16 %v4314, %v4306
    %v5339 = vpack.c.b16 %v4315, %v4307
    %6364 = vmatprep.subr.bf16.mxu0 %v4317
    %6365 = vmatpush1.bf16.msra.mxu0 %v4316
    %6366 = vmatprep.subr.bf16.mxu0 %v4325
    %6367 = vmatpush1.bf16.msra.mxu0 %v4324
    %6368 = vmatprep.subr.bf16.mxu0 %v4333
    %6369 = vmatpush1.bf16.msra.mxu0 %v4332
    %6370 = vmatprep.subr.bf16.mxu0 %v4341
    %6371 = vmatpush1.bf16.msra.mxu0 %v4340
    %6372 = vmatprep.subr.bf16.mxu0 %v4349
    %6373 = vmatpush1.bf16.msra.mxu0 %v4348
    %6374 = vmatprep.subr.bf16.mxu0 %v4357
    %6375 = vmatpush1.bf16.msra.mxu0 %v4356
    %6376 = vmatprep.subr.bf16.mxu0 %v4365
    %6377 = vmatpush1.bf16.msra.mxu0 %v4364
    %6378 = vmatprep.subr.bf16.mxu0 %v4373
    %6379 = vmatpush1.bf16.msra.mxu0 %v4372
    %6380 = vmatprep.subr.bf16.mxu0 %v4381
    %6381 = vmatpush1.bf16.msra.mxu0 %v4380
    %6382 = vmatprep.subr.bf16.mxu0 %v4389
    %6383 = vmatpush1.bf16.msra.mxu0 %v4388
    %6384 = vmatprep.subr.bf16.mxu0 %v4397
    %6385 = vmatpush1.bf16.msra.mxu0 %v4396
    %6386 = vmatprep.subr.bf16.mxu0 %v4405
    %6387 = vmatpush1.bf16.msra.mxu0 %v4404
    %6388 = vmatprep.subr.bf16.mxu0 %v4413
    %6389 = vmatpush1.bf16.msra.mxu0 %v4412
    %6390 = vmatprep.subr.bf16.mxu0 %v4421
    %6391 = vmatpush1.bf16.msra.mxu0 %v4420
    %6392 = vmatprep.subr.bf16.mxu0 %v4429
    %6393 = vmatpush1.bf16.msra.mxu0 %v4428
    %6394 = vmatprep.subr.bf16.mxu0 %v4437
    %6395 = vmatpush1.bf16.msra.mxu0 %v4436
    %6396 = vmatprep.mubr.bf16.mxu0 %v163
    %6397 = vmatmul.mubr.bf16.gmra.mrb[0].mxu0 %v162
    %v6398 = vpop.f32.mrb[0].mxu0
    %v6399 = vadd.f32 %v1207, %v6398
    %v6400 = vpop.f32.mrb[0].mxu0
    %v6401 = vadd.f32 %v1211, %v6400
    %v6402 = vpop.f32.mrb[0].mxu0
    %v6403 = vpop.f32.mrb[0].mxu0
    %6404 = vdwg.mxu0
    %6405 = vmatprep.subr.bf16.mxu0 %v4445
    %6406 = vmatpush1.bf16.msra.mxu0 %v4444
    %6407 = vmatprep.subr.bf16.mxu0 %v4453
    %6408 = vmatpush1.bf16.msra.mxu0 %v4452
    %6409 = vmatprep.subr.bf16.mxu0 %v4461
    %6410 = vmatpush1.bf16.msra.mxu0 %v4460
    %6411 = vmatprep.subr.bf16.mxu0 %v4469
    %6412 = vmatpush1.bf16.msra.mxu0 %v4468
    %6413 = vmatprep.subr.bf16.mxu0 %v4477
    %6414 = vmatpush1.bf16.msra.mxu0 %v4476
    %6415 = vmatprep.subr.bf16.mxu0 %v4485
    %6416 = vmatpush1.bf16.msra.mxu0 %v4484
    %6417 = vmatprep.subr.bf16.mxu0 %v4493
    %6418 = vmatpush1.bf16.msra.mxu0 %v4492
    %6419 = vmatprep.subr.bf16.mxu0 %v4501
    %6420 = vmatpush1.bf16.msra.mxu0 %v4500
    %6421 = vmatprep.subr.bf16.mxu0 %v4509
    %6422 = vmatpush1.bf16.msra.mxu0 %v4508
    %6423 = vmatprep.subr.bf16.mxu0 %v4517
    %6424 = vmatpush1.bf16.msra.mxu0 %v4516
    %6425 = vmatprep.subr.bf16.mxu0 %v4525
    %6426 = vmatpush1.bf16.msra.mxu0 %v4524
    %6427 = vmatprep.subr.bf16.mxu0 %v4533
    %6428 = vmatpush1.bf16.msra.mxu0 %v4532
    %6429 = vmatprep.subr.bf16.mxu0 %v4541
    %6430 = vmatpush1.bf16.msra.mxu0 %v4540
    %6431 = vmatprep.subr.bf16.mxu0 %v4549
    %6432 = vmatpush1.bf16.msra.mxu0 %v4548
    %6433 = vmatprep.subr.bf16.mxu0 %v4557
    %6434 = vmatpush1.bf16.msra.mxu0 %v4556
    %6435 = vmatprep.subr.bf16.mxu0 %v4565
    %6436 = vmatpush1.bf16.msra.mxu0 %v4564
    %6437 = vmatprep.mubr.bf16.mxu0 %v165
    %6438 = vmatmul.mubr.bf16.gmra.mrb[0].mxu0 %v164
    %v6439 = vpop.f32.mrb[0].mxu0
    %v6440 = vadd.f32 %v6399, %v6439
    %v6441 = vpop.f32.mrb[0].mxu0
    %v6442 = vadd.f32 %v6401, %v6441
    %v6443 = vpop.f32.mrb[0].mxu0
    %v6444 = vpop.f32.mrb[0].mxu0
    %6445 = vdwg.mxu0
    %6446 = vmatprep.subr.bf16.mxu0 %v4573
    %6447 = vmatpush1.bf16.msra.mxu0 %v4572
    %6448 = vmatprep.subr.bf16.mxu0 %v4581
    %6449 = vmatpush1.bf16.msra.mxu0 %v4580
    %6450 = vmatprep.subr.bf16.mxu0 %v4589
    %6451 = vmatpush1.bf16.msra.mxu0 %v4588
    %6452 = vmatprep.subr.bf16.mxu0 %v4597
    %6453 = vmatpush1.bf16.msra.mxu0 %v4596
    %6454 = vmatprep.subr.bf16.mxu0 %v4605
    %6455 = vmatpush1.bf16.msra.mxu0 %v4604
    %6456 = vmatprep.subr.bf16.mxu0 %v4613
    %6457 = vmatpush1.bf16.msra.mxu0 %v4612
    %6458 = vmatprep.subr.bf16.mxu0 %v4621
    %6459 = vmatpush1.bf16.msra.mxu0 %v4620
    %6460 = vmatprep.subr.bf16.mxu0 %v4629
    %6461 = vmatpush1.bf16.msra.mxu0 %v4628
    %6462 = vmatprep.subr.bf16.mxu0 %v4637
    %6463 = vmatpush1.bf16.msra.mxu0 %v4636
    %6464 = vmatprep.subr.bf16.mxu0 %v4645
    %6465 = vmatpush1.bf16.msra.mxu0 %v4644
    %6466 = vmatprep.subr.bf16.mxu0 %v4653
    %6467 = vmatpush1.bf16.msra.mxu0 %v4652
    %6468 = vmatprep.subr.bf16.mxu0 %v4661
    %6469 = vmatpush1.bf16.msra.mxu0 %v4660
    %6470 = vmatprep.subr.bf16.mxu0 %v4669
    %6471 = vmatpush1.bf16.msra.mxu0 %v4668
    %6472 = vmatprep.subr.bf16.mxu0 %v4677
    %6473 = vmatpush1.bf16.msra.mxu0 %v4676
    %6474 = vmatprep.subr.bf16.mxu0 %v4685
    %6475 = vmatpush1.bf16.msra.mxu0 %v4684
    %6476 = vmatprep.subr.bf16.mxu0 %v4693
    %6477 = vmatpush1.bf16.msra.mxu0 %v4692
    %6478 = vmatprep.mubr.bf16.mxu0 %v167
    %6479 = vmatmul.mubr.bf16.gmra.mrb[0].mxu0 %v166
    %v6480 = vpop.f32.mrb[0].mxu0
    %v6481 = vadd.f32 %v6440, %v6480
    %v6482 = vpop.f32.mrb[0].mxu0
    %v6483 = vadd.f32 %v6442, %v6482
    %v6484 = vpop.f32.mrb[0].mxu0
    %v6485 = vpop.f32.mrb[0].mxu0
    %6486 = vdwg.mxu0
    %6487 = vmatprep.subr.bf16.mxu0 %v4701
    %6488 = vmatpush1.bf16.msra.mxu0 %v4700
    %6489 = vmatprep.subr.bf16.mxu0 %v4709
    %6490 = vmatpush1.bf16.msra.mxu0 %v4708
    %6491 = vmatprep.subr.bf16.mxu0 %v4717
    %6492 = vmatpush1.bf16.msra.mxu0 %v4716
    %6493 = vmatprep.subr.bf16.mxu0 %v4725
    %6494 = vmatpush1.bf16.msra.mxu0 %v4724
    %6495 = vmatprep.subr.bf16.mxu0 %v4733
    %6496 = vmatpush1.bf16.msra.mxu0 %v4732
    %6497 = vmatprep.subr.bf16.mxu0 %v4741
    %6498 = vmatpush1.bf16.msra.mxu0 %v4740
    %6499 = vmatprep.subr.bf16.mxu0 %v4749
    %6500 = vmatpush1.bf16.msra.mxu0 %v4748
    %6501 = vmatprep.subr.bf16.mxu0 %v4757
    %6502 = vmatpush1.bf16.msra.mxu0 %v4756
    %6503 = vmatprep.subr.bf16.mxu0 %v4765
    %6504 = vmatpush1.bf16.msra.mxu0 %v4764
    %6505 = vmatprep.subr.bf16.mxu0 %v4773
    %6506 = vmatpush1.bf16.msra.mxu0 %v4772
    %6507 = vmatprep.subr.bf16.mxu0 %v4781
    %6508 = vmatpush1.bf16.msra.mxu0 %v4780
    %6509 = vmatprep.subr.bf16.mxu0 %v4789
    %6510 = vmatpush1.bf16.msra.mxu0 %v4788
    %6511 = vmatprep.subr.bf16.mxu0 %v4797
    %6512 = vmatpush1.bf16.msra.mxu0 %v4796
    %6513 = vmatprep.subr.bf16.mxu0 %v4805
    %6514 = vmatpush1.bf16.msra.mxu0 %v4804
    %6515 = vmatprep.subr.bf16.mxu0 %v4813
    %6516 = vmatpush1.bf16.msra.mxu0 %v4812
    %6517 = vmatprep.subr.bf16.mxu0 %v4821
    %6518 = vmatpush1.bf16.msra.mxu0 %v4820
    %6519 = vmatprep.mubr.bf16.mxu0 %v169
    %6520 = vmatmul.mubr.bf16.gmra.mrb[0].mxu0 %v168
    %v6521 = vpop.f32.mrb[0].mxu0
    %v6522 = vadd.f32 %v6481, %v6521
    %v6523 = vpop.f32.mrb[0].mxu0
    %v6524 = vadd.f32 %v6483, %v6523
    %v6525 = vpop.f32.mrb[0].mxu0
    %v6526 = vpop.f32.mrb[0].mxu0
    %6527 = vdwg.mxu0
    %6528 = vmatprep.subr.bf16.mxu0 %v4829
    %6529 = vmatpush1.bf16.msra.mxu0 %v4828
    %6530 = vmatprep.subr.bf16.mxu0 %v4837
    %6531 = vmatpush1.bf16.msra.mxu0 %v4836
    %6532 = vmatprep.subr.bf16.mxu0 %v4845
    %6533 = vmatpush1.bf16.msra.mxu0 %v4844
    %6534 = vmatprep.subr.bf16.mxu0 %v4853
    %6535 = vmatpush1.bf16.msra.mxu0 %v4852
    %6536 = vmatprep.subr.bf16.mxu0 %v4861
    %6537 = vmatpush1.bf16.msra.mxu0 %v4860
    %6538 = vmatprep.subr.bf16.mxu0 %v4869
    %6539 = vmatpush1.bf16.msra.mxu0 %v4868
    %6540 = vmatprep.subr.bf16.mxu0 %v4877
    %6541 = vmatpush1.bf16.msra.mxu0 %v4876
    %6542 = vmatprep.subr.bf16.mxu0 %v4885
    %6543 = vmatpush1.bf16.msra.mxu0 %v4884
    %6544 = vmatprep.subr.bf16.mxu0 %v4893
    %6545 = vmatpush1.bf16.msra.mxu0 %v4892
    %6546 = vmatprep.subr.bf16.mxu0 %v4901
    %6547 = vmatpush1.bf16.msra.mxu0 %v4900
    %6548 = vmatprep.subr.bf16.mxu0 %v4909
    %6549 = vmatpush1.bf16.msra.mxu0 %v4908
    %6550 = vmatprep.subr.bf16.mxu0 %v4917
    %6551 = vmatpush1.bf16.msra.mxu0 %v4916
    %6552 = vmatprep.subr.bf16.mxu0 %v4925
    %6553 = vmatpush1.bf16.msra.mxu0 %v4924
    %6554 = vmatprep.subr.bf16.mxu0 %v4933
    %6555 = vmatpush1.bf16.msra.mxu0 %v4932
    %6556 = vmatprep.subr.bf16.mxu0 %v4941
    %6557 = vmatpush1.bf16.msra.mxu0 %v4940
    %6558 = vmatprep.subr.bf16.mxu0 %v4949
    %6559 = vmatpush1.bf16.msra.mxu0 %v4948
    %6560 = vmatprep.mubr.bf16.mxu0 %v171
    %6561 = vmatmul.mubr.bf16.gmra.mrb[0].mxu0 %v170
    %v6562 = vpop.f32.mrb[0].mxu0
    %v6563 = vadd.f32 %v6522, %v6562
    %v6564 = vpop.f32.mrb[0].mxu0
    %v6565 = vadd.f32 %v6524, %v6564
    %v6566 = vpop.f32.mrb[0].mxu0
    %v6567 = vpop.f32.mrb[0].mxu0
    %6568 = vdwg.mxu0
    %6569 = vmatprep.subr.bf16.mxu0 %v4957
    %6570 = vmatpush1.bf16.msra.mxu0 %v4956
    %6571 = vmatprep.subr.bf16.mxu0 %v4965
    %6572 = vmatpush1.bf16.msra.mxu0 %v4964
    %6573 = vmatprep.subr.bf16.mxu0 %v4973
    %6574 = vmatpush1.bf16.msra.mxu0 %v4972
    %6575 = vmatprep.subr.bf16.mxu0 %v4981
    %6576 = vmatpush1.bf16.msra.mxu0 %v4980
    %6577 = vmatprep.subr.bf16.mxu0 %v4989
    %6578 = vmatpush1.bf16.msra.mxu0 %v4988
    %6579 = vmatprep.subr.bf16.mxu0 %v4997
    %6580 = vmatpush1.bf16.msra.mxu0 %v4996
    %6581 = vmatprep.subr.bf16.mxu0 %v5005
    %6582 = vmatpush1.bf16.msra.mxu0 %v5004
    %6583 = vmatprep.subr.bf16.mxu0 %v5013
    %6584 = vmatpush1.bf16.msra.mxu0 %v5012
    %6585 = vmatprep.subr.bf16.mxu0 %v5021
    %6586 = vmatpush1.bf16.msra.mxu0 %v5020
    %6587 = vmatprep.subr.bf16.mxu0 %v5029
    %6588 = vmatpush1.bf16.msra.mxu0 %v5028
    %6589 = vmatprep.subr.bf16.mxu0 %v5037
    %6590 = vmatpush1.bf16.msra.mxu0 %v5036
    %6591 = vmatprep.subr.bf16.mxu0 %v5045
    %6592 = vmatpush1.bf16.msra.mxu0 %v5044
    %6593 = vmatprep.subr.bf16.mxu0 %v5053
    %6594 = vmatpush1.bf16.msra.mxu0 %v5052
    %6595 = vmatprep.subr.bf16.mxu0 %v5061
    %6596 = vmatpush1.bf16.msra.mxu0 %v5060
    %6597 = vmatprep.subr.bf16.mxu0 %v5069
    %6598 = vmatpush1.bf16.msra.mxu0 %v5068
    %6599 = vmatprep.subr.bf16.mxu0 %v5077
    %6600 = vmatpush1.bf16.msra.mxu0 %v5076
    %6601 = vmatprep.mubr.bf16.mxu0 %v173
    %6602 = vmatmul.mubr.bf16.gmra.mrb[0].mxu0 %v172
    %v6603 = vpop.f32.mrb[0].mxu0
    %v6604 = vadd.f32 %v6563, %v6603
    %v6605 = vpop.f32.mrb[0].mxu0
    %v6606 = vadd.f32 %v6565, %v6605
    %v6607 = vpop.f32.mrb[0].mxu0
    %v6608 = vpop.f32.mrb[0].mxu0
    %6609 = vdwg.mxu0
    %6610 = vmatprep.subr.bf16.mxu0 %v5085
    %6611 = vmatpush1.bf16.msra.mxu0 %v5084
    %6612 = vmatprep.subr.bf16.mxu0 %v5093
    %6613 = vmatpush1.bf16.msra.mxu0 %v5092
    %6614 = vmatprep.subr.bf16.mxu0 %v5101
    %6615 = vmatpush1.bf16.msra.mxu0 %v5100
    %6616 = vmatprep.subr.bf16.mxu0 %v5109
    %6617 = vmatpush1.bf16.msra.mxu0 %v5108
    %6618 = vmatprep.subr.bf16.mxu0 %v5117
    %6619 = vmatpush1.bf16.msra.mxu0 %v5116
    %6620 = vmatprep.subr.bf16.mxu0 %v5125
    %6621 = vmatpush1.bf16.msra.mxu0 %v5124
    %6622 = vmatprep.subr.bf16.mxu0 %v5133
    %6623 = vmatpush1.bf16.msra.mxu0 %v5132
    %6624 = vmatprep.subr.bf16.mxu0 %v5141
    %6625 = vmatpush1.bf16.msra.mxu0 %v5140
    %6626 = vmatprep.subr.bf16.mxu0 %v5149
    %6627 = vmatpush1.bf16.msra.mxu0 %v5148
    %6628 = vmatprep.subr.bf16.mxu0 %v5157
    %6629 = vmatpush1.bf16.msra.mxu0 %v5156
    %6630 = vmatprep.subr.bf16.mxu0 %v5165
    %6631 = vmatpush1.bf16.msra.mxu0 %v5164
    %6632 = vmatprep.subr.bf16.mxu0 %v5173
    %6633 = vmatpush1.bf16.msra.mxu0 %v5172
    %6634 = vmatprep.subr.bf16.mxu0 %v5181
    %6635 = vmatpush1.bf16.msra.mxu0 %v5180
    %6636 = vmatprep.subr.bf16.mxu0 %v5189
    %6637 = vmatpush1.bf16.msra.mxu0 %v5188
    %6638 = vmatprep.subr.bf16.mxu0 %v5197
    %6639 = vmatpush1.bf16.msra.mxu0 %v5196
    %6640 = vmatprep.subr.bf16.mxu0 %v5205
    %6641 = vmatpush1.bf16.msra.mxu0 %v5204
    %6642 = vmatprep.mubr.bf16.mxu0 %v175
    %6643 = vmatmul.mubr.bf16.gmra.mrb[0].mxu0 %v174
    %v6644 = vpop.f32.mrb[0].mxu0
    %v6645 = vadd.f32 %v6604, %v6644
    %v6646 = vpop.f32.mrb[0].mxu0
    %v6647 = vadd.f32 %v6606, %v6646
    %v6648 = vpop.f32.mrb[0].mxu0
    %v6649 = vpop.f32.mrb[0].mxu0
    %6650 = vdwg.mxu0
    %6651 = vmatprep.subr.bf16.mxu0 %v5213
    %6652 = vmatpush1.bf16.msra.mxu0 %v5212
    %6653 = vmatprep.subr.bf16.mxu0 %v5221
    %6654 = vmatpush1.bf16.msra.mxu0 %v5220
    %6655 = vmatprep.subr.bf16.mxu0 %v5229
    %6656 = vmatpush1.bf16.msra.mxu0 %v5228
    %6657 = vmatprep.subr.bf16.mxu0 %v5237
    %6658 = vmatpush1.bf16.msra.mxu0 %v5236
    %6659 = vmatprep.subr.bf16.mxu0 %v5245
    %6660 = vmatpush1.bf16.msra.mxu0 %v5244
    %6661 = vmatprep.subr.bf16.mxu0 %v5253
    %6662 = vmatpush1.bf16.msra.mxu0 %v5252
    %6663 = vmatprep.subr.bf16.mxu0 %v5261
    %6664 = vmatpush1.bf16.msra.mxu0 %v5260
    %6665 = vmatprep.subr.bf16.mxu0 %v5269
    %6666 = vmatpush1.bf16.msra.mxu0 %v5268
    %6667 = vmatprep.subr.bf16.mxu0 %v5277
    %6668 = vmatpush1.bf16.msra.mxu0 %v5276
    %6669 = vmatprep.subr.bf16.mxu0 %v5285
    %6670 = vmatpush1.bf16.msra.mxu0 %v5284
    %6671 = vmatprep.subr.bf16.mxu0 %v5293
    %6672 = vmatpush1.bf16.msra.mxu0 %v5292
    %6673 = vmatprep.subr.bf16.mxu0 %v5301
    %6674 = vmatpush1.bf16.msra.mxu0 %v5300
    %6675 = vmatprep.subr.bf16.mxu0 %v5309
    %6676 = vmatpush1.bf16.msra.mxu0 %v5308
    %6677 = vmatprep.subr.bf16.mxu0 %v5317
    %6678 = vmatpush1.bf16.msra.mxu0 %v5316
    %6679 = vmatprep.subr.bf16.mxu0 %v5325
    %6680 = vmatpush1.bf16.msra.mxu0 %v5324
    %6681 = vmatprep.subr.bf16.mxu0 %v5333
    %6682 = vmatpush1.bf16.msra.mxu0 %v5332
    %6683 = vmatprep.mubr.bf16.mxu0 %v177
    %6684 = vmatmul.mubr.bf16.gmra.mrb[0].mxu0 %v176
    %v6685 = vpop.f32.mrb[0].mxu0
    %v6686 = vadd.f32 %v6645, %v6685
    %v6687 = vpop.f32.mrb[0].mxu0
    %v6688 = vadd.f32 %v6647, %v6687
    %v6689 = vpop.f32.mrb[0].mxu0
    %v6690 = vpop.f32.mrb[0].mxu0
    %6691 = vdwg.mxu0
    %6692 = vmatprep.subr.bf16.mxu0 %v4319
    %6693 = vmatpush1.bf16.msra.mxu0 %v4318
    %6694 = vmatprep.subr.bf16.mxu0 %v4327
    %6695 = vmatpush1.bf16.msra.mxu0 %v4326
    %6696 = vmatprep.subr.bf16.mxu0 %v4335
    %6697 = vmatpush1.bf16.msra.mxu0 %v4334
    %6698 = vmatprep.subr.bf16.mxu0 %v4343
    %6699 = vmatpush1.bf16.msra.mxu0 %v4342
    %6700 = vmatprep.subr.bf16.mxu0 %v4351
    %6701 = vmatpush1.bf16.msra.mxu0 %v4350
    %6702 = vmatprep.subr.bf16.mxu0 %v4359
    %6703 = vmatpush1.bf16.msra.mxu0 %v4358
    %6704 = vmatprep.subr.bf16.mxu0 %v4367
    %6705 = vmatpush1.bf16.msra.mxu0 %v4366
    %6706 = vmatprep.subr.bf16.mxu0 %v4375
    %6707 = vmatpush1.bf16.msra.mxu0 %v4374
    %6708 = vmatprep.subr.bf16.mxu0 %v4383
    %6709 = vmatpush1.bf16.msra.mxu0 %v4382
    %6710 = vmatprep.subr.bf16.mxu0 %v4391
    %6711 = vmatpush1.bf16.msra.mxu0 %v4390
    %6712 = vmatprep.subr.bf16.mxu0 %v4399
    %6713 = vmatpush1.bf16.msra.mxu0 %v4398
    %6714 = vmatprep.subr.bf16.mxu0 %v4407
    %6715 = vmatpush1.bf16.msra.mxu0 %v4406
    %6716 = vmatprep.subr.bf16.mxu0 %v4415
    %6717 = vmatpush1.bf16.msra.mxu0 %v4414
    %6718 = vmatprep.subr.bf16.mxu0 %v4423
    %6719 = vmatpush1.bf16.msra.mxu0 %v4422
    %6720 = vmatprep.subr.bf16.mxu0 %v4431
    %6721 = vmatpush1.bf16.msra.mxu0 %v4430
    %6722 = vmatprep.subr.bf16.mxu0 %v4439
    %6723 = vmatpush1.bf16.msra.mxu0 %v4438
    %6724 = vmatprep.mubr.bf16.mxu0 %v163
    %6725 = vmatmul.mubr.bf16.gmra.mrb[0].mxu0 %v162
    %v6726 = vpop.f32.mrb[0].mxu0
    %v6727 = vadd.f32 %v1215, %v6726
    %v6728 = vpop.f32.mrb[0].mxu0
    %v6729 = vadd.f32 %v1219, %v6728
    %v6730 = vpop.f32.mrb[0].mxu0
    %v6731 = vpop.f32.mrb[0].mxu0
    %6732 = vdwg.mxu0
    %6733 = vmatprep.subr.bf16.mxu0 %v4447
    %6734 = vmatpush1.bf16.msra.mxu0 %v4446
    %6735 = vmatprep.subr.bf16.mxu0 %v4455
    %6736 = vmatpush1.bf16.msra.mxu0 %v4454
    %6737 = vmatprep.subr.bf16.mxu0 %v4463
    %6738 = vmatpush1.bf16.msra.mxu0 %v4462
    %6739 = vmatprep.subr.bf16.mxu0 %v4471
    %6740 = vmatpush1.bf16.msra.mxu0 %v4470
    %6741 = vmatprep.subr.bf16.mxu0 %v4479
    %6742 = vmatpush1.bf16.msra.mxu0 %v4478
    %6743 = vmatprep.subr.bf16.mxu0 %v4487
    %6744 = vmatpush1.bf16.msra.mxu0 %v4486
    %6745 = vmatprep.subr.bf16.mxu0 %v4495
    %6746 = vmatpush1.bf16.msra.mxu0 %v4494
    %6747 = vmatprep.subr.bf16.mxu0 %v4503
    %6748 = vmatpush1.bf16.msra.mxu0 %v4502
    %6749 = vmatprep.subr.bf16.mxu0 %v4511
    %6750 = vmatpush1.bf16.msra.mxu0 %v4510
    %6751 = vmatprep.subr.bf16.mxu0 %v4519
    %6752 = vmatpush1.bf16.msra.mxu0 %v4518
    %6753 = vmatprep.subr.bf16.mxu0 %v4527
    %6754 = vmatpush1.bf16.msra.mxu0 %v4526
    %6755 = vmatprep.subr.bf16.mxu0 %v4535
    %6756 = vmatpush1.bf16.msra.mxu0 %v4534
    %6757 = vmatprep.subr.bf16.mxu0 %v4543
    %6758 = vmatpush1.bf16.msra.mxu0 %v4542
    %6759 = vmatprep.subr.bf16.mxu0 %v4551
    %6760 = vmatpush1.bf16.msra.mxu0 %v4550
    %6761 = vmatprep.subr.bf16.mxu0 %v4559
    %6762 = vmatpush1.bf16.msra.mxu0 %v4558
    %6763 = vmatprep.subr.bf16.mxu0 %v4567
    %6764 = vmatpush1.bf16.msra.mxu0 %v4566
    %6765 = vmatprep.mubr.bf16.mxu0 %v165
    %6766 = vmatmul.mubr.bf16.gmra.mrb[0].mxu0 %v164
    %v6767 = vpop.f32.mrb[0].mxu0
    %v6768 = vadd.f32 %v6727, %v6767
    %v6769 = vpop.f32.mrb[0].mxu0
    %v6770 = vadd.f32 %v6729, %v6769
    %v6771 = vpop.f32.mrb[0].mxu0
    %v6772 = vpop.f32.mrb[0].mxu0
    %6773 = vdwg.mxu0
    %6774 = vmatprep.subr.bf16.mxu0 %v4575
    %6775 = vmatpush1.bf16.msra.mxu0 %v4574
    %6776 = vmatprep.subr.bf16.mxu0 %v4583
    %6777 = vmatpush1.bf16.msra.mxu0 %v4582
    %6778 = vmatprep.subr.bf16.mxu0 %v4591
    %6779 = vmatpush1.bf16.msra.mxu0 %v4590
    %6780 = vmatprep.subr.bf16.mxu0 %v4599
    %6781 = vmatpush1.bf16.msra.mxu0 %v4598
    %6782 = vmatprep.subr.bf16.mxu0 %v4607
    %6783 = vmatpush1.bf16.msra.mxu0 %v4606
    %6784 = vmatprep.subr.bf16.mxu0 %v4615
    %6785 = vmatpush1.bf16.msra.mxu0 %v4614
    %6786 = vmatprep.subr.bf16.mxu0 %v4623
    %6787 = vmatpush1.bf16.msra.mxu0 %v4622
    %6788 = vmatprep.subr.bf16.mxu0 %v4631
    %6789 = vmatpush1.bf16.msra.mxu0 %v4630
    %6790 = vmatprep.subr.bf16.mxu0 %v4639
    %6791 = vmatpush1.bf16.msra.mxu0 %v4638
    %6792 = vmatprep.subr.bf16.mxu0 %v4647
    %6793 = vmatpush1.bf16.msra.mxu0 %v4646
    %6794 = vmatprep.subr.bf16.mxu0 %v4655
    %6795 = vmatpush1.bf16.msra.mxu0 %v4654
    %6796 = vmatprep.subr.bf16.mxu0 %v4663
    %6797 = vmatpush1.bf16.msra.mxu0 %v4662
    %6798 = vmatprep.subr.bf16.mxu0 %v4671
    %6799 = vmatpush1.bf16.msra.mxu0 %v4670
    %6800 = vmatprep.subr.bf16.mxu0 %v4679
    %6801 = vmatpush1.bf16.msra.mxu0 %v4678
    %6802 = vmatprep.subr.bf16.mxu0 %v4687
    %6803 = vmatpush1.bf16.msra.mxu0 %v4686
    %6804 = vmatprep.subr.bf16.mxu0 %v4695
    %6805 = vmatpush1.bf16.msra.mxu0 %v4694
    %6806 = vmatprep.mubr.bf16.mxu0 %v167
    %6807 = vmatmul.mubr.bf16.gmra.mrb[0].mxu0 %v166
    %v6808 = vpop.f32.mrb[0].mxu0
    %v6809 = vadd.f32 %v6768, %v6808
    %v6810 = vpop.f32.mrb[0].mxu0
    %v6811 = vadd.f32 %v6770, %v6810
    %v6812 = vpop.f32.mrb[0].mxu0
    %v6813 = vpop.f32.mrb[0].mxu0
    %6814 = vdwg.mxu0
    %6815 = vmatprep.subr.bf16.mxu0 %v4703
    %6816 = vmatpush1.bf16.msra.mxu0 %v4702
    %6817 = vmatprep.subr.bf16.mxu0 %v4711
    %6818 = vmatpush1.bf16.msra.mxu0 %v4710
    %6819 = vmatprep.subr.bf16.mxu0 %v4719
    %6820 = vmatpush1.bf16.msra.mxu0 %v4718
    %6821 = vmatprep.subr.bf16.mxu0 %v4727
    %6822 = vmatpush1.bf16.msra.mxu0 %v4726
    %6823 = vmatprep.subr.bf16.mxu0 %v4735
    %6824 = vmatpush1.bf16.msra.mxu0 %v4734
    %6825 = vmatprep.subr.bf16.mxu0 %v4743
    %6826 = vmatpush1.bf16.msra.mxu0 %v4742
    %6827 = vmatprep.subr.bf16.mxu0 %v4751
    %6828 = vmatpush1.bf16.msra.mxu0 %v4750
    %6829 = vmatprep.subr.bf16.mxu0 %v4759
    %6830 = vmatpush1.bf16.msra.mxu0 %v4758
    %6831 = vmatprep.subr.bf16.mxu0 %v4767
    %6832 = vmatpush1.bf16.msra.mxu0 %v4766
    %6833 = vmatprep.subr.bf16.mxu0 %v4775
    %6834 = vmatpush1.bf16.msra.mxu0 %v4774
    %6835 = vmatprep.subr.bf16.mxu0 %v4783
    %6836 = vmatpush1.bf16.msra.mxu0 %v4782
    %6837 = vmatprep.subr.bf16.mxu0 %v4791
    %6838 = vmatpush1.bf16.msra.mxu0 %v4790
    %6839 = vmatprep.subr.bf16.mxu0 %v4799
    %6840 = vmatpush1.bf16.msra.mxu0 %v4798
    %6841 = vmatprep.subr.bf16.mxu0 %v4807
    %6842 = vmatpush1.bf16.msra.mxu0 %v4806
    %6843 = vmatprep.subr.bf16.mxu0 %v4815
    %6844 = vmatpush1.bf16.msra.mxu0 %v4814
    %6845 = vmatprep.subr.bf16.mxu0 %v4823
    %6846 = vmatpush1.bf16.msra.mxu0 %v4822
    %6847 = vmatprep.mubr.bf16.mxu0 %v169
    %6848 = vmatmul.mubr.bf16.gmra.mrb[0].mxu0 %v168
    %v6849 = vpop.f32.mrb[0].mxu0
    %v6850 = vadd.f32 %v6809, %v6849
    %v6851 = vpop.f32.mrb[0].mxu0
    %v6852 = vadd.f32 %v6811, %v6851
    %v6853 = vpop.f32.mrb[0].mxu0
    %v6854 = vpop.f32.mrb[0].mxu0
    %6855 = vdwg.mxu0
    %6856 = vmatprep.subr.bf16.mxu0 %v4831
    %6857 = vmatpush1.bf16.msra.mxu0 %v4830
    %6858 = vmatprep.subr.bf16.mxu0 %v4839
    %6859 = vmatpush1.bf16.msra.mxu0 %v4838
    %6860 = vmatprep.subr.bf16.mxu0 %v4847
    %6861 = vmatpush1.bf16.msra.mxu0 %v4846
    %6862 = vmatprep.subr.bf16.mxu0 %v4855
    %6863 = vmatpush1.bf16.msra.mxu0 %v4854
    %6864 = vmatprep.subr.bf16.mxu0 %v4863
    %6865 = vmatpush1.bf16.msra.mxu0 %v4862
    %6866 = vmatprep.subr.bf16.mxu0 %v4871
    %6867 = vmatpush1.bf16.msra.mxu0 %v4870
    %6868 = vmatprep.subr.bf16.mxu0 %v4879
    %6869 = vmatpush1.bf16.msra.mxu0 %v4878
    %6870 = vmatprep.subr.bf16.mxu0 %v4887
    %6871 = vmatpush1.bf16.msra.mxu0 %v4886
    %6872 = vmatprep.subr.bf16.mxu0 %v4895
    %6873 = vmatpush1.bf16.msra.mxu0 %v4894
    %6874 = vmatprep.subr.bf16.mxu0 %v4903
    %6875 = vmatpush1.bf16.msra.mxu0 %v4902
    %6876 = vmatprep.subr.bf16.mxu0 %v4911
    %6877 = vmatpush1.bf16.msra.mxu0 %v4910
    %6878 = vmatprep.subr.bf16.mxu0 %v4919
    %6879 = vmatpush1.bf16.msra.mxu0 %v4918
    %6880 = vmatprep.subr.bf16.mxu0 %v4927
    %6881 = vmatpush1.bf16.msra.mxu0 %v4926
    %6882 = vmatprep.subr.bf16.mxu0 %v4935
    %6883 = vmatpush1.bf16.msra.mxu0 %v4934
    %6884 = vmatprep.subr.bf16.mxu0 %v4943
    %6885 = vmatpush1.bf16.msra.mxu0 %v4942
    %6886 = vmatprep.subr.bf16.mxu0 %v4951
    %6887 = vmatpush1.bf16.msra.mxu0 %v4950
    %6888 = vmatprep.mubr.bf16.mxu0 %v171
    %6889 = vmatmul.mubr.bf16.gmra.mrb[0].mxu0 %v170
    %v6890 = vpop.f32.mrb[0].mxu0
    %v6891 = vadd.f32 %v6850, %v6890
    %v6892 = vpop.f32.mrb[0].mxu0
    %v6893 = vadd.f32 %v6852, %v6892
    %v6894 = vpop.f32.mrb[0].mxu0
    %v6895 = vpop.f32.mrb[0].mxu0
    %6896 = vdwg.mxu0
    %6897 = vmatprep.subr.bf16.mxu0 %v4959
    %6898 = vmatpush1.bf16.msra.mxu0 %v4958
    %6899 = vmatprep.subr.bf16.mxu0 %v4967
    %6900 = vmatpush1.bf16.msra.mxu0 %v4966
    %6901 = vmatprep.subr.bf16.mxu0 %v4975
    %6902 = vmatpush1.bf16.msra.mxu0 %v4974
    %6903 = vmatprep.subr.bf16.mxu0 %v4983
    %6904 = vmatpush1.bf16.msra.mxu0 %v4982
    %6905 = vmatprep.subr.bf16.mxu0 %v4991
    %6906 = vmatpush1.bf16.msra.mxu0 %v4990
    %6907 = vmatprep.subr.bf16.mxu0 %v4999
    %6908 = vmatpush1.bf16.msra.mxu0 %v4998
    %6909 = vmatprep.subr.bf16.mxu0 %v5007
    %6910 = vmatpush1.bf16.msra.mxu0 %v5006
    %6911 = vmatprep.subr.bf16.mxu0 %v5015
    %6912 = vmatpush1.bf16.msra.mxu0 %v5014
    %6913 = vmatprep.subr.bf16.mxu0 %v5023
    %6914 = vmatpush1.bf16.msra.mxu0 %v5022
    %6915 = vmatprep.subr.bf16.mxu0 %v5031
    %6916 = vmatpush1.bf16.msra.mxu0 %v5030
    %6917 = vmatprep.subr.bf16.mxu0 %v5039
    %6918 = vmatpush1.bf16.msra.mxu0 %v5038
    %6919 = vmatprep.subr.bf16.mxu0 %v5047
    %6920 = vmatpush1.bf16.msra.mxu0 %v5046
    %6921 = vmatprep.subr.bf16.mxu0 %v5055
    %6922 = vmatpush1.bf16.msra.mxu0 %v5054
    %6923 = vmatprep.subr.bf16.mxu0 %v5063
    %6924 = vmatpush1.bf16.msra.mxu0 %v5062
    %6925 = vmatprep.subr.bf16.mxu0 %v5071
    %6926 = vmatpush1.bf16.msra.mxu0 %v5070
    %6927 = vmatprep.subr.bf16.mxu0 %v5079
    %6928 = vmatpush1.bf16.msra.mxu0 %v5078
    %6929 = vmatprep.mubr.bf16.mxu0 %v173
    %6930 = vmatmul.mubr.bf16.gmra.mrb[0].mxu0 %v172
    %v6931 = vpop.f32.mrb[0].mxu0
    %v6932 = vadd.f32 %v6891, %v6931
    %v6933 = vpop.f32.mrb[0].mxu0
    %v6934 = vadd.f32 %v6893, %v6933
    %v6935 = vpop.f32.mrb[0].mxu0
    %v6936 = vpop.f32.mrb[0].mxu0
    %6937 = vdwg.mxu0
    %6938 = vmatprep.subr.bf16.mxu0 %v5087
    %6939 = vmatpush1.bf16.msra.mxu0 %v5086
    %6940 = vmatprep.subr.bf16.mxu0 %v5095
    %6941 = vmatpush1.bf16.msra.mxu0 %v5094
    %6942 = vmatprep.subr.bf16.mxu0 %v5103
    %6943 = vmatpush1.bf16.msra.mxu0 %v5102
    %6944 = vmatprep.subr.bf16.mxu0 %v5111
    %6945 = vmatpush1.bf16.msra.mxu0 %v5110
    %6946 = vmatprep.subr.bf16.mxu0 %v5119
    %6947 = vmatpush1.bf16.msra.mxu0 %v5118
    %6948 = vmatprep.subr.bf16.mxu0 %v5127
    %6949 = vmatpush1.bf16.msra.mxu0 %v5126
    %6950 = vmatprep.subr.bf16.mxu0 %v5135
    %6951 = vmatpush1.bf16.msra.mxu0 %v5134
    %6952 = vmatprep.subr.bf16.mxu0 %v5143
    %6953 = vmatpush1.bf16.msra.mxu0 %v5142
    %6954 = vmatprep.subr.bf16.mxu0 %v5151
    %6955 = vmatpush1.bf16.msra.mxu0 %v5150
    %6956 = vmatprep.subr.bf16.mxu0 %v5159
    %6957 = vmatpush1.bf16.msra.mxu0 %v5158
    %6958 = vmatprep.subr.bf16.mxu0 %v5167
    %6959 = vmatpush1.bf16.msra.mxu0 %v5166
    %6960 = vmatprep.subr.bf16.mxu0 %v5175
    %6961 = vmatpush1.bf16.msra.mxu0 %v5174
    %6962 = vmatprep.subr.bf16.mxu0 %v5183
    %6963 = vmatpush1.bf16.msra.mxu0 %v5182
    %6964 = vmatprep.subr.bf16.mxu0 %v5191
    %6965 = vmatpush1.bf16.msra.mxu0 %v5190
    %6966 = vmatprep.subr.bf16.mxu0 %v5199
    %6967 = vmatpush1.bf16.msra.mxu0 %v5198
    %6968 = vmatprep.subr.bf16.mxu0 %v5207
    %6969 = vmatpush1.bf16.msra.mxu0 %v5206
    %6970 = vmatprep.mubr.bf16.mxu0 %v175
    %6971 = vmatmul.mubr.bf16.gmra.mrb[0].mxu0 %v174
    %v6972 = vpop.f32.mrb[0].mxu0
    %v6973 = vadd.f32 %v6932, %v6972
    %v6974 = vpop.f32.mrb[0].mxu0
    %v6975 = vadd.f32 %v6934, %v6974
    %v6976 = vpop.f32.mrb[0].mxu0
    %v6977 = vpop.f32.mrb[0].mxu0
    %6978 = vdwg.mxu0
    %6979 = vmatprep.subr.bf16.mxu0 %v5215
    %6980 = vmatpush1.bf16.msra.mxu0 %v5214
    %6981 = vmatprep.subr.bf16.mxu0 %v5223
    %6982 = vmatpush1.bf16.msra.mxu0 %v5222
    %6983 = vmatprep.subr.bf16.mxu0 %v5231
    %6984 = vmatpush1.bf16.msra.mxu0 %v5230
    %6985 = vmatprep.subr.bf16.mxu0 %v5239
    %6986 = vmatpush1.bf16.msra.mxu0 %v5238
    %6987 = vmatprep.subr.bf16.mxu0 %v5247
    %6988 = vmatpush1.bf16.msra.mxu0 %v5246
    %6989 = vmatprep.subr.bf16.mxu0 %v5255
    %6990 = vmatpush1.bf16.msra.mxu0 %v5254
    %6991 = vmatprep.subr.bf16.mxu0 %v5263
    %6992 = vmatpush1.bf16.msra.mxu0 %v5262
    %6993 = vmatprep.subr.bf16.mxu0 %v5271
    %6994 = vmatpush1.bf16.msra.mxu0 %v5270
    %6995 = vmatprep.subr.bf16.mxu0 %v5279
    %6996 = vmatpush1.bf16.msra.mxu0 %v5278
    %6997 = vmatprep.subr.bf16.mxu0 %v5287
    %6998 = vmatpush1.bf16.msra.mxu0 %v5286
    %6999 = vmatprep.subr.bf16.mxu0 %v5295
    %7000 = vmatpush1.bf16.msra.mxu0 %v5294
    %7001 = vmatprep.subr.bf16.mxu0 %v5303
    %7002 = vmatpush1.bf16.msra.mxu0 %v5302
    %7003 = vmatprep.subr.bf16.mxu0 %v5311
    %7004 = vmatpush1.bf16.msra.mxu0 %v5310
    %7005 = vmatprep.subr.bf16.mxu0 %v5319
    %7006 = vmatpush1.bf16.msra.mxu0 %v5318
    %7007 = vmatprep.subr.bf16.mxu0 %v5327
    %7008 = vmatpush1.bf16.msra.mxu0 %v5326
    %7009 = vmatprep.subr.bf16.mxu0 %v5335
    %7010 = vmatpush1.bf16.msra.mxu0 %v5334
    %7011 = vmatprep.mubr.bf16.mxu0 %v177
    %7012 = vmatmul.mubr.bf16.gmra.mrb[0].mxu0 %v176
    %v7013 = vpop.f32.mrb[0].mxu0
    %v7014 = vadd.f32 %v6973, %v7013
    %v7015 = vpop.f32.mrb[0].mxu0
    %v7016 = vadd.f32 %v6975, %v7015
    %v7017 = vpop.f32.mrb[0].mxu0
    %v7018 = vpop.f32.mrb[0].mxu0
    %7019 = vdwg.mxu0
    %7020 = vmatprep.subr.bf16.mxu0 %v4321
    %7021 = vmatpush1.bf16.msra.mxu0 %v4320
    %7022 = vmatprep.subr.bf16.mxu0 %v4329
    %7023 = vmatpush1.bf16.msra.mxu0 %v4328
    %7024 = vmatprep.subr.bf16.mxu0 %v4337
    %7025 = vmatpush1.bf16.msra.mxu0 %v4336
    %7026 = vmatprep.subr.bf16.mxu0 %v4345
    %7027 = vmatpush1.bf16.msra.mxu0 %v4344
    %7028 = vmatprep.subr.bf16.mxu0 %v4353
    %7029 = vmatpush1.bf16.msra.mxu0 %v4352
    %7030 = vmatprep.subr.bf16.mxu0 %v4361
    %7031 = vmatpush1.bf16.msra.mxu0 %v4360
    %7032 = vmatprep.subr.bf16.mxu0 %v4369
    %7033 = vmatpush1.bf16.msra.mxu0 %v4368
    %7034 = vmatprep.subr.bf16.mxu0 %v4377
    %7035 = vmatpush1.bf16.msra.mxu0 %v4376
    %7036 = vmatprep.subr.bf16.mxu0 %v4385
    %7037 = vmatpush1.bf16.msra.mxu0 %v4384
    %7038 = vmatprep.subr.bf16.mxu0 %v4393
    %7039 = vmatpush1.bf16.msra.mxu0 %v4392
    %7040 = vmatprep.subr.bf16.mxu0 %v4401
    %7041 = vmatpush1.bf16.msra.mxu0 %v4400
    %7042 = vmatprep.subr.bf16.mxu0 %v4409
    %7043 = vmatpush1.bf16.msra.mxu0 %v4408
    %7044 = vmatprep.subr.bf16.mxu0 %v4417
    %7045 = vmatpush1.bf16.msra.mxu0 %v4416
    %7046 = vmatprep.subr.bf16.mxu0 %v4425
    %7047 = vmatpush1.bf16.msra.mxu0 %v4424
    %7048 = vmatprep.subr.bf16.mxu0 %v4433
    %7049 = vmatpush1.bf16.msra.mxu0 %v4432
    %7050 = vmatprep.subr.bf16.mxu0 %v4441
    %7051 = vmatpush1.bf16.msra.mxu0 %v4440
    %7052 = vmatprep.mubr.bf16.mxu0 %v163
    %7053 = vmatmul.mubr.bf16.gmra.mrb[0].mxu0 %v162
    %v7054 = vpop.f32.mrb[0].mxu0
    %v7055 = vadd.f32 %v1223, %v7054
    %v7056 = vpop.f32.mrb[0].mxu0
    %v7057 = vadd.f32 %v1227, %v7056
    %v7058 = vpop.f32.mrb[0].mxu0
    %v7059 = vpop.f32.mrb[0].mxu0
    %7060 = vdwg.mxu0
    %7061 = vmatprep.subr.bf16.mxu0 %v4449
    %7062 = vmatpush1.bf16.msra.mxu0 %v4448
    %7063 = vmatprep.subr.bf16.mxu0 %v4457
    %7064 = vmatpush1.bf16.msra.mxu0 %v4456
    %7065 = vmatprep.subr.bf16.mxu0 %v4465
    %7066 = vmatpush1.bf16.msra.mxu0 %v4464
    %7067 = vmatprep.subr.bf16.mxu0 %v4473
    %7068 = vmatpush1.bf16.msra.mxu0 %v4472
    %7069 = vmatprep.subr.bf16.mxu0 %v4481
    %7070 = vmatpush1.bf16.msra.mxu0 %v4480
    %7071 = vmatprep.subr.bf16.mxu0 %v4489
    %7072 = vmatpush1.bf16.msra.mxu0 %v4488
    %7073 = vmatprep.subr.bf16.mxu0 %v4497
    %7074 = vmatpush1.bf16.msra.mxu0 %v4496
    %7075 = vmatprep.subr.bf16.mxu0 %v4505
    %7076 = vmatpush1.bf16.msra.mxu0 %v4504
    %7077 = vmatprep.subr.bf16.mxu0 %v4513
    %7078 = vmatpush1.bf16.msra.mxu0 %v4512
    %7079 = vmatprep.subr.bf16.mxu0 %v4521
    %7080 = vmatpush1.bf16.msra.mxu0 %v4520
    %7081 = vmatprep.subr.bf16.mxu0 %v4529
    %7082 = vmatpush1.bf16.msra.mxu0 %v4528
    %7083 = vmatprep.subr.bf16.mxu0 %v4537
    %7084 = vmatpush1.bf16.msra.mxu0 %v4536
    %7085 = vmatprep.subr.bf16.mxu0 %v4545
    %7086 = vmatpush1.bf16.msra.mxu0 %v4544
    %7087 = vmatprep.subr.bf16.mxu0 %v4553
    %7088 = vmatpush1.bf16.msra.mxu0 %v4552
    %7089 = vmatprep.subr.bf16.mxu0 %v4561
    %7090 = vmatpush1.bf16.msra.mxu0 %v4560
    %7091 = vmatprep.subr.bf16.mxu0 %v4569
    %7092 = vmatpush1.bf16.msra.mxu0 %v4568
    %7093 = vmatprep.mubr.bf16.mxu0 %v165
    %7094 = vmatmul.mubr.bf16.gmra.mrb[0].mxu0 %v164
    %v7095 = vpop.f32.mrb[0].mxu0
    %v7096 = vadd.f32 %v7055, %v7095
    %v7097 = vpop.f32.mrb[0].mxu0
    %v7098 = vadd.f32 %v7057, %v7097
    %v7099 = vpop.f32.mrb[0].mxu0
    %v7100 = vpop.f32.mrb[0].mxu0
    %7101 = vdwg.mxu0
    %7102 = vmatprep.subr.bf16.mxu0 %v4577
    %7103 = vmatpush1.bf16.msra.mxu0 %v4576
    %7104 = vmatprep.subr.bf16.mxu0 %v4585
    %7105 = vmatpush1.bf16.msra.mxu0 %v4584
    %7106 = vmatprep.subr.bf16.mxu0 %v4593
    %7107 = vmatpush1.bf16.msra.mxu0 %v4592
    %7108 = vmatprep.subr.bf16.mxu0 %v4601
    %7109 = vmatpush1.bf16.msra.mxu0 %v4600
    %7110 = vmatprep.subr.bf16.mxu0 %v4609
    %7111 = vmatpush1.bf16.msra.mxu0 %v4608
    %7112 = vmatprep.subr.bf16.mxu0 %v4617
    %7113 = vmatpush1.bf16.msra.mxu0 %v4616
    %7114 = vmatprep.subr.bf16.mxu0 %v4625
    %7115 = vmatpush1.bf16.msra.mxu0 %v4624
    %7116 = vmatprep.subr.bf16.mxu0 %v4633
    %7117 = vmatpush1.bf16.msra.mxu0 %v4632
    %7118 = vmatprep.subr.bf16.mxu0 %v4641
    %7119 = vmatpush1.bf16.msra.mxu0 %v4640
    %7120 = vmatprep.subr.bf16.mxu0 %v4649
    %7121 = vmatpush1.bf16.msra.mxu0 %v4648
    %7122 = vmatprep.subr.bf16.mxu0 %v4657
    %7123 = vmatpush1.bf16.msra.mxu0 %v4656
    %7124 = vmatprep.subr.bf16.mxu0 %v4665
    %7125 = vmatpush1.bf16.msra.mxu0 %v4664
    %7126 = vmatprep.subr.bf16.mxu0 %v4673
    %7127 = vmatpush1.bf16.msra.mxu0 %v4672
    %7128 = vmatprep.subr.bf16.mxu0 %v4681
    %7129 = vmatpush1.bf16.msra.mxu0 %v4680
    %7130 = vmatprep.subr.bf16.mxu0 %v4689
    %7131 = vmatpush1.bf16.msra.mxu0 %v4688
    %7132 = vmatprep.subr.bf16.mxu0 %v4697
    %7133 = vmatpush1.bf16.msra.mxu0 %v4696
    %7134 = vmatprep.mubr.bf16.mxu0 %v167
    %7135 = vmatmul.mubr.bf16.gmra.mrb[0].mxu0 %v166
    %v7136 = vpop.f32.mrb[0].mxu0
    %v7137 = vadd.f32 %v7096, %v7136
    %v7138 = vpop.f32.mrb[0].mxu0
    %v7139 = vadd.f32 %v7098, %v7138
    %v7140 = vpop.f32.mrb[0].mxu0
    %v7141 = vpop.f32.mrb[0].mxu0
    %7142 = vdwg.mxu0
    %7143 = vmatprep.subr.bf16.mxu0 %v4705
    %7144 = vmatpush1.bf16.msra.mxu0 %v4704
    %7145 = vmatprep.subr.bf16.mxu0 %v4713
    %7146 = vmatpush1.bf16.msra.mxu0 %v4712
    %7147 = vmatprep.subr.bf16.mxu0 %v4721
    %7148 = vmatpush1.bf16.msra.mxu0 %v4720
    %7149 = vmatprep.subr.bf16.mxu0 %v4729
    %7150 = vmatpush1.bf16.msra.mxu0 %v4728
    %7151 = vmatprep.subr.bf16.mxu0 %v4737
    %7152 = vmatpush1.bf16.msra.mxu0 %v4736
    %7153 = vmatprep.subr.bf16.mxu0 %v4745
    %7154 = vmatpush1.bf16.msra.mxu0 %v4744
    %7155 = vmatprep.subr.bf16.mxu0 %v4753
    %7156 = vmatpush1.bf16.msra.mxu0 %v4752
    %7157 = vmatprep.subr.bf16.mxu0 %v4761
    %7158 = vmatpush1.bf16.msra.mxu0 %v4760
    %7159 = vmatprep.subr.bf16.mxu0 %v4769
    %7160 = vmatpush1.bf16.msra.mxu0 %v4768
    %7161 = vmatprep.subr.bf16.mxu0 %v4777
    %7162 = vmatpush1.bf16.msra.mxu0 %v4776
    %7163 = vmatprep.subr.bf16.mxu0 %v4785
    %7164 = vmatpush1.bf16.msra.mxu0 %v4784
    %7165 = vmatprep.subr.bf16.mxu0 %v4793
    %7166 = vmatpush1.bf16.msra.mxu0 %v4792
    %7167 = vmatprep.subr.bf16.mxu0 %v4801
    %7168 = vmatpush1.bf16.msra.mxu0 %v4800
    %7169 = vmatprep.subr.bf16.mxu0 %v4809
    %7170 = vmatpush1.bf16.msra.mxu0 %v4808
    %7171 = vmatprep.subr.bf16.mxu0 %v4817
    %7172 = vmatpush1.bf16.msra.mxu0 %v4816
    %7173 = vmatprep.subr.bf16.mxu0 %v4825
    %7174 = vmatpush1.bf16.msra.mxu0 %v4824
    %7175 = vmatprep.mubr.bf16.mxu0 %v169
    %7176 = vmatmul.mubr.bf16.gmra.mrb[0].mxu0 %v168
    %v7177 = vpop.f32.mrb[0].mxu0
    %v7178 = vadd.f32 %v7137, %v7177
    %v7179 = vpop.f32.mrb[0].mxu0
    %v7180 = vadd.f32 %v7139, %v7179
    %v7181 = vpop.f32.mrb[0].mxu0
    %v7182 = vpop.f32.mrb[0].mxu0
    %7183 = vdwg.mxu0
    %7184 = vmatprep.subr.bf16.mxu0 %v4833
    %7185 = vmatpush1.bf16.msra.mxu0 %v4832
    %7186 = vmatprep.subr.bf16.mxu0 %v4841
    %7187 = vmatpush1.bf16.msra.mxu0 %v4840
    %7188 = vmatprep.subr.bf16.mxu0 %v4849
    %7189 = vmatpush1.bf16.msra.mxu0 %v4848
    %7190 = vmatprep.subr.bf16.mxu0 %v4857
    %7191 = vmatpush1.bf16.msra.mxu0 %v4856
    %7192 = vmatprep.subr.bf16.mxu0 %v4865
    %7193 = vmatpush1.bf16.msra.mxu0 %v4864
    %7194 = vmatprep.subr.bf16.mxu0 %v4873
    %7195 = vmatpush1.bf16.msra.mxu0 %v4872
    %7196 = vmatprep.subr.bf16.mxu0 %v4881
    %7197 = vmatpush1.bf16.msra.mxu0 %v4880
    %7198 = vmatprep.subr.bf16.mxu0 %v4889
    %7199 = vmatpush1.bf16.msra.mxu0 %v4888
    %7200 = vmatprep.subr.bf16.mxu0 %v4897
    %7201 = vmatpush1.bf16.msra.mxu0 %v4896
    %7202 = vmatprep.subr.bf16.mxu0 %v4905
    %7203 = vmatpush1.bf16.msra.mxu0 %v4904
    %7204 = vmatprep.subr.bf16.mxu0 %v4913
    %7205 = vmatpush1.bf16.msra.mxu0 %v4912
    %7206 = vmatprep.subr.bf16.mxu0 %v4921
    %7207 = vmatpush1.bf16.msra.mxu0 %v4920
    %7208 = vmatprep.subr.bf16.mxu0 %v4929
    %7209 = vmatpush1.bf16.msra.mxu0 %v4928
    %7210 = vmatprep.subr.bf16.mxu0 %v4937
    %7211 = vmatpush1.bf16.msra.mxu0 %v4936
    %7212 = vmatprep.subr.bf16.mxu0 %v4945
    %7213 = vmatpush1.bf16.msra.mxu0 %v4944
    %7214 = vmatprep.subr.bf16.mxu0 %v4953
    %7215 = vmatpush1.bf16.msra.mxu0 %v4952
    %7216 = vmatprep.mubr.bf16.mxu0 %v171
    %7217 = vmatmul.mubr.bf16.gmra.mrb[0].mxu0 %v170
    %v7218 = vpop.f32.mrb[0].mxu0
    %v7219 = vadd.f32 %v7178, %v7218
    %v7220 = vpop.f32.mrb[0].mxu0
    %v7221 = vadd.f32 %v7180, %v7220
    %v7222 = vpop.f32.mrb[0].mxu0
    %v7223 = vpop.f32.mrb[0].mxu0
    %7224 = vdwg.mxu0
    %7225 = vmatprep.subr.bf16.mxu0 %v4961
    %7226 = vmatpush1.bf16.msra.mxu0 %v4960
    %7227 = vmatprep.subr.bf16.mxu0 %v4969
    %7228 = vmatpush1.bf16.msra.mxu0 %v4968
    %7229 = vmatprep.subr.bf16.mxu0 %v4977
    %7230 = vmatpush1.bf16.msra.mxu0 %v4976
    %7231 = vmatprep.subr.bf16.mxu0 %v4985
    %7232 = vmatpush1.bf16.msra.mxu0 %v4984
    %7233 = vmatprep.subr.bf16.mxu0 %v4993
    %7234 = vmatpush1.bf16.msra.mxu0 %v4992
    %7235 = vmatprep.subr.bf16.mxu0 %v5001
    %7236 = vmatpush1.bf16.msra.mxu0 %v5000
    %7237 = vmatprep.subr.bf16.mxu0 %v5009
    %7238 = vmatpush1.bf16.msra.mxu0 %v5008
    %7239 = vmatprep.subr.bf16.mxu0 %v5017
    %7240 = vmatpush1.bf16.msra.mxu0 %v5016
    %7241 = vmatprep.subr.bf16.mxu0 %v5025
    %7242 = vmatpush1.bf16.msra.mxu0 %v5024
    %7243 = vmatprep.subr.bf16.mxu0 %v5033
    %7244 = vmatpush1.bf16.msra.mxu0 %v5032
    %7245 = vmatprep.subr.bf16.mxu0 %v5041
    %7246 = vmatpush1.bf16.msra.mxu0 %v5040
    %7247 = vmatprep.subr.bf16.mxu0 %v5049
    %7248 = vmatpush1.bf16.msra.mxu0 %v5048
    %7249 = vmatprep.subr.bf16.mxu0 %v5057
    %7250 = vmatpush1.bf16.msra.mxu0 %v5056
    %7251 = vmatprep.subr.bf16.mxu0 %v5065
    %7252 = vmatpush1.bf16.msra.mxu0 %v5064
    %7253 = vmatprep.subr.bf16.mxu0 %v5073
    %7254 = vmatpush1.bf16.msra.mxu0 %v5072
    %7255 = vmatprep.subr.bf16.mxu0 %v5081
    %7256 = vmatpush1.bf16.msra.mxu0 %v5080
    %7257 = vmatprep.mubr.bf16.mxu0 %v173
    %7258 = vmatmul.mubr.bf16.gmra.mrb[0].mxu0 %v172
    %v7259 = vpop.f32.mrb[0].mxu0
    %v7260 = vadd.f32 %v7219, %v7259
    %v7261 = vpop.f32.mrb[0].mxu0
    %v7262 = vadd.f32 %v7221, %v7261
    %v7263 = vpop.f32.mrb[0].mxu0
    %v7264 = vpop.f32.mrb[0].mxu0
    %7265 = vdwg.mxu0
    %7266 = vmatprep.subr.bf16.mxu0 %v5089
    %7267 = vmatpush1.bf16.msra.mxu0 %v5088
    %7268 = vmatprep.subr.bf16.mxu0 %v5097
    %7269 = vmatpush1.bf16.msra.mxu0 %v5096
    %7270 = vmatprep.subr.bf16.mxu0 %v5105
    %7271 = vmatpush1.bf16.msra.mxu0 %v5104
    %7272 = vmatprep.subr.bf16.mxu0 %v5113
    %7273 = vmatpush1.bf16.msra.mxu0 %v5112
    %7274 = vmatprep.subr.bf16.mxu0 %v5121
    %7275 = vmatpush1.bf16.msra.mxu0 %v5120
    %7276 = vmatprep.subr.bf16.mxu0 %v5129
    %7277 = vmatpush1.bf16.msra.mxu0 %v5128
    %7278 = vmatprep.subr.bf16.mxu0 %v5137
    %7279 = vmatpush1.bf16.msra.mxu0 %v5136
    %7280 = vmatprep.subr.bf16.mxu0 %v5145
    %7281 = vmatpush1.bf16.msra.mxu0 %v5144
    %7282 = vmatprep.subr.bf16.mxu0 %v5153
    %7283 = vmatpush1.bf16.msra.mxu0 %v5152
    %7284 = vmatprep.subr.bf16.mxu0 %v5161
    %7285 = vmatpush1.bf16.msra.mxu0 %v5160
    %7286 = vmatprep.subr.bf16.mxu0 %v5169
    %7287 = vmatpush1.bf16.msra.mxu0 %v5168
    %7288 = vmatprep.subr.bf16.mxu0 %v5177
    %7289 = vmatpush1.bf16.msra.mxu0 %v5176
    %7290 = vmatprep.subr.bf16.mxu0 %v5185
    %7291 = vmatpush1.bf16.msra.mxu0 %v5184
    %7292 = vmatprep.subr.bf16.mxu0 %v5193
    %7293 = vmatpush1.bf16.msra.mxu0 %v5192
    %7294 = vmatprep.subr.bf16.mxu0 %v5201
    %7295 = vmatpush1.bf16.msra.mxu0 %v5200
    %7296 = vmatprep.subr.bf16.mxu0 %v5209
    %7297 = vmatpush1.bf16.msra.mxu0 %v5208
    %7298 = vmatprep.mubr.bf16.mxu0 %v175
    %7299 = vmatmul.mubr.bf16.gmra.mrb[0].mxu0 %v174
    %v7300 = vpop.f32.mrb[0].mxu0
    %v7301 = vadd.f32 %v7260, %v7300
    %v7302 = vpop.f32.mrb[0].mxu0
    %v7303 = vadd.f32 %v7262, %v7302
    %v7304 = vpop.f32.mrb[0].mxu0
    %v7305 = vpop.f32.mrb[0].mxu0
    %7306 = vdwg.mxu0
    %7307 = vmatprep.subr.bf16.mxu0 %v5217
    %7308 = vmatpush1.bf16.msra.mxu0 %v5216
    %7309 = vmatprep.subr.bf16.mxu0 %v5225
    %7310 = vmatpush1.bf16.msra.mxu0 %v5224
    %7311 = vmatprep.subr.bf16.mxu0 %v5233
    %7312 = vmatpush1.bf16.msra.mxu0 %v5232
    %7313 = vmatprep.subr.bf16.mxu0 %v5241
    %7314 = vmatpush1.bf16.msra.mxu0 %v5240
    %7315 = vmatprep.subr.bf16.mxu0 %v5249
    %7316 = vmatpush1.bf16.msra.mxu0 %v5248
    %7317 = vmatprep.subr.bf16.mxu0 %v5257
    %7318 = vmatpush1.bf16.msra.mxu0 %v5256
    %7319 = vmatprep.subr.bf16.mxu0 %v5265
    %7320 = vmatpush1.bf16.msra.mxu0 %v5264
    %7321 = vmatprep.subr.bf16.mxu0 %v5273
    %7322 = vmatpush1.bf16.msra.mxu0 %v5272
    %7323 = vmatprep.subr.bf16.mxu0 %v5281
    %7324 = vmatpush1.bf16.msra.mxu0 %v5280
    %7325 = vmatprep.subr.bf16.mxu0 %v5289
    %7326 = vmatpush1.bf16.msra.mxu0 %v5288
    %7327 = vmatprep.subr.bf16.mxu0 %v5297
    %7328 = vmatpush1.bf16.msra.mxu0 %v5296
    %7329 = vmatprep.subr.bf16.mxu0 %v5305
    %7330 = vmatpush1.bf16.msra.mxu0 %v5304
    %7331 = vmatprep.subr.bf16.mxu0 %v5313
    %7332 = vmatpush1.bf16.msra.mxu0 %v5312
    %7333 = vmatprep.subr.bf16.mxu0 %v5321
    %7334 = vmatpush1.bf16.msra.mxu0 %v5320
    %7335 = vmatprep.subr.bf16.mxu0 %v5329
    %7336 = vmatpush1.bf16.msra.mxu0 %v5328
    %7337 = vmatprep.subr.bf16.mxu0 %v5337
    %7338 = vmatpush1.bf16.msra.mxu0 %v5336
    %7339 = vmatprep.mubr.bf16.mxu0 %v177
    %7340 = vmatmul.mubr.bf16.gmra.mrb[0].mxu0 %v176
    %v7341 = vpop.f32.mrb[0].mxu0
    %v7342 = vadd.f32 %v7301, %v7341
    %v7343 = vpop.f32.mrb[0].mxu0
    %v7344 = vadd.f32 %v7303, %v7343
    %v7345 = vpop.f32.mrb[0].mxu0
    %v7346 = vpop.f32.mrb[0].mxu0
    %7347 = vdwg.mxu0
    %7348 = vmatprep.subr.bf16.mxu0 %v4323
    %7349 = vmatpush1.bf16.msra.mxu0 %v4322
    %7350 = vmatprep.subr.bf16.mxu0 %v4331
    %7351 = vmatpush1.bf16.msra.mxu0 %v4330
    %7352 = vmatprep.subr.bf16.mxu0 %v4339
    %7353 = vmatpush1.bf16.msra.mxu0 %v4338
    %7354 = vmatprep.subr.bf16.mxu0 %v4347
    %7355 = vmatpush1.bf16.msra.mxu0 %v4346
    %7356 = vmatprep.subr.bf16.mxu0 %v4355
    %7357 = vmatpush1.bf16.msra.mxu0 %v4354
    %7358 = vmatprep.subr.bf16.mxu0 %v4363
    %7359 = vmatpush1.bf16.msra.mxu0 %v4362
    %7360 = vmatprep.subr.bf16.mxu0 %v4371
    %7361 = vmatpush1.bf16.msra.mxu0 %v4370
    %7362 = vmatprep.subr.bf16.mxu0 %v4379
    %7363 = vmatpush1.bf16.msra.mxu0 %v4378
    %7364 = vmatprep.subr.bf16.mxu0 %v4387
    %7365 = vmatpush1.bf16.msra.mxu0 %v4386
    %7366 = vmatprep.subr.bf16.mxu0 %v4395
    %7367 = vmatpush1.bf16.msra.mxu0 %v4394
    %7368 = vmatprep.subr.bf16.mxu0 %v4403
    %7369 = vmatpush1.bf16.msra.mxu0 %v4402
    %7370 = vmatprep.subr.bf16.mxu0 %v4411
    %7371 = vmatpush1.bf16.msra.mxu0 %v4410
    %7372 = vmatprep.subr.bf16.mxu0 %v4419
    %7373 = vmatpush1.bf16.msra.mxu0 %v4418
    %7374 = vmatprep.subr.bf16.mxu0 %v4427
    %7375 = vmatpush1.bf16.msra.mxu0 %v4426
    %7376 = vmatprep.subr.bf16.mxu0 %v4435
    %7377 = vmatpush1.bf16.msra.mxu0 %v4434
    %7378 = vmatprep.subr.bf16.mxu0 %v4443
    %7379 = vmatpush1.bf16.msra.mxu0 %v4442
    %7380 = vmatprep.mubr.bf16.mxu0 %v163
    %7381 = vmatmul.mubr.bf16.gmra.mrb[0].mxu0 %v162
    %v7382 = vpop.f32.mrb[0].mxu0
    %v7383 = vadd.f32 %v1231, %v7382
    %v7384 = vpop.f32.mrb[0].mxu0
    %v7385 = vadd.f32 %v1235, %v7384
    %v7386 = vpop.f32.mrb[0].mxu0
    %v7387 = vpop.f32.mrb[0].mxu0
    %7388 = vdwg.mxu0
    %7389 = vmatprep.subr.bf16.mxu0 %v4451
    %7390 = vmatpush1.bf16.msra.mxu0 %v4450
    %7391 = vmatprep.subr.bf16.mxu0 %v4459
    %7392 = vmatpush1.bf16.msra.mxu0 %v4458
    %7393 = vmatprep.subr.bf16.mxu0 %v4467
    %7394 = vmatpush1.bf16.msra.mxu0 %v4466
    %7395 = vmatprep.subr.bf16.mxu0 %v4475
    %7396 = vmatpush1.bf16.msra.mxu0 %v4474
    %7397 = vmatprep.subr.bf16.mxu0 %v4483
    %7398 = vmatpush1.bf16.msra.mxu0 %v4482
    %7399 = vmatprep.subr.bf16.mxu0 %v4491
    %7400 = vmatpush1.bf16.msra.mxu0 %v4490
    %7401 = vmatprep.subr.bf16.mxu0 %v4499
    %7402 = vmatpush1.bf16.msra.mxu0 %v4498
    %7403 = vmatprep.subr.bf16.mxu0 %v4507
    %7404 = vmatpush1.bf16.msra.mxu0 %v4506
    %7405 = vmatprep.subr.bf16.mxu0 %v4515
    %7406 = vmatpush1.bf16.msra.mxu0 %v4514
    %7407 = vmatprep.subr.bf16.mxu0 %v4523
    %7408 = vmatpush1.bf16.msra.mxu0 %v4522
    %7409 = vmatprep.subr.bf16.mxu0 %v4531
    %7410 = vmatpush1.bf16.msra.mxu0 %v4530
    %7411 = vmatprep.subr.bf16.mxu0 %v4539
    %7412 = vmatpush1.bf16.msra.mxu0 %v4538
    %7413 = vmatprep.subr.bf16.mxu0 %v4547
    %7414 = vmatpush1.bf16.msra.mxu0 %v4546
    %7415 = vmatprep.subr.bf16.mxu0 %v4555
    %7416 = vmatpush1.bf16.msra.mxu0 %v4554
    %7417 = vmatprep.subr.bf16.mxu0 %v4563
    %7418 = vmatpush1.bf16.msra.mxu0 %v4562
    %7419 = vmatprep.subr.bf16.mxu0 %v4571
    %7420 = vmatpush1.bf16.msra.mxu0 %v4570
    %7421 = vmatprep.mubr.bf16.mxu0 %v165
    %7422 = vmatmul.mubr.bf16.gmra.mrb[0].mxu0 %v164
    %v7423 = vpop.f32.mrb[0].mxu0
    %v7424 = vadd.f32 %v7383, %v7423
    %v7425 = vpop.f32.mrb[0].mxu0
    %v7426 = vadd.f32 %v7385, %v7425
    %v7427 = vpop.f32.mrb[0].mxu0
    %v7428 = vpop.f32.mrb[0].mxu0
    %7429 = vdwg.mxu0
    %7430 = vmatprep.subr.bf16.mxu0 %v4579
    %7431 = vmatpush1.bf16.msra.mxu0 %v4578
    %7432 = vmatprep.subr.bf16.mxu0 %v4587
    %7433 = vmatpush1.bf16.msra.mxu0 %v4586
    %7434 = vmatprep.subr.bf16.mxu0 %v4595
    %7435 = vmatpush1.bf16.msra.mxu0 %v4594
    %7436 = vmatprep.subr.bf16.mxu0 %v4603
    %7437 = vmatpush1.bf16.msra.mxu0 %v4602
    %7438 = vmatprep.subr.bf16.mxu0 %v4611
    %7439 = vmatpush1.bf16.msra.mxu0 %v4610
    %7440 = vmatprep.subr.bf16.mxu0 %v4619
    %7441 = vmatpush1.bf16.msra.mxu0 %v4618
    %7442 = vmatprep.subr.bf16.mxu0 %v4627
    %7443 = vmatpush1.bf16.msra.mxu0 %v4626
    %7444 = vmatprep.subr.bf16.mxu0 %v4635
    %7445 = vmatpush1.bf16.msra.mxu0 %v4634
    %7446 = vmatprep.subr.bf16.mxu0 %v4643
    %7447 = vmatpush1.bf16.msra.mxu0 %v4642
    %7448 = vmatprep.subr.bf16.mxu0 %v4651
    %7449 = vmatpush1.bf16.msra.mxu0 %v4650
    %7450 = vmatprep.subr.bf16.mxu0 %v4659
    %7451 = vmatpush1.bf16.msra.mxu0 %v4658
    %7452 = vmatprep.subr.bf16.mxu0 %v4667
    %7453 = vmatpush1.bf16.msra.mxu0 %v4666
    %7454 = vmatprep.subr.bf16.mxu0 %v4675
    %7455 = vmatpush1.bf16.msra.mxu0 %v4674
    %7456 = vmatprep.subr.bf16.mxu0 %v4683
    %7457 = vmatpush1.bf16.msra.mxu0 %v4682
    %7458 = vmatprep.subr.bf16.mxu0 %v4691
    %7459 = vmatpush1.bf16.msra.mxu0 %v4690
    %7460 = vmatprep.subr.bf16.mxu0 %v4699
    %7461 = vmatpush1.bf16.msra.mxu0 %v4698
    %7462 = vmatprep.mubr.bf16.mxu0 %v167
    %7463 = vmatmul.mubr.bf16.gmra.mrb[0].mxu0 %v166
    %v7464 = vpop.f32.mrb[0].mxu0
    %v7465 = vadd.f32 %v7424, %v7464
    %v7466 = vpop.f32.mrb[0].mxu0
    %v7467 = vadd.f32 %v7426, %v7466
    %v7468 = vpop.f32.mrb[0].mxu0
    %v7469 = vpop.f32.mrb[0].mxu0
    %7470 = vdwg.mxu0
    %7471 = vmatprep.subr.bf16.mxu0 %v4707
    %7472 = vmatpush1.bf16.msra.mxu0 %v4706
    %7473 = vmatprep.subr.bf16.mxu0 %v4715
    %7474 = vmatpush1.bf16.msra.mxu0 %v4714
    %7475 = vmatprep.subr.bf16.mxu0 %v4723
    %7476 = vmatpush1.bf16.msra.mxu0 %v4722
    %7477 = vmatprep.subr.bf16.mxu0 %v4731
    %7478 = vmatpush1.bf16.msra.mxu0 %v4730
    %7479 = vmatprep.subr.bf16.mxu0 %v4739
    %7480 = vmatpush1.bf16.msra.mxu0 %v4738
    %7481 = vmatprep.subr.bf16.mxu0 %v4747
    %7482 = vmatpush1.bf16.msra.mxu0 %v4746
    %7483 = vmatprep.subr.bf16.mxu0 %v4755
    %7484 = vmatpush1.bf16.msra.mxu0 %v4754
    %7485 = vmatprep.subr.bf16.mxu0 %v4763
    %7486 = vmatpush1.bf16.msra.mxu0 %v4762
    %7487 = vmatprep.subr.bf16.mxu0 %v4771
    %7488 = vmatpush1.bf16.msra.mxu0 %v4770
    %7489 = vmatprep.subr.bf16.mxu0 %v4779
    %7490 = vmatpush1.bf16.msra.mxu0 %v4778
    %7491 = vmatprep.subr.bf16.mxu0 %v4787
    %7492 = vmatpush1.bf16.msra.mxu0 %v4786
    %7493 = vmatprep.subr.bf16.mxu0 %v4795
    %7494 = vmatpush1.bf16.msra.mxu0 %v4794
    %7495 = vmatprep.subr.bf16.mxu0 %v4803
    %7496 = vmatpush1.bf16.msra.mxu0 %v4802
    %7497 = vmatprep.subr.bf16.mxu0 %v4811
    %7498 = vmatpush1.bf16.msra.mxu0 %v4810
    %7499 = vmatprep.subr.bf16.mxu0 %v4819
    %7500 = vmatpush1.bf16.msra.mxu0 %v4818
    %7501 = vmatprep.subr.bf16.mxu0 %v4827
    %7502 = vmatpush1.bf16.msra.mxu0 %v4826
    %7503 = vmatprep.mubr.bf16.mxu0 %v169
    %7504 = vmatmul.mubr.bf16.gmra.mrb[0].mxu0 %v168
    %v7505 = vpop.f32.mrb[0].mxu0
    %v7506 = vadd.f32 %v7465, %v7505
    %v7507 = vpop.f32.mrb[0].mxu0
    %v7508 = vadd.f32 %v7467, %v7507
    %v7509 = vpop.f32.mrb[0].mxu0
    %v7510 = vpop.f32.mrb[0].mxu0
    %7511 = vdwg.mxu0
    %7512 = vmatprep.subr.bf16.mxu0 %v4835
    %7513 = vmatpush1.bf16.msra.mxu0 %v4834
    %7514 = vmatprep.subr.bf16.mxu0 %v4843
    %7515 = vmatpush1.bf16.msra.mxu0 %v4842
    %7516 = vmatprep.subr.bf16.mxu0 %v4851
    %7517 = vmatpush1.bf16.msra.mxu0 %v4850
    %7518 = vmatprep.subr.bf16.mxu0 %v4859
    %7519 = vmatpush1.bf16.msra.mxu0 %v4858
    %7520 = vmatprep.subr.bf16.mxu0 %v4867
    %7521 = vmatpush1.bf16.msra.mxu0 %v4866
    %7522 = vmatprep.subr.bf16.mxu0 %v4875
    %7523 = vmatpush1.bf16.msra.mxu0 %v4874
    %7524 = vmatprep.subr.bf16.mxu0 %v4883
    %7525 = vmatpush1.bf16.msra.mxu0 %v4882
    %7526 = vmatprep.subr.bf16.mxu0 %v4891
    %7527 = vmatpush1.bf16.msra.mxu0 %v4890
    %7528 = vmatprep.subr.bf16.mxu0 %v4899
    %7529 = vmatpush1.bf16.msra.mxu0 %v4898
    %7530 = vmatprep.subr.bf16.mxu0 %v4907
    %7531 = vmatpush1.bf16.msra.mxu0 %v4906
    %7532 = vmatprep.subr.bf16.mxu0 %v4915
    %7533 = vmatpush1.bf16.msra.mxu0 %v4914
    %7534 = vmatprep.subr.bf16.mxu0 %v4923
    %7535 = vmatpush1.bf16.msra.mxu0 %v4922
    %7536 = vmatprep.subr.bf16.mxu0 %v4931
    %7537 = vmatpush1.bf16.msra.mxu0 %v4930
    %7538 = vmatprep.subr.bf16.mxu0 %v4939
    %7539 = vmatpush1.bf16.msra.mxu0 %v4938
    %7540 = vmatprep.subr.bf16.mxu0 %v4947
    %7541 = vmatpush1.bf16.msra.mxu0 %v4946
    %7542 = vmatprep.subr.bf16.mxu0 %v4955
    %7543 = vmatpush1.bf16.msra.mxu0 %v4954
    %7544 = vmatprep.mubr.bf16.mxu0 %v171
    %7545 = vmatmul.mubr.bf16.gmra.mrb[0].mxu0 %v170
    %v7546 = vpop.f32.mrb[0].mxu0
    %v7547 = vadd.f32 %v7506, %v7546
    %v7548 = vpop.f32.mrb[0].mxu0
    %v7549 = vadd.f32 %v7508, %v7548
    %v7550 = vpop.f32.mrb[0].mxu0
    %v7551 = vpop.f32.mrb[0].mxu0
    %7552 = vdwg.mxu0
    %7553 = vmatprep.subr.bf16.mxu0 %v4963
    %7554 = vmatpush1.bf16.msra.mxu0 %v4962
    %7555 = vmatprep.subr.bf16.mxu0 %v4971
    %7556 = vmatpush1.bf16.msra.mxu0 %v4970
    %7557 = vmatprep.subr.bf16.mxu0 %v4979
    %7558 = vmatpush1.bf16.msra.mxu0 %v4978
    %7559 = vmatprep.subr.bf16.mxu0 %v4987
    %7560 = vmatpush1.bf16.msra.mxu0 %v4986
    %7561 = vmatprep.subr.bf16.mxu0 %v4995
    %7562 = vmatpush1.bf16.msra.mxu0 %v4994
    %7563 = vmatprep.subr.bf16.mxu0 %v5003
    %7564 = vmatpush1.bf16.msra.mxu0 %v5002
    %7565 = vmatprep.subr.bf16.mxu0 %v5011
    %7566 = vmatpush1.bf16.msra.mxu0 %v5010
    %7567 = vmatprep.subr.bf16.mxu0 %v5019
    %7568 = vmatpush1.bf16.msra.mxu0 %v5018
    %7569 = vmatprep.subr.bf16.mxu0 %v5027
    %7570 = vmatpush1.bf16.msra.mxu0 %v5026
    %7571 = vmatprep.subr.bf16.mxu0 %v5035
    %7572 = vmatpush1.bf16.msra.mxu0 %v5034
    %7573 = vmatprep.subr.bf16.mxu0 %v5043
    %7574 = vmatpush1.bf16.msra.mxu0 %v5042
    %7575 = vmatprep.subr.bf16.mxu0 %v5051
    %7576 = vmatpush1.bf16.msra.mxu0 %v5050
    %7577 = vmatprep.subr.bf16.mxu0 %v5059
    %7578 = vmatpush1.bf16.msra.mxu0 %v5058
    %7579 = vmatprep.subr.bf16.mxu0 %v5067
    %7580 = vmatpush1.bf16.msra.mxu0 %v5066
    %7581 = vmatprep.subr.bf16.mxu0 %v5075
    %7582 = vmatpush1.bf16.msra.mxu0 %v5074
    %7583 = vmatprep.subr.bf16.mxu0 %v5083
    %7584 = vmatpush1.bf16.msra.mxu0 %v5082
    %7585 = vmatprep.mubr.bf16.mxu0 %v173
    %7586 = vmatmul.mubr.bf16.gmra.mrb[0].mxu0 %v172
    %v7587 = vpop.f32.mrb[0].mxu0
    %v7588 = vadd.f32 %v7547, %v7587
    %v7589 = vpop.f32.mrb[0].mxu0
    %v7590 = vadd.f32 %v7549, %v7589
    %v7591 = vpop.f32.mrb[0].mxu0
    %v7592 = vpop.f32.mrb[0].mxu0
    %7593 = vdwg.mxu0
    %7594 = vmatprep.subr.bf16.mxu0 %v5091
    %7595 = vmatpush1.bf16.msra.mxu0 %v5090
    %7596 = vmatprep.subr.bf16.mxu0 %v5099
    %7597 = vmatpush1.bf16.msra.mxu0 %v5098
    %7598 = vmatprep.subr.bf16.mxu0 %v5107
    %7599 = vmatpush1.bf16.msra.mxu0 %v5106
    %7600 = vmatprep.subr.bf16.mxu0 %v5115
    %7601 = vmatpush1.bf16.msra.mxu0 %v5114
    %7602 = vmatprep.subr.bf16.mxu0 %v5123
    %7603 = vmatpush1.bf16.msra.mxu0 %v5122
    %7604 = vmatprep.subr.bf16.mxu0 %v5131
    %7605 = vmatpush1.bf16.msra.mxu0 %v5130
    %7606 = vmatprep.subr.bf16.mxu0 %v5139
    %7607 = vmatpush1.bf16.msra.mxu0 %v5138
    %7608 = vmatprep.subr.bf16.mxu0 %v5147
    %7609 = vmatpush1.bf16.msra.mxu0 %v5146
    %7610 = vmatprep.subr.bf16.mxu0 %v5155
    %7611 = vmatpush1.bf16.msra.mxu0 %v5154
    %7612 = vmatprep.subr.bf16.mxu0 %v5163
    %7613 = vmatpush1.bf16.msra.mxu0 %v5162
    %7614 = vmatprep.subr.bf16.mxu0 %v5171
    %7615 = vmatpush1.bf16.msra.mxu0 %v5170
    %7616 = vmatprep.subr.bf16.mxu0 %v5179
    %7617 = vmatpush1.bf16.msra.mxu0 %v5178
    %7618 = vmatprep.subr.bf16.mxu0 %v5187
    %7619 = vmatpush1.bf16.msra.mxu0 %v5186
    %7620 = vmatprep.subr.bf16.mxu0 %v5195
    %7621 = vmatpush1.bf16.msra.mxu0 %v5194
    %7622 = vmatprep.subr.bf16.mxu0 %v5203
    %7623 = vmatpush1.bf16.msra.mxu0 %v5202
    %7624 = vmatprep.subr.bf16.mxu0 %v5211
    %7625 = vmatpush1.bf16.msra.mxu0 %v5210
    %7626 = vmatprep.mubr.bf16.mxu0 %v175
    %7627 = vmatmul.mubr.bf16.gmra.mrb[0].mxu0 %v174
    %v7628 = vpop.f32.mrb[0].mxu0
    %v7629 = vadd.f32 %v7588, %v7628
    %v7630 = vpop.f32.mrb[0].mxu0
    %v7631 = vadd.f32 %v7590, %v7630
    %v7632 = vpop.f32.mrb[0].mxu0
    %v7633 = vpop.f32.mrb[0].mxu0
    %7634 = vdwg.mxu0
    %7635 = vmatprep.subr.bf16.mxu0 %v5219
    %7636 = vmatpush1.bf16.msra.mxu0 %v5218
    %7637 = vmatprep.subr.bf16.mxu0 %v5227
    %7638 = vmatpush1.bf16.msra.mxu0 %v5226
    %7639 = vmatprep.subr.bf16.mxu0 %v5235
    %7640 = vmatpush1.bf16.msra.mxu0 %v5234
    %7641 = vmatprep.subr.bf16.mxu0 %v5243
    %7642 = vmatpush1.bf16.msra.mxu0 %v5242
    %7643 = vmatprep.subr.bf16.mxu0 %v5251
    %7644 = vmatpush1.bf16.msra.mxu0 %v5250
    %7645 = vmatprep.subr.bf16.mxu0 %v5259
    %7646 = vmatpush1.bf16.msra.mxu0 %v5258
    %7647 = vmatprep.subr.bf16.mxu0 %v5267
    %7648 = vmatpush1.bf16.msra.mxu0 %v5266
    %7649 = vmatprep.subr.bf16.mxu0 %v5275
    %7650 = vmatpush1.bf16.msra.mxu0 %v5274
    %7651 = vmatprep.subr.bf16.mxu0 %v5283
    %7652 = vmatpush1.bf16.msra.mxu0 %v5282
    %7653 = vmatprep.subr.bf16.mxu0 %v5291
    %7654 = vmatpush1.bf16.msra.mxu0 %v5290
    %7655 = vmatprep.subr.bf16.mxu0 %v5299
    %7656 = vmatpush1.bf16.msra.mxu0 %v5298
    %7657 = vmatprep.subr.bf16.mxu0 %v5307
    %7658 = vmatpush1.bf16.msra.mxu0 %v5306
    %7659 = vmatprep.subr.bf16.mxu0 %v5315
    %7660 = vmatpush1.bf16.msra.mxu0 %v5314
    %7661 = vmatprep.subr.bf16.mxu0 %v5323
    %7662 = vmatpush1.bf16.msra.mxu0 %v5322
    %7663 = vmatprep.subr.bf16.mxu0 %v5331
    %7664 = vmatpush1.bf16.msra.mxu0 %v5330
    %7665 = vmatprep.subr.bf16.mxu0 %v5339
    %7666 = vmatpush1.bf16.msra.mxu0 %v5338
    %7667 = vmatprep.mubr.bf16.mxu0 %v177
    %7668 = vmatmul.mubr.bf16.gmra.mrb[0].mxu0 %v176
    %v7669 = vpop.f32.mrb[0].mxu0
    %v7670 = vadd.f32 %v7629, %v7669
    %v7671 = vpop.f32.mrb[0].mxu0
    %v7672 = vadd.f32 %v7631, %v7671
    %v7673 = vpop.f32.mrb[0].mxu0
    %v7674 = vpop.f32.mrb[0].mxu0
    %7675 = vdwg.mxu0
    %v7676 = vmax.f32 %v6686, 0.0
    %v7677 = vmax.f32 %v6688, 0.0
    %v7678 = vmax.f32 %v7014, 0.0
    %v7679 = vmax.f32 %v7016, 0.0
    %v7680 = vmax.f32 %v7342, 0.0
    %v7681 = vmax.f32 %v7344, 0.0
    %v7682 = vmax.f32 %v7670, 0.0
    %v7683 = vmax.f32 %v7672, 0.0
    %v7684 = vpack.c.bf16 %v7676, %v7676
    %v7685 = vpack.c.bf16 %v7677, %v7677
    %v7686 = vpack.c.bf16 %v7678, %v7678
    %v7687 = vpack.c.bf16 %v7679, %v7679
    %v7688 = vpack.c.bf16 %v7680, %v7680
    %v7689 = vpack.c.bf16 %v7681, %v7681
    %v7690 = vpack.c.bf16 %v7682, %v7682
    %v7691 = vpack.c.bf16 %v7683, %v7683
    %v7692 = vld [vmem:[#allocation8] sm:$0xff]
    %v7693 = vld [vmem:[#allocation8 + $0x8] sm:$0xff]
    %v7694 = vld [vmem:[#allocation8 + $0x10] sm:$0xff]
    %v7695 = vld [vmem:[#allocation8 + $0x18] sm:$0xff]
    %v7696 = vld [vmem:[#allocation8 + $0x20] sm:$0xff]
    %v7697 = vld [vmem:[#allocation8 + $0x28] sm:$0xff]
    %v7698 = vld [vmem:[#allocation8 + $0x30] sm:$0xff]
    %v7699 = vld [vmem:[#allocation8 + $0x38] sm:$0xff]
    %v7700 = vld [vmem:[#allocation8 + $0x40] sm:$0xff]
    %v7701 = vld [vmem:[#allocation8 + $0x48] sm:$0xff]
    %v7702 = vld [vmem:[#allocation8 + $0x50] sm:$0xff]
    %v7703 = vld [vmem:[#allocation8 + $0x58] sm:$0xff]
    %v7704 = vld [vmem:[#allocation8 + $0x60] sm:$0xff]
    %v7705 = vld [vmem:[#allocation8 + $0x68] sm:$0xff]
    %v7706 = vld [vmem:[#allocation8 + $0x70] sm:$0xff]
    %v7707 = vld [vmem:[#allocation8 + $0x78] sm:$0xff]
    %v7708 = vld [vmem:[#allocation8 + $0x80] sm:$0xff]
    %v7709 = vld [vmem:[#allocation8 + $0x88] sm:$0xff]
    %v7710 = vld [vmem:[#allocation8 + $0x90] sm:$0xff]
    %v7711 = vld [vmem:[#allocation8 + $0x98] sm:$0xff]
    %v7712 = vld [vmem:[#allocation8 + $0xa0] sm:$0xff]
    %v7713 = vld [vmem:[#allocation8 + $0xa8] sm:$0xff]
    %v7714 = vld [vmem:[#allocation8 + $0xb0] sm:$0xff]
    %v7715 = vld [vmem:[#allocation8 + $0xb8] sm:$0xff]
    %v7716 = vld [vmem:[#allocation8 + $0xc0] sm:$0xff]
    %v7717 = vld [vmem:[#allocation8 + $0xc8] sm:$0xff]
    %v7718 = vld [vmem:[#allocation8 + $0xd0] sm:$0xff]
    %v7719 = vld [vmem:[#allocation8 + $0xd8] sm:$0xff]
    %v7720 = vld [vmem:[#allocation8 + $0xe0] sm:$0xff]
    %v7721 = vld [vmem:[#allocation8 + $0xe8] sm:$0xff]
    %v7722 = vld [vmem:[#allocation8 + $0xf0] sm:$0xff]
    %v7723 = vld [vmem:[#allocation8 + $0xf8] sm:$0xff]
    %v7724 = vld [vmem:[#allocation8 + $0x100] sm:$0xff]
    %v7725 = vld [vmem:[#allocation8 + $0x108] sm:$0xff]
    %v7726 = vld [vmem:[#allocation8 + $0x110] sm:$0xff]
    %v7727 = vld [vmem:[#allocation8 + $0x118] sm:$0xff]
    %v7728 = vld [vmem:[#allocation8 + $0x120] sm:$0xff]
    %v7729 = vld [vmem:[#allocation8 + $0x128] sm:$0xff]
    %v7730 = vld [vmem:[#allocation8 + $0x130] sm:$0xff]
    %v7731 = vld [vmem:[#allocation8 + $0x138] sm:$0xff]
    %v7732 = vld [vmem:[#allocation8 + $0x140] sm:$0xff]
    %v7733 = vld [vmem:[#allocation8 + $0x148] sm:$0xff]
    %v7734 = vld [vmem:[#allocation8 + $0x150] sm:$0xff]
    %v7735 = vld [vmem:[#allocation8 + $0x158] sm:$0xff]
    %v7736 = vld [vmem:[#allocation8 + $0x160] sm:$0xff]
    %v7737 = vld [vmem:[#allocation8 + $0x168] sm:$0xff]
    %v7738 = vld [vmem:[#allocation8 + $0x170] sm:$0xff]
    %v7739 = vld [vmem:[#allocation8 + $0x178] sm:$0xff]
    %v7740 = vld [vmem:[#allocation8 + $0x180] sm:$0xff]
    %v7741 = vld [vmem:[#allocation8 + $0x188] sm:$0xff]
    %v7742 = vld [vmem:[#allocation8 + $0x190] sm:$0xff]
    %v7743 = vld [vmem:[#allocation8 + $0x198] sm:$0xff]
    %v7744 = vld [vmem:[#allocation8 + $0x1a0] sm:$0xff]
    %v7745 = vld [vmem:[#allocation8 + $0x1a8] sm:$0xff]
    %v7746 = vld [vmem:[#allocation8 + $0x1b0] sm:$0xff]
    %v7747 = vld [vmem:[#allocation8 + $0x1b8] sm:$0xff]
    %v7748 = vld [vmem:[#allocation8 + $0x1c0] sm:$0xff]
    %v7749 = vld [vmem:[#allocation8 + $0x1c8] sm:$0xff]
    %v7750 = vld [vmem:[#allocation8 + $0x1d0] sm:$0xff]
    %v7751 = vld [vmem:[#allocation8 + $0x1d8] sm:$0xff]
    %v7752 = vld [vmem:[#allocation8 + $0x1e0] sm:$0xff]
    %v7753 = vld [vmem:[#allocation8 + $0x1e8] sm:$0xff]
    %v7754 = vld [vmem:[#allocation8 + $0x1f0] sm:$0xff]
    %v7755 = vld [vmem:[#allocation8 + $0x1f8] sm:$0xff]
    %v7756 = vld [vmem:[#allocation8 + $0x200] sm:$0xff]
    %v7757 = vld [vmem:[#allocation8 + $0x208] sm:$0xff]
    %v7758 = vld [vmem:[#allocation8 + $0x210] sm:$0xff]
    %v7759 = vld [vmem:[#allocation8 + $0x218] sm:$0xff]
    %v7760 = vld [vmem:[#allocation8 + $0x220] sm:$0xff]
    %v7761 = vld [vmem:[#allocation8 + $0x228] sm:$0xff]
    %v7762 = vld [vmem:[#allocation8 + $0x230] sm:$0xff]
    %v7763 = vld [vmem:[#allocation8 + $0x238] sm:$0xff]
    %v7764 = vld [vmem:[#allocation8 + $0x240] sm:$0xff]
    %v7765 = vld [vmem:[#allocation8 + $0x248] sm:$0xff]
    %v7766 = vld [vmem:[#allocation8 + $0x250] sm:$0xff]
    %v7767 = vld [vmem:[#allocation8 + $0x258] sm:$0xff]
    %v7768 = vld [vmem:[#allocation8 + $0x260] sm:$0xff]
    %v7769 = vld [vmem:[#allocation8 + $0x268] sm:$0xff]
    %v7770 = vld [vmem:[#allocation8 + $0x270] sm:$0xff]
    %v7771 = vld [vmem:[#allocation8 + $0x278] sm:$0xff]
    %v7772 = vld [vmem:[#allocation8 + $0x280] sm:$0xff]
    %v7773 = vld [vmem:[#allocation8 + $0x288] sm:$0xff]
    %v7774 = vld [vmem:[#allocation8 + $0x290] sm:$0xff]
    %v7775 = vld [vmem:[#allocation8 + $0x298] sm:$0xff]
    %v7776 = vld [vmem:[#allocation8 + $0x2a0] sm:$0xff]
    %v7777 = vld [vmem:[#allocation8 + $0x2a8] sm:$0xff]
    %v7778 = vld [vmem:[#allocation8 + $0x2b0] sm:$0xff]
    %v7779 = vld [vmem:[#allocation8 + $0x2b8] sm:$0xff]
    %v7780 = vld [vmem:[#allocation8 + $0x2c0] sm:$0xff]
    %v7781 = vld [vmem:[#allocation8 + $0x2c8] sm:$0xff]
    %v7782 = vld [vmem:[#allocation8 + $0x2d0] sm:$0xff]
    %v7783 = vld [vmem:[#allocation8 + $0x2d8] sm:$0xff]
    %v7784 = vld [vmem:[#allocation8 + $0x2e0] sm:$0xff]
    %v7785 = vld [vmem:[#allocation8 + $0x2e8] sm:$0xff]
    %v7786 = vld [vmem:[#allocation8 + $0x2f0] sm:$0xff]
    %v7787 = vld [vmem:[#allocation8 + $0x2f8] sm:$0xff]
    %v7788 = vld [vmem:[#allocation8 + $0x300] sm:$0xff]
    %v7789 = vld [vmem:[#allocation8 + $0x308] sm:$0xff]
    %v7790 = vld [vmem:[#allocation8 + $0x310] sm:$0xff]
    %v7791 = vld [vmem:[#allocation8 + $0x318] sm:$0xff]
    %v7792 = vld [vmem:[#allocation8 + $0x320] sm:$0xff]
    %v7793 = vld [vmem:[#allocation8 + $0x328] sm:$0xff]
    %v7794 = vld [vmem:[#allocation8 + $0x330] sm:$0xff]
    %v7795 = vld [vmem:[#allocation8 + $0x338] sm:$0xff]
    %v7796 = vld [vmem:[#allocation8 + $0x340] sm:$0xff]
    %v7797 = vld [vmem:[#allocation8 + $0x348] sm:$0xff]
    %v7798 = vld [vmem:[#allocation8 + $0x350] sm:$0xff]
    %v7799 = vld [vmem:[#allocation8 + $0x358] sm:$0xff]
    %v7800 = vld [vmem:[#allocation8 + $0x360] sm:$0xff]
    %v7801 = vld [vmem:[#allocation8 + $0x368] sm:$0xff]
    %v7802 = vld [vmem:[#allocation8 + $0x370] sm:$0xff]
    %v7803 = vld [vmem:[#allocation8 + $0x378] sm:$0xff]
    %v7804 = vld [vmem:[#allocation8 + $0x380] sm:$0xff]
    %v7805 = vld [vmem:[#allocation8 + $0x388] sm:$0xff]
    %v7806 = vld [vmem:[#allocation8 + $0x390] sm:$0xff]
    %v7807 = vld [vmem:[#allocation8 + $0x398] sm:$0xff]
    %v7808 = vld [vmem:[#allocation8 + $0x3a0] sm:$0xff]
    %v7809 = vld [vmem:[#allocation8 + $0x3a8] sm:$0xff]
    %v7810 = vld [vmem:[#allocation8 + $0x3b0] sm:$0xff]
    %v7811 = vld [vmem:[#allocation8 + $0x3b8] sm:$0xff]
    %v7812 = vld [vmem:[#allocation8 + $0x3c0] sm:$0xff]
    %v7813 = vld [vmem:[#allocation8 + $0x3c8] sm:$0xff]
    %v7814 = vld [vmem:[#allocation8 + $0x3d0] sm:$0xff]
    %v7815 = vld [vmem:[#allocation8 + $0x3d8] sm:$0xff]
    %v7816 = vld [vmem:[#allocation8 + $0x3e0] sm:$0xff]
    %v7817 = vld [vmem:[#allocation8 + $0x3e8] sm:$0xff]
    %v7818 = vld [vmem:[#allocation8 + $0x3f0] sm:$0xff]
    %v7819 = vld [vmem:[#allocation8 + $0x3f8] sm:$0xff]
    %v7820 = vld [vmem:[#allocation8 + $0x400] sm:$0xff]
    %v7821 = vld [vmem:[#allocation8 + $0x408] sm:$0xff]
    %v7822 = vld [vmem:[#allocation8 + $0x410] sm:$0xff]
    %v7823 = vld [vmem:[#allocation8 + $0x418] sm:$0xff]
    %v7824 = vld [vmem:[#allocation8 + $0x420] sm:$0xff]
    %v7825 = vld [vmem:[#allocation8 + $0x428] sm:$0xff]
    %v7826 = vld [vmem:[#allocation8 + $0x430] sm:$0xff]
    %v7827 = vld [vmem:[#allocation8 + $0x438] sm:$0xff]
    %v7828 = vld [vmem:[#allocation8 + $0x440] sm:$0xff]
    %v7829 = vld [vmem:[#allocation8 + $0x448] sm:$0xff]
    %v7830 = vld [vmem:[#allocation8 + $0x450] sm:$0xff]
    %v7831 = vld [vmem:[#allocation8 + $0x458] sm:$0xff]
    %v7832 = vld [vmem:[#allocation8 + $0x460] sm:$0xff]
    %v7833 = vld [vmem:[#allocation8 + $0x468] sm:$0xff]
    %v7834 = vld [vmem:[#allocation8 + $0x470] sm:$0xff]
    %v7835 = vld [vmem:[#allocation8 + $0x478] sm:$0xff]
    %v7836 = vld [vmem:[#allocation8 + $0x480] sm:$0xff]
    %v7837 = vld [vmem:[#allocation8 + $0x488] sm:$0xff]
    %v7838 = vld [vmem:[#allocation8 + $0x490] sm:$0xff]
    %v7839 = vld [vmem:[#allocation8 + $0x498] sm:$0xff]
    %v7840 = vld [vmem:[#allocation8 + $0x4a0] sm:$0xff]
    %v7841 = vld [vmem:[#allocation8 + $0x4a8] sm:$0xff]
    %v7842 = vld [vmem:[#allocation8 + $0x4b0] sm:$0xff]
    %v7843 = vld [vmem:[#allocation8 + $0x4b8] sm:$0xff]
    %v7844 = vld [vmem:[#allocation8 + $0x4c0] sm:$0xff]
    %v7845 = vld [vmem:[#allocation8 + $0x4c8] sm:$0xff]
    %v7846 = vld [vmem:[#allocation8 + $0x4d0] sm:$0xff]
    %v7847 = vld [vmem:[#allocation8 + $0x4d8] sm:$0xff]
    %v7848 = vld [vmem:[#allocation8 + $0x4e0] sm:$0xff]
    %v7849 = vld [vmem:[#allocation8 + $0x4e8] sm:$0xff]
    %v7850 = vld [vmem:[#allocation8 + $0x4f0] sm:$0xff]
    %v7851 = vld [vmem:[#allocation8 + $0x4f8] sm:$0xff]
    %v7852 = vld [vmem:[#allocation8 + $0x500] sm:$0xff]
    %v7853 = vld [vmem:[#allocation8 + $0x508] sm:$0xff]
    %v7854 = vld [vmem:[#allocation8 + $0x510] sm:$0xff]
    %v7855 = vld [vmem:[#allocation8 + $0x518] sm:$0xff]
    %v7856 = vld [vmem:[#allocation8 + $0x520] sm:$0xff]
    %v7857 = vld [vmem:[#allocation8 + $0x528] sm:$0xff]
    %v7858 = vld [vmem:[#allocation8 + $0x530] sm:$0xff]
    %v7859 = vld [vmem:[#allocation8 + $0x538] sm:$0xff]
    %v7860 = vld [vmem:[#allocation8 + $0x540] sm:$0xff]
    %v7861 = vld [vmem:[#allocation8 + $0x548] sm:$0xff]
    %v7862 = vld [vmem:[#allocation8 + $0x550] sm:$0xff]
    %v7863 = vld [vmem:[#allocation8 + $0x558] sm:$0xff]
    %v7864 = vld [vmem:[#allocation8 + $0x560] sm:$0xff]
    %v7865 = vld [vmem:[#allocation8 + $0x568] sm:$0xff]
    %v7866 = vld [vmem:[#allocation8 + $0x570] sm:$0xff]
    %v7867 = vld [vmem:[#allocation8 + $0x578] sm:$0xff]
    %v7868 = vld [vmem:[#allocation8 + $0x580] sm:$0xff]
    %v7869 = vld [vmem:[#allocation8 + $0x588] sm:$0xff]
    %v7870 = vld [vmem:[#allocation8 + $0x590] sm:$0xff]
    %v7871 = vld [vmem:[#allocation8 + $0x598] sm:$0xff]
    %v7872 = vld [vmem:[#allocation8 + $0x5a0] sm:$0xff]
    %v7873 = vld [vmem:[#allocation8 + $0x5a8] sm:$0xff]
    %v7874 = vld [vmem:[#allocation8 + $0x5b0] sm:$0xff]
    %v7875 = vld [vmem:[#allocation8 + $0x5b8] sm:$0xff]
    %v7876 = vld [vmem:[#allocation8 + $0x5c0] sm:$0xff]
    %v7877 = vld [vmem:[#allocation8 + $0x5c8] sm:$0xff]
    %v7878 = vld [vmem:[#allocation8 + $0x5d0] sm:$0xff]
    %v7879 = vld [vmem:[#allocation8 + $0x5d8] sm:$0xff]
    %v7880 = vld [vmem:[#allocation8 + $0x5e0] sm:$0xff]
    %v7881 = vld [vmem:[#allocation8 + $0x5e8] sm:$0xff]
    %v7882 = vld [vmem:[#allocation8 + $0x5f0] sm:$0xff]
    %v7883 = vld [vmem:[#allocation8 + $0x5f8] sm:$0xff]
    %v7884 = vld [vmem:[#allocation8 + $0x600] sm:$0xff]
    %v7885 = vld [vmem:[#allocation8 + $0x608] sm:$0xff]
    %v7886 = vld [vmem:[#allocation8 + $0x610] sm:$0xff]
    %v7887 = vld [vmem:[#allocation8 + $0x618] sm:$0xff]
    %v7888 = vld [vmem:[#allocation8 + $0x620] sm:$0xff]
    %v7889 = vld [vmem:[#allocation8 + $0x628] sm:$0xff]
    %v7890 = vld [vmem:[#allocation8 + $0x630] sm:$0xff]
    %v7891 = vld [vmem:[#allocation8 + $0x638] sm:$0xff]
    %v7892 = vld [vmem:[#allocation8 + $0x640] sm:$0xff]
    %v7893 = vld [vmem:[#allocation8 + $0x648] sm:$0xff]
    %v7894 = vld [vmem:[#allocation8 + $0x650] sm:$0xff]
    %v7895 = vld [vmem:[#allocation8 + $0x658] sm:$0xff]
    %v7896 = vld [vmem:[#allocation8 + $0x660] sm:$0xff]
    %v7897 = vld [vmem:[#allocation8 + $0x668] sm:$0xff]
    %v7898 = vld [vmem:[#allocation8 + $0x670] sm:$0xff]
    %v7899 = vld [vmem:[#allocation8 + $0x678] sm:$0xff]
    %v7900 = vld [vmem:[#allocation8 + $0x680] sm:$0xff]
    %v7901 = vld [vmem:[#allocation8 + $0x688] sm:$0xff]
    %v7902 = vld [vmem:[#allocation8 + $0x690] sm:$0xff]
    %v7903 = vld [vmem:[#allocation8 + $0x698] sm:$0xff]
    %v7904 = vld [vmem:[#allocation8 + $0x6a0] sm:$0xff]
    %v7905 = vld [vmem:[#allocation8 + $0x6a8] sm:$0xff]
    %v7906 = vld [vmem:[#allocation8 + $0x6b0] sm:$0xff]
    %v7907 = vld [vmem:[#allocation8 + $0x6b8] sm:$0xff]
    %v7908 = vld [vmem:[#allocation8 + $0x6c0] sm:$0xff]
    %v7909 = vld [vmem:[#allocation8 + $0x6c8] sm:$0xff]
    %v7910 = vld [vmem:[#allocation8 + $0x6d0] sm:$0xff]
    %v7911 = vld [vmem:[#allocation8 + $0x6d8] sm:$0xff]
    %v7912 = vld [vmem:[#allocation8 + $0x6e0] sm:$0xff]
    %v7913 = vld [vmem:[#allocation8 + $0x6e8] sm:$0xff]
    %v7914 = vld [vmem:[#allocation8 + $0x6f0] sm:$0xff]
    %v7915 = vld [vmem:[#allocation8 + $0x6f8] sm:$0xff]
    %v7916 = vld [vmem:[#allocation8 + $0x700] sm:$0xff]
    %v7917 = vld [vmem:[#allocation8 + $0x708] sm:$0xff]
    %v7918 = vld [vmem:[#allocation8 + $0x710] sm:$0xff]
    %v7919 = vld [vmem:[#allocation8 + $0x718] sm:$0xff]
    %v7920 = vld [vmem:[#allocation8 + $0x720] sm:$0xff]
    %v7921 = vld [vmem:[#allocation8 + $0x728] sm:$0xff]
    %v7922 = vld [vmem:[#allocation8 + $0x730] sm:$0xff]
    %v7923 = vld [vmem:[#allocation8 + $0x738] sm:$0xff]
    %v7924 = vld [vmem:[#allocation8 + $0x740] sm:$0xff]
    %v7925 = vld [vmem:[#allocation8 + $0x748] sm:$0xff]
    %v7926 = vld [vmem:[#allocation8 + $0x750] sm:$0xff]
    %v7927 = vld [vmem:[#allocation8 + $0x758] sm:$0xff]
    %v7928 = vld [vmem:[#allocation8 + $0x760] sm:$0xff]
    %v7929 = vld [vmem:[#allocation8 + $0x768] sm:$0xff]
    %v7930 = vld [vmem:[#allocation8 + $0x770] sm:$0xff]
    %v7931 = vld [vmem:[#allocation8 + $0x778] sm:$0xff]
    %v7932 = vld [vmem:[#allocation8 + $0x780] sm:$0xff]
    %v7933 = vld [vmem:[#allocation8 + $0x788] sm:$0xff]
    %v7934 = vld [vmem:[#allocation8 + $0x790] sm:$0xff]
    %v7935 = vld [vmem:[#allocation8 + $0x798] sm:$0xff]
    %v7936 = vld [vmem:[#allocation8 + $0x7a0] sm:$0xff]
    %v7937 = vld [vmem:[#allocation8 + $0x7a8] sm:$0xff]
    %v7938 = vld [vmem:[#allocation8 + $0x7b0] sm:$0xff]
    %v7939 = vld [vmem:[#allocation8 + $0x7b8] sm:$0xff]
    %v7940 = vld [vmem:[#allocation8 + $0x7c0] sm:$0xff]
    %v7941 = vld [vmem:[#allocation8 + $0x7c8] sm:$0xff]
    %v7942 = vld [vmem:[#allocation8 + $0x7d0] sm:$0xff]
    %v7943 = vld [vmem:[#allocation8 + $0x7d8] sm:$0xff]
    %v7944 = vld [vmem:[#allocation8 + $0x7e0] sm:$0xff]
    %v7945 = vld [vmem:[#allocation8 + $0x7e8] sm:$0xff]
    %v7946 = vld [vmem:[#allocation8 + $0x7f0] sm:$0xff]
    %v7947 = vld [vmem:[#allocation8 + $0x7f8] sm:$0xff]
    %v7948 = vld [vmem:[#allocation8 + $0x800] sm:$0xff]
    %v7949 = vld [vmem:[#allocation8 + $0x808] sm:$0xff]
    %v7950 = vld [vmem:[#allocation8 + $0x810] sm:$0xff]
    %v7951 = vld [vmem:[#allocation8 + $0x818] sm:$0xff]
    %v7952 = vld [vmem:[#allocation8 + $0x820] sm:$0xff]
    %v7953 = vld [vmem:[#allocation8 + $0x828] sm:$0xff]
    %v7954 = vld [vmem:[#allocation8 + $0x830] sm:$0xff]
    %v7955 = vld [vmem:[#allocation8 + $0x838] sm:$0xff]
    %v7956 = vld [vmem:[#allocation8 + $0x840] sm:$0xff]
    %v7957 = vld [vmem:[#allocation8 + $0x848] sm:$0xff]
    %v7958 = vld [vmem:[#allocation8 + $0x850] sm:$0xff]
    %v7959 = vld [vmem:[#allocation8 + $0x858] sm:$0xff]
    %v7960 = vld [vmem:[#allocation8 + $0x860] sm:$0xff]
    %v7961 = vld [vmem:[#allocation8 + $0x868] sm:$0xff]
    %v7962 = vld [vmem:[#allocation8 + $0x870] sm:$0xff]
    %v7963 = vld [vmem:[#allocation8 + $0x878] sm:$0xff]
    %v7964 = vld [vmem:[#allocation8 + $0x880] sm:$0xff]
    %v7965 = vld [vmem:[#allocation8 + $0x888] sm:$0xff]
    %v7966 = vld [vmem:[#allocation8 + $0x890] sm:$0xff]
    %v7967 = vld [vmem:[#allocation8 + $0x898] sm:$0xff]
    %v7968 = vld [vmem:[#allocation8 + $0x8a0] sm:$0xff]
    %v7969 = vld [vmem:[#allocation8 + $0x8a8] sm:$0xff]
    %v7970 = vld [vmem:[#allocation8 + $0x8b0] sm:$0xff]
    %v7971 = vld [vmem:[#allocation8 + $0x8b8] sm:$0xff]
    %v7972 = vld [vmem:[#allocation8 + $0x8c0] sm:$0xff]
    %v7973 = vld [vmem:[#allocation8 + $0x8c8] sm:$0xff]
    %v7974 = vld [vmem:[#allocation8 + $0x8d0] sm:$0xff]
    %v7975 = vld [vmem:[#allocation8 + $0x8d8] sm:$0xff]
    %v7976 = vld [vmem:[#allocation8 + $0x8e0] sm:$0xff]
    %v7977 = vld [vmem:[#allocation8 + $0x8e8] sm:$0xff]
    %v7978 = vld [vmem:[#allocation8 + $0x8f0] sm:$0xff]
    %v7979 = vld [vmem:[#allocation8 + $0x8f8] sm:$0xff]
    %v7980 = vld [vmem:[#allocation8 + $0x900] sm:$0xff]
    %v7981 = vld [vmem:[#allocation8 + $0x908] sm:$0xff]
    %v7982 = vld [vmem:[#allocation8 + $0x910] sm:$0xff]
    %v7983 = vld [vmem:[#allocation8 + $0x918] sm:$0xff]
    %v7984 = vld [vmem:[#allocation8 + $0x920] sm:$0xff]
    %v7985 = vld [vmem:[#allocation8 + $0x928] sm:$0xff]
    %v7986 = vld [vmem:[#allocation8 + $0x930] sm:$0xff]
    %v7987 = vld [vmem:[#allocation8 + $0x938] sm:$0xff]
    %v7988 = vld [vmem:[#allocation8 + $0x940] sm:$0xff]
    %v7989 = vld [vmem:[#allocation8 + $0x948] sm:$0xff]
    %v7990 = vld [vmem:[#allocation8 + $0x950] sm:$0xff]
    %v7991 = vld [vmem:[#allocation8 + $0x958] sm:$0xff]
    %v7992 = vld [vmem:[#allocation8 + $0x960] sm:$0xff]
    %v7993 = vld [vmem:[#allocation8 + $0x968] sm:$0xff]
    %v7994 = vld [vmem:[#allocation8 + $0x970] sm:$0xff]
    %v7995 = vld [vmem:[#allocation8 + $0x978] sm:$0xff]
    %v7996 = vld [vmem:[#allocation8 + $0x980] sm:$0xff]
    %v7997 = vld [vmem:[#allocation8 + $0x988] sm:$0xff]
    %v7998 = vld [vmem:[#allocation8 + $0x990] sm:$0xff]
    %v7999 = vld [vmem:[#allocation8 + $0x998] sm:$0xff]
    %v8000 = vld [vmem:[#allocation8 + $0x9a0] sm:$0xff]
    %v8001 = vld [vmem:[#allocation8 + $0x9a8] sm:$0xff]
    %v8002 = vld [vmem:[#allocation8 + $0x9b0] sm:$0xff]
    %v8003 = vld [vmem:[#allocation8 + $0x9b8] sm:$0xff]
    %v8004 = vld [vmem:[#allocation8 + $0x9c0] sm:$0xff]
    %v8005 = vld [vmem:[#allocation8 + $0x9c8] sm:$0xff]
    %v8006 = vld [vmem:[#allocation8 + $0x9d0] sm:$0xff]
    %v8007 = vld [vmem:[#allocation8 + $0x9d8] sm:$0xff]
    %v8008 = vld [vmem:[#allocation8 + $0x9e0] sm:$0xff]
    %v8009 = vld [vmem:[#allocation8 + $0x9e8] sm:$0xff]
    %v8010 = vld [vmem:[#allocation8 + $0x9f0] sm:$0xff]
    %v8011 = vld [vmem:[#allocation8 + $0x9f8] sm:$0xff]
    %v8012 = vld [vmem:[#allocation8 + $0xa00] sm:$0xff]
    %v8013 = vld [vmem:[#allocation8 + $0xa08] sm:$0xff]
    %v8014 = vld [vmem:[#allocation8 + $0xa10] sm:$0xff]
    %v8015 = vld [vmem:[#allocation8 + $0xa18] sm:$0xff]
    %v8016 = vld [vmem:[#allocation8 + $0xa20] sm:$0xff]
    %v8017 = vld [vmem:[#allocation8 + $0xa28] sm:$0xff]
    %v8018 = vld [vmem:[#allocation8 + $0xa30] sm:$0xff]
    %v8019 = vld [vmem:[#allocation8 + $0xa38] sm:$0xff]
    %v8020 = vld [vmem:[#allocation8 + $0xa40] sm:$0xff]
    %v8021 = vld [vmem:[#allocation8 + $0xa48] sm:$0xff]
    %v8022 = vld [vmem:[#allocation8 + $0xa50] sm:$0xff]
    %v8023 = vld [vmem:[#allocation8 + $0xa58] sm:$0xff]
    %v8024 = vld [vmem:[#allocation8 + $0xa60] sm:$0xff]
    %v8025 = vld [vmem:[#allocation8 + $0xa68] sm:$0xff]
    %v8026 = vld [vmem:[#allocation8 + $0xa70] sm:$0xff]
    %v8027 = vld [vmem:[#allocation8 + $0xa78] sm:$0xff]
    %v8028 = vld [vmem:[#allocation8 + $0xa80] sm:$0xff]
    %v8029 = vld [vmem:[#allocation8 + $0xa88] sm:$0xff]
    %v8030 = vld [vmem:[#allocation8 + $0xa90] sm:$0xff]
    %v8031 = vld [vmem:[#allocation8 + $0xa98] sm:$0xff]
    %v8032 = vld [vmem:[#allocation8 + $0xaa0] sm:$0xff]
    %v8033 = vld [vmem:[#allocation8 + $0xaa8] sm:$0xff]
    %v8034 = vld [vmem:[#allocation8 + $0xab0] sm:$0xff]
    %v8035 = vld [vmem:[#allocation8 + $0xab8] sm:$0xff]
    %v8036 = vld [vmem:[#allocation8 + $0xac0] sm:$0xff]
    %v8037 = vld [vmem:[#allocation8 + $0xac8] sm:$0xff]
    %v8038 = vld [vmem:[#allocation8 + $0xad0] sm:$0xff]
    %v8039 = vld [vmem:[#allocation8 + $0xad8] sm:$0xff]
    %v8040 = vld [vmem:[#allocation8 + $0xae0] sm:$0xff]
    %v8041 = vld [vmem:[#allocation8 + $0xae8] sm:$0xff]
    %v8042 = vld [vmem:[#allocation8 + $0xaf0] sm:$0xff]
    %v8043 = vld [vmem:[#allocation8 + $0xaf8] sm:$0xff]
    %v8044 = vld [vmem:[#allocation8 + $0xb00] sm:$0xff]
    %v8045 = vld [vmem:[#allocation8 + $0xb08] sm:$0xff]
    %v8046 = vld [vmem:[#allocation8 + $0xb10] sm:$0xff]
    %v8047 = vld [vmem:[#allocation8 + $0xb18] sm:$0xff]
    %v8048 = vld [vmem:[#allocation8 + $0xb20] sm:$0xff]
    %v8049 = vld [vmem:[#allocation8 + $0xb28] sm:$0xff]
    %v8050 = vld [vmem:[#allocation8 + $0xb30] sm:$0xff]
    %v8051 = vld [vmem:[#allocation8 + $0xb38] sm:$0xff]
    %v8052 = vld [vmem:[#allocation8 + $0xb40] sm:$0xff]
    %v8053 = vld [vmem:[#allocation8 + $0xb48] sm:$0xff]
    %v8054 = vld [vmem:[#allocation8 + $0xb50] sm:$0xff]
    %v8055 = vld [vmem:[#allocation8 + $0xb58] sm:$0xff]
    %v8056 = vld [vmem:[#allocation8 + $0xb60] sm:$0xff]
    %v8057 = vld [vmem:[#allocation8 + $0xb68] sm:$0xff]
    %v8058 = vld [vmem:[#allocation8 + $0xb70] sm:$0xff]
    %v8059 = vld [vmem:[#allocation8 + $0xb78] sm:$0xff]
    %v8060 = vld [vmem:[#allocation8 + $0xb80] sm:$0xff]
    %v8061 = vld [vmem:[#allocation8 + $0xb88] sm:$0xff]
    %v8062 = vld [vmem:[#allocation8 + $0xb90] sm:$0xff]
    %v8063 = vld [vmem:[#allocation8 + $0xb98] sm:$0xff]
    %v8064 = vld [vmem:[#allocation8 + $0xba0] sm:$0xff]
    %v8065 = vld [vmem:[#allocation8 + $0xba8] sm:$0xff]
    %v8066 = vld [vmem:[#allocation8 + $0xbb0] sm:$0xff]
    %v8067 = vld [vmem:[#allocation8 + $0xbb8] sm:$0xff]
    %v8068 = vld [vmem:[#allocation8 + $0xbc0] sm:$0xff]
    %v8069 = vld [vmem:[#allocation8 + $0xbc8] sm:$0xff]
    %v8070 = vld [vmem:[#allocation8 + $0xbd0] sm:$0xff]
    %v8071 = vld [vmem:[#allocation8 + $0xbd8] sm:$0xff]
    %v8072 = vld [vmem:[#allocation8 + $0xbe0] sm:$0xff]
    %v8073 = vld [vmem:[#allocation8 + $0xbe8] sm:$0xff]
    %v8074 = vld [vmem:[#allocation8 + $0xbf0] sm:$0xff]
    %v8075 = vld [vmem:[#allocation8 + $0xbf8] sm:$0xff]
    %v8076 = vld [vmem:[#allocation8 + $0xc00] sm:$0xff]
    %v8077 = vld [vmem:[#allocation8 + $0xc08] sm:$0xff]
    %v8078 = vld [vmem:[#allocation8 + $0xc10] sm:$0xff]
    %v8079 = vld [vmem:[#allocation8 + $0xc18] sm:$0xff]
    %v8080 = vld [vmem:[#allocation8 + $0xc20] sm:$0xff]
    %v8081 = vld [vmem:[#allocation8 + $0xc28] sm:$0xff]
    %v8082 = vld [vmem:[#allocation8 + $0xc30] sm:$0xff]
    %v8083 = vld [vmem:[#allocation8 + $0xc38] sm:$0xff]
    %v8084 = vld [vmem:[#allocation8 + $0xc40] sm:$0xff]
    %v8085 = vld [vmem:[#allocation8 + $0xc48] sm:$0xff]
    %v8086 = vld [vmem:[#allocation8 + $0xc50] sm:$0xff]
    %v8087 = vld [vmem:[#allocation8 + $0xc58] sm:$0xff]
    %v8088 = vld [vmem:[#allocation8 + $0xc60] sm:$0xff]
    %v8089 = vld [vmem:[#allocation8 + $0xc68] sm:$0xff]
    %v8090 = vld [vmem:[#allocation8 + $0xc70] sm:$0xff]
    %v8091 = vld [vmem:[#allocation8 + $0xc78] sm:$0xff]
    %v8092 = vld [vmem:[#allocation8 + $0xc80] sm:$0xff]
    %v8093 = vld [vmem:[#allocation8 + $0xc88] sm:$0xff]
    %v8094 = vld [vmem:[#allocation8 + $0xc90] sm:$0xff]
    %v8095 = vld [vmem:[#allocation8 + $0xc98] sm:$0xff]
    %v8096 = vld [vmem:[#allocation8 + $0xca0] sm:$0xff]
    %v8097 = vld [vmem:[#allocation8 + $0xca8] sm:$0xff]
    %v8098 = vld [vmem:[#allocation8 + $0xcb0] sm:$0xff]
    %v8099 = vld [vmem:[#allocation8 + $0xcb8] sm:$0xff]
    %v8100 = vld [vmem:[#allocation8 + $0xcc0] sm:$0xff]
    %v8101 = vld [vmem:[#allocation8 + $0xcc8] sm:$0xff]
    %v8102 = vld [vmem:[#allocation8 + $0xcd0] sm:$0xff]
    %v8103 = vld [vmem:[#allocation8 + $0xcd8] sm:$0xff]
    %v8104 = vld [vmem:[#allocation8 + $0xce0] sm:$0xff]
    %v8105 = vld [vmem:[#allocation8 + $0xce8] sm:$0xff]
    %v8106 = vld [vmem:[#allocation8 + $0xcf0] sm:$0xff]
    %v8107 = vld [vmem:[#allocation8 + $0xcf8] sm:$0xff]
    %v8108 = vld [vmem:[#allocation8 + $0xd00] sm:$0xff]
    %v8109 = vld [vmem:[#allocation8 + $0xd08] sm:$0xff]
    %v8110 = vld [vmem:[#allocation8 + $0xd10] sm:$0xff]
    %v8111 = vld [vmem:[#allocation8 + $0xd18] sm:$0xff]
    %v8112 = vld [vmem:[#allocation8 + $0xd20] sm:$0xff]
    %v8113 = vld [vmem:[#allocation8 + $0xd28] sm:$0xff]
    %v8114 = vld [vmem:[#allocation8 + $0xd30] sm:$0xff]
    %v8115 = vld [vmem:[#allocation8 + $0xd38] sm:$0xff]
    %v8116 = vld [vmem:[#allocation8 + $0xd40] sm:$0xff]
    %v8117 = vld [vmem:[#allocation8 + $0xd48] sm:$0xff]
    %v8118 = vld [vmem:[#allocation8 + $0xd50] sm:$0xff]
    %v8119 = vld [vmem:[#allocation8 + $0xd58] sm:$0xff]
    %v8120 = vld [vmem:[#allocation8 + $0xd60] sm:$0xff]
    %v8121 = vld [vmem:[#allocation8 + $0xd68] sm:$0xff]
    %v8122 = vld [vmem:[#allocation8 + $0xd70] sm:$0xff]
    %v8123 = vld [vmem:[#allocation8 + $0xd78] sm:$0xff]
    %v8124 = vld [vmem:[#allocation8 + $0xd80] sm:$0xff]
    %v8125 = vld [vmem:[#allocation8 + $0xd88] sm:$0xff]
    %v8126 = vld [vmem:[#allocation8 + $0xd90] sm:$0xff]
    %v8127 = vld [vmem:[#allocation8 + $0xd98] sm:$0xff]
    %v8128 = vld [vmem:[#allocation8 + $0xda0] sm:$0xff]
    %v8129 = vld [vmem:[#allocation8 + $0xda8] sm:$0xff]
    %v8130 = vld [vmem:[#allocation8 + $0xdb0] sm:$0xff]
    %v8131 = vld [vmem:[#allocation8 + $0xdb8] sm:$0xff]
    %v8132 = vld [vmem:[#allocation8 + $0xdc0] sm:$0xff]
    %v8133 = vld [vmem:[#allocation8 + $0xdc8] sm:$0xff]
    %v8134 = vld [vmem:[#allocation8 + $0xdd0] sm:$0xff]
    %v8135 = vld [vmem:[#allocation8 + $0xdd8] sm:$0xff]
    %v8136 = vld [vmem:[#allocation8 + $0xde0] sm:$0xff]
    %v8137 = vld [vmem:[#allocation8 + $0xde8] sm:$0xff]
    %v8138 = vld [vmem:[#allocation8 + $0xdf0] sm:$0xff]
    %v8139 = vld [vmem:[#allocation8 + $0xdf8] sm:$0xff]
    %v8140 = vld [vmem:[#allocation8 + $0xe00] sm:$0xff]
    %v8141 = vld [vmem:[#allocation8 + $0xe08] sm:$0xff]
    %v8142 = vld [vmem:[#allocation8 + $0xe10] sm:$0xff]
    %v8143 = vld [vmem:[#allocation8 + $0xe18] sm:$0xff]
    %v8144 = vld [vmem:[#allocation8 + $0xe20] sm:$0xff]
    %v8145 = vld [vmem:[#allocation8 + $0xe28] sm:$0xff]
    %v8146 = vld [vmem:[#allocation8 + $0xe30] sm:$0xff]
    %v8147 = vld [vmem:[#allocation8 + $0xe38] sm:$0xff]
    %v8148 = vld [vmem:[#allocation8 + $0xe40] sm:$0xff]
    %v8149 = vld [vmem:[#allocation8 + $0xe48] sm:$0xff]
    %v8150 = vld [vmem:[#allocation8 + $0xe50] sm:$0xff]
    %v8151 = vld [vmem:[#allocation8 + $0xe58] sm:$0xff]
    %v8152 = vld [vmem:[#allocation8 + $0xe60] sm:$0xff]
    %v8153 = vld [vmem:[#allocation8 + $0xe68] sm:$0xff]
    %v8154 = vld [vmem:[#allocation8 + $0xe70] sm:$0xff]
    %v8155 = vld [vmem:[#allocation8 + $0xe78] sm:$0xff]
    %v8156 = vld [vmem:[#allocation8 + $0xe80] sm:$0xff]
    %v8157 = vld [vmem:[#allocation8 + $0xe88] sm:$0xff]
    %v8158 = vld [vmem:[#allocation8 + $0xe90] sm:$0xff]
    %v8159 = vld [vmem:[#allocation8 + $0xe98] sm:$0xff]
    %v8160 = vld [vmem:[#allocation8 + $0xea0] sm:$0xff]
    %v8161 = vld [vmem:[#allocation8 + $0xea8] sm:$0xff]
    %v8162 = vld [vmem:[#allocation8 + $0xeb0] sm:$0xff]
    %v8163 = vld [vmem:[#allocation8 + $0xeb8] sm:$0xff]
    %v8164 = vld [vmem:[#allocation8 + $0xec0] sm:$0xff]
    %v8165 = vld [vmem:[#allocation8 + $0xec8] sm:$0xff]
    %v8166 = vld [vmem:[#allocation8 + $0xed0] sm:$0xff]
    %v8167 = vld [vmem:[#allocation8 + $0xed8] sm:$0xff]
    %v8168 = vld [vmem:[#allocation8 + $0xee0] sm:$0xff]
    %v8169 = vld [vmem:[#allocation8 + $0xee8] sm:$0xff]
    %v8170 = vld [vmem:[#allocation8 + $0xef0] sm:$0xff]
    %v8171 = vld [vmem:[#allocation8 + $0xef8] sm:$0xff]
    %v8172 = vld [vmem:[#allocation8 + $0xf00] sm:$0xff]
    %v8173 = vld [vmem:[#allocation8 + $0xf08] sm:$0xff]
    %v8174 = vld [vmem:[#allocation8 + $0xf10] sm:$0xff]
    %v8175 = vld [vmem:[#allocation8 + $0xf18] sm:$0xff]
    %v8176 = vld [vmem:[#allocation8 + $0xf20] sm:$0xff]
    %v8177 = vld [vmem:[#allocation8 + $0xf28] sm:$0xff]
    %v8178 = vld [vmem:[#allocation8 + $0xf30] sm:$0xff]
    %v8179 = vld [vmem:[#allocation8 + $0xf38] sm:$0xff]
    %v8180 = vld [vmem:[#allocation8 + $0xf40] sm:$0xff]
    %v8181 = vld [vmem:[#allocation8 + $0xf48] sm:$0xff]
    %v8182 = vld [vmem:[#allocation8 + $0xf50] sm:$0xff]
    %v8183 = vld [vmem:[#allocation8 + $0xf58] sm:$0xff]
    %v8184 = vld [vmem:[#allocation8 + $0xf60] sm:$0xff]
    %v8185 = vld [vmem:[#allocation8 + $0xf68] sm:$0xff]
    %v8186 = vld [vmem:[#allocation8 + $0xf70] sm:$0xff]
    %v8187 = vld [vmem:[#allocation8 + $0xf78] sm:$0xff]
    %v8188 = vld [vmem:[#allocation8 + $0xf80] sm:$0xff]
    %v8189 = vld [vmem:[#allocation8 + $0xf88] sm:$0xff]
    %v8190 = vld [vmem:[#allocation8 + $0xf90] sm:$0xff]
    %v8191 = vld [vmem:[#allocation8 + $0xf98] sm:$0xff]
    %v8192 = vld [vmem:[#allocation8 + $0xfa0] sm:$0xff]
    %v8193 = vld [vmem:[#allocation8 + $0xfa8] sm:$0xff]
    %v8194 = vld [vmem:[#allocation8 + $0xfb0] sm:$0xff]
    %v8195 = vld [vmem:[#allocation8 + $0xfb8] sm:$0xff]
    %v8196 = vld [vmem:[#allocation8 + $0xfc0] sm:$0xff]
    %v8197 = vld [vmem:[#allocation8 + $0xfc8] sm:$0xff]
    %v8198 = vld [vmem:[#allocation8 + $0xfd0] sm:$0xff]
    %v8199 = vld [vmem:[#allocation8 + $0xfd8] sm:$0xff]
    %v8200 = vld [vmem:[#allocation8 + $0xfe0] sm:$0xff]
    %v8201 = vld [vmem:[#allocation8 + $0xfe8] sm:$0xff]
    %v8202 = vld [vmem:[#allocation8 + $0xff0] sm:$0xff]
    %v8203 = vld [vmem:[#allocation8 + $0xff8] sm:$0xff]
    %v8204 = vld [vmem:[#allocation10] sm:$0xff]
    %v8206 = vlaneseq
    %v8207 = vshrl.u32 %v8206, 7
    %v8208 = vsub.s32 0, %v8207
    %v8209 = vrot.slane %v8204, %v8208
    %v8210 = vlaneseq
    %v8211 = vshrl.u32 %v8210, 7
    %v8212 = vsub.s32 1, %v8211
    %v8213 = vrot.slane %v8204, %v8212
    %v8214 = vlaneseq
    %v8215 = vshrl.u32 %v8214, 7
    %v8216 = vsub.s32 2, %v8215
    %v8217 = vrot.slane %v8204, %v8216
    %v8218 = vlaneseq
    %v8219 = vshrl.u32 %v8218, 7
    %v8220 = vsub.s32 3, %v8219
    %v8221 = vrot.slane %v8204, %v8220
    %v8222 = vlaneseq
    %v8223 = vshrl.u32 %v8222, 7
    %v8224 = vsub.s32 4, %v8223
    %v8225 = vrot.slane %v8204, %v8224
    %v8226 = vlaneseq
    %v8227 = vshrl.u32 %v8226, 7
    %v8228 = vsub.s32 5, %v8227
    %v8229 = vrot.slane %v8204, %v8228
    %v8230 = vlaneseq
    %v8231 = vshrl.u32 %v8230, 7
    %v8232 = vsub.s32 6, %v8231
    %v8233 = vrot.slane %v8204, %v8232
    %v8234 = vlaneseq
    %v8235 = vshrl.u32 %v8234, 7
    %v8236 = vsub.s32 7, %v8235
    %v8237 = vrot.slane %v8204, %v8236
    %v8758 = vunpack.c.l.b16 %v7692
    %v8759 = vunpack.c.h.b16 %v7692
    %v8760 = vunpack.c.l.b16 %v7693
    %v8761 = vunpack.c.h.b16 %v7693
    %v8762 = vunpack.c.l.b16 %v7694
    %v8763 = vunpack.c.h.b16 %v7694
    %v8764 = vunpack.c.l.b16 %v7695
    %v8765 = vunpack.c.h.b16 %v7695
    %v8766 = vunpack.c.l.b16 %v7696
    %v8767 = vunpack.c.h.b16 %v7696
    %v8768 = vunpack.c.l.b16 %v7697
    %v8769 = vunpack.c.h.b16 %v7697
    %v8770 = vunpack.c.l.b16 %v7698
    %v8771 = vunpack.c.h.b16 %v7698
    %v8772 = vunpack.c.l.b16 %v7699
    %v8773 = vunpack.c.h.b16 %v7699
    %v8774 = vunpack.c.l.b16 %v7700
    %v8775 = vunpack.c.h.b16 %v7700
    %v8776 = vunpack.c.l.b16 %v7701
    %v8777 = vunpack.c.h.b16 %v7701
    %v8778 = vunpack.c.l.b16 %v7702
    %v8779 = vunpack.c.h.b16 %v7702
    %v8780 = vunpack.c.l.b16 %v7703
    %v8781 = vunpack.c.h.b16 %v7703
    %v8782 = vunpack.c.l.b16 %v7704
    %v8783 = vunpack.c.h.b16 %v7704
    %v8784 = vunpack.c.l.b16 %v7705
    %v8785 = vunpack.c.h.b16 %v7705
    %v8786 = vunpack.c.l.b16 %v7706
    %v8787 = vunpack.c.h.b16 %v7706
    %v8788 = vunpack.c.l.b16 %v7707
    %v8789 = vunpack.c.h.b16 %v7707
    %v8790 = vunpack.c.l.b16 %v7708
    %v8791 = vunpack.c.h.b16 %v7708
    %v8792 = vunpack.c.l.b16 %v7709
    %v8793 = vunpack.c.h.b16 %v7709
    %v8794 = vunpack.c.l.b16 %v7710
    %v8795 = vunpack.c.h.b16 %v7710
    %v8796 = vunpack.c.l.b16 %v7711
    %v8797 = vunpack.c.h.b16 %v7711
    %v8798 = vunpack.c.l.b16 %v7712
    %v8799 = vunpack.c.h.b16 %v7712
    %v8800 = vunpack.c.l.b16 %v7713
    %v8801 = vunpack.c.h.b16 %v7713
    %v8802 = vunpack.c.l.b16 %v7714
    %v8803 = vunpack.c.h.b16 %v7714
    %v8804 = vunpack.c.l.b16 %v7715
    %v8805 = vunpack.c.h.b16 %v7715
    %v8806 = vunpack.c.l.b16 %v7716
    %v8807 = vunpack.c.h.b16 %v7716
    %v8808 = vunpack.c.l.b16 %v7717
    %v8809 = vunpack.c.h.b16 %v7717
    %v8810 = vunpack.c.l.b16 %v7718
    %v8811 = vunpack.c.h.b16 %v7718
    %v8812 = vunpack.c.l.b16 %v7719
    %v8813 = vunpack.c.h.b16 %v7719
    %v8814 = vunpack.c.l.b16 %v7720
    %v8815 = vunpack.c.h.b16 %v7720
    %v8816 = vunpack.c.l.b16 %v7721
    %v8817 = vunpack.c.h.b16 %v7721
    %v8818 = vunpack.c.l.b16 %v7722
    %v8819 = vunpack.c.h.b16 %v7722
    %v8820 = vunpack.c.l.b16 %v7723
    %v8821 = vunpack.c.h.b16 %v7723
    %v8822 = vunpack.c.l.b16 %v7724
    %v8823 = vunpack.c.h.b16 %v7724
    %v8824 = vunpack.c.l.b16 %v7725
    %v8825 = vunpack.c.h.b16 %v7725
    %v8826 = vunpack.c.l.b16 %v7726
    %v8827 = vunpack.c.h.b16 %v7726
    %v8828 = vunpack.c.l.b16 %v7727
    %v8829 = vunpack.c.h.b16 %v7727
    %v8830 = vunpack.c.l.b16 %v7728
    %v8831 = vunpack.c.h.b16 %v7728
    %v8832 = vunpack.c.l.b16 %v7729
    %v8833 = vunpack.c.h.b16 %v7729
    %v8834 = vunpack.c.l.b16 %v7730
    %v8835 = vunpack.c.h.b16 %v7730
    %v8836 = vunpack.c.l.b16 %v7731
    %v8837 = vunpack.c.h.b16 %v7731
    %v8838 = vunpack.c.l.b16 %v7732
    %v8839 = vunpack.c.h.b16 %v7732
    %v8840 = vunpack.c.l.b16 %v7733
    %v8841 = vunpack.c.h.b16 %v7733
    %v8842 = vunpack.c.l.b16 %v7734
    %v8843 = vunpack.c.h.b16 %v7734
    %v8844 = vunpack.c.l.b16 %v7735
    %v8845 = vunpack.c.h.b16 %v7735
    %v8846 = vunpack.c.l.b16 %v7736
    %v8847 = vunpack.c.h.b16 %v7736
    %v8848 = vunpack.c.l.b16 %v7737
    %v8849 = vunpack.c.h.b16 %v7737
    %v8850 = vunpack.c.l.b16 %v7738
    %v8851 = vunpack.c.h.b16 %v7738
    %v8852 = vunpack.c.l.b16 %v7739
    %v8853 = vunpack.c.h.b16 %v7739
    %v8854 = vunpack.c.l.b16 %v7740
    %v8855 = vunpack.c.h.b16 %v7740
    %v8856 = vunpack.c.l.b16 %v7741
    %v8857 = vunpack.c.h.b16 %v7741
    %v8858 = vunpack.c.l.b16 %v7742
    %v8859 = vunpack.c.h.b16 %v7742
    %v8860 = vunpack.c.l.b16 %v7743
    %v8861 = vunpack.c.h.b16 %v7743
    %v8862 = vunpack.c.l.b16 %v7744
    %v8863 = vunpack.c.h.b16 %v7744
    %v8864 = vunpack.c.l.b16 %v7745
    %v8865 = vunpack.c.h.b16 %v7745
    %v8866 = vunpack.c.l.b16 %v7746
    %v8867 = vunpack.c.h.b16 %v7746
    %v8868 = vunpack.c.l.b16 %v7747
    %v8869 = vunpack.c.h.b16 %v7747
    %v8870 = vunpack.c.l.b16 %v7748
    %v8871 = vunpack.c.h.b16 %v7748
    %v8872 = vunpack.c.l.b16 %v7749
    %v8873 = vunpack.c.h.b16 %v7749
    %v8874 = vunpack.c.l.b16 %v7750
    %v8875 = vunpack.c.h.b16 %v7750
    %v8876 = vunpack.c.l.b16 %v7751
    %v8877 = vunpack.c.h.b16 %v7751
    %v8878 = vunpack.c.l.b16 %v7752
    %v8879 = vunpack.c.h.b16 %v7752
    %v8880 = vunpack.c.l.b16 %v7753
    %v8881 = vunpack.c.h.b16 %v7753
    %v8882 = vunpack.c.l.b16 %v7754
    %v8883 = vunpack.c.h.b16 %v7754
    %v8884 = vunpack.c.l.b16 %v7755
    %v8885 = vunpack.c.h.b16 %v7755
    %v8886 = vunpack.c.l.b16 %v7756
    %v8887 = vunpack.c.h.b16 %v7756
    %v8888 = vunpack.c.l.b16 %v7757
    %v8889 = vunpack.c.h.b16 %v7757
    %v8890 = vunpack.c.l.b16 %v7758
    %v8891 = vunpack.c.h.b16 %v7758
    %v8892 = vunpack.c.l.b16 %v7759
    %v8893 = vunpack.c.h.b16 %v7759
    %v8894 = vunpack.c.l.b16 %v7760
    %v8895 = vunpack.c.h.b16 %v7760
    %v8896 = vunpack.c.l.b16 %v7761
    %v8897 = vunpack.c.h.b16 %v7761
    %v8898 = vunpack.c.l.b16 %v7762
    %v8899 = vunpack.c.h.b16 %v7762
    %v8900 = vunpack.c.l.b16 %v7763
    %v8901 = vunpack.c.h.b16 %v7763
    %v8902 = vunpack.c.l.b16 %v7764
    %v8903 = vunpack.c.h.b16 %v7764
    %v8904 = vunpack.c.l.b16 %v7765
    %v8905 = vunpack.c.h.b16 %v7765
    %v8906 = vunpack.c.l.b16 %v7766
    %v8907 = vunpack.c.h.b16 %v7766
    %v8908 = vunpack.c.l.b16 %v7767
    %v8909 = vunpack.c.h.b16 %v7767
    %v8910 = vunpack.c.l.b16 %v7768
    %v8911 = vunpack.c.h.b16 %v7768
    %v8912 = vunpack.c.l.b16 %v7769
    %v8913 = vunpack.c.h.b16 %v7769
    %v8914 = vunpack.c.l.b16 %v7770
    %v8915 = vunpack.c.h.b16 %v7770
    %v8916 = vunpack.c.l.b16 %v7771
    %v8917 = vunpack.c.h.b16 %v7771
    %v8918 = vunpack.c.l.b16 %v7772
    %v8919 = vunpack.c.h.b16 %v7772
    %v8920 = vunpack.c.l.b16 %v7773
    %v8921 = vunpack.c.h.b16 %v7773
    %v8922 = vunpack.c.l.b16 %v7774
    %v8923 = vunpack.c.h.b16 %v7774
    %v8924 = vunpack.c.l.b16 %v7775
    %v8925 = vunpack.c.h.b16 %v7775
    %v8926 = vunpack.c.l.b16 %v7776
    %v8927 = vunpack.c.h.b16 %v7776
    %v8928 = vunpack.c.l.b16 %v7777
    %v8929 = vunpack.c.h.b16 %v7777
    %v8930 = vunpack.c.l.b16 %v7778
    %v8931 = vunpack.c.h.b16 %v7778
    %v8932 = vunpack.c.l.b16 %v7779
    %v8933 = vunpack.c.h.b16 %v7779
    %v8934 = vunpack.c.l.b16 %v7780
    %v8935 = vunpack.c.h.b16 %v7780
    %v8936 = vunpack.c.l.b16 %v7781
    %v8937 = vunpack.c.h.b16 %v7781
    %v8938 = vunpack.c.l.b16 %v7782
    %v8939 = vunpack.c.h.b16 %v7782
    %v8940 = vunpack.c.l.b16 %v7783
    %v8941 = vunpack.c.h.b16 %v7783
    %v8942 = vunpack.c.l.b16 %v7784
    %v8943 = vunpack.c.h.b16 %v7784
    %v8944 = vunpack.c.l.b16 %v7785
    %v8945 = vunpack.c.h.b16 %v7785
    %v8946 = vunpack.c.l.b16 %v7786
    %v8947 = vunpack.c.h.b16 %v7786
    %v8948 = vunpack.c.l.b16 %v7787
    %v8949 = vunpack.c.h.b16 %v7787
    %v8950 = vunpack.c.l.b16 %v7788
    %v8951 = vunpack.c.h.b16 %v7788
    %v8952 = vunpack.c.l.b16 %v7789
    %v8953 = vunpack.c.h.b16 %v7789
    %v8954 = vunpack.c.l.b16 %v7790
    %v8955 = vunpack.c.h.b16 %v7790
    %v8956 = vunpack.c.l.b16 %v7791
    %v8957 = vunpack.c.h.b16 %v7791
    %v8958 = vunpack.c.l.b16 %v7792
    %v8959 = vunpack.c.h.b16 %v7792
    %v8960 = vunpack.c.l.b16 %v7793
    %v8961 = vunpack.c.h.b16 %v7793
    %v8962 = vunpack.c.l.b16 %v7794
    %v8963 = vunpack.c.h.b16 %v7794
    %v8964 = vunpack.c.l.b16 %v7795
    %v8965 = vunpack.c.h.b16 %v7795
    %v8966 = vunpack.c.l.b16 %v7796
    %v8967 = vunpack.c.h.b16 %v7796
    %v8968 = vunpack.c.l.b16 %v7797
    %v8969 = vunpack.c.h.b16 %v7797
    %v8970 = vunpack.c.l.b16 %v7798
    %v8971 = vunpack.c.h.b16 %v7798
    %v8972 = vunpack.c.l.b16 %v7799
    %v8973 = vunpack.c.h.b16 %v7799
    %v8974 = vunpack.c.l.b16 %v7800
    %v8975 = vunpack.c.h.b16 %v7800
    %v8976 = vunpack.c.l.b16 %v7801
    %v8977 = vunpack.c.h.b16 %v7801
    %v8978 = vunpack.c.l.b16 %v7802
    %v8979 = vunpack.c.h.b16 %v7802
    %v8980 = vunpack.c.l.b16 %v7803
    %v8981 = vunpack.c.h.b16 %v7803
    %v8982 = vunpack.c.l.b16 %v7804
    %v8983 = vunpack.c.h.b16 %v7804
    %v8984 = vunpack.c.l.b16 %v7805
    %v8985 = vunpack.c.h.b16 %v7805
    %v8986 = vunpack.c.l.b16 %v7806
    %v8987 = vunpack.c.h.b16 %v7806
    %v8988 = vunpack.c.l.b16 %v7807
    %v8989 = vunpack.c.h.b16 %v7807
    %v8990 = vunpack.c.l.b16 %v7808
    %v8991 = vunpack.c.h.b16 %v7808
    %v8992 = vunpack.c.l.b16 %v7809
    %v8993 = vunpack.c.h.b16 %v7809
    %v8994 = vunpack.c.l.b16 %v7810
    %v8995 = vunpack.c.h.b16 %v7810
    %v8996 = vunpack.c.l.b16 %v7811
    %v8997 = vunpack.c.h.b16 %v7811
    %v8998 = vunpack.c.l.b16 %v7812
    %v8999 = vunpack.c.h.b16 %v7812
    %v9000 = vunpack.c.l.b16 %v7813
    %v9001 = vunpack.c.h.b16 %v7813
    %v9002 = vunpack.c.l.b16 %v7814
    %v9003 = vunpack.c.h.b16 %v7814
    %v9004 = vunpack.c.l.b16 %v7815
    %v9005 = vunpack.c.h.b16 %v7815
    %v9006 = vunpack.c.l.b16 %v7816
    %v9007 = vunpack.c.h.b16 %v7816
    %v9008 = vunpack.c.l.b16 %v7817
    %v9009 = vunpack.c.h.b16 %v7817
    %v9010 = vunpack.c.l.b16 %v7818
    %v9011 = vunpack.c.h.b16 %v7818
    %v9012 = vunpack.c.l.b16 %v7819
    %v9013 = vunpack.c.h.b16 %v7819
    %v9014 = vunpack.c.l.b16 %v7820
    %v9015 = vunpack.c.h.b16 %v7820
    %v9016 = vunpack.c.l.b16 %v7821
    %v9017 = vunpack.c.h.b16 %v7821
    %v9018 = vunpack.c.l.b16 %v7822
    %v9019 = vunpack.c.h.b16 %v7822
    %v9020 = vunpack.c.l.b16 %v7823
    %v9021 = vunpack.c.h.b16 %v7823
    %v9022 = vunpack.c.l.b16 %v7824
    %v9023 = vunpack.c.h.b16 %v7824
    %v9024 = vunpack.c.l.b16 %v7825
    %v9025 = vunpack.c.h.b16 %v7825
    %v9026 = vunpack.c.l.b16 %v7826
    %v9027 = vunpack.c.h.b16 %v7826
    %v9028 = vunpack.c.l.b16 %v7827
    %v9029 = vunpack.c.h.b16 %v7827
    %v9030 = vunpack.c.l.b16 %v7828
    %v9031 = vunpack.c.h.b16 %v7828
    %v9032 = vunpack.c.l.b16 %v7829
    %v9033 = vunpack.c.h.b16 %v7829
    %v9034 = vunpack.c.l.b16 %v7830
    %v9035 = vunpack.c.h.b16 %v7830
    %v9036 = vunpack.c.l.b16 %v7831
    %v9037 = vunpack.c.h.b16 %v7831
    %v9038 = vunpack.c.l.b16 %v7832
    %v9039 = vunpack.c.h.b16 %v7832
    %v9040 = vunpack.c.l.b16 %v7833
    %v9041 = vunpack.c.h.b16 %v7833
    %v9042 = vunpack.c.l.b16 %v7834
    %v9043 = vunpack.c.h.b16 %v7834
    %v9044 = vunpack.c.l.b16 %v7835
    %v9045 = vunpack.c.h.b16 %v7835
    %v9046 = vunpack.c.l.b16 %v7836
    %v9047 = vunpack.c.h.b16 %v7836
    %v9048 = vunpack.c.l.b16 %v7837
    %v9049 = vunpack.c.h.b16 %v7837
    %v9050 = vunpack.c.l.b16 %v7838
    %v9051 = vunpack.c.h.b16 %v7838
    %v9052 = vunpack.c.l.b16 %v7839
    %v9053 = vunpack.c.h.b16 %v7839
    %v9054 = vunpack.c.l.b16 %v7840
    %v9055 = vunpack.c.h.b16 %v7840
    %v9056 = vunpack.c.l.b16 %v7841
    %v9057 = vunpack.c.h.b16 %v7841
    %v9058 = vunpack.c.l.b16 %v7842
    %v9059 = vunpack.c.h.b16 %v7842
    %v9060 = vunpack.c.l.b16 %v7843
    %v9061 = vunpack.c.h.b16 %v7843
    %v9062 = vunpack.c.l.b16 %v7844
    %v9063 = vunpack.c.h.b16 %v7844
    %v9064 = vunpack.c.l.b16 %v7845
    %v9065 = vunpack.c.h.b16 %v7845
    %v9066 = vunpack.c.l.b16 %v7846
    %v9067 = vunpack.c.h.b16 %v7846
    %v9068 = vunpack.c.l.b16 %v7847
    %v9069 = vunpack.c.h.b16 %v7847
    %v9070 = vunpack.c.l.b16 %v7848
    %v9071 = vunpack.c.h.b16 %v7848
    %v9072 = vunpack.c.l.b16 %v7849
    %v9073 = vunpack.c.h.b16 %v7849
    %v9074 = vunpack.c.l.b16 %v7850
    %v9075 = vunpack.c.h.b16 %v7850
    %v9076 = vunpack.c.l.b16 %v7851
    %v9077 = vunpack.c.h.b16 %v7851
    %v9078 = vunpack.c.l.b16 %v7852
    %v9079 = vunpack.c.h.b16 %v7852
    %v9080 = vunpack.c.l.b16 %v7853
    %v9081 = vunpack.c.h.b16 %v7853
    %v9082 = vunpack.c.l.b16 %v7854
    %v9083 = vunpack.c.h.b16 %v7854
    %v9084 = vunpack.c.l.b16 %v7855
    %v9085 = vunpack.c.h.b16 %v7855
    %v9086 = vunpack.c.l.b16 %v7856
    %v9087 = vunpack.c.h.b16 %v7856
    %v9088 = vunpack.c.l.b16 %v7857
    %v9089 = vunpack.c.h.b16 %v7857
    %v9090 = vunpack.c.l.b16 %v7858
    %v9091 = vunpack.c.h.b16 %v7858
    %v9092 = vunpack.c.l.b16 %v7859
    %v9093 = vunpack.c.h.b16 %v7859
    %v9094 = vunpack.c.l.b16 %v7860
    %v9095 = vunpack.c.h.b16 %v7860
    %v9096 = vunpack.c.l.b16 %v7861
    %v9097 = vunpack.c.h.b16 %v7861
    %v9098 = vunpack.c.l.b16 %v7862
    %v9099 = vunpack.c.h.b16 %v7862
    %v9100 = vunpack.c.l.b16 %v7863
    %v9101 = vunpack.c.h.b16 %v7863
    %v9102 = vunpack.c.l.b16 %v7864
    %v9103 = vunpack.c.h.b16 %v7864
    %v9104 = vunpack.c.l.b16 %v7865
    %v9105 = vunpack.c.h.b16 %v7865
    %v9106 = vunpack.c.l.b16 %v7866
    %v9107 = vunpack.c.h.b16 %v7866
    %v9108 = vunpack.c.l.b16 %v7867
    %v9109 = vunpack.c.h.b16 %v7867
    %v9110 = vunpack.c.l.b16 %v7868
    %v9111 = vunpack.c.h.b16 %v7868
    %v9112 = vunpack.c.l.b16 %v7869
    %v9113 = vunpack.c.h.b16 %v7869
    %v9114 = vunpack.c.l.b16 %v7870
    %v9115 = vunpack.c.h.b16 %v7870
    %v9116 = vunpack.c.l.b16 %v7871
    %v9117 = vunpack.c.h.b16 %v7871
    %v9118 = vunpack.c.l.b16 %v7872
    %v9119 = vunpack.c.h.b16 %v7872
    %v9120 = vunpack.c.l.b16 %v7873
    %v9121 = vunpack.c.h.b16 %v7873
    %v9122 = vunpack.c.l.b16 %v7874
    %v9123 = vunpack.c.h.b16 %v7874
    %v9124 = vunpack.c.l.b16 %v7875
    %v9125 = vunpack.c.h.b16 %v7875
    %v9126 = vunpack.c.l.b16 %v7876
    %v9127 = vunpack.c.h.b16 %v7876
    %v9128 = vunpack.c.l.b16 %v7877
    %v9129 = vunpack.c.h.b16 %v7877
    %v9130 = vunpack.c.l.b16 %v7878
    %v9131 = vunpack.c.h.b16 %v7878
    %v9132 = vunpack.c.l.b16 %v7879
    %v9133 = vunpack.c.h.b16 %v7879
    %v9134 = vunpack.c.l.b16 %v7880
    %v9135 = vunpack.c.h.b16 %v7880
    %v9136 = vunpack.c.l.b16 %v7881
    %v9137 = vunpack.c.h.b16 %v7881
    %v9138 = vunpack.c.l.b16 %v7882
    %v9139 = vunpack.c.h.b16 %v7882
    %v9140 = vunpack.c.l.b16 %v7883
    %v9141 = vunpack.c.h.b16 %v7883
    %v9142 = vunpack.c.l.b16 %v7884
    %v9143 = vunpack.c.h.b16 %v7884
    %v9144 = vunpack.c.l.b16 %v7885
    %v9145 = vunpack.c.h.b16 %v7885
    %v9146 = vunpack.c.l.b16 %v7886
    %v9147 = vunpack.c.h.b16 %v7886
    %v9148 = vunpack.c.l.b16 %v7887
    %v9149 = vunpack.c.h.b16 %v7887
    %v9150 = vunpack.c.l.b16 %v7888
    %v9151 = vunpack.c.h.b16 %v7888
    %v9152 = vunpack.c.l.b16 %v7889
    %v9153 = vunpack.c.h.b16 %v7889
    %v9154 = vunpack.c.l.b16 %v7890
    %v9155 = vunpack.c.h.b16 %v7890
    %v9156 = vunpack.c.l.b16 %v7891
    %v9157 = vunpack.c.h.b16 %v7891
    %v9158 = vunpack.c.l.b16 %v7892
    %v9159 = vunpack.c.h.b16 %v7892
    %v9160 = vunpack.c.l.b16 %v7893
    %v9161 = vunpack.c.h.b16 %v7893
    %v9162 = vunpack.c.l.b16 %v7894
    %v9163 = vunpack.c.h.b16 %v7894
    %v9164 = vunpack.c.l.b16 %v7895
    %v9165 = vunpack.c.h.b16 %v7895
    %v9166 = vunpack.c.l.b16 %v7896
    %v9167 = vunpack.c.h.b16 %v7896
    %v9168 = vunpack.c.l.b16 %v7897
    %v9169 = vunpack.c.h.b16 %v7897
    %v9170 = vunpack.c.l.b16 %v7898
    %v9171 = vunpack.c.h.b16 %v7898
    %v9172 = vunpack.c.l.b16 %v7899
    %v9173 = vunpack.c.h.b16 %v7899
    %v9174 = vunpack.c.l.b16 %v7900
    %v9175 = vunpack.c.h.b16 %v7900
    %v9176 = vunpack.c.l.b16 %v7901
    %v9177 = vunpack.c.h.b16 %v7901
    %v9178 = vunpack.c.l.b16 %v7902
    %v9179 = vunpack.c.h.b16 %v7902
    %v9180 = vunpack.c.l.b16 %v7903
    %v9181 = vunpack.c.h.b16 %v7903
    %v9182 = vunpack.c.l.b16 %v7904
    %v9183 = vunpack.c.h.b16 %v7904
    %v9184 = vunpack.c.l.b16 %v7905
    %v9185 = vunpack.c.h.b16 %v7905
    %v9186 = vunpack.c.l.b16 %v7906
    %v9187 = vunpack.c.h.b16 %v7906
    %v9188 = vunpack.c.l.b16 %v7907
    %v9189 = vunpack.c.h.b16 %v7907
    %v9190 = vunpack.c.l.b16 %v7908
    %v9191 = vunpack.c.h.b16 %v7908
    %v9192 = vunpack.c.l.b16 %v7909
    %v9193 = vunpack.c.h.b16 %v7909
    %v9194 = vunpack.c.l.b16 %v7910
    %v9195 = vunpack.c.h.b16 %v7910
    %v9196 = vunpack.c.l.b16 %v7911
    %v9197 = vunpack.c.h.b16 %v7911
    %v9198 = vunpack.c.l.b16 %v7912
    %v9199 = vunpack.c.h.b16 %v7912
    %v9200 = vunpack.c.l.b16 %v7913
    %v9201 = vunpack.c.h.b16 %v7913
    %v9202 = vunpack.c.l.b16 %v7914
    %v9203 = vunpack.c.h.b16 %v7914
    %v9204 = vunpack.c.l.b16 %v7915
    %v9205 = vunpack.c.h.b16 %v7915
    %v9206 = vunpack.c.l.b16 %v7916
    %v9207 = vunpack.c.h.b16 %v7916
    %v9208 = vunpack.c.l.b16 %v7917
    %v9209 = vunpack.c.h.b16 %v7917
    %v9210 = vunpack.c.l.b16 %v7918
    %v9211 = vunpack.c.h.b16 %v7918
    %v9212 = vunpack.c.l.b16 %v7919
    %v9213 = vunpack.c.h.b16 %v7919
    %v9214 = vunpack.c.l.b16 %v7920
    %v9215 = vunpack.c.h.b16 %v7920
    %v9216 = vunpack.c.l.b16 %v7921
    %v9217 = vunpack.c.h.b16 %v7921
    %v9218 = vunpack.c.l.b16 %v7922
    %v9219 = vunpack.c.h.b16 %v7922
    %v9220 = vunpack.c.l.b16 %v7923
    %v9221 = vunpack.c.h.b16 %v7923
    %v9222 = vunpack.c.l.b16 %v7924
    %v9223 = vunpack.c.h.b16 %v7924
    %v9224 = vunpack.c.l.b16 %v7925
    %v9225 = vunpack.c.h.b16 %v7925
    %v9226 = vunpack.c.l.b16 %v7926
    %v9227 = vunpack.c.h.b16 %v7926
    %v9228 = vunpack.c.l.b16 %v7927
    %v9229 = vunpack.c.h.b16 %v7927
    %v9230 = vunpack.c.l.b16 %v7928
    %v9231 = vunpack.c.h.b16 %v7928
    %v9232 = vunpack.c.l.b16 %v7929
    %v9233 = vunpack.c.h.b16 %v7929
    %v9234 = vunpack.c.l.b16 %v7930
    %v9235 = vunpack.c.h.b16 %v7930
    %v9236 = vunpack.c.l.b16 %v7931
    %v9237 = vunpack.c.h.b16 %v7931
    %v9238 = vunpack.c.l.b16 %v7932
    %v9239 = vunpack.c.h.b16 %v7932
    %v9240 = vunpack.c.l.b16 %v7933
    %v9241 = vunpack.c.h.b16 %v7933
    %v9242 = vunpack.c.l.b16 %v7934
    %v9243 = vunpack.c.h.b16 %v7934
    %v9244 = vunpack.c.l.b16 %v7935
    %v9245 = vunpack.c.h.b16 %v7935
    %v9246 = vunpack.c.l.b16 %v7936
    %v9247 = vunpack.c.h.b16 %v7936
    %v9248 = vunpack.c.l.b16 %v7937
    %v9249 = vunpack.c.h.b16 %v7937
    %v9250 = vunpack.c.l.b16 %v7938
    %v9251 = vunpack.c.h.b16 %v7938
    %v9252 = vunpack.c.l.b16 %v7939
    %v9253 = vunpack.c.h.b16 %v7939
    %v9254 = vunpack.c.l.b16 %v7940
    %v9255 = vunpack.c.h.b16 %v7940
    %v9256 = vunpack.c.l.b16 %v7941
    %v9257 = vunpack.c.h.b16 %v7941
    %v9258 = vunpack.c.l.b16 %v7942
    %v9259 = vunpack.c.h.b16 %v7942
    %v9260 = vunpack.c.l.b16 %v7943
    %v9261 = vunpack.c.h.b16 %v7943
    %v9262 = vunpack.c.l.b16 %v7944
    %v9263 = vunpack.c.h.b16 %v7944
    %v9264 = vunpack.c.l.b16 %v7945
    %v9265 = vunpack.c.h.b16 %v7945
    %v9266 = vunpack.c.l.b16 %v7946
    %v9267 = vunpack.c.h.b16 %v7946
    %v9268 = vunpack.c.l.b16 %v7947
    %v9269 = vunpack.c.h.b16 %v7947
    %v9270 = vunpack.c.l.b16 %v7948
    %v9271 = vunpack.c.h.b16 %v7948
    %v9272 = vunpack.c.l.b16 %v7949
    %v9273 = vunpack.c.h.b16 %v7949
    %v9274 = vunpack.c.l.b16 %v7950
    %v9275 = vunpack.c.h.b16 %v7950
    %v9276 = vunpack.c.l.b16 %v7951
    %v9277 = vunpack.c.h.b16 %v7951
    %v9278 = vunpack.c.l.b16 %v7952
    %v9279 = vunpack.c.h.b16 %v7952
    %v9280 = vunpack.c.l.b16 %v7953
    %v9281 = vunpack.c.h.b16 %v7953
    %v9282 = vunpack.c.l.b16 %v7954
    %v9283 = vunpack.c.h.b16 %v7954
    %v9284 = vunpack.c.l.b16 %v7955
    %v9285 = vunpack.c.h.b16 %v7955
    %v9286 = vunpack.c.l.b16 %v7956
    %v9287 = vunpack.c.h.b16 %v7956
    %v9288 = vunpack.c.l.b16 %v7957
    %v9289 = vunpack.c.h.b16 %v7957
    %v9290 = vunpack.c.l.b16 %v7958
    %v9291 = vunpack.c.h.b16 %v7958
    %v9292 = vunpack.c.l.b16 %v7959
    %v9293 = vunpack.c.h.b16 %v7959
    %v9294 = vunpack.c.l.b16 %v7960
    %v9295 = vunpack.c.h.b16 %v7960
    %v9296 = vunpack.c.l.b16 %v7961
    %v9297 = vunpack.c.h.b16 %v7961
    %v9298 = vunpack.c.l.b16 %v7962
    %v9299 = vunpack.c.h.b16 %v7962
    %v9300 = vunpack.c.l.b16 %v7963
    %v9301 = vunpack.c.h.b16 %v7963
    %v9302 = vunpack.c.l.b16 %v7964
    %v9303 = vunpack.c.h.b16 %v7964
    %v9304 = vunpack.c.l.b16 %v7965
    %v9305 = vunpack.c.h.b16 %v7965
    %v9306 = vunpack.c.l.b16 %v7966
    %v9307 = vunpack.c.h.b16 %v7966
    %v9308 = vunpack.c.l.b16 %v7967
    %v9309 = vunpack.c.h.b16 %v7967
    %v9310 = vunpack.c.l.b16 %v7968
    %v9311 = vunpack.c.h.b16 %v7968
    %v9312 = vunpack.c.l.b16 %v7969
    %v9313 = vunpack.c.h.b16 %v7969
    %v9314 = vunpack.c.l.b16 %v7970
    %v9315 = vunpack.c.h.b16 %v7970
    %v9316 = vunpack.c.l.b16 %v7971
    %v9317 = vunpack.c.h.b16 %v7971
    %v9318 = vunpack.c.l.b16 %v7972
    %v9319 = vunpack.c.h.b16 %v7972
    %v9320 = vunpack.c.l.b16 %v7973
    %v9321 = vunpack.c.h.b16 %v7973
    %v9322 = vunpack.c.l.b16 %v7974
    %v9323 = vunpack.c.h.b16 %v7974
    %v9324 = vunpack.c.l.b16 %v7975
    %v9325 = vunpack.c.h.b16 %v7975
    %v9326 = vunpack.c.l.b16 %v7976
    %v9327 = vunpack.c.h.b16 %v7976
    %v9328 = vunpack.c.l.b16 %v7977
    %v9329 = vunpack.c.h.b16 %v7977
    %v9330 = vunpack.c.l.b16 %v7978
    %v9331 = vunpack.c.h.b16 %v7978
    %v9332 = vunpack.c.l.b16 %v7979
    %v9333 = vunpack.c.h.b16 %v7979
    %v9334 = vunpack.c.l.b16 %v7980
    %v9335 = vunpack.c.h.b16 %v7980
    %v9336 = vunpack.c.l.b16 %v7981
    %v9337 = vunpack.c.h.b16 %v7981
    %v9338 = vunpack.c.l.b16 %v7982
    %v9339 = vunpack.c.h.b16 %v7982
    %v9340 = vunpack.c.l.b16 %v7983
    %v9341 = vunpack.c.h.b16 %v7983
    %v9342 = vunpack.c.l.b16 %v7984
    %v9343 = vunpack.c.h.b16 %v7984
    %v9344 = vunpack.c.l.b16 %v7985
    %v9345 = vunpack.c.h.b16 %v7985
    %v9346 = vunpack.c.l.b16 %v7986
    %v9347 = vunpack.c.h.b16 %v7986
    %v9348 = vunpack.c.l.b16 %v7987
    %v9349 = vunpack.c.h.b16 %v7987
    %v9350 = vunpack.c.l.b16 %v7988
    %v9351 = vunpack.c.h.b16 %v7988
    %v9352 = vunpack.c.l.b16 %v7989
    %v9353 = vunpack.c.h.b16 %v7989
    %v9354 = vunpack.c.l.b16 %v7990
    %v9355 = vunpack.c.h.b16 %v7990
    %v9356 = vunpack.c.l.b16 %v7991
    %v9357 = vunpack.c.h.b16 %v7991
    %v9358 = vunpack.c.l.b16 %v7992
    %v9359 = vunpack.c.h.b16 %v7992
    %v9360 = vunpack.c.l.b16 %v7993
    %v9361 = vunpack.c.h.b16 %v7993
    %v9362 = vunpack.c.l.b16 %v7994
    %v9363 = vunpack.c.h.b16 %v7994
    %v9364 = vunpack.c.l.b16 %v7995
    %v9365 = vunpack.c.h.b16 %v7995
    %v9366 = vunpack.c.l.b16 %v7996
    %v9367 = vunpack.c.h.b16 %v7996
    %v9368 = vunpack.c.l.b16 %v7997
    %v9369 = vunpack.c.h.b16 %v7997
    %v9370 = vunpack.c.l.b16 %v7998
    %v9371 = vunpack.c.h.b16 %v7998
    %v9372 = vunpack.c.l.b16 %v7999
    %v9373 = vunpack.c.h.b16 %v7999
    %v9374 = vunpack.c.l.b16 %v8000
    %v9375 = vunpack.c.h.b16 %v8000
    %v9376 = vunpack.c.l.b16 %v8001
    %v9377 = vunpack.c.h.b16 %v8001
    %v9378 = vunpack.c.l.b16 %v8002
    %v9379 = vunpack.c.h.b16 %v8002
    %v9380 = vunpack.c.l.b16 %v8003
    %v9381 = vunpack.c.h.b16 %v8003
    %v9382 = vunpack.c.l.b16 %v8004
    %v9383 = vunpack.c.h.b16 %v8004
    %v9384 = vunpack.c.l.b16 %v8005
    %v9385 = vunpack.c.h.b16 %v8005
    %v9386 = vunpack.c.l.b16 %v8006
    %v9387 = vunpack.c.h.b16 %v8006
    %v9388 = vunpack.c.l.b16 %v8007
    %v9389 = vunpack.c.h.b16 %v8007
    %v9390 = vunpack.c.l.b16 %v8008
    %v9391 = vunpack.c.h.b16 %v8008
    %v9392 = vunpack.c.l.b16 %v8009
    %v9393 = vunpack.c.h.b16 %v8009
    %v9394 = vunpack.c.l.b16 %v8010
    %v9395 = vunpack.c.h.b16 %v8010
    %v9396 = vunpack.c.l.b16 %v8011
    %v9397 = vunpack.c.h.b16 %v8011
    %v9398 = vunpack.c.l.b16 %v8012
    %v9399 = vunpack.c.h.b16 %v8012
    %v9400 = vunpack.c.l.b16 %v8013
    %v9401 = vunpack.c.h.b16 %v8013
    %v9402 = vunpack.c.l.b16 %v8014
    %v9403 = vunpack.c.h.b16 %v8014
    %v9404 = vunpack.c.l.b16 %v8015
    %v9405 = vunpack.c.h.b16 %v8015
    %v9406 = vunpack.c.l.b16 %v8016
    %v9407 = vunpack.c.h.b16 %v8016
    %v9408 = vunpack.c.l.b16 %v8017
    %v9409 = vunpack.c.h.b16 %v8017
    %v9410 = vunpack.c.l.b16 %v8018
    %v9411 = vunpack.c.h.b16 %v8018
    %v9412 = vunpack.c.l.b16 %v8019
    %v9413 = vunpack.c.h.b16 %v8019
    %v9414 = vunpack.c.l.b16 %v8020
    %v9415 = vunpack.c.h.b16 %v8020
    %v9416 = vunpack.c.l.b16 %v8021
    %v9417 = vunpack.c.h.b16 %v8021
    %v9418 = vunpack.c.l.b16 %v8022
    %v9419 = vunpack.c.h.b16 %v8022
    %v9420 = vunpack.c.l.b16 %v8023
    %v9421 = vunpack.c.h.b16 %v8023
    %v9422 = vunpack.c.l.b16 %v8024
    %v9423 = vunpack.c.h.b16 %v8024
    %v9424 = vunpack.c.l.b16 %v8025
    %v9425 = vunpack.c.h.b16 %v8025
    %v9426 = vunpack.c.l.b16 %v8026
    %v9427 = vunpack.c.h.b16 %v8026
    %v9428 = vunpack.c.l.b16 %v8027
    %v9429 = vunpack.c.h.b16 %v8027
    %v9430 = vunpack.c.l.b16 %v8028
    %v9431 = vunpack.c.h.b16 %v8028
    %v9432 = vunpack.c.l.b16 %v8029
    %v9433 = vunpack.c.h.b16 %v8029
    %v9434 = vunpack.c.l.b16 %v8030
    %v9435 = vunpack.c.h.b16 %v8030
    %v9436 = vunpack.c.l.b16 %v8031
    %v9437 = vunpack.c.h.b16 %v8031
    %v9438 = vunpack.c.l.b16 %v8032
    %v9439 = vunpack.c.h.b16 %v8032
    %v9440 = vunpack.c.l.b16 %v8033
    %v9441 = vunpack.c.h.b16 %v8033
    %v9442 = vunpack.c.l.b16 %v8034
    %v9443 = vunpack.c.h.b16 %v8034
    %v9444 = vunpack.c.l.b16 %v8035
    %v9445 = vunpack.c.h.b16 %v8035
    %v9446 = vunpack.c.l.b16 %v8036
    %v9447 = vunpack.c.h.b16 %v8036
    %v9448 = vunpack.c.l.b16 %v8037
    %v9449 = vunpack.c.h.b16 %v8037
    %v9450 = vunpack.c.l.b16 %v8038
    %v9451 = vunpack.c.h.b16 %v8038
    %v9452 = vunpack.c.l.b16 %v8039
    %v9453 = vunpack.c.h.b16 %v8039
    %v9454 = vunpack.c.l.b16 %v8040
    %v9455 = vunpack.c.h.b16 %v8040
    %v9456 = vunpack.c.l.b16 %v8041
    %v9457 = vunpack.c.h.b16 %v8041
    %v9458 = vunpack.c.l.b16 %v8042
    %v9459 = vunpack.c.h.b16 %v8042
    %v9460 = vunpack.c.l.b16 %v8043
    %v9461 = vunpack.c.h.b16 %v8043
    %v9462 = vunpack.c.l.b16 %v8044
    %v9463 = vunpack.c.h.b16 %v8044
    %v9464 = vunpack.c.l.b16 %v8045
    %v9465 = vunpack.c.h.b16 %v8045
    %v9466 = vunpack.c.l.b16 %v8046
    %v9467 = vunpack.c.h.b16 %v8046
    %v9468 = vunpack.c.l.b16 %v8047
    %v9469 = vunpack.c.h.b16 %v8047
    %v9470 = vunpack.c.l.b16 %v8048
    %v9471 = vunpack.c.h.b16 %v8048
    %v9472 = vunpack.c.l.b16 %v8049
    %v9473 = vunpack.c.h.b16 %v8049
    %v9474 = vunpack.c.l.b16 %v8050
    %v9475 = vunpack.c.h.b16 %v8050
    %v9476 = vunpack.c.l.b16 %v8051
    %v9477 = vunpack.c.h.b16 %v8051
    %v9478 = vunpack.c.l.b16 %v8052
    %v9479 = vunpack.c.h.b16 %v8052
    %v9480 = vunpack.c.l.b16 %v8053
    %v9481 = vunpack.c.h.b16 %v8053
    %v9482 = vunpack.c.l.b16 %v8054
    %v9483 = vunpack.c.h.b16 %v8054
    %v9484 = vunpack.c.l.b16 %v8055
    %v9485 = vunpack.c.h.b16 %v8055
    %v9486 = vunpack.c.l.b16 %v8056
    %v9487 = vunpack.c.h.b16 %v8056
    %v9488 = vunpack.c.l.b16 %v8057
    %v9489 = vunpack.c.h.b16 %v8057
    %v9490 = vunpack.c.l.b16 %v8058
    %v9491 = vunpack.c.h.b16 %v8058
    %v9492 = vunpack.c.l.b16 %v8059
    %v9493 = vunpack.c.h.b16 %v8059
    %v9494 = vunpack.c.l.b16 %v8060
    %v9495 = vunpack.c.h.b16 %v8060
    %v9496 = vunpack.c.l.b16 %v8061
    %v9497 = vunpack.c.h.b16 %v8061
    %v9498 = vunpack.c.l.b16 %v8062
    %v9499 = vunpack.c.h.b16 %v8062
    %v9500 = vunpack.c.l.b16 %v8063
    %v9501 = vunpack.c.h.b16 %v8063
    %v9502 = vunpack.c.l.b16 %v8064
    %v9503 = vunpack.c.h.b16 %v8064
    %v9504 = vunpack.c.l.b16 %v8065
    %v9505 = vunpack.c.h.b16 %v8065
    %v9506 = vunpack.c.l.b16 %v8066
    %v9507 = vunpack.c.h.b16 %v8066
    %v9508 = vunpack.c.l.b16 %v8067
    %v9509 = vunpack.c.h.b16 %v8067
    %v9510 = vunpack.c.l.b16 %v8068
    %v9511 = vunpack.c.h.b16 %v8068
    %v9512 = vunpack.c.l.b16 %v8069
    %v9513 = vunpack.c.h.b16 %v8069
    %v9514 = vunpack.c.l.b16 %v8070
    %v9515 = vunpack.c.h.b16 %v8070
    %v9516 = vunpack.c.l.b16 %v8071
    %v9517 = vunpack.c.h.b16 %v8071
    %v9518 = vunpack.c.l.b16 %v8072
    %v9519 = vunpack.c.h.b16 %v8072
    %v9520 = vunpack.c.l.b16 %v8073
    %v9521 = vunpack.c.h.b16 %v8073
    %v9522 = vunpack.c.l.b16 %v8074
    %v9523 = vunpack.c.h.b16 %v8074
    %v9524 = vunpack.c.l.b16 %v8075
    %v9525 = vunpack.c.h.b16 %v8075
    %v9526 = vunpack.c.l.b16 %v8076
    %v9527 = vunpack.c.h.b16 %v8076
    %v9528 = vunpack.c.l.b16 %v8077
    %v9529 = vunpack.c.h.b16 %v8077
    %v9530 = vunpack.c.l.b16 %v8078
    %v9531 = vunpack.c.h.b16 %v8078
    %v9532 = vunpack.c.l.b16 %v8079
    %v9533 = vunpack.c.h.b16 %v8079
    %v9534 = vunpack.c.l.b16 %v8080
    %v9535 = vunpack.c.h.b16 %v8080
    %v9536 = vunpack.c.l.b16 %v8081
    %v9537 = vunpack.c.h.b16 %v8081
    %v9538 = vunpack.c.l.b16 %v8082
    %v9539 = vunpack.c.h.b16 %v8082
    %v9540 = vunpack.c.l.b16 %v8083
    %v9541 = vunpack.c.h.b16 %v8083
    %v9542 = vunpack.c.l.b16 %v8084
    %v9543 = vunpack.c.h.b16 %v8084
    %v9544 = vunpack.c.l.b16 %v8085
    %v9545 = vunpack.c.h.b16 %v8085
    %v9546 = vunpack.c.l.b16 %v8086
    %v9547 = vunpack.c.h.b16 %v8086
    %v9548 = vunpack.c.l.b16 %v8087
    %v9549 = vunpack.c.h.b16 %v8087
    %v9550 = vunpack.c.l.b16 %v8088
    %v9551 = vunpack.c.h.b16 %v8088
    %v9552 = vunpack.c.l.b16 %v8089
    %v9553 = vunpack.c.h.b16 %v8089
    %v9554 = vunpack.c.l.b16 %v8090
    %v9555 = vunpack.c.h.b16 %v8090
    %v9556 = vunpack.c.l.b16 %v8091
    %v9557 = vunpack.c.h.b16 %v8091
    %v9558 = vunpack.c.l.b16 %v8092
    %v9559 = vunpack.c.h.b16 %v8092
    %v9560 = vunpack.c.l.b16 %v8093
    %v9561 = vunpack.c.h.b16 %v8093
    %v9562 = vunpack.c.l.b16 %v8094
    %v9563 = vunpack.c.h.b16 %v8094
    %v9564 = vunpack.c.l.b16 %v8095
    %v9565 = vunpack.c.h.b16 %v8095
    %v9566 = vunpack.c.l.b16 %v8096
    %v9567 = vunpack.c.h.b16 %v8096
    %v9568 = vunpack.c.l.b16 %v8097
    %v9569 = vunpack.c.h.b16 %v8097
    %v9570 = vunpack.c.l.b16 %v8098
    %v9571 = vunpack.c.h.b16 %v8098
    %v9572 = vunpack.c.l.b16 %v8099
    %v9573 = vunpack.c.h.b16 %v8099
    %v9574 = vunpack.c.l.b16 %v8100
    %v9575 = vunpack.c.h.b16 %v8100
    %v9576 = vunpack.c.l.b16 %v8101
    %v9577 = vunpack.c.h.b16 %v8101
    %v9578 = vunpack.c.l.b16 %v8102
    %v9579 = vunpack.c.h.b16 %v8102
    %v9580 = vunpack.c.l.b16 %v8103
    %v9581 = vunpack.c.h.b16 %v8103
    %v9582 = vunpack.c.l.b16 %v8104
    %v9583 = vunpack.c.h.b16 %v8104
    %v9584 = vunpack.c.l.b16 %v8105
    %v9585 = vunpack.c.h.b16 %v8105
    %v9586 = vunpack.c.l.b16 %v8106
    %v9587 = vunpack.c.h.b16 %v8106
    %v9588 = vunpack.c.l.b16 %v8107
    %v9589 = vunpack.c.h.b16 %v8107
    %v9590 = vunpack.c.l.b16 %v8108
    %v9591 = vunpack.c.h.b16 %v8108
    %v9592 = vunpack.c.l.b16 %v8109
    %v9593 = vunpack.c.h.b16 %v8109
    %v9594 = vunpack.c.l.b16 %v8110
    %v9595 = vunpack.c.h.b16 %v8110
    %v9596 = vunpack.c.l.b16 %v8111
    %v9597 = vunpack.c.h.b16 %v8111
    %v9598 = vunpack.c.l.b16 %v8112
    %v9599 = vunpack.c.h.b16 %v8112
    %v9600 = vunpack.c.l.b16 %v8113
    %v9601 = vunpack.c.h.b16 %v8113
    %v9602 = vunpack.c.l.b16 %v8114
    %v9603 = vunpack.c.h.b16 %v8114
    %v9604 = vunpack.c.l.b16 %v8115
    %v9605 = vunpack.c.h.b16 %v8115
    %v9606 = vunpack.c.l.b16 %v8116
    %v9607 = vunpack.c.h.b16 %v8116
    %v9608 = vunpack.c.l.b16 %v8117
    %v9609 = vunpack.c.h.b16 %v8117
    %v9610 = vunpack.c.l.b16 %v8118
    %v9611 = vunpack.c.h.b16 %v8118
    %v9612 = vunpack.c.l.b16 %v8119
    %v9613 = vunpack.c.h.b16 %v8119
    %v9614 = vunpack.c.l.b16 %v8120
    %v9615 = vunpack.c.h.b16 %v8120
    %v9616 = vunpack.c.l.b16 %v8121
    %v9617 = vunpack.c.h.b16 %v8121
    %v9618 = vunpack.c.l.b16 %v8122
    %v9619 = vunpack.c.h.b16 %v8122
    %v9620 = vunpack.c.l.b16 %v8123
    %v9621 = vunpack.c.h.b16 %v8123
    %v9622 = vunpack.c.l.b16 %v8124
    %v9623 = vunpack.c.h.b16 %v8124
    %v9624 = vunpack.c.l.b16 %v8125
    %v9625 = vunpack.c.h.b16 %v8125
    %v9626 = vunpack.c.l.b16 %v8126
    %v9627 = vunpack.c.h.b16 %v8126
    %v9628 = vunpack.c.l.b16 %v8127
    %v9629 = vunpack.c.h.b16 %v8127
    %v9630 = vunpack.c.l.b16 %v8128
    %v9631 = vunpack.c.h.b16 %v8128
    %v9632 = vunpack.c.l.b16 %v8129
    %v9633 = vunpack.c.h.b16 %v8129
    %v9634 = vunpack.c.l.b16 %v8130
    %v9635 = vunpack.c.h.b16 %v8130
    %v9636 = vunpack.c.l.b16 %v8131
    %v9637 = vunpack.c.h.b16 %v8131
    %v9638 = vunpack.c.l.b16 %v8132
    %v9639 = vunpack.c.h.b16 %v8132
    %v9640 = vunpack.c.l.b16 %v8133
    %v9641 = vunpack.c.h.b16 %v8133
    %v9642 = vunpack.c.l.b16 %v8134
    %v9643 = vunpack.c.h.b16 %v8134
    %v9644 = vunpack.c.l.b16 %v8135
    %v9645 = vunpack.c.h.b16 %v8135
    %v9646 = vunpack.c.l.b16 %v8136
    %v9647 = vunpack.c.h.b16 %v8136
    %v9648 = vunpack.c.l.b16 %v8137
    %v9649 = vunpack.c.h.b16 %v8137
    %v9650 = vunpack.c.l.b16 %v8138
    %v9651 = vunpack.c.h.b16 %v8138
    %v9652 = vunpack.c.l.b16 %v8139
    %v9653 = vunpack.c.h.b16 %v8139
    %v9654 = vunpack.c.l.b16 %v8140
    %v9655 = vunpack.c.h.b16 %v8140
    %v9656 = vunpack.c.l.b16 %v8141
    %v9657 = vunpack.c.h.b16 %v8141
    %v9658 = vunpack.c.l.b16 %v8142
    %v9659 = vunpack.c.h.b16 %v8142
    %v9660 = vunpack.c.l.b16 %v8143
    %v9661 = vunpack.c.h.b16 %v8143
    %v9662 = vunpack.c.l.b16 %v8144
    %v9663 = vunpack.c.h.b16 %v8144
    %v9664 = vunpack.c.l.b16 %v8145
    %v9665 = vunpack.c.h.b16 %v8145
    %v9666 = vunpack.c.l.b16 %v8146
    %v9667 = vunpack.c.h.b16 %v8146
    %v9668 = vunpack.c.l.b16 %v8147
    %v9669 = vunpack.c.h.b16 %v8147
    %v9670 = vunpack.c.l.b16 %v8148
    %v9671 = vunpack.c.h.b16 %v8148
    %v9672 = vunpack.c.l.b16 %v8149
    %v9673 = vunpack.c.h.b16 %v8149
    %v9674 = vunpack.c.l.b16 %v8150
    %v9675 = vunpack.c.h.b16 %v8150
    %v9676 = vunpack.c.l.b16 %v8151
    %v9677 = vunpack.c.h.b16 %v8151
    %v9678 = vunpack.c.l.b16 %v8152
    %v9679 = vunpack.c.h.b16 %v8152
    %v9680 = vunpack.c.l.b16 %v8153
    %v9681 = vunpack.c.h.b16 %v8153
    %v9682 = vunpack.c.l.b16 %v8154
    %v9683 = vunpack.c.h.b16 %v8154
    %v9684 = vunpack.c.l.b16 %v8155
    %v9685 = vunpack.c.h.b16 %v8155
    %v9686 = vunpack.c.l.b16 %v8156
    %v9687 = vunpack.c.h.b16 %v8156
    %v9688 = vunpack.c.l.b16 %v8157
    %v9689 = vunpack.c.h.b16 %v8157
    %v9690 = vunpack.c.l.b16 %v8158
    %v9691 = vunpack.c.h.b16 %v8158
    %v9692 = vunpack.c.l.b16 %v8159
    %v9693 = vunpack.c.h.b16 %v8159
    %v9694 = vunpack.c.l.b16 %v8160
    %v9695 = vunpack.c.h.b16 %v8160
    %v9696 = vunpack.c.l.b16 %v8161
    %v9697 = vunpack.c.h.b16 %v8161
    %v9698 = vunpack.c.l.b16 %v8162
    %v9699 = vunpack.c.h.b16 %v8162
    %v9700 = vunpack.c.l.b16 %v8163
    %v9701 = vunpack.c.h.b16 %v8163
    %v9702 = vunpack.c.l.b16 %v8164
    %v9703 = vunpack.c.h.b16 %v8164
    %v9704 = vunpack.c.l.b16 %v8165
    %v9705 = vunpack.c.h.b16 %v8165
    %v9706 = vunpack.c.l.b16 %v8166
    %v9707 = vunpack.c.h.b16 %v8166
    %v9708 = vunpack.c.l.b16 %v8167
    %v9709 = vunpack.c.h.b16 %v8167
    %v9710 = vunpack.c.l.b16 %v8168
    %v9711 = vunpack.c.h.b16 %v8168
    %v9712 = vunpack.c.l.b16 %v8169
    %v9713 = vunpack.c.h.b16 %v8169
    %v9714 = vunpack.c.l.b16 %v8170
    %v9715 = vunpack.c.h.b16 %v8170
    %v9716 = vunpack.c.l.b16 %v8171
    %v9717 = vunpack.c.h.b16 %v8171
    %v9718 = vunpack.c.l.b16 %v8172
    %v9719 = vunpack.c.h.b16 %v8172
    %v9720 = vunpack.c.l.b16 %v8173
    %v9721 = vunpack.c.h.b16 %v8173
    %v9722 = vunpack.c.l.b16 %v8174
    %v9723 = vunpack.c.h.b16 %v8174
    %v9724 = vunpack.c.l.b16 %v8175
    %v9725 = vunpack.c.h.b16 %v8175
    %v9726 = vunpack.c.l.b16 %v8176
    %v9727 = vunpack.c.h.b16 %v8176
    %v9728 = vunpack.c.l.b16 %v8177
    %v9729 = vunpack.c.h.b16 %v8177
    %v9730 = vunpack.c.l.b16 %v8178
    %v9731 = vunpack.c.h.b16 %v8178
    %v9732 = vunpack.c.l.b16 %v8179
    %v9733 = vunpack.c.h.b16 %v8179
    %v9734 = vunpack.c.l.b16 %v8180
    %v9735 = vunpack.c.h.b16 %v8180
    %v9736 = vunpack.c.l.b16 %v8181
    %v9737 = vunpack.c.h.b16 %v8181
    %v9738 = vunpack.c.l.b16 %v8182
    %v9739 = vunpack.c.h.b16 %v8182
    %v9740 = vunpack.c.l.b16 %v8183
    %v9741 = vunpack.c.h.b16 %v8183
    %v9742 = vunpack.c.l.b16 %v8184
    %v9743 = vunpack.c.h.b16 %v8184
    %v9744 = vunpack.c.l.b16 %v8185
    %v9745 = vunpack.c.h.b16 %v8185
    %v9746 = vunpack.c.l.b16 %v8186
    %v9747 = vunpack.c.h.b16 %v8186
    %v9748 = vunpack.c.l.b16 %v8187
    %v9749 = vunpack.c.h.b16 %v8187
    %v9750 = vunpack.c.l.b16 %v8188
    %v9751 = vunpack.c.h.b16 %v8188
    %v9752 = vunpack.c.l.b16 %v8189
    %v9753 = vunpack.c.h.b16 %v8189
    %v9754 = vunpack.c.l.b16 %v8190
    %v9755 = vunpack.c.h.b16 %v8190
    %v9756 = vunpack.c.l.b16 %v8191
    %v9757 = vunpack.c.h.b16 %v8191
    %v9758 = vunpack.c.l.b16 %v8192
    %v9759 = vunpack.c.h.b16 %v8192
    %v9760 = vunpack.c.l.b16 %v8193
    %v9761 = vunpack.c.h.b16 %v8193
    %v9762 = vunpack.c.l.b16 %v8194
    %v9763 = vunpack.c.h.b16 %v8194
    %v9764 = vunpack.c.l.b16 %v8195
    %v9765 = vunpack.c.h.b16 %v8195
    %v9766 = vunpack.c.l.b16 %v8196
    %v9767 = vunpack.c.h.b16 %v8196
    %v9768 = vunpack.c.l.b16 %v8197
    %v9769 = vunpack.c.h.b16 %v8197
    %v9770 = vunpack.c.l.b16 %v8198
    %v9771 = vunpack.c.h.b16 %v8198
    %v9772 = vunpack.c.l.b16 %v8199
    %v9773 = vunpack.c.h.b16 %v8199
    %v9774 = vunpack.c.l.b16 %v8200
    %v9775 = vunpack.c.h.b16 %v8200
    %v9776 = vunpack.c.l.b16 %v8201
    %v9777 = vunpack.c.h.b16 %v8201
    %v9778 = vunpack.c.l.b16 %v8202
    %v9779 = vunpack.c.h.b16 %v8202
    %v9780 = vunpack.c.l.b16 %v8203
    %v9781 = vunpack.c.h.b16 %v8203
    %v9782 = vpack.c.b16 %v8766, %v8758
    %v9783 = vpack.c.b16 %v8767, %v8759
    %v9784 = vpack.c.b16 %v8768, %v8760
    %v9785 = vpack.c.b16 %v8769, %v8761
    %v9786 = vpack.c.b16 %v8770, %v8762
    %v9787 = vpack.c.b16 %v8771, %v8763
    %v9788 = vpack.c.b16 %v8772, %v8764
    %v9789 = vpack.c.b16 %v8773, %v8765
    %v9790 = vpack.c.b16 %v8782, %v8774
    %v9791 = vpack.c.b16 %v8783, %v8775
    %v9792 = vpack.c.b16 %v8784, %v8776
    %v9793 = vpack.c.b16 %v8785, %v8777
    %v9794 = vpack.c.b16 %v8786, %v8778
    %v9795 = vpack.c.b16 %v8787, %v8779
    %v9796 = vpack.c.b16 %v8788, %v8780
    %v9797 = vpack.c.b16 %v8789, %v8781
    %v9798 = vpack.c.b16 %v8798, %v8790
    %v9799 = vpack.c.b16 %v8799, %v8791
    %v9800 = vpack.c.b16 %v8800, %v8792
    %v9801 = vpack.c.b16 %v8801, %v8793
    %v9802 = vpack.c.b16 %v8802, %v8794
    %v9803 = vpack.c.b16 %v8803, %v8795
    %v9804 = vpack.c.b16 %v8804, %v8796
    %v9805 = vpack.c.b16 %v8805, %v8797
    %v9806 = vpack.c.b16 %v8814, %v8806
    %v9807 = vpack.c.b16 %v8815, %v8807
    %v9808 = vpack.c.b16 %v8816, %v8808
    %v9809 = vpack.c.b16 %v8817, %v8809
    %v9810 = vpack.c.b16 %v8818, %v8810
    %v9811 = vpack.c.b16 %v8819, %v8811
    %v9812 = vpack.c.b16 %v8820, %v8812
    %v9813 = vpack.c.b16 %v8821, %v8813
    %v9814 = vpack.c.b16 %v8830, %v8822
    %v9815 = vpack.c.b16 %v8831, %v8823
    %v9816 = vpack.c.b16 %v8832, %v8824
    %v9817 = vpack.c.b16 %v8833, %v8825
    %v9818 = vpack.c.b16 %v8834, %v8826
    %v9819 = vpack.c.b16 %v8835, %v8827
    %v9820 = vpack.c.b16 %v8836, %v8828
    %v9821 = vpack.c.b16 %v8837, %v8829
    %v9822 = vpack.c.b16 %v8846, %v8838
    %v9823 = vpack.c.b16 %v8847, %v8839
    %v9824 = vpack.c.b16 %v8848, %v8840
    %v9825 = vpack.c.b16 %v8849, %v8841
    %v9826 = vpack.c.b16 %v8850, %v8842
    %v9827 = vpack.c.b16 %v8851, %v8843
    %v9828 = vpack.c.b16 %v8852, %v8844
    %v9829 = vpack.c.b16 %v8853, %v8845
    %v9830 = vpack.c.b16 %v8862, %v8854
    %v9831 = vpack.c.b16 %v8863, %v8855
    %v9832 = vpack.c.b16 %v8864, %v8856
    %v9833 = vpack.c.b16 %v8865, %v8857
    %v9834 = vpack.c.b16 %v8866, %v8858
    %v9835 = vpack.c.b16 %v8867, %v8859
    %v9836 = vpack.c.b16 %v8868, %v8860
    %v9837 = vpack.c.b16 %v8869, %v8861
    %v9838 = vpack.c.b16 %v8878, %v8870
    %v9839 = vpack.c.b16 %v8879, %v8871
    %v9840 = vpack.c.b16 %v8880, %v8872
    %v9841 = vpack.c.b16 %v8881, %v8873
    %v9842 = vpack.c.b16 %v8882, %v8874
    %v9843 = vpack.c.b16 %v8883, %v8875
    %v9844 = vpack.c.b16 %v8884, %v8876
    %v9845 = vpack.c.b16 %v8885, %v8877
    %v9846 = vpack.c.b16 %v8894, %v8886
    %v9847 = vpack.c.b16 %v8895, %v8887
    %v9848 = vpack.c.b16 %v8896, %v8888
    %v9849 = vpack.c.b16 %v8897, %v8889
    %v9850 = vpack.c.b16 %v8898, %v8890
    %v9851 = vpack.c.b16 %v8899, %v8891
    %v9852 = vpack.c.b16 %v8900, %v8892
    %v9853 = vpack.c.b16 %v8901, %v8893
    %v9854 = vpack.c.b16 %v8910, %v8902
    %v9855 = vpack.c.b16 %v8911, %v8903
    %v9856 = vpack.c.b16 %v8912, %v8904
    %v9857 = vpack.c.b16 %v8913, %v8905
    %v9858 = vpack.c.b16 %v8914, %v8906
    %v9859 = vpack.c.b16 %v8915, %v8907
    %v9860 = vpack.c.b16 %v8916, %v8908
    %v9861 = vpack.c.b16 %v8917, %v8909
    %v9862 = vpack.c.b16 %v8926, %v8918
    %v9863 = vpack.c.b16 %v8927, %v8919
    %v9864 = vpack.c.b16 %v8928, %v8920
    %v9865 = vpack.c.b16 %v8929, %v8921
    %v9866 = vpack.c.b16 %v8930, %v8922
    %v9867 = vpack.c.b16 %v8931, %v8923
    %v9868 = vpack.c.b16 %v8932, %v8924
    %v9869 = vpack.c.b16 %v8933, %v8925
    %v9870 = vpack.c.b16 %v8942, %v8934
    %v9871 = vpack.c.b16 %v8943, %v8935
    %v9872 = vpack.c.b16 %v8944, %v8936
    %v9873 = vpack.c.b16 %v8945, %v8937
    %v9874 = vpack.c.b16 %v8946, %v8938
    %v9875 = vpack.c.b16 %v8947, %v8939
    %v9876 = vpack.c.b16 %v8948, %v8940
    %v9877 = vpack.c.b16 %v8949, %v8941
    %v9878 = vpack.c.b16 %v8958, %v8950
    %v9879 = vpack.c.b16 %v8959, %v8951
    %v9880 = vpack.c.b16 %v8960, %v8952
    %v9881 = vpack.c.b16 %v8961, %v8953
    %v9882 = vpack.c.b16 %v8962, %v8954
    %v9883 = vpack.c.b16 %v8963, %v8955
    %v9884 = vpack.c.b16 %v8964, %v8956
    %v9885 = vpack.c.b16 %v8965, %v8957
    %v9886 = vpack.c.b16 %v8974, %v8966
    %v9887 = vpack.c.b16 %v8975, %v8967
    %v9888 = vpack.c.b16 %v8976, %v8968
    %v9889 = vpack.c.b16 %v8977, %v8969
    %v9890 = vpack.c.b16 %v8978, %v8970
    %v9891 = vpack.c.b16 %v8979, %v8971
    %v9892 = vpack.c.b16 %v8980, %v8972
    %v9893 = vpack.c.b16 %v8981, %v8973
    %v9894 = vpack.c.b16 %v8990, %v8982
    %v9895 = vpack.c.b16 %v8991, %v8983
    %v9896 = vpack.c.b16 %v8992, %v8984
    %v9897 = vpack.c.b16 %v8993, %v8985
    %v9898 = vpack.c.b16 %v8994, %v8986
    %v9899 = vpack.c.b16 %v8995, %v8987
    %v9900 = vpack.c.b16 %v8996, %v8988
    %v9901 = vpack.c.b16 %v8997, %v8989
    %v9902 = vpack.c.b16 %v9006, %v8998
    %v9903 = vpack.c.b16 %v9007, %v8999
    %v9904 = vpack.c.b16 %v9008, %v9000
    %v9905 = vpack.c.b16 %v9009, %v9001
    %v9906 = vpack.c.b16 %v9010, %v9002
    %v9907 = vpack.c.b16 %v9011, %v9003
    %v9908 = vpack.c.b16 %v9012, %v9004
    %v9909 = vpack.c.b16 %v9013, %v9005
    %v9910 = vpack.c.b16 %v9022, %v9014
    %v9911 = vpack.c.b16 %v9023, %v9015
    %v9912 = vpack.c.b16 %v9024, %v9016
    %v9913 = vpack.c.b16 %v9025, %v9017
    %v9914 = vpack.c.b16 %v9026, %v9018
    %v9915 = vpack.c.b16 %v9027, %v9019
    %v9916 = vpack.c.b16 %v9028, %v9020
    %v9917 = vpack.c.b16 %v9029, %v9021
    %v9918 = vpack.c.b16 %v9038, %v9030
    %v9919 = vpack.c.b16 %v9039, %v9031
    %v9920 = vpack.c.b16 %v9040, %v9032
    %v9921 = vpack.c.b16 %v9041, %v9033
    %v9922 = vpack.c.b16 %v9042, %v9034
    %v9923 = vpack.c.b16 %v9043, %v9035
    %v9924 = vpack.c.b16 %v9044, %v9036
    %v9925 = vpack.c.b16 %v9045, %v9037
    %v9926 = vpack.c.b16 %v9054, %v9046
    %v9927 = vpack.c.b16 %v9055, %v9047
    %v9928 = vpack.c.b16 %v9056, %v9048
    %v9929 = vpack.c.b16 %v9057, %v9049
    %v9930 = vpack.c.b16 %v9058, %v9050
    %v9931 = vpack.c.b16 %v9059, %v9051
    %v9932 = vpack.c.b16 %v9060, %v9052
    %v9933 = vpack.c.b16 %v9061, %v9053
    %v9934 = vpack.c.b16 %v9070, %v9062
    %v9935 = vpack.c.b16 %v9071, %v9063
    %v9936 = vpack.c.b16 %v9072, %v9064
    %v9937 = vpack.c.b16 %v9073, %v9065
    %v9938 = vpack.c.b16 %v9074, %v9066
    %v9939 = vpack.c.b16 %v9075, %v9067
    %v9940 = vpack.c.b16 %v9076, %v9068
    %v9941 = vpack.c.b16 %v9077, %v9069
    %v9942 = vpack.c.b16 %v9086, %v9078
    %v9943 = vpack.c.b16 %v9087, %v9079
    %v9944 = vpack.c.b16 %v9088, %v9080
    %v9945 = vpack.c.b16 %v9089, %v9081
    %v9946 = vpack.c.b16 %v9090, %v9082
    %v9947 = vpack.c.b16 %v9091, %v9083
    %v9948 = vpack.c.b16 %v9092, %v9084
    %v9949 = vpack.c.b16 %v9093, %v9085
    %v9950 = vpack.c.b16 %v9102, %v9094
    %v9951 = vpack.c.b16 %v9103, %v9095
    %v9952 = vpack.c.b16 %v9104, %v9096
    %v9953 = vpack.c.b16 %v9105, %v9097
    %v9954 = vpack.c.b16 %v9106, %v9098
    %v9955 = vpack.c.b16 %v9107, %v9099
    %v9956 = vpack.c.b16 %v9108, %v9100
    %v9957 = vpack.c.b16 %v9109, %v9101
    %v9958 = vpack.c.b16 %v9118, %v9110
    %v9959 = vpack.c.b16 %v9119, %v9111
    %v9960 = vpack.c.b16 %v9120, %v9112
    %v9961 = vpack.c.b16 %v9121, %v9113
    %v9962 = vpack.c.b16 %v9122, %v9114
    %v9963 = vpack.c.b16 %v9123, %v9115
    %v9964 = vpack.c.b16 %v9124, %v9116
    %v9965 = vpack.c.b16 %v9125, %v9117
    %v9966 = vpack.c.b16 %v9134, %v9126
    %v9967 = vpack.c.b16 %v9135, %v9127
    %v9968 = vpack.c.b16 %v9136, %v9128
    %v9969 = vpack.c.b16 %v9137, %v9129
    %v9970 = vpack.c.b16 %v9138, %v9130
    %v9971 = vpack.c.b16 %v9139, %v9131
    %v9972 = vpack.c.b16 %v9140, %v9132
    %v9973 = vpack.c.b16 %v9141, %v9133
    %v9974 = vpack.c.b16 %v9150, %v9142
    %v9975 = vpack.c.b16 %v9151, %v9143
    %v9976 = vpack.c.b16 %v9152, %v9144
    %v9977 = vpack.c.b16 %v9153, %v9145
    %v9978 = vpack.c.b16 %v9154, %v9146
    %v9979 = vpack.c.b16 %v9155, %v9147
    %v9980 = vpack.c.b16 %v9156, %v9148
    %v9981 = vpack.c.b16 %v9157, %v9149
    %v9982 = vpack.c.b16 %v9166, %v9158
    %v9983 = vpack.c.b16 %v9167, %v9159
    %v9984 = vpack.c.b16 %v9168, %v9160
    %v9985 = vpack.c.b16 %v9169, %v9161
    %v9986 = vpack.c.b16 %v9170, %v9162
    %v9987 = vpack.c.b16 %v9171, %v9163
    %v9988 = vpack.c.b16 %v9172, %v9164
    %v9989 = vpack.c.b16 %v9173, %v9165
    %v9990 = vpack.c.b16 %v9182, %v9174
    %v9991 = vpack.c.b16 %v9183, %v9175
    %v9992 = vpack.c.b16 %v9184, %v9176
    %v9993 = vpack.c.b16 %v9185, %v9177
    %v9994 = vpack.c.b16 %v9186, %v9178
    %v9995 = vpack.c.b16 %v9187, %v9179
    %v9996 = vpack.c.b16 %v9188, %v9180
    %v9997 = vpack.c.b16 %v9189, %v9181
    %v9998 = vpack.c.b16 %v9198, %v9190
    %v9999 = vpack.c.b16 %v9199, %v9191
    %v10000 = vpack.c.b16 %v9200, %v9192
    %v10001 = vpack.c.b16 %v9201, %v9193
    %v10002 = vpack.c.b16 %v9202, %v9194
    %v10003 = vpack.c.b16 %v9203, %v9195
    %v10004 = vpack.c.b16 %v9204, %v9196
    %v10005 = vpack.c.b16 %v9205, %v9197
    %v10006 = vpack.c.b16 %v9214, %v9206
    %v10007 = vpack.c.b16 %v9215, %v9207
    %v10008 = vpack.c.b16 %v9216, %v9208
    %v10009 = vpack.c.b16 %v9217, %v9209
    %v10010 = vpack.c.b16 %v9218, %v9210
    %v10011 = vpack.c.b16 %v9219, %v9211
    %v10012 = vpack.c.b16 %v9220, %v9212
    %v10013 = vpack.c.b16 %v9221, %v9213
    %v10014 = vpack.c.b16 %v9230, %v9222
    %v10015 = vpack.c.b16 %v9231, %v9223
    %v10016 = vpack.c.b16 %v9232, %v9224
    %v10017 = vpack.c.b16 %v9233, %v9225
    %v10018 = vpack.c.b16 %v9234, %v9226
    %v10019 = vpack.c.b16 %v9235, %v9227
    %v10020 = vpack.c.b16 %v9236, %v9228
    %v10021 = vpack.c.b16 %v9237, %v9229
    %v10022 = vpack.c.b16 %v9246, %v9238
    %v10023 = vpack.c.b16 %v9247, %v9239
    %v10024 = vpack.c.b16 %v9248, %v9240
    %v10025 = vpack.c.b16 %v9249, %v9241
    %v10026 = vpack.c.b16 %v9250, %v9242
    %v10027 = vpack.c.b16 %v9251, %v9243
    %v10028 = vpack.c.b16 %v9252, %v9244
    %v10029 = vpack.c.b16 %v9253, %v9245
    %v10030 = vpack.c.b16 %v9262, %v9254
    %v10031 = vpack.c.b16 %v9263, %v9255
    %v10032 = vpack.c.b16 %v9264, %v9256
    %v10033 = vpack.c.b16 %v9265, %v9257
    %v10034 = vpack.c.b16 %v9266, %v9258
    %v10035 = vpack.c.b16 %v9267, %v9259
    %v10036 = vpack.c.b16 %v9268, %v9260
    %v10037 = vpack.c.b16 %v9269, %v9261
    %v10038 = vpack.c.b16 %v9278, %v9270
    %v10039 = vpack.c.b16 %v9279, %v9271
    %v10040 = vpack.c.b16 %v9280, %v9272
    %v10041 = vpack.c.b16 %v9281, %v9273
    %v10042 = vpack.c.b16 %v9282, %v9274
    %v10043 = vpack.c.b16 %v9283, %v9275
    %v10044 = vpack.c.b16 %v9284, %v9276
    %v10045 = vpack.c.b16 %v9285, %v9277
    %v10046 = vpack.c.b16 %v9294, %v9286
    %v10047 = vpack.c.b16 %v9295, %v9287
    %v10048 = vpack.c.b16 %v9296, %v9288
    %v10049 = vpack.c.b16 %v9297, %v9289
    %v10050 = vpack.c.b16 %v9298, %v9290
    %v10051 = vpack.c.b16 %v9299, %v9291
    %v10052 = vpack.c.b16 %v9300, %v9292
    %v10053 = vpack.c.b16 %v9301, %v9293
    %v10054 = vpack.c.b16 %v9310, %v9302
    %v10055 = vpack.c.b16 %v9311, %v9303
    %v10056 = vpack.c.b16 %v9312, %v9304
    %v10057 = vpack.c.b16 %v9313, %v9305
    %v10058 = vpack.c.b16 %v9314, %v9306
    %v10059 = vpack.c.b16 %v9315, %v9307
    %v10060 = vpack.c.b16 %v9316, %v9308
    %v10061 = vpack.c.b16 %v9317, %v9309
    %v10062 = vpack.c.b16 %v9326, %v9318
    %v10063 = vpack.c.b16 %v9327, %v9319
    %v10064 = vpack.c.b16 %v9328, %v9320
    %v10065 = vpack.c.b16 %v9329, %v9321
    %v10066 = vpack.c.b16 %v9330, %v9322
    %v10067 = vpack.c.b16 %v9331, %v9323
    %v10068 = vpack.c.b16 %v9332, %v9324
    %v10069 = vpack.c.b16 %v9333, %v9325
    %v10070 = vpack.c.b16 %v9342, %v9334
    %v10071 = vpack.c.b16 %v9343, %v9335
    %v10072 = vpack.c.b16 %v9344, %v9336
    %v10073 = vpack.c.b16 %v9345, %v9337
    %v10074 = vpack.c.b16 %v9346, %v9338
    %v10075 = vpack.c.b16 %v9347, %v9339
    %v10076 = vpack.c.b16 %v9348, %v9340
    %v10077 = vpack.c.b16 %v9349, %v9341
    %v10078 = vpack.c.b16 %v9358, %v9350
    %v10079 = vpack.c.b16 %v9359, %v9351
    %v10080 = vpack.c.b16 %v9360, %v9352
    %v10081 = vpack.c.b16 %v9361, %v9353
    %v10082 = vpack.c.b16 %v9362, %v9354
    %v10083 = vpack.c.b16 %v9363, %v9355
    %v10084 = vpack.c.b16 %v9364, %v9356
    %v10085 = vpack.c.b16 %v9365, %v9357
    %v10086 = vpack.c.b16 %v9374, %v9366
    %v10087 = vpack.c.b16 %v9375, %v9367
    %v10088 = vpack.c.b16 %v9376, %v9368
    %v10089 = vpack.c.b16 %v9377, %v9369
    %v10090 = vpack.c.b16 %v9378, %v9370
    %v10091 = vpack.c.b16 %v9379, %v9371
    %v10092 = vpack.c.b16 %v9380, %v9372
    %v10093 = vpack.c.b16 %v9381, %v9373
    %v10094 = vpack.c.b16 %v9390, %v9382
    %v10095 = vpack.c.b16 %v9391, %v9383
    %v10096 = vpack.c.b16 %v9392, %v9384
    %v10097 = vpack.c.b16 %v9393, %v9385
    %v10098 = vpack.c.b16 %v9394, %v9386
    %v10099 = vpack.c.b16 %v9395, %v9387
    %v10100 = vpack.c.b16 %v9396, %v9388
    %v10101 = vpack.c.b16 %v9397, %v9389
    %v10102 = vpack.c.b16 %v9406, %v9398
    %v10103 = vpack.c.b16 %v9407, %v9399
    %v10104 = vpack.c.b16 %v9408, %v9400
    %v10105 = vpack.c.b16 %v9409, %v9401
    %v10106 = vpack.c.b16 %v9410, %v9402
    %v10107 = vpack.c.b16 %v9411, %v9403
    %v10108 = vpack.c.b16 %v9412, %v9404
    %v10109 = vpack.c.b16 %v9413, %v9405
    %v10110 = vpack.c.b16 %v9422, %v9414
    %v10111 = vpack.c.b16 %v9423, %v9415
    %v10112 = vpack.c.b16 %v9424, %v9416
    %v10113 = vpack.c.b16 %v9425, %v9417
    %v10114 = vpack.c.b16 %v9426, %v9418
    %v10115 = vpack.c.b16 %v9427, %v9419
    %v10116 = vpack.c.b16 %v9428, %v9420
    %v10117 = vpack.c.b16 %v9429, %v9421
    %v10118 = vpack.c.b16 %v9438, %v9430
    %v10119 = vpack.c.b16 %v9439, %v9431
    %v10120 = vpack.c.b16 %v9440, %v9432
    %v10121 = vpack.c.b16 %v9441, %v9433
    %v10122 = vpack.c.b16 %v9442, %v9434
    %v10123 = vpack.c.b16 %v9443, %v9435
    %v10124 = vpack.c.b16 %v9444, %v9436
    %v10125 = vpack.c.b16 %v9445, %v9437
    %v10126 = vpack.c.b16 %v9454, %v9446
    %v10127 = vpack.c.b16 %v9455, %v9447
    %v10128 = vpack.c.b16 %v9456, %v9448
    %v10129 = vpack.c.b16 %v9457, %v9449
    %v10130 = vpack.c.b16 %v9458, %v9450
    %v10131 = vpack.c.b16 %v9459, %v9451
    %v10132 = vpack.c.b16 %v9460, %v9452
    %v10133 = vpack.c.b16 %v9461, %v9453
    %v10134 = vpack.c.b16 %v9470, %v9462
    %v10135 = vpack.c.b16 %v9471, %v9463
    %v10136 = vpack.c.b16 %v9472, %v9464
    %v10137 = vpack.c.b16 %v9473, %v9465
    %v10138 = vpack.c.b16 %v9474, %v9466
    %v10139 = vpack.c.b16 %v9475, %v9467
    %v10140 = vpack.c.b16 %v9476, %v9468
    %v10141 = vpack.c.b16 %v9477, %v9469
    %v10142 = vpack.c.b16 %v9486, %v9478
    %v10143 = vpack.c.b16 %v9487, %v9479
    %v10144 = vpack.c.b16 %v9488, %v9480
    %v10145 = vpack.c.b16 %v9489, %v9481
    %v10146 = vpack.c.b16 %v9490, %v9482
    %v10147 = vpack.c.b16 %v9491, %v9483
    %v10148 = vpack.c.b16 %v9492, %v9484
    %v10149 = vpack.c.b16 %v9493, %v9485
    %v10150 = vpack.c.b16 %v9502, %v9494
    %v10151 = vpack.c.b16 %v9503, %v9495
    %v10152 = vpack.c.b16 %v9504, %v9496
    %v10153 = vpack.c.b16 %v9505, %v9497
    %v10154 = vpack.c.b16 %v9506, %v9498
    %v10155 = vpack.c.b16 %v9507, %v9499
    %v10156 = vpack.c.b16 %v9508, %v9500
    %v10157 = vpack.c.b16 %v9509, %v9501
    %v10158 = vpack.c.b16 %v9518, %v9510
    %v10159 = vpack.c.b16 %v9519, %v9511
    %v10160 = vpack.c.b16 %v9520, %v9512
    %v10161 = vpack.c.b16 %v9521, %v9513
    %v10162 = vpack.c.b16 %v9522, %v9514
    %v10163 = vpack.c.b16 %v9523, %v9515
    %v10164 = vpack.c.b16 %v9524, %v9516
    %v10165 = vpack.c.b16 %v9525, %v9517
    %v10166 = vpack.c.b16 %v9534, %v9526
    %v10167 = vpack.c.b16 %v9535, %v9527
    %v10168 = vpack.c.b16 %v9536, %v9528
    %v10169 = vpack.c.b16 %v9537, %v9529
    %v10170 = vpack.c.b16 %v9538, %v9530
    %v10171 = vpack.c.b16 %v9539, %v9531
    %v10172 = vpack.c.b16 %v9540, %v9532
    %v10173 = vpack.c.b16 %v9541, %v9533
    %v10174 = vpack.c.b16 %v9550, %v9542
    %v10175 = vpack.c.b16 %v9551, %v9543
    %v10176 = vpack.c.b16 %v9552, %v9544
    %v10177 = vpack.c.b16 %v9553, %v9545
    %v10178 = vpack.c.b16 %v9554, %v9546
    %v10179 = vpack.c.b16 %v9555, %v9547
    %v10180 = vpack.c.b16 %v9556, %v9548
    %v10181 = vpack.c.b16 %v9557, %v9549
    %v10182 = vpack.c.b16 %v9566, %v9558
    %v10183 = vpack.c.b16 %v9567, %v9559
    %v10184 = vpack.c.b16 %v9568, %v9560
    %v10185 = vpack.c.b16 %v9569, %v9561
    %v10186 = vpack.c.b16 %v9570, %v9562
    %v10187 = vpack.c.b16 %v9571, %v9563
    %v10188 = vpack.c.b16 %v9572, %v9564
    %v10189 = vpack.c.b16 %v9573, %v9565
    %v10190 = vpack.c.b16 %v9582, %v9574
    %v10191 = vpack.c.b16 %v9583, %v9575
    %v10192 = vpack.c.b16 %v9584, %v9576
    %v10193 = vpack.c.b16 %v9585, %v9577
    %v10194 = vpack.c.b16 %v9586, %v9578
    %v10195 = vpack.c.b16 %v9587, %v9579
    %v10196 = vpack.c.b16 %v9588, %v9580
    %v10197 = vpack.c.b16 %v9589, %v9581
    %v10198 = vpack.c.b16 %v9598, %v9590
    %v10199 = vpack.c.b16 %v9599, %v9591
    %v10200 = vpack.c.b16 %v9600, %v9592
    %v10201 = vpack.c.b16 %v9601, %v9593
    %v10202 = vpack.c.b16 %v9602, %v9594
    %v10203 = vpack.c.b16 %v9603, %v9595
    %v10204 = vpack.c.b16 %v9604, %v9596
    %v10205 = vpack.c.b16 %v9605, %v9597
    %v10206 = vpack.c.b16 %v9614, %v9606
    %v10207 = vpack.c.b16 %v9615, %v9607
    %v10208 = vpack.c.b16 %v9616, %v9608
    %v10209 = vpack.c.b16 %v9617, %v9609
    %v10210 = vpack.c.b16 %v9618, %v9610
    %v10211 = vpack.c.b16 %v9619, %v9611
    %v10212 = vpack.c.b16 %v9620, %v9612
    %v10213 = vpack.c.b16 %v9621, %v9613
    %v10214 = vpack.c.b16 %v9630, %v9622
    %v10215 = vpack.c.b16 %v9631, %v9623
    %v10216 = vpack.c.b16 %v9632, %v9624
    %v10217 = vpack.c.b16 %v9633, %v9625
    %v10218 = vpack.c.b16 %v9634, %v9626
    %v10219 = vpack.c.b16 %v9635, %v9627
    %v10220 = vpack.c.b16 %v9636, %v9628
    %v10221 = vpack.c.b16 %v9637, %v9629
    %v10222 = vpack.c.b16 %v9646, %v9638
    %v10223 = vpack.c.b16 %v9647, %v9639
    %v10224 = vpack.c.b16 %v9648, %v9640
    %v10225 = vpack.c.b16 %v9649, %v9641
    %v10226 = vpack.c.b16 %v9650, %v9642
    %v10227 = vpack.c.b16 %v9651, %v9643
    %v10228 = vpack.c.b16 %v9652, %v9644
    %v10229 = vpack.c.b16 %v9653, %v9645
    %v10230 = vpack.c.b16 %v9662, %v9654
    %v10231 = vpack.c.b16 %v9663, %v9655
    %v10232 = vpack.c.b16 %v9664, %v9656
    %v10233 = vpack.c.b16 %v9665, %v9657
    %v10234 = vpack.c.b16 %v9666, %v9658
    %v10235 = vpack.c.b16 %v9667, %v9659
    %v10236 = vpack.c.b16 %v9668, %v9660
    %v10237 = vpack.c.b16 %v9669, %v9661
    %v10238 = vpack.c.b16 %v9678, %v9670
    %v10239 = vpack.c.b16 %v9679, %v9671
    %v10240 = vpack.c.b16 %v9680, %v9672
    %v10241 = vpack.c.b16 %v9681, %v9673
    %v10242 = vpack.c.b16 %v9682, %v9674
    %v10243 = vpack.c.b16 %v9683, %v9675
    %v10244 = vpack.c.b16 %v9684, %v9676
    %v10245 = vpack.c.b16 %v9685, %v9677
    %v10246 = vpack.c.b16 %v9694, %v9686
    %v10247 = vpack.c.b16 %v9695, %v9687
    %v10248 = vpack.c.b16 %v9696, %v9688
    %v10249 = vpack.c.b16 %v9697, %v9689
    %v10250 = vpack.c.b16 %v9698, %v9690
    %v10251 = vpack.c.b16 %v9699, %v9691
    %v10252 = vpack.c.b16 %v9700, %v9692
    %v10253 = vpack.c.b16 %v9701, %v9693
    %v10254 = vpack.c.b16 %v9710, %v9702
    %v10255 = vpack.c.b16 %v9711, %v9703
    %v10256 = vpack.c.b16 %v9712, %v9704
    %v10257 = vpack.c.b16 %v9713, %v9705
    %v10258 = vpack.c.b16 %v9714, %v9706
    %v10259 = vpack.c.b16 %v9715, %v9707
    %v10260 = vpack.c.b16 %v9716, %v9708
    %v10261 = vpack.c.b16 %v9717, %v9709
    %v10262 = vpack.c.b16 %v9726, %v9718
    %v10263 = vpack.c.b16 %v9727, %v9719
    %v10264 = vpack.c.b16 %v9728, %v9720
    %v10265 = vpack.c.b16 %v9729, %v9721
    %v10266 = vpack.c.b16 %v9730, %v9722
    %v10267 = vpack.c.b16 %v9731, %v9723
    %v10268 = vpack.c.b16 %v9732, %v9724
    %v10269 = vpack.c.b16 %v9733, %v9725
    %v10270 = vpack.c.b16 %v9742, %v9734
    %v10271 = vpack.c.b16 %v9743, %v9735
    %v10272 = vpack.c.b16 %v9744, %v9736
    %v10273 = vpack.c.b16 %v9745, %v9737
    %v10274 = vpack.c.b16 %v9746, %v9738
    %v10275 = vpack.c.b16 %v9747, %v9739
    %v10276 = vpack.c.b16 %v9748, %v9740
    %v10277 = vpack.c.b16 %v9749, %v9741
    %v10278 = vpack.c.b16 %v9758, %v9750
    %v10279 = vpack.c.b16 %v9759, %v9751
    %v10280 = vpack.c.b16 %v9760, %v9752
    %v10281 = vpack.c.b16 %v9761, %v9753
    %v10282 = vpack.c.b16 %v9762, %v9754
    %v10283 = vpack.c.b16 %v9763, %v9755
    %v10284 = vpack.c.b16 %v9764, %v9756
    %v10285 = vpack.c.b16 %v9765, %v9757
    %v10286 = vpack.c.b16 %v9774, %v9766
    %v10287 = vpack.c.b16 %v9775, %v9767
    %v10288 = vpack.c.b16 %v9776, %v9768
    %v10289 = vpack.c.b16 %v9777, %v9769
    %v10290 = vpack.c.b16 %v9778, %v9770
    %v10291 = vpack.c.b16 %v9779, %v9771
    %v10292 = vpack.c.b16 %v9780, %v9772
    %v10293 = vpack.c.b16 %v9781, %v9773
    %10806 = vmatprep.subr.bf16.mxu0 %v9783
    %10807 = vmatpush1.bf16.msra.mxu0 %v9782
    %10808 = vmatprep.subr.bf16.mxu0 %v9791
    %10809 = vmatpush1.bf16.msra.mxu0 %v9790
    %10810 = vmatprep.subr.bf16.mxu0 %v9799
    %10811 = vmatpush1.bf16.msra.mxu0 %v9798
    %10812 = vmatprep.subr.bf16.mxu0 %v9807
    %10813 = vmatpush1.bf16.msra.mxu0 %v9806
    %10814 = vmatprep.subr.bf16.mxu0 %v9815
    %10815 = vmatpush1.bf16.msra.mxu0 %v9814
    %10816 = vmatprep.subr.bf16.mxu0 %v9823
    %10817 = vmatpush1.bf16.msra.mxu0 %v9822
    %10818 = vmatprep.subr.bf16.mxu0 %v9831
    %10819 = vmatpush1.bf16.msra.mxu0 %v9830
    %10820 = vmatprep.subr.bf16.mxu0 %v9839
    %10821 = vmatpush1.bf16.msra.mxu0 %v9838
    %10822 = vmatprep.subr.bf16.mxu0 %v9847
    %10823 = vmatpush1.bf16.msra.mxu0 %v9846
    %10824 = vmatprep.subr.bf16.mxu0 %v9855
    %10825 = vmatpush1.bf16.msra.mxu0 %v9854
    %10826 = vmatprep.subr.bf16.mxu0 %v9863
    %10827 = vmatpush1.bf16.msra.mxu0 %v9862
    %10828 = vmatprep.subr.bf16.mxu0 %v9871
    %10829 = vmatpush1.bf16.msra.mxu0 %v9870
    %10830 = vmatprep.subr.bf16.mxu0 %v9879
    %10831 = vmatpush1.bf16.msra.mxu0 %v9878
    %10832 = vmatprep.subr.bf16.mxu0 %v9887
    %10833 = vmatpush1.bf16.msra.mxu0 %v9886
    %10834 = vmatprep.subr.bf16.mxu0 %v9895
    %10835 = vmatpush1.bf16.msra.mxu0 %v9894
    %10836 = vmatprep.subr.bf16.mxu0 %v9903
    %10837 = vmatpush1.bf16.msra.mxu0 %v9902
    %10838 = vmatprep.mubr.bf16.mxu0 %v7685
    %10839 = vmatmul.mubr.bf16.gmra.mrb[0].mxu0 %v7684
    %v10840 = vpop.f32.mrb[0].mxu0
    %v10841 = vadd.f32 %v8209, %v10840
    %v10842 = vpop.f32.mrb[0].mxu0
    %v10843 = vadd.f32 %v8213, %v10842
    %v10844 = vpop.f32.mrb[0].mxu0
    %v10845 = vpop.f32.mrb[0].mxu0
    %10846 = vdwg.mxu0
    %10847 = vmatprep.subr.bf16.mxu0 %v9911
    %10848 = vmatpush1.bf16.msra.mxu0 %v9910
    %10849 = vmatprep.subr.bf16.mxu0 %v9919
    %10850 = vmatpush1.bf16.msra.mxu0 %v9918
    %10851 = vmatprep.subr.bf16.mxu0 %v9927
    %10852 = vmatpush1.bf16.msra.mxu0 %v9926
    %10853 = vmatprep.subr.bf16.mxu0 %v9935
    %10854 = vmatpush1.bf16.msra.mxu0 %v9934
    %10855 = vmatprep.subr.bf16.mxu0 %v9943
    %10856 = vmatpush1.bf16.msra.mxu0 %v9942
    %10857 = vmatprep.subr.bf16.mxu0 %v9951
    %10858 = vmatpush1.bf16.msra.mxu0 %v9950
    %10859 = vmatprep.subr.bf16.mxu0 %v9959
    %10860 = vmatpush1.bf16.msra.mxu0 %v9958
    %10861 = vmatprep.subr.bf16.mxu0 %v9967
    %10862 = vmatpush1.bf16.msra.mxu0 %v9966
    %10863 = vmatprep.subr.bf16.mxu0 %v9975
    %10864 = vmatpush1.bf16.msra.mxu0 %v9974
    %10865 = vmatprep.subr.bf16.mxu0 %v9983
    %10866 = vmatpush1.bf16.msra.mxu0 %v9982
    %10867 = vmatprep.subr.bf16.mxu0 %v9991
    %10868 = vmatpush1.bf16.msra.mxu0 %v9990
    %10869 = vmatprep.subr.bf16.mxu0 %v9999
    %10870 = vmatpush1.bf16.msra.mxu0 %v9998
    %10871 = vmatprep.subr.bf16.mxu0 %v10007
    %10872 = vmatpush1.bf16.msra.mxu0 %v10006
    %10873 = vmatprep.subr.bf16.mxu0 %v10015
    %10874 = vmatpush1.bf16.msra.mxu0 %v10014
    %10875 = vmatprep.subr.bf16.mxu0 %v10023
    %10876 = vmatpush1.bf16.msra.mxu0 %v10022
    %10877 = vmatprep.subr.bf16.mxu0 %v10031
    %10878 = vmatpush1.bf16.msra.mxu0 %v10030
    %10879 = vmatprep.mubr.bf16.mxu0 %v7687
    %10880 = vmatmul.mubr.bf16.gmra.mrb[0].mxu0 %v7686
    %v10881 = vpop.f32.mrb[0].mxu0
    %v10882 = vadd.f32 %v10841, %v10881
    %v10883 = vpop.f32.mrb[0].mxu0
    %v10884 = vadd.f32 %v10843, %v10883
    %v10885 = vpop.f32.mrb[0].mxu0
    %v10886 = vpop.f32.mrb[0].mxu0
    %10887 = vdwg.mxu0
    %10888 = vmatprep.subr.bf16.mxu0 %v10039
    %10889 = vmatpush1.bf16.msra.mxu0 %v10038
    %10890 = vmatprep.subr.bf16.mxu0 %v10047
    %10891 = vmatpush1.bf16.msra.mxu0 %v10046
    %10892 = vmatprep.subr.bf16.mxu0 %v10055
    %10893 = vmatpush1.bf16.msra.mxu0 %v10054
    %10894 = vmatprep.subr.bf16.mxu0 %v10063
    %10895 = vmatpush1.bf16.msra.mxu0 %v10062
    %10896 = vmatprep.subr.bf16.mxu0 %v10071
    %10897 = vmatpush1.bf16.msra.mxu0 %v10070
    %10898 = vmatprep.subr.bf16.mxu0 %v10079
    %10899 = vmatpush1.bf16.msra.mxu0 %v10078
    %10900 = vmatprep.subr.bf16.mxu0 %v10087
    %10901 = vmatpush1.bf16.msra.mxu0 %v10086
    %10902 = vmatprep.subr.bf16.mxu0 %v10095
    %10903 = vmatpush1.bf16.msra.mxu0 %v10094
    %10904 = vmatprep.subr.bf16.mxu0 %v10103
    %10905 = vmatpush1.bf16.msra.mxu0 %v10102
    %10906 = vmatprep.subr.bf16.mxu0 %v10111
    %10907 = vmatpush1.bf16.msra.mxu0 %v10110
    %10908 = vmatprep.subr.bf16.mxu0 %v10119
    %10909 = vmatpush1.bf16.msra.mxu0 %v10118
    %10910 = vmatprep.subr.bf16.mxu0 %v10127
    %10911 = vmatpush1.bf16.msra.mxu0 %v10126
    %10912 = vmatprep.subr.bf16.mxu0 %v10135
    %10913 = vmatpush1.bf16.msra.mxu0 %v10134
    %10914 = vmatprep.subr.bf16.mxu0 %v10143
    %10915 = vmatpush1.bf16.msra.mxu0 %v10142
    %10916 = vmatprep.subr.bf16.mxu0 %v10151
    %10917 = vmatpush1.bf16.msra.mxu0 %v10150
    %10918 = vmatprep.subr.bf16.mxu0 %v10159
    %10919 = vmatpush1.bf16.msra.mxu0 %v10158
    %10920 = vmatprep.mubr.bf16.mxu0 %v7689
    %10921 = vmatmul.mubr.bf16.gmra.mrb[0].mxu0 %v7688
    %v10922 = vpop.f32.mrb[0].mxu0
    %v10923 = vadd.f32 %v10882, %v10922
    %v10924 = vpop.f32.mrb[0].mxu0
    %v10925 = vadd.f32 %v10884, %v10924
    %v10926 = vpop.f32.mrb[0].mxu0
    %v10927 = vpop.f32.mrb[0].mxu0
    %10928 = vdwg.mxu0
    %10929 = vmatprep.subr.bf16.mxu0 %v10167
    %10930 = vmatpush1.bf16.msra.mxu0 %v10166
    %10931 = vmatprep.subr.bf16.mxu0 %v10175
    %10932 = vmatpush1.bf16.msra.mxu0 %v10174
    %10933 = vmatprep.subr.bf16.mxu0 %v10183
    %10934 = vmatpush1.bf16.msra.mxu0 %v10182
    %10935 = vmatprep.subr.bf16.mxu0 %v10191
    %10936 = vmatpush1.bf16.msra.mxu0 %v10190
    %10937 = vmatprep.subr.bf16.mxu0 %v10199
    %10938 = vmatpush1.bf16.msra.mxu0 %v10198
    %10939 = vmatprep.subr.bf16.mxu0 %v10207
    %10940 = vmatpush1.bf16.msra.mxu0 %v10206
    %10941 = vmatprep.subr.bf16.mxu0 %v10215
    %10942 = vmatpush1.bf16.msra.mxu0 %v10214
    %10943 = vmatprep.subr.bf16.mxu0 %v10223
    %10944 = vmatpush1.bf16.msra.mxu0 %v10222
    %10945 = vmatprep.subr.bf16.mxu0 %v10231
    %10946 = vmatpush1.bf16.msra.mxu0 %v10230
    %10947 = vmatprep.subr.bf16.mxu0 %v10239
    %10948 = vmatpush1.bf16.msra.mxu0 %v10238
    %10949 = vmatprep.subr.bf16.mxu0 %v10247
    %10950 = vmatpush1.bf16.msra.mxu0 %v10246
    %10951 = vmatprep.subr.bf16.mxu0 %v10255
    %10952 = vmatpush1.bf16.msra.mxu0 %v10254
    %10953 = vmatprep.subr.bf16.mxu0 %v10263
    %10954 = vmatpush1.bf16.msra.mxu0 %v10262
    %10955 = vmatprep.subr.bf16.mxu0 %v10271
    %10956 = vmatpush1.bf16.msra.mxu0 %v10270
    %10957 = vmatprep.subr.bf16.mxu0 %v10279
    %10958 = vmatpush1.bf16.msra.mxu0 %v10278
    %10959 = vmatprep.subr.bf16.mxu0 %v10287
    %10960 = vmatpush1.bf16.msra.mxu0 %v10286
    %10961 = vmatprep.mubr.bf16.mxu0 %v7691
    %10962 = vmatmul.mubr.bf16.gmra.mrb[0].mxu0 %v7690
    %v10963 = vpop.f32.mrb[0].mxu0
    %v10964 = vadd.f32 %v10923, %v10963
    %v10965 = vpop.f32.mrb[0].mxu0
    %v10966 = vadd.f32 %v10925, %v10965
    %v10967 = vpop.f32.mrb[0].mxu0
    %v10968 = vpop.f32.mrb[0].mxu0
    %10969 = vdwg.mxu0
    %10970 = vmatprep.subr.bf16.mxu0 %v9785
    %10971 = vmatpush1.bf16.msra.mxu0 %v9784
    %10972 = vmatprep.subr.bf16.mxu0 %v9793
    %10973 = vmatpush1.bf16.msra.mxu0 %v9792
    %10974 = vmatprep.subr.bf16.mxu0 %v9801
    %10975 = vmatpush1.bf16.msra.mxu0 %v9800
    %10976 = vmatprep.subr.bf16.mxu0 %v9809
    %10977 = vmatpush1.bf16.msra.mxu0 %v9808
    %10978 = vmatprep.subr.bf16.mxu0 %v9817
    %10979 = vmatpush1.bf16.msra.mxu0 %v9816
    %10980 = vmatprep.subr.bf16.mxu0 %v9825
    %10981 = vmatpush1.bf16.msra.mxu0 %v9824
    %10982 = vmatprep.subr.bf16.mxu0 %v9833
    %10983 = vmatpush1.bf16.msra.mxu0 %v9832
    %10984 = vmatprep.subr.bf16.mxu0 %v9841
    %10985 = vmatpush1.bf16.msra.mxu0 %v9840
    %10986 = vmatprep.subr.bf16.mxu0 %v9849
    %10987 = vmatpush1.bf16.msra.mxu0 %v9848
    %10988 = vmatprep.subr.bf16.mxu0 %v9857
    %10989 = vmatpush1.bf16.msra.mxu0 %v9856
    %10990 = vmatprep.subr.bf16.mxu0 %v9865
    %10991 = vmatpush1.bf16.msra.mxu0 %v9864
    %10992 = vmatprep.subr.bf16.mxu0 %v9873
    %10993 = vmatpush1.bf16.msra.mxu0 %v9872
    %10994 = vmatprep.subr.bf16.mxu0 %v9881
    %10995 = vmatpush1.bf16.msra.mxu0 %v9880
    %10996 = vmatprep.subr.bf16.mxu0 %v9889
    %10997 = vmatpush1.bf16.msra.mxu0 %v9888
    %10998 = vmatprep.subr.bf16.mxu0 %v9897
    %10999 = vmatpush1.bf16.msra.mxu0 %v9896
    %11000 = vmatprep.subr.bf16.mxu0 %v9905
    %11001 = vmatpush1.bf16.msra.mxu0 %v9904
    %11002 = vmatprep.mubr.bf16.mxu0 %v7685
    %11003 = vmatmul.mubr.bf16.gmra.mrb[0].mxu0 %v7684
    %v11004 = vpop.f32.mrb[0].mxu0
    %v11005 = vadd.f32 %v8217, %v11004
    %v11006 = vpop.f32.mrb[0].mxu0
    %v11007 = vadd.f32 %v8221, %v11006
    %v11008 = vpop.f32.mrb[0].mxu0
    %v11009 = vpop.f32.mrb[0].mxu0
    %11010 = vdwg.mxu0
    %11011 = vmatprep.subr.bf16.mxu0 %v9913
    %11012 = vmatpush1.bf16.msra.mxu0 %v9912
    %11013 = vmatprep.subr.bf16.mxu0 %v9921
    %11014 = vmatpush1.bf16.msra.mxu0 %v9920
    %11015 = vmatprep.subr.bf16.mxu0 %v9929
    %11016 = vmatpush1.bf16.msra.mxu0 %v9928
    %11017 = vmatprep.subr.bf16.mxu0 %v9937
    %11018 = vmatpush1.bf16.msra.mxu0 %v9936
    %11019 = vmatprep.subr.bf16.mxu0 %v9945
    %11020 = vmatpush1.bf16.msra.mxu0 %v9944
    %11021 = vmatprep.subr.bf16.mxu0 %v9953
    %11022 = vmatpush1.bf16.msra.mxu0 %v9952
    %11023 = vmatprep.subr.bf16.mxu0 %v9961
    %11024 = vmatpush1.bf16.msra.mxu0 %v9960
    %11025 = vmatprep.subr.bf16.mxu0 %v9969
    %11026 = vmatpush1.bf16.msra.mxu0 %v9968
    %11027 = vmatprep.subr.bf16.mxu0 %v9977
    %11028 = vmatpush1.bf16.msra.mxu0 %v9976
    %11029 = vmatprep.subr.bf16.mxu0 %v9985
    %11030 = vmatpush1.bf16.msra.mxu0 %v9984
    %11031 = vmatprep.subr.bf16.mxu0 %v9993
    %11032 = vmatpush1.bf16.msra.mxu0 %v9992
    %11033 = vmatprep.subr.bf16.mxu0 %v10001
    %11034 = vmatpush1.bf16.msra.mxu0 %v10000
    %11035 = vmatprep.subr.bf16.mxu0 %v10009
    %11036 = vmatpush1.bf16.msra.mxu0 %v10008
    %11037 = vmatprep.subr.bf16.mxu0 %v10017
    %11038 = vmatpush1.bf16.msra.mxu0 %v10016
    %11039 = vmatprep.subr.bf16.mxu0 %v10025
    %11040 = vmatpush1.bf16.msra.mxu0 %v10024
    %11041 = vmatprep.subr.bf16.mxu0 %v10033
    %11042 = vmatpush1.bf16.msra.mxu0 %v10032
    %11043 = vmatprep.mubr.bf16.mxu0 %v7687
    %11044 = vmatmul.mubr.bf16.gmra.mrb[0].mxu0 %v7686
    %v11045 = vpop.f32.mrb[0].mxu0
    %v11046 = vadd.f32 %v11005, %v11045
    %v11047 = vpop.f32.mrb[0].mxu0
    %v11048 = vadd.f32 %v11007, %v11047
    %v11049 = vpop.f32.mrb[0].mxu0
    %v11050 = vpop.f32.mrb[0].mxu0
    %11051 = vdwg.mxu0
    %11052 = vmatprep.subr.bf16.mxu0 %v10041
    %11053 = vmatpush1.bf16.msra.mxu0 %v10040
    %11054 = vmatprep.subr.bf16.mxu0 %v10049
    %11055 = vmatpush1.bf16.msra.mxu0 %v10048
    %11056 = vmatprep.subr.bf16.mxu0 %v10057
    %11057 = vmatpush1.bf16.msra.mxu0 %v10056
    %11058 = vmatprep.subr.bf16.mxu0 %v10065
    %11059 = vmatpush1.bf16.msra.mxu0 %v10064
    %11060 = vmatprep.subr.bf16.mxu0 %v10073
    %11061 = vmatpush1.bf16.msra.mxu0 %v10072
    %11062 = vmatprep.subr.bf16.mxu0 %v10081
    %11063 = vmatpush1.bf16.msra.mxu0 %v10080
    %11064 = vmatprep.subr.bf16.mxu0 %v10089
    %11065 = vmatpush1.bf16.msra.mxu0 %v10088
    %11066 = vmatprep.subr.bf16.mxu0 %v10097
    %11067 = vmatpush1.bf16.msra.mxu0 %v10096
    %11068 = vmatprep.subr.bf16.mxu0 %v10105
    %11069 = vmatpush1.bf16.msra.mxu0 %v10104
    %11070 = vmatprep.subr.bf16.mxu0 %v10113
    %11071 = vmatpush1.bf16.msra.mxu0 %v10112
    %11072 = vmatprep.subr.bf16.mxu0 %v10121
    %11073 = vmatpush1.bf16.msra.mxu0 %v10120
    %11074 = vmatprep.subr.bf16.mxu0 %v10129
    %11075 = vmatpush1.bf16.msra.mxu0 %v10128
    %11076 = vmatprep.subr.bf16.mxu0 %v10137
    %11077 = vmatpush1.bf16.msra.mxu0 %v10136
    %11078 = vmatprep.subr.bf16.mxu0 %v10145
    %11079 = vmatpush1.bf16.msra.mxu0 %v10144
    %11080 = vmatprep.subr.bf16.mxu0 %v10153
    %11081 = vmatpush1.bf16.msra.mxu0 %v10152
    %11082 = vmatprep.subr.bf16.mxu0 %v10161
    %11083 = vmatpush1.bf16.msra.mxu0 %v10160
    %11084 = vmatprep.mubr.bf16.mxu0 %v7689
    %11085 = vmatmul.mubr.bf16.gmra.mrb[0].mxu0 %v7688
    %v11086 = vpop.f32.mrb[0].mxu0
    %v11087 = vadd.f32 %v11046, %v11086
    %v11088 = vpop.f32.mrb[0].mxu0
    %v11089 = vadd.f32 %v11048, %v11088
    %v11090 = vpop.f32.mrb[0].mxu0
    %v11091 = vpop.f32.mrb[0].mxu0
    %11092 = vdwg.mxu0
    %11093 = vmatprep.subr.bf16.mxu0 %v10169
    %11094 = vmatpush1.bf16.msra.mxu0 %v10168
    %11095 = vmatprep.subr.bf16.mxu0 %v10177
    %11096 = vmatpush1.bf16.msra.mxu0 %v10176
    %11097 = vmatprep.subr.bf16.mxu0 %v10185
    %11098 = vmatpush1.bf16.msra.mxu0 %v10184
    %11099 = vmatprep.subr.bf16.mxu0 %v10193
    %11100 = vmatpush1.bf16.msra.mxu0 %v10192
    %11101 = vmatprep.subr.bf16.mxu0 %v10201
    %11102 = vmatpush1.bf16.msra.mxu0 %v10200
    %11103 = vmatprep.subr.bf16.mxu0 %v10209
    %11104 = vmatpush1.bf16.msra.mxu0 %v10208
    %11105 = vmatprep.subr.bf16.mxu0 %v10217
    %11106 = vmatpush1.bf16.msra.mxu0 %v10216
    %11107 = vmatprep.subr.bf16.mxu0 %v10225
    %11108 = vmatpush1.bf16.msra.mxu0 %v10224
    %11109 = vmatprep.subr.bf16.mxu0 %v10233
    %11110 = vmatpush1.bf16.msra.mxu0 %v10232
    %11111 = vmatprep.subr.bf16.mxu0 %v10241
    %11112 = vmatpush1.bf16.msra.mxu0 %v10240
    %11113 = vmatprep.subr.bf16.mxu0 %v10249
    %11114 = vmatpush1.bf16.msra.mxu0 %v10248
    %11115 = vmatprep.subr.bf16.mxu0 %v10257
    %11116 = vmatpush1.bf16.msra.mxu0 %v10256
    %11117 = vmatprep.subr.bf16.mxu0 %v10265
    %11118 = vmatpush1.bf16.msra.mxu0 %v10264
    %11119 = vmatprep.subr.bf16.mxu0 %v10273
    %11120 = vmatpush1.bf16.msra.mxu0 %v10272
    %11121 = vmatprep.subr.bf16.mxu0 %v10281
    %11122 = vmatpush1.bf16.msra.mxu0 %v10280
    %11123 = vmatprep.subr.bf16.mxu0 %v10289
    %11124 = vmatpush1.bf16.msra.mxu0 %v10288
    %11125 = vmatprep.mubr.bf16.mxu0 %v7691
    %11126 = vmatmul.mubr.bf16.gmra.mrb[0].mxu0 %v7690
    %v11127 = vpop.f32.mrb[0].mxu0
    %v11128 = vadd.f32 %v11087, %v11127
    %v11129 = vpop.f32.mrb[0].mxu0
    %v11130 = vadd.f32 %v11089, %v11129
    %v11131 = vpop.f32.mrb[0].mxu0
    %v11132 = vpop.f32.mrb[0].mxu0
    %11133 = vdwg.mxu0
    %11134 = vmatprep.subr.bf16.mxu0 %v9787
    %11135 = vmatpush1.bf16.msra.mxu0 %v9786
    %11136 = vmatprep.subr.bf16.mxu0 %v9795
    %11137 = vmatpush1.bf16.msra.mxu0 %v9794
    %11138 = vmatprep.subr.bf16.mxu0 %v9803
    %11139 = vmatpush1.bf16.msra.mxu0 %v9802
    %11140 = vmatprep.subr.bf16.mxu0 %v9811
    %11141 = vmatpush1.bf16.msra.mxu0 %v9810
    %11142 = vmatprep.subr.bf16.mxu0 %v9819
    %11143 = vmatpush1.bf16.msra.mxu0 %v9818
    %11144 = vmatprep.subr.bf16.mxu0 %v9827
    %11145 = vmatpush1.bf16.msra.mxu0 %v9826
    %11146 = vmatprep.subr.bf16.mxu0 %v9835
    %11147 = vmatpush1.bf16.msra.mxu0 %v9834
    %11148 = vmatprep.subr.bf16.mxu0 %v9843
    %11149 = vmatpush1.bf16.msra.mxu0 %v9842
    %11150 = vmatprep.subr.bf16.mxu0 %v9851
    %11151 = vmatpush1.bf16.msra.mxu0 %v9850
    %11152 = vmatprep.subr.bf16.mxu0 %v9859
    %11153 = vmatpush1.bf16.msra.mxu0 %v9858
    %11154 = vmatprep.subr.bf16.mxu0 %v9867
    %11155 = vmatpush1.bf16.msra.mxu0 %v9866
    %11156 = vmatprep.subr.bf16.mxu0 %v9875
    %11157 = vmatpush1.bf16.msra.mxu0 %v9874
    %11158 = vmatprep.subr.bf16.mxu0 %v9883
    %11159 = vmatpush1.bf16.msra.mxu0 %v9882
    %11160 = vmatprep.subr.bf16.mxu0 %v9891
    %11161 = vmatpush1.bf16.msra.mxu0 %v9890
    %11162 = vmatprep.subr.bf16.mxu0 %v9899
    %11163 = vmatpush1.bf16.msra.mxu0 %v9898
    %11164 = vmatprep.subr.bf16.mxu0 %v9907
    %11165 = vmatpush1.bf16.msra.mxu0 %v9906
    %11166 = vmatprep.mubr.bf16.mxu0 %v7685
    %11167 = vmatmul.mubr.bf16.gmra.mrb[0].mxu0 %v7684
    %v11168 = vpop.f32.mrb[0].mxu0
    %v11169 = vadd.f32 %v8225, %v11168
    %v11170 = vpop.f32.mrb[0].mxu0
    %v11171 = vadd.f32 %v8229, %v11170
    %v11172 = vpop.f32.mrb[0].mxu0
    %v11173 = vpop.f32.mrb[0].mxu0
    %11174 = vdwg.mxu0
    %11175 = vmatprep.subr.bf16.mxu0 %v9915
    %11176 = vmatpush1.bf16.msra.mxu0 %v9914
    %11177 = vmatprep.subr.bf16.mxu0 %v9923
    %11178 = vmatpush1.bf16.msra.mxu0 %v9922
    %11179 = vmatprep.subr.bf16.mxu0 %v9931
    %11180 = vmatpush1.bf16.msra.mxu0 %v9930
    %11181 = vmatprep.subr.bf16.mxu0 %v9939
    %11182 = vmatpush1.bf16.msra.mxu0 %v9938
    %11183 = vmatprep.subr.bf16.mxu0 %v9947
    %11184 = vmatpush1.bf16.msra.mxu0 %v9946
    %11185 = vmatprep.subr.bf16.mxu0 %v9955
    %11186 = vmatpush1.bf16.msra.mxu0 %v9954
    %11187 = vmatprep.subr.bf16.mxu0 %v9963
    %11188 = vmatpush1.bf16.msra.mxu0 %v9962
    %11189 = vmatprep.subr.bf16.mxu0 %v9971
    %11190 = vmatpush1.bf16.msra.mxu0 %v9970
    %11191 = vmatprep.subr.bf16.mxu0 %v9979
    %11192 = vmatpush1.bf16.msra.mxu0 %v9978
    %11193 = vmatprep.subr.bf16.mxu0 %v9987
    %11194 = vmatpush1.bf16.msra.mxu0 %v9986
    %11195 = vmatprep.subr.bf16.mxu0 %v9995
    %11196 = vmatpush1.bf16.msra.mxu0 %v9994
    %11197 = vmatprep.subr.bf16.mxu0 %v10003
    %11198 = vmatpush1.bf16.msra.mxu0 %v10002
    %11199 = vmatprep.subr.bf16.mxu0 %v10011
    %11200 = vmatpush1.bf16.msra.mxu0 %v10010
    %11201 = vmatprep.subr.bf16.mxu0 %v10019
    %11202 = vmatpush1.bf16.msra.mxu0 %v10018
    %11203 = vmatprep.subr.bf16.mxu0 %v10027
    %11204 = vmatpush1.bf16.msra.mxu0 %v10026
    %11205 = vmatprep.subr.bf16.mxu0 %v10035
    %11206 = vmatpush1.bf16.msra.mxu0 %v10034
    %11207 = vmatprep.mubr.bf16.mxu0 %v7687
    %11208 = vmatmul.mubr.bf16.gmra.mrb[0].mxu0 %v7686
    %v11209 = vpop.f32.mrb[0].mxu0
    %v11210 = vadd.f32 %v11169, %v11209
    %v11211 = vpop.f32.mrb[0].mxu0
    %v11212 = vadd.f32 %v11171, %v11211
    %v11213 = vpop.f32.mrb[0].mxu0
    %v11214 = vpop.f32.mrb[0].mxu0
    %11215 = vdwg.mxu0
    %11216 = vmatprep.subr.bf16.mxu0 %v10043
    %11217 = vmatpush1.bf16.msra.mxu0 %v10042
    %11218 = vmatprep.subr.bf16.mxu0 %v10051
    %11219 = vmatpush1.bf16.msra.mxu0 %v10050
    %11220 = vmatprep.subr.bf16.mxu0 %v10059
    %11221 = vmatpush1.bf16.msra.mxu0 %v10058
    %11222 = vmatprep.subr.bf16.mxu0 %v10067
    %11223 = vmatpush1.bf16.msra.mxu0 %v10066
    %11224 = vmatprep.subr.bf16.mxu0 %v10075
    %11225 = vmatpush1.bf16.msra.mxu0 %v10074
    %11226 = vmatprep.subr.bf16.mxu0 %v10083
    %11227 = vmatpush1.bf16.msra.mxu0 %v10082
    %11228 = vmatprep.subr.bf16.mxu0 %v10091
    %11229 = vmatpush1.bf16.msra.mxu0 %v10090
    %11230 = vmatprep.subr.bf16.mxu0 %v10099
    %11231 = vmatpush1.bf16.msra.mxu0 %v10098
    %11232 = vmatprep.subr.bf16.mxu0 %v10107
    %11233 = vmatpush1.bf16.msra.mxu0 %v10106
    %11234 = vmatprep.subr.bf16.mxu0 %v10115
    %11235 = vmatpush1.bf16.msra.mxu0 %v10114
    %11236 = vmatprep.subr.bf16.mxu0 %v10123
    %11237 = vmatpush1.bf16.msra.mxu0 %v10122
    %11238 = vmatprep.subr.bf16.mxu0 %v10131
    %11239 = vmatpush1.bf16.msra.mxu0 %v10130
    %11240 = vmatprep.subr.bf16.mxu0 %v10139
    %11241 = vmatpush1.bf16.msra.mxu0 %v10138
    %11242 = vmatprep.subr.bf16.mxu0 %v10147
    %11243 = vmatpush1.bf16.msra.mxu0 %v10146
    %11244 = vmatprep.subr.bf16.mxu0 %v10155
    %11245 = vmatpush1.bf16.msra.mxu0 %v10154
    %11246 = vmatprep.subr.bf16.mxu0 %v10163
    %11247 = vmatpush1.bf16.msra.mxu0 %v10162
    %11248 = vmatprep.mubr.bf16.mxu0 %v7689
    %11249 = vmatmul.mubr.bf16.gmra.mrb[0].mxu0 %v7688
    %v11250 = vpop.f32.mrb[0].mxu0
    %v11251 = vadd.f32 %v11210, %v11250
    %v11252 = vpop.f32.mrb[0].mxu0
    %v11253 = vadd.f32 %v11212, %v11252
    %v11254 = vpop.f32.mrb[0].mxu0
    %v11255 = vpop.f32.mrb[0].mxu0
    %11256 = vdwg.mxu0
    %11257 = vmatprep.subr.bf16.mxu0 %v10171
    %11258 = vmatpush1.bf16.msra.mxu0 %v10170
    %11259 = vmatprep.subr.bf16.mxu0 %v10179
    %11260 = vmatpush1.bf16.msra.mxu0 %v10178
    %11261 = vmatprep.subr.bf16.mxu0 %v10187
    %11262 = vmatpush1.bf16.msra.mxu0 %v10186
    %11263 = vmatprep.subr.bf16.mxu0 %v10195
    %11264 = vmatpush1.bf16.msra.mxu0 %v10194
    %11265 = vmatprep.subr.bf16.mxu0 %v10203
    %11266 = vmatpush1.bf16.msra.mxu0 %v10202
    %11267 = vmatprep.subr.bf16.mxu0 %v10211
    %11268 = vmatpush1.bf16.msra.mxu0 %v10210
    %11269 = vmatprep.subr.bf16.mxu0 %v10219
    %11270 = vmatpush1.bf16.msra.mxu0 %v10218
    %11271 = vmatprep.subr.bf16.mxu0 %v10227
    %11272 = vmatpush1.bf16.msra.mxu0 %v10226
    %11273 = vmatprep.subr.bf16.mxu0 %v10235
    %11274 = vmatpush1.bf16.msra.mxu0 %v10234
    %11275 = vmatprep.subr.bf16.mxu0 %v10243
    %11276 = vmatpush1.bf16.msra.mxu0 %v10242
    %11277 = vmatprep.subr.bf16.mxu0 %v10251
    %11278 = vmatpush1.bf16.msra.mxu0 %v10250
    %11279 = vmatprep.subr.bf16.mxu0 %v10259
    %11280 = vmatpush1.bf16.msra.mxu0 %v10258
    %11281 = vmatprep.subr.bf16.mxu0 %v10267
    %11282 = vmatpush1.bf16.msra.mxu0 %v10266
    %11283 = vmatprep.subr.bf16.mxu0 %v10275
    %11284 = vmatpush1.bf16.msra.mxu0 %v10274
    %11285 = vmatprep.subr.bf16.mxu0 %v10283
    %11286 = vmatpush1.bf16.msra.mxu0 %v10282
    %11287 = vmatprep.subr.bf16.mxu0 %v10291
    %11288 = vmatpush1.bf16.msra.mxu0 %v10290
    %11289 = vmatprep.mubr.bf16.mxu0 %v7691
    %11290 = vmatmul.mubr.bf16.gmra.mrb[0].mxu0 %v7690
    %v11291 = vpop.f32.mrb[0].mxu0
    %v11292 = vadd.f32 %v11251, %v11291
    %v11293 = vpop.f32.mrb[0].mxu0
    %v11294 = vadd.f32 %v11253, %v11293
    %v11295 = vpop.f32.mrb[0].mxu0
    %v11296 = vpop.f32.mrb[0].mxu0
    %11297 = vdwg.mxu0
    %11298 = vmatprep.subr.bf16.mxu0 %v9789
    %11299 = vmatpush1.bf16.msra.mxu0 %v9788
    %11300 = vmatprep.subr.bf16.mxu0 %v9797
    %11301 = vmatpush1.bf16.msra.mxu0 %v9796
    %11302 = vmatprep.subr.bf16.mxu0 %v9805
    %11303 = vmatpush1.bf16.msra.mxu0 %v9804
    %11304 = vmatprep.subr.bf16.mxu0 %v9813
    %11305 = vmatpush1.bf16.msra.mxu0 %v9812
    %11306 = vmatprep.subr.bf16.mxu0 %v9821
    %11307 = vmatpush1.bf16.msra.mxu0 %v9820
    %11308 = vmatprep.subr.bf16.mxu0 %v9829
    %11309 = vmatpush1.bf16.msra.mxu0 %v9828
    %11310 = vmatprep.subr.bf16.mxu0 %v9837
    %11311 = vmatpush1.bf16.msra.mxu0 %v9836
    %11312 = vmatprep.subr.bf16.mxu0 %v9845
    %11313 = vmatpush1.bf16.msra.mxu0 %v9844
    %11314 = vmatprep.subr.bf16.mxu0 %v9853
    %11315 = vmatpush1.bf16.msra.mxu0 %v9852
    %11316 = vmatprep.subr.bf16.mxu0 %v9861
    %11317 = vmatpush1.bf16.msra.mxu0 %v9860
    %11318 = vmatprep.subr.bf16.mxu0 %v9869
    %11319 = vmatpush1.bf16.msra.mxu0 %v9868
    %11320 = vmatprep.subr.bf16.mxu0 %v9877
    %11321 = vmatpush1.bf16.msra.mxu0 %v9876
    %11322 = vmatprep.subr.bf16.mxu0 %v9885
    %11323 = vmatpush1.bf16.msra.mxu0 %v9884
    %11324 = vmatprep.subr.bf16.mxu0 %v9893
    %11325 = vmatpush1.bf16.msra.mxu0 %v9892
    %11326 = vmatprep.subr.bf16.mxu0 %v9901
    %11327 = vmatpush1.bf16.msra.mxu0 %v9900
    %11328 = vmatprep.subr.bf16.mxu0 %v9909
    %11329 = vmatpush1.bf16.msra.mxu0 %v9908
    %11330 = vmatprep.mubr.bf16.mxu0 %v7685
    %11331 = vmatmul.mubr.bf16.gmra.mrb[0].mxu0 %v7684
    %v11332 = vpop.f32.mrb[0].mxu0
    %v11333 = vadd.f32 %v8233, %v11332
    %v11334 = vpop.f32.mrb[0].mxu0
    %v11335 = vadd.f32 %v8237, %v11334
    %v11336 = vpop.f32.mrb[0].mxu0
    %v11337 = vpop.f32.mrb[0].mxu0
    %11338 = vdwg.mxu0
    %11339 = vmatprep.subr.bf16.mxu0 %v9917
    %11340 = vmatpush1.bf16.msra.mxu0 %v9916
    %11341 = vmatprep.subr.bf16.mxu0 %v9925
    %11342 = vmatpush1.bf16.msra.mxu0 %v9924
    %11343 = vmatprep.subr.bf16.mxu0 %v9933
    %11344 = vmatpush1.bf16.msra.mxu0 %v9932
    %11345 = vmatprep.subr.bf16.mxu0 %v9941
    %11346 = vmatpush1.bf16.msra.mxu0 %v9940
    %11347 = vmatprep.subr.bf16.mxu0 %v9949
    %11348 = vmatpush1.bf16.msra.mxu0 %v9948
    %11349 = vmatprep.subr.bf16.mxu0 %v9957
    %11350 = vmatpush1.bf16.msra.mxu0 %v9956
    %11351 = vmatprep.subr.bf16.mxu0 %v9965
    %11352 = vmatpush1.bf16.msra.mxu0 %v9964
    %11353 = vmatprep.subr.bf16.mxu0 %v9973
    %11354 = vmatpush1.bf16.msra.mxu0 %v9972
    %11355 = vmatprep.subr.bf16.mxu0 %v9981
    %11356 = vmatpush1.bf16.msra.mxu0 %v9980
    %11357 = vmatprep.subr.bf16.mxu0 %v9989
    %11358 = vmatpush1.bf16.msra.mxu0 %v9988
    %11359 = vmatprep.subr.bf16.mxu0 %v9997
    %11360 = vmatpush1.bf16.msra.mxu0 %v9996
    %11361 = vmatprep.subr.bf16.mxu0 %v10005
    %11362 = vmatpush1.bf16.msra.mxu0 %v10004
    %11363 = vmatprep.subr.bf16.mxu0 %v10013
    %11364 = vmatpush1.bf16.msra.mxu0 %v10012
    %11365 = vmatprep.subr.bf16.mxu0 %v10021
    %11366 = vmatpush1.bf16.msra.mxu0 %v10020
    %11367 = vmatprep.subr.bf16.mxu0 %v10029
    %11368 = vmatpush1.bf16.msra.mxu0 %v10028
    %11369 = vmatprep.subr.bf16.mxu0 %v10037
    %11370 = vmatpush1.bf16.msra.mxu0 %v10036
    %11371 = vmatprep.mubr.bf16.mxu0 %v7687
    %11372 = vmatmul.mubr.bf16.gmra.mrb[0].mxu0 %v7686
    %v11373 = vpop.f32.mrb[0].mxu0
    %v11374 = vadd.f32 %v11333, %v11373
    %v11375 = vpop.f32.mrb[0].mxu0
    %v11376 = vadd.f32 %v11335, %v11375
    %v11377 = vpop.f32.mrb[0].mxu0
    %v11378 = vpop.f32.mrb[0].mxu0
    %11379 = vdwg.mxu0
    %11380 = vmatprep.subr.bf16.mxu0 %v10045
    %11381 = vmatpush1.bf16.msra.mxu0 %v10044
    %11382 = vmatprep.subr.bf16.mxu0 %v10053
    %11383 = vmatpush1.bf16.msra.mxu0 %v10052
    %11384 = vmatprep.subr.bf16.mxu0 %v10061
    %11385 = vmatpush1.bf16.msra.mxu0 %v10060
    %11386 = vmatprep.subr.bf16.mxu0 %v10069
    %11387 = vmatpush1.bf16.msra.mxu0 %v10068
    %11388 = vmatprep.subr.bf16.mxu0 %v10077
    %11389 = vmatpush1.bf16.msra.mxu0 %v10076
    %11390 = vmatprep.subr.bf16.mxu0 %v10085
    %11391 = vmatpush1.bf16.msra.mxu0 %v10084
    %11392 = vmatprep.subr.bf16.mxu0 %v10093
    %11393 = vmatpush1.bf16.msra.mxu0 %v10092
    %11394 = vmatprep.subr.bf16.mxu0 %v10101
    %11395 = vmatpush1.bf16.msra.mxu0 %v10100
    %11396 = vmatprep.subr.bf16.mxu0 %v10109
    %11397 = vmatpush1.bf16.msra.mxu0 %v10108
    %11398 = vmatprep.subr.bf16.mxu0 %v10117
    %11399 = vmatpush1.bf16.msra.mxu0 %v10116
    %11400 = vmatprep.subr.bf16.mxu0 %v10125
    %11401 = vmatpush1.bf16.msra.mxu0 %v10124
    %11402 = vmatprep.subr.bf16.mxu0 %v10133
    %11403 = vmatpush1.bf16.msra.mxu0 %v10132
    %11404 = vmatprep.subr.bf16.mxu0 %v10141
    %11405 = vmatpush1.bf16.msra.mxu0 %v10140
    %11406 = vmatprep.subr.bf16.mxu0 %v10149
    %11407 = vmatpush1.bf16.msra.mxu0 %v10148
    %11408 = vmatprep.subr.bf16.mxu0 %v10157
    %11409 = vmatpush1.bf16.msra.mxu0 %v10156
    %11410 = vmatprep.subr.bf16.mxu0 %v10165
    %11411 = vmatpush1.bf16.msra.mxu0 %v10164
    %11412 = vmatprep.mubr.bf16.mxu0 %v7689
    %11413 = vmatmul.mubr.bf16.gmra.mrb[0].mxu0 %v7688
    %v11414 = vpop.f32.mrb[0].mxu0
    %v11415 = vadd.f32 %v11374, %v11414
    %v11416 = vpop.f32.mrb[0].mxu0
    %v11417 = vadd.f32 %v11376, %v11416
    %v11418 = vpop.f32.mrb[0].mxu0
    %v11419 = vpop.f32.mrb[0].mxu0
    %11420 = vdwg.mxu0
    %11421 = vmatprep.subr.bf16.mxu0 %v10173
    %11422 = vmatpush1.bf16.msra.mxu0 %v10172
    %11423 = vmatprep.subr.bf16.mxu0 %v10181
    %11424 = vmatpush1.bf16.msra.mxu0 %v10180
    %11425 = vmatprep.subr.bf16.mxu0 %v10189
    %11426 = vmatpush1.bf16.msra.mxu0 %v10188
    %11427 = vmatprep.subr.bf16.mxu0 %v10197
    %11428 = vmatpush1.bf16.msra.mxu0 %v10196
    %11429 = vmatprep.subr.bf16.mxu0 %v10205
    %11430 = vmatpush1.bf16.msra.mxu0 %v10204
    %11431 = vmatprep.subr.bf16.mxu0 %v10213
    %11432 = vmatpush1.bf16.msra.mxu0 %v10212
    %11433 = vmatprep.subr.bf16.mxu0 %v10221
    %11434 = vmatpush1.bf16.msra.mxu0 %v10220
    %11435 = vmatprep.subr.bf16.mxu0 %v10229
    %11436 = vmatpush1.bf16.msra.mxu0 %v10228
    %11437 = vmatprep.subr.bf16.mxu0 %v10237
    %11438 = vmatpush1.bf16.msra.mxu0 %v10236
    %11439 = vmatprep.subr.bf16.mxu0 %v10245
    %11440 = vmatpush1.bf16.msra.mxu0 %v10244
    %11441 = vmatprep.subr.bf16.mxu0 %v10253
    %11442 = vmatpush1.bf16.msra.mxu0 %v10252
    %11443 = vmatprep.subr.bf16.mxu0 %v10261
    %11444 = vmatpush1.bf16.msra.mxu0 %v10260
    %11445 = vmatprep.subr.bf16.mxu0 %v10269
    %11446 = vmatpush1.bf16.msra.mxu0 %v10268
    %11447 = vmatprep.subr.bf16.mxu0 %v10277
    %11448 = vmatpush1.bf16.msra.mxu0 %v10276
    %11449 = vmatprep.subr.bf16.mxu0 %v10285
    %11450 = vmatpush1.bf16.msra.mxu0 %v10284
    %11451 = vmatprep.subr.bf16.mxu0 %v10293
    %11452 = vmatpush1.bf16.msra.mxu0 %v10292
    %11453 = vmatprep.mubr.bf16.mxu0 %v7691
    %11454 = vmatmul.mubr.bf16.gmra.mrb[0].mxu0 %v7690
    %v11455 = vpop.f32.mrb[0].mxu0
    %v11456 = vadd.f32 %v11415, %v11455
    %v11457 = vpop.f32.mrb[0].mxu0
    %v11458 = vadd.f32 %v11417, %v11457
    %v11459 = vpop.f32.mrb[0].mxu0
    %v11460 = vpop.f32.mrb[0].mxu0
    %11461 = vdwg.mxu0
    %v11462 = vmax.f32 %v10964, 0.0
    %v11463 = vmax.f32 %v10966, 0.0
    %v11464 = vmax.f32 %v11128, 0.0
    %v11465 = vmax.f32 %v11130, 0.0
    %v11466 = vmax.f32 %v11292, 0.0
    %v11467 = vmax.f32 %v11294, 0.0
    %v11468 = vmax.f32 %v11456, 0.0
    %v11469 = vmax.f32 %v11458, 0.0
    %v11470 = vpack.c.bf16 %v11462, %v11462
    %v11471 = vpack.c.bf16 %v11463, %v11463
    %v11472 = vpack.c.bf16 %v11464, %v11464
    %v11473 = vpack.c.bf16 %v11465, %v11465
    %v11474 = vpack.c.bf16 %v11466, %v11466
    %v11475 = vpack.c.bf16 %v11467, %v11467
    %v11476 = vpack.c.bf16 %v11468, %v11468
    %v11477 = vpack.c.bf16 %v11469, %v11469
    %v11478 = vld [vmem:[#allocation11] sm:$0xff]
    %v11479 = vld [vmem:[#allocation11 + $0x8] sm:$0xff]
    %v11480 = vld [vmem:[#allocation11 + $0x10] sm:$0xff]
    %v11481 = vld [vmem:[#allocation11 + $0x18] sm:$0xff]
    %v11482 = vld [vmem:[#allocation11 + $0x20] sm:$0xff]
    %v11483 = vld [vmem:[#allocation11 + $0x28] sm:$0xff]
    %v11484 = vld [vmem:[#allocation11 + $0x30] sm:$0xff]
    %v11485 = vld [vmem:[#allocation11 + $0x38] sm:$0xff]
    %v11486 = vld [vmem:[#allocation11 + $0x40] sm:$0xff]
    %v11487 = vld [vmem:[#allocation11 + $0x48] sm:$0xff]
    %v11488 = vld [vmem:[#allocation11 + $0x50] sm:$0xff]
    %v11489 = vld [vmem:[#allocation11 + $0x58] sm:$0xff]
    %v11490 = vld [vmem:[#allocation11 + $0x60] sm:$0xff]
    %v11491 = vld [vmem:[#allocation11 + $0x68] sm:$0xff]
    %v11492 = vld [vmem:[#allocation11 + $0x70] sm:$0xff]
    %v11493 = vld [vmem:[#allocation11 + $0x78] sm:$0xff]
    %v11494 = vld [vmem:[#allocation11 + $0x80] sm:$0xff]
    %v11495 = vld [vmem:[#allocation11 + $0x88] sm:$0xff]
    %v11496 = vld [vmem:[#allocation11 + $0x90] sm:$0xff]
    %v11497 = vld [vmem:[#allocation11 + $0x98] sm:$0xff]
    %v11498 = vld [vmem:[#allocation11 + $0xa0] sm:$0xff]
    %v11499 = vld [vmem:[#allocation11 + $0xa8] sm:$0xff]
    %v11500 = vld [vmem:[#allocation11 + $0xb0] sm:$0xff]
    %v11501 = vld [vmem:[#allocation11 + $0xb8] sm:$0xff]
    %v11502 = vld [vmem:[#allocation11 + $0xc0] sm:$0xff]
    %v11503 = vld [vmem:[#allocation11 + $0xc8] sm:$0xff]
    %v11504 = vld [vmem:[#allocation11 + $0xd0] sm:$0xff]
    %v11505 = vld [vmem:[#allocation11 + $0xd8] sm:$0xff]
    %v11506 = vld [vmem:[#allocation11 + $0xe0] sm:$0xff]
    %v11507 = vld [vmem:[#allocation11 + $0xe8] sm:$0xff]
    %v11508 = vld [vmem:[#allocation11 + $0xf0] sm:$0xff]
    %v11509 = vld [vmem:[#allocation11 + $0xf8] sm:$0xff]
    %v11510 = vld [vmem:[#allocation11 + $0x100] sm:$0xff]
    %v11511 = vld [vmem:[#allocation11 + $0x108] sm:$0xff]
    %v11512 = vld [vmem:[#allocation11 + $0x110] sm:$0xff]
    %v11513 = vld [vmem:[#allocation11 + $0x118] sm:$0xff]
    %v11514 = vld [vmem:[#allocation11 + $0x120] sm:$0xff]
    %v11515 = vld [vmem:[#allocation11 + $0x128] sm:$0xff]
    %v11516 = vld [vmem:[#allocation11 + $0x130] sm:$0xff]
    %v11517 = vld [vmem:[#allocation11 + $0x138] sm:$0xff]
    %v11518 = vld [vmem:[#allocation11 + $0x140] sm:$0xff]
    %v11519 = vld [vmem:[#allocation11 + $0x148] sm:$0xff]
    %v11520 = vld [vmem:[#allocation11 + $0x150] sm:$0xff]
    %v11521 = vld [vmem:[#allocation11 + $0x158] sm:$0xff]
    %v11522 = vld [vmem:[#allocation11 + $0x160] sm:$0xff]
    %v11523 = vld [vmem:[#allocation11 + $0x168] sm:$0xff]
    %v11524 = vld [vmem:[#allocation11 + $0x170] sm:$0xff]
    %v11525 = vld [vmem:[#allocation11 + $0x178] sm:$0xff]
    %v11526 = vld [vmem:[#allocation11 + $0x180] sm:$0xff]
    %v11527 = vld [vmem:[#allocation11 + $0x188] sm:$0xff]
    %v11528 = vld [vmem:[#allocation11 + $0x190] sm:$0xff]
    %v11529 = vld [vmem:[#allocation11 + $0x198] sm:$0xff]
    %v11530 = vld [vmem:[#allocation11 + $0x1a0] sm:$0xff]
    %v11531 = vld [vmem:[#allocation11 + $0x1a8] sm:$0xff]
    %v11532 = vld [vmem:[#allocation11 + $0x1b0] sm:$0xff]
    %v11533 = vld [vmem:[#allocation11 + $0x1b8] sm:$0xff]
    %v11534 = vld [vmem:[#allocation11 + $0x1c0] sm:$0xff]
    %v11535 = vld [vmem:[#allocation11 + $0x1c8] sm:$0xff]
    %v11536 = vld [vmem:[#allocation11 + $0x1d0] sm:$0xff]
    %v11537 = vld [vmem:[#allocation11 + $0x1d8] sm:$0xff]
    %v11538 = vld [vmem:[#allocation11 + $0x1e0] sm:$0xff]
    %v11539 = vld [vmem:[#allocation11 + $0x1e8] sm:$0xff]
    %v11540 = vld [vmem:[#allocation11 + $0x1f0] sm:$0xff]
    %v11541 = vld [vmem:[#allocation11 + $0x1f8] sm:$0xff]
    %v11542 = vld [vmem:[#allocation11 + $0x200] sm:$0xff]
    %v11543 = vld [vmem:[#allocation11 + $0x208] sm:$0xff]
    %v11544 = vld [vmem:[#allocation11 + $0x210] sm:$0xff]
    %v11545 = vld [vmem:[#allocation11 + $0x218] sm:$0xff]
    %v11546 = vld [vmem:[#allocation11 + $0x220] sm:$0xff]
    %v11547 = vld [vmem:[#allocation11 + $0x228] sm:$0xff]
    %v11548 = vld [vmem:[#allocation11 + $0x230] sm:$0xff]
    %v11549 = vld [vmem:[#allocation11 + $0x238] sm:$0xff]
    %v11550 = vld [vmem:[#allocation11 + $0x240] sm:$0xff]
    %v11551 = vld [vmem:[#allocation11 + $0x248] sm:$0xff]
    %v11552 = vld [vmem:[#allocation11 + $0x250] sm:$0xff]
    %v11553 = vld [vmem:[#allocation11 + $0x258] sm:$0xff]
    %v11554 = vld [vmem:[#allocation11 + $0x260] sm:$0xff]
    %v11555 = vld [vmem:[#allocation11 + $0x268] sm:$0xff]
    %v11556 = vld [vmem:[#allocation11 + $0x270] sm:$0xff]
    %v11557 = vld [vmem:[#allocation11 + $0x278] sm:$0xff]
    %v11558 = vld [vmem:[#allocation11 + $0x280] sm:$0xff]
    %v11559 = vld [vmem:[#allocation11 + $0x288] sm:$0xff]
    %v11560 = vld [vmem:[#allocation11 + $0x290] sm:$0xff]
    %v11561 = vld [vmem:[#allocation11 + $0x298] sm:$0xff]
    %v11562 = vld [vmem:[#allocation11 + $0x2a0] sm:$0xff]
    %v11563 = vld [vmem:[#allocation11 + $0x2a8] sm:$0xff]
    %v11564 = vld [vmem:[#allocation11 + $0x2b0] sm:$0xff]
    %v11565 = vld [vmem:[#allocation11 + $0x2b8] sm:$0xff]
    %v11566 = vld [vmem:[#allocation11 + $0x2c0] sm:$0xff]
    %v11567 = vld [vmem:[#allocation11 + $0x2c8] sm:$0xff]
    %v11568 = vld [vmem:[#allocation11 + $0x2d0] sm:$0xff]
    %v11569 = vld [vmem:[#allocation11 + $0x2d8] sm:$0xff]
    %v11570 = vld [vmem:[#allocation11 + $0x2e0] sm:$0xff]
    %v11571 = vld [vmem:[#allocation11 + $0x2e8] sm:$0xff]
    %v11572 = vld [vmem:[#allocation11 + $0x2f0] sm:$0xff]
    %v11573 = vld [vmem:[#allocation11 + $0x2f8] sm:$0xff]
    %v11574 = vld [vmem:[#allocation11 + $0x300] sm:$0xff]
    %v11575 = vld [vmem:[#allocation11 + $0x308] sm:$0xff]
    %v11576 = vld [vmem:[#allocation11 + $0x310] sm:$0xff]
    %v11577 = vld [vmem:[#allocation11 + $0x318] sm:$0xff]
    %v11578 = vld [vmem:[#allocation11 + $0x320] sm:$0xff]
    %v11579 = vld [vmem:[#allocation11 + $0x328] sm:$0xff]
    %v11580 = vld [vmem:[#allocation11 + $0x330] sm:$0xff]
    %v11581 = vld [vmem:[#allocation11 + $0x338] sm:$0xff]
    %v11582 = vld [vmem:[#allocation11 + $0x340] sm:$0xff]
    %v11583 = vld [vmem:[#allocation11 + $0x348] sm:$0xff]
    %v11584 = vld [vmem:[#allocation11 + $0x350] sm:$0xff]
    %v11585 = vld [vmem:[#allocation11 + $0x358] sm:$0xff]
    %v11586 = vld [vmem:[#allocation11 + $0x360] sm:$0xff]
    %v11587 = vld [vmem:[#allocation11 + $0x368] sm:$0xff]
    %v11588 = vld [vmem:[#allocation11 + $0x370] sm:$0xff]
    %v11589 = vld [vmem:[#allocation11 + $0x378] sm:$0xff]
    %v11590 = vld [vmem:[#allocation11 + $0x380] sm:$0xff]
    %v11591 = vld [vmem:[#allocation11 + $0x388] sm:$0xff]
    %v11592 = vld [vmem:[#allocation11 + $0x390] sm:$0xff]
    %v11593 = vld [vmem:[#allocation11 + $0x398] sm:$0xff]
    %v11594 = vld [vmem:[#allocation11 + $0x3a0] sm:$0xff]
    %v11595 = vld [vmem:[#allocation11 + $0x3a8] sm:$0xff]
    %v11596 = vld [vmem:[#allocation11 + $0x3b0] sm:$0xff]
    %v11597 = vld [vmem:[#allocation11 + $0x3b8] sm:$0xff]
    %v11598 = vld [vmem:[#allocation11 + $0x3c0] sm:$0xff]
    %v11599 = vld [vmem:[#allocation11 + $0x3c8] sm:$0xff]
    %v11600 = vld [vmem:[#allocation11 + $0x3d0] sm:$0xff]
    %v11601 = vld [vmem:[#allocation11 + $0x3d8] sm:$0xff]
    %v11602 = vld [vmem:[#allocation11 + $0x3e0] sm:$0xff]
    %v11603 = vld [vmem:[#allocation11 + $0x3e8] sm:$0xff]
    %v11604 = vld [vmem:[#allocation11 + $0x3f0] sm:$0xff]
    %v11605 = vld [vmem:[#allocation11 + $0x3f8] sm:$0xff]
    %v11606 = vld [vmem:[#allocation11 + $0x400] sm:$0xff]
    %v11607 = vld [vmem:[#allocation11 + $0x408] sm:$0xff]
    %v11608 = vld [vmem:[#allocation11 + $0x410] sm:$0xff]
    %v11609 = vld [vmem:[#allocation11 + $0x418] sm:$0xff]
    %v11610 = vld [vmem:[#allocation11 + $0x420] sm:$0xff]
    %v11611 = vld [vmem:[#allocation11 + $0x428] sm:$0xff]
    %v11612 = vld [vmem:[#allocation11 + $0x430] sm:$0xff]
    %v11613 = vld [vmem:[#allocation11 + $0x438] sm:$0xff]
    %v11614 = vld [vmem:[#allocation11 + $0x440] sm:$0xff]
    %v11615 = vld [vmem:[#allocation11 + $0x448] sm:$0xff]
    %v11616 = vld [vmem:[#allocation11 + $0x450] sm:$0xff]
    %v11617 = vld [vmem:[#allocation11 + $0x458] sm:$0xff]
    %v11618 = vld [vmem:[#allocation11 + $0x460] sm:$0xff]
    %v11619 = vld [vmem:[#allocation11 + $0x468] sm:$0xff]
    %v11620 = vld [vmem:[#allocation11 + $0x470] sm:$0xff]
    %v11621 = vld [vmem:[#allocation11 + $0x478] sm:$0xff]
    %v11622 = vld [vmem:[#allocation11 + $0x480] sm:$0xff]
    %v11623 = vld [vmem:[#allocation11 + $0x488] sm:$0xff]
    %v11624 = vld [vmem:[#allocation11 + $0x490] sm:$0xff]
    %v11625 = vld [vmem:[#allocation11 + $0x498] sm:$0xff]
    %v11626 = vld [vmem:[#allocation11 + $0x4a0] sm:$0xff]
    %v11627 = vld [vmem:[#allocation11 + $0x4a8] sm:$0xff]
    %v11628 = vld [vmem:[#allocation11 + $0x4b0] sm:$0xff]
    %v11629 = vld [vmem:[#allocation11 + $0x4b8] sm:$0xff]
    %v11630 = vld [vmem:[#allocation11 + $0x4c0] sm:$0xff]
    %v11631 = vld [vmem:[#allocation11 + $0x4c8] sm:$0xff]
    %v11632 = vld [vmem:[#allocation11 + $0x4d0] sm:$0xff]
    %v11633 = vld [vmem:[#allocation11 + $0x4d8] sm:$0xff]
    %v11634 = vld [vmem:[#allocation11 + $0x4e0] sm:$0xff]
    %v11635 = vld [vmem:[#allocation11 + $0x4e8] sm:$0xff]
    %v11636 = vld [vmem:[#allocation11 + $0x4f0] sm:$0xff]
    %v11637 = vld [vmem:[#allocation11 + $0x4f8] sm:$0xff]
    %v11638 = vld [vmem:[#allocation11 + $0x500] sm:$0xff]
    %v11639 = vld [vmem:[#allocation11 + $0x508] sm:$0xff]
    %v11640 = vld [vmem:[#allocation11 + $0x510] sm:$0xff]
    %v11641 = vld [vmem:[#allocation11 + $0x518] sm:$0xff]
    %v11642 = vld [vmem:[#allocation11 + $0x520] sm:$0xff]
    %v11643 = vld [vmem:[#allocation11 + $0x528] sm:$0xff]
    %v11644 = vld [vmem:[#allocation11 + $0x530] sm:$0xff]
    %v11645 = vld [vmem:[#allocation11 + $0x538] sm:$0xff]
    %v11646 = vld [vmem:[#allocation11 + $0x540] sm:$0xff]
    %v11647 = vld [vmem:[#allocation11 + $0x548] sm:$0xff]
    %v11648 = vld [vmem:[#allocation11 + $0x550] sm:$0xff]
    %v11649 = vld [vmem:[#allocation11 + $0x558] sm:$0xff]
    %v11650 = vld [vmem:[#allocation11 + $0x560] sm:$0xff]
    %v11651 = vld [vmem:[#allocation11 + $0x568] sm:$0xff]
    %v11652 = vld [vmem:[#allocation11 + $0x570] sm:$0xff]
    %v11653 = vld [vmem:[#allocation11 + $0x578] sm:$0xff]
    %v11654 = vld [vmem:[#allocation11 + $0x580] sm:$0xff]
    %v11655 = vld [vmem:[#allocation11 + $0x588] sm:$0xff]
    %v11656 = vld [vmem:[#allocation11 + $0x590] sm:$0xff]
    %v11657 = vld [vmem:[#allocation11 + $0x598] sm:$0xff]
    %v11658 = vld [vmem:[#allocation11 + $0x5a0] sm:$0xff]
    %v11659 = vld [vmem:[#allocation11 + $0x5a8] sm:$0xff]
    %v11660 = vld [vmem:[#allocation11 + $0x5b0] sm:$0xff]
    %v11661 = vld [vmem:[#allocation11 + $0x5b8] sm:$0xff]
    %v11662 = vld [vmem:[#allocation11 + $0x5c0] sm:$0xff]
    %v11663 = vld [vmem:[#allocation11 + $0x5c8] sm:$0xff]
    %v11664 = vld [vmem:[#allocation11 + $0x5d0] sm:$0xff]
    %v11665 = vld [vmem:[#allocation11 + $0x5d8] sm:$0xff]
    %v11666 = vld [vmem:[#allocation11 + $0x5e0] sm:$0xff]
    %v11667 = vld [vmem:[#allocation11 + $0x5e8] sm:$0xff]
    %v11668 = vld [vmem:[#allocation11 + $0x5f0] sm:$0xff]
    %v11669 = vld [vmem:[#allocation11 + $0x5f8] sm:$0xff]
    %v11670 = vld [vmem:[#allocation11 + $0x600] sm:$0xff]
    %v11671 = vld [vmem:[#allocation11 + $0x608] sm:$0xff]
    %v11672 = vld [vmem:[#allocation11 + $0x610] sm:$0xff]
    %v11673 = vld [vmem:[#allocation11 + $0x618] sm:$0xff]
    %v11674 = vld [vmem:[#allocation11 + $0x620] sm:$0xff]
    %v11675 = vld [vmem:[#allocation11 + $0x628] sm:$0xff]
    %v11676 = vld [vmem:[#allocation11 + $0x630] sm:$0xff]
    %v11677 = vld [vmem:[#allocation11 + $0x638] sm:$0xff]
    %v11678 = vld [vmem:[#allocation11 + $0x640] sm:$0xff]
    %v11679 = vld [vmem:[#allocation11 + $0x648] sm:$0xff]
    %v11680 = vld [vmem:[#allocation11 + $0x650] sm:$0xff]
    %v11681 = vld [vmem:[#allocation11 + $0x658] sm:$0xff]
    %v11682 = vld [vmem:[#allocation11 + $0x660] sm:$0xff]
    %v11683 = vld [vmem:[#allocation11 + $0x668] sm:$0xff]
    %v11684 = vld [vmem:[#allocation11 + $0x670] sm:$0xff]
    %v11685 = vld [vmem:[#allocation11 + $0x678] sm:$0xff]
    %v11686 = vld [vmem:[#allocation11 + $0x680] sm:$0xff]
    %v11687 = vld [vmem:[#allocation11 + $0x688] sm:$0xff]
    %v11688 = vld [vmem:[#allocation11 + $0x690] sm:$0xff]
    %v11689 = vld [vmem:[#allocation11 + $0x698] sm:$0xff]
    %v11690 = vld [vmem:[#allocation11 + $0x6a0] sm:$0xff]
    %v11691 = vld [vmem:[#allocation11 + $0x6a8] sm:$0xff]
    %v11692 = vld [vmem:[#allocation11 + $0x6b0] sm:$0xff]
    %v11693 = vld [vmem:[#allocation11 + $0x6b8] sm:$0xff]
    %v11694 = vld [vmem:[#allocation11 + $0x6c0] sm:$0xff]
    %v11695 = vld [vmem:[#allocation11 + $0x6c8] sm:$0xff]
    %v11696 = vld [vmem:[#allocation11 + $0x6d0] sm:$0xff]
    %v11697 = vld [vmem:[#allocation11 + $0x6d8] sm:$0xff]
    %v11698 = vld [vmem:[#allocation11 + $0x6e0] sm:$0xff]
    %v11699 = vld [vmem:[#allocation11 + $0x6e8] sm:$0xff]
    %v11700 = vld [vmem:[#allocation11 + $0x6f0] sm:$0xff]
    %v11701 = vld [vmem:[#allocation11 + $0x6f8] sm:$0xff]
    %v11702 = vld [vmem:[#allocation11 + $0x700] sm:$0xff]
    %v11703 = vld [vmem:[#allocation11 + $0x708] sm:$0xff]
    %v11704 = vld [vmem:[#allocation11 + $0x710] sm:$0xff]
    %v11705 = vld [vmem:[#allocation11 + $0x718] sm:$0xff]
    %v11706 = vld [vmem:[#allocation11 + $0x720] sm:$0xff]
    %v11707 = vld [vmem:[#allocation11 + $0x728] sm:$0xff]
    %v11708 = vld [vmem:[#allocation11 + $0x730] sm:$0xff]
    %v11709 = vld [vmem:[#allocation11 + $0x738] sm:$0xff]
    %v11710 = vld [vmem:[#allocation11 + $0x740] sm:$0xff]
    %v11711 = vld [vmem:[#allocation11 + $0x748] sm:$0xff]
    %v11712 = vld [vmem:[#allocation11 + $0x750] sm:$0xff]
    %v11713 = vld [vmem:[#allocation11 + $0x758] sm:$0xff]
    %v11714 = vld [vmem:[#allocation11 + $0x760] sm:$0xff]
    %v11715 = vld [vmem:[#allocation11 + $0x768] sm:$0xff]
    %v11716 = vld [vmem:[#allocation11 + $0x770] sm:$0xff]
    %v11717 = vld [vmem:[#allocation11 + $0x778] sm:$0xff]
    %v11718 = vld [vmem:[#allocation11 + $0x780] sm:$0xff]
    %v11719 = vld [vmem:[#allocation11 + $0x788] sm:$0xff]
    %v11720 = vld [vmem:[#allocation11 + $0x790] sm:$0xff]
    %v11721 = vld [vmem:[#allocation11 + $0x798] sm:$0xff]
    %v11722 = vld [vmem:[#allocation11 + $0x7a0] sm:$0xff]
    %v11723 = vld [vmem:[#allocation11 + $0x7a8] sm:$0xff]
    %v11724 = vld [vmem:[#allocation11 + $0x7b0] sm:$0xff]
    %v11725 = vld [vmem:[#allocation11 + $0x7b8] sm:$0xff]
    %v11726 = vld [vmem:[#allocation11 + $0x7c0] sm:$0xff]
    %v11727 = vld [vmem:[#allocation11 + $0x7c8] sm:$0xff]
    %v11728 = vld [vmem:[#allocation11 + $0x7d0] sm:$0xff]
    %v11729 = vld [vmem:[#allocation11 + $0x7d8] sm:$0xff]
    %v11730 = vld [vmem:[#allocation11 + $0x7e0] sm:$0xff]
    %v11731 = vld [vmem:[#allocation11 + $0x7e8] sm:$0xff]
    %v11732 = vld [vmem:[#allocation11 + $0x7f0] sm:$0xff]
    %v11733 = vld [vmem:[#allocation11 + $0x7f8] sm:$0xff]
    %v11734 = vld [vmem:[#allocation13] sm:$0xf]
    %v11736 = vlaneseq
    %v11737 = vshrl.u32 %v11736, 7
    %v11738 = vsub.s32 0, %v11737
    %v11739 = vrot.slane %v11734, %v11738
    %v11740 = vlaneseq
    %v11741 = vshrl.u32 %v11740, 7
    %v11742 = vsub.s32 1, %v11741
    %v11743 = vrot.slane %v11734, %v11742
    %v11744 = vlaneseq
    %v11745 = vshrl.u32 %v11744, 7
    %v11746 = vsub.s32 2, %v11745
    %v11747 = vrot.slane %v11734, %v11746
    %v11748 = vlaneseq
    %v11749 = vshrl.u32 %v11748, 7
    %v11750 = vsub.s32 3, %v11749
    %v11751 = vrot.slane %v11734, %v11750
    %v12012 = vunpack.c.l.b16 %v11478
    %v12013 = vunpack.c.h.b16 %v11478
    %v12014 = vunpack.c.l.b16 %v11479
    %v12015 = vunpack.c.h.b16 %v11479
    %v12016 = vunpack.c.l.b16 %v11480
    %v12017 = vunpack.c.h.b16 %v11480
    %v12018 = vunpack.c.l.b16 %v11481
    %v12019 = vunpack.c.h.b16 %v11481
    %v12020 = vunpack.c.l.b16 %v11482
    %v12021 = vunpack.c.h.b16 %v11482
    %v12022 = vunpack.c.l.b16 %v11483
    %v12023 = vunpack.c.h.b16 %v11483
    %v12024 = vunpack.c.l.b16 %v11484
    %v12025 = vunpack.c.h.b16 %v11484
    %v12026 = vunpack.c.l.b16 %v11485
    %v12027 = vunpack.c.h.b16 %v11485
    %v12028 = vunpack.c.l.b16 %v11486
    %v12029 = vunpack.c.h.b16 %v11486
    %v12030 = vunpack.c.l.b16 %v11487
    %v12031 = vunpack.c.h.b16 %v11487
    %v12032 = vunpack.c.l.b16 %v11488
    %v12033 = vunpack.c.h.b16 %v11488
    %v12034 = vunpack.c.l.b16 %v11489
    %v12035 = vunpack.c.h.b16 %v11489
    %v12036 = vunpack.c.l.b16 %v11490
    %v12037 = vunpack.c.h.b16 %v11490
    %v12038 = vunpack.c.l.b16 %v11491
    %v12039 = vunpack.c.h.b16 %v11491
    %v12040 = vunpack.c.l.b16 %v11492
    %v12041 = vunpack.c.h.b16 %v11492
    %v12042 = vunpack.c.l.b16 %v11493
    %v12043 = vunpack.c.h.b16 %v11493
    %v12044 = vunpack.c.l.b16 %v11494
    %v12045 = vunpack.c.h.b16 %v11494
    %v12046 = vunpack.c.l.b16 %v11495
    %v12047 = vunpack.c.h.b16 %v11495
    %v12048 = vunpack.c.l.b16 %v11496
    %v12049 = vunpack.c.h.b16 %v11496
    %v12050 = vunpack.c.l.b16 %v11497
    %v12051 = vunpack.c.h.b16 %v11497
    %v12052 = vunpack.c.l.b16 %v11498
    %v12053 = vunpack.c.h.b16 %v11498
    %v12054 = vunpack.c.l.b16 %v11499
    %v12055 = vunpack.c.h.b16 %v11499
    %v12056 = vunpack.c.l.b16 %v11500
    %v12057 = vunpack.c.h.b16 %v11500
    %v12058 = vunpack.c.l.b16 %v11501
    %v12059 = vunpack.c.h.b16 %v11501
    %v12060 = vunpack.c.l.b16 %v11502
    %v12061 = vunpack.c.h.b16 %v11502
    %v12062 = vunpack.c.l.b16 %v11503
    %v12063 = vunpack.c.h.b16 %v11503
    %v12064 = vunpack.c.l.b16 %v11504
    %v12065 = vunpack.c.h.b16 %v11504
    %v12066 = vunpack.c.l.b16 %v11505
    %v12067 = vunpack.c.h.b16 %v11505
    %v12068 = vunpack.c.l.b16 %v11506
    %v12069 = vunpack.c.h.b16 %v11506
    %v12070 = vunpack.c.l.b16 %v11507
    %v12071 = vunpack.c.h.b16 %v11507
    %v12072 = vunpack.c.l.b16 %v11508
    %v12073 = vunpack.c.h.b16 %v11508
    %v12074 = vunpack.c.l.b16 %v11509
    %v12075 = vunpack.c.h.b16 %v11509
    %v12076 = vunpack.c.l.b16 %v11510
    %v12077 = vunpack.c.h.b16 %v11510
    %v12078 = vunpack.c.l.b16 %v11511
    %v12079 = vunpack.c.h.b16 %v11511
    %v12080 = vunpack.c.l.b16 %v11512
    %v12081 = vunpack.c.h.b16 %v11512
    %v12082 = vunpack.c.l.b16 %v11513
    %v12083 = vunpack.c.h.b16 %v11513
    %v12084 = vunpack.c.l.b16 %v11514
    %v12085 = vunpack.c.h.b16 %v11514
    %v12086 = vunpack.c.l.b16 %v11515
    %v12087 = vunpack.c.h.b16 %v11515
    %v12088 = vunpack.c.l.b16 %v11516
    %v12089 = vunpack.c.h.b16 %v11516
    %v12090 = vunpack.c.l.b16 %v11517
    %v12091 = vunpack.c.h.b16 %v11517
    %v12092 = vunpack.c.l.b16 %v11518
    %v12093 = vunpack.c.h.b16 %v11518
    %v12094 = vunpack.c.l.b16 %v11519
    %v12095 = vunpack.c.h.b16 %v11519
    %v12096 = vunpack.c.l.b16 %v11520
    %v12097 = vunpack.c.h.b16 %v11520
    %v12098 = vunpack.c.l.b16 %v11521
    %v12099 = vunpack.c.h.b16 %v11521
    %v12100 = vunpack.c.l.b16 %v11522
    %v12101 = vunpack.c.h.b16 %v11522
    %v12102 = vunpack.c.l.b16 %v11523
    %v12103 = vunpack.c.h.b16 %v11523
    %v12104 = vunpack.c.l.b16 %v11524
    %v12105 = vunpack.c.h.b16 %v11524
    %v12106 = vunpack.c.l.b16 %v11525
    %v12107 = vunpack.c.h.b16 %v11525
    %v12108 = vunpack.c.l.b16 %v11526
    %v12109 = vunpack.c.h.b16 %v11526
    %v12110 = vunpack.c.l.b16 %v11527
    %v12111 = vunpack.c.h.b16 %v11527
    %v12112 = vunpack.c.l.b16 %v11528
    %v12113 = vunpack.c.h.b16 %v11528
    %v12114 = vunpack.c.l.b16 %v11529
    %v12115 = vunpack.c.h.b16 %v11529
    %v12116 = vunpack.c.l.b16 %v11530
    %v12117 = vunpack.c.h.b16 %v11530
    %v12118 = vunpack.c.l.b16 %v11531
    %v12119 = vunpack.c.h.b16 %v11531
    %v12120 = vunpack.c.l.b16 %v11532
    %v12121 = vunpack.c.h.b16 %v11532
    %v12122 = vunpack.c.l.b16 %v11533
    %v12123 = vunpack.c.h.b16 %v11533
    %v12124 = vunpack.c.l.b16 %v11534
    %v12125 = vunpack.c.h.b16 %v11534
    %v12126 = vunpack.c.l.b16 %v11535
    %v12127 = vunpack.c.h.b16 %v11535
    %v12128 = vunpack.c.l.b16 %v11536
    %v12129 = vunpack.c.h.b16 %v11536
    %v12130 = vunpack.c.l.b16 %v11537
    %v12131 = vunpack.c.h.b16 %v11537
    %v12132 = vunpack.c.l.b16 %v11538
    %v12133 = vunpack.c.h.b16 %v11538
    %v12134 = vunpack.c.l.b16 %v11539
    %v12135 = vunpack.c.h.b16 %v11539
    %v12136 = vunpack.c.l.b16 %v11540
    %v12137 = vunpack.c.h.b16 %v11540
    %v12138 = vunpack.c.l.b16 %v11541
    %v12139 = vunpack.c.h.b16 %v11541
    %v12140 = vunpack.c.l.b16 %v11542
    %v12141 = vunpack.c.h.b16 %v11542
    %v12142 = vunpack.c.l.b16 %v11543
    %v12143 = vunpack.c.h.b16 %v11543
    %v12144 = vunpack.c.l.b16 %v11544
    %v12145 = vunpack.c.h.b16 %v11544
    %v12146 = vunpack.c.l.b16 %v11545
    %v12147 = vunpack.c.h.b16 %v11545
    %v12148 = vunpack.c.l.b16 %v11546
    %v12149 = vunpack.c.h.b16 %v11546
    %v12150 = vunpack.c.l.b16 %v11547
    %v12151 = vunpack.c.h.b16 %v11547
    %v12152 = vunpack.c.l.b16 %v11548
    %v12153 = vunpack.c.h.b16 %v11548
    %v12154 = vunpack.c.l.b16 %v11549
    %v12155 = vunpack.c.h.b16 %v11549
    %v12156 = vunpack.c.l.b16 %v11550
    %v12157 = vunpack.c.h.b16 %v11550
    %v12158 = vunpack.c.l.b16 %v11551
    %v12159 = vunpack.c.h.b16 %v11551
    %v12160 = vunpack.c.l.b16 %v11552
    %v12161 = vunpack.c.h.b16 %v11552
    %v12162 = vunpack.c.l.b16 %v11553
    %v12163 = vunpack.c.h.b16 %v11553
    %v12164 = vunpack.c.l.b16 %v11554
    %v12165 = vunpack.c.h.b16 %v11554
    %v12166 = vunpack.c.l.b16 %v11555
    %v12167 = vunpack.c.h.b16 %v11555
    %v12168 = vunpack.c.l.b16 %v11556
    %v12169 = vunpack.c.h.b16 %v11556
    %v12170 = vunpack.c.l.b16 %v11557
    %v12171 = vunpack.c.h.b16 %v11557
    %v12172 = vunpack.c.l.b16 %v11558
    %v12173 = vunpack.c.h.b16 %v11558
    %v12174 = vunpack.c.l.b16 %v11559
    %v12175 = vunpack.c.h.b16 %v11559
    %v12176 = vunpack.c.l.b16 %v11560
    %v12177 = vunpack.c.h.b16 %v11560
    %v12178 = vunpack.c.l.b16 %v11561
    %v12179 = vunpack.c.h.b16 %v11561
    %v12180 = vunpack.c.l.b16 %v11562
    %v12181 = vunpack.c.h.b16 %v11562
    %v12182 = vunpack.c.l.b16 %v11563
    %v12183 = vunpack.c.h.b16 %v11563
    %v12184 = vunpack.c.l.b16 %v11564
    %v12185 = vunpack.c.h.b16 %v11564
    %v12186 = vunpack.c.l.b16 %v11565
    %v12187 = vunpack.c.h.b16 %v11565
    %v12188 = vunpack.c.l.b16 %v11566
    %v12189 = vunpack.c.h.b16 %v11566
    %v12190 = vunpack.c.l.b16 %v11567
    %v12191 = vunpack.c.h.b16 %v11567
    %v12192 = vunpack.c.l.b16 %v11568
    %v12193 = vunpack.c.h.b16 %v11568
    %v12194 = vunpack.c.l.b16 %v11569
    %v12195 = vunpack.c.h.b16 %v11569
    %v12196 = vunpack.c.l.b16 %v11570
    %v12197 = vunpack.c.h.b16 %v11570
    %v12198 = vunpack.c.l.b16 %v11571
    %v12199 = vunpack.c.h.b16 %v11571
    %v12200 = vunpack.c.l.b16 %v11572
    %v12201 = vunpack.c.h.b16 %v11572
    %v12202 = vunpack.c.l.b16 %v11573
    %v12203 = vunpack.c.h.b16 %v11573
    %v12204 = vunpack.c.l.b16 %v11574
    %v12205 = vunpack.c.h.b16 %v11574
    %v12206 = vunpack.c.l.b16 %v11575
    %v12207 = vunpack.c.h.b16 %v11575
    %v12208 = vunpack.c.l.b16 %v11576
    %v12209 = vunpack.c.h.b16 %v11576
    %v12210 = vunpack.c.l.b16 %v11577
    %v12211 = vunpack.c.h.b16 %v11577
    %v12212 = vunpack.c.l.b16 %v11578
    %v12213 = vunpack.c.h.b16 %v11578
    %v12214 = vunpack.c.l.b16 %v11579
    %v12215 = vunpack.c.h.b16 %v11579
    %v12216 = vunpack.c.l.b16 %v11580
    %v12217 = vunpack.c.h.b16 %v11580
    %v12218 = vunpack.c.l.b16 %v11581
    %v12219 = vunpack.c.h.b16 %v11581
    %v12220 = vunpack.c.l.b16 %v11582
    %v12221 = vunpack.c.h.b16 %v11582
    %v12222 = vunpack.c.l.b16 %v11583
    %v12223 = vunpack.c.h.b16 %v11583
    %v12224 = vunpack.c.l.b16 %v11584
    %v12225 = vunpack.c.h.b16 %v11584
    %v12226 = vunpack.c.l.b16 %v11585
    %v12227 = vunpack.c.h.b16 %v11585
    %v12228 = vunpack.c.l.b16 %v11586
    %v12229 = vunpack.c.h.b16 %v11586
    %v12230 = vunpack.c.l.b16 %v11587
    %v12231 = vunpack.c.h.b16 %v11587
    %v12232 = vunpack.c.l.b16 %v11588
    %v12233 = vunpack.c.h.b16 %v11588
    %v12234 = vunpack.c.l.b16 %v11589
    %v12235 = vunpack.c.h.b16 %v11589
    %v12236 = vunpack.c.l.b16 %v11590
    %v12237 = vunpack.c.h.b16 %v11590
    %v12238 = vunpack.c.l.b16 %v11591
    %v12239 = vunpack.c.h.b16 %v11591
    %v12240 = vunpack.c.l.b16 %v11592
    %v12241 = vunpack.c.h.b16 %v11592
    %v12242 = vunpack.c.l.b16 %v11593
    %v12243 = vunpack.c.h.b16 %v11593
    %v12244 = vunpack.c.l.b16 %v11594
    %v12245 = vunpack.c.h.b16 %v11594
    %v12246 = vunpack.c.l.b16 %v11595
    %v12247 = vunpack.c.h.b16 %v11595
    %v12248 = vunpack.c.l.b16 %v11596
    %v12249 = vunpack.c.h.b16 %v11596
    %v12250 = vunpack.c.l.b16 %v11597
    %v12251 = vunpack.c.h.b16 %v11597
    %v12252 = vunpack.c.l.b16 %v11598
    %v12253 = vunpack.c.h.b16 %v11598
    %v12254 = vunpack.c.l.b16 %v11599
    %v12255 = vunpack.c.h.b16 %v11599
    %v12256 = vunpack.c.l.b16 %v11600
    %v12257 = vunpack.c.h.b16 %v11600
    %v12258 = vunpack.c.l.b16 %v11601
    %v12259 = vunpack.c.h.b16 %v11601
    %v12260 = vunpack.c.l.b16 %v11602
    %v12261 = vunpack.c.h.b16 %v11602
    %v12262 = vunpack.c.l.b16 %v11603
    %v12263 = vunpack.c.h.b16 %v11603
    %v12264 = vunpack.c.l.b16 %v11604
    %v12265 = vunpack.c.h.b16 %v11604
    %v12266 = vunpack.c.l.b16 %v11605
    %v12267 = vunpack.c.h.b16 %v11605
    %v12268 = vunpack.c.l.b16 %v11606
    %v12269 = vunpack.c.h.b16 %v11606
    %v12270 = vunpack.c.l.b16 %v11607
    %v12271 = vunpack.c.h.b16 %v11607
    %v12272 = vunpack.c.l.b16 %v11608
    %v12273 = vunpack.c.h.b16 %v11608
    %v12274 = vunpack.c.l.b16 %v11609
    %v12275 = vunpack.c.h.b16 %v11609
    %v12276 = vunpack.c.l.b16 %v11610
    %v12277 = vunpack.c.h.b16 %v11610
    %v12278 = vunpack.c.l.b16 %v11611
    %v12279 = vunpack.c.h.b16 %v11611
    %v12280 = vunpack.c.l.b16 %v11612
    %v12281 = vunpack.c.h.b16 %v11612
    %v12282 = vunpack.c.l.b16 %v11613
    %v12283 = vunpack.c.h.b16 %v11613
    %v12284 = vunpack.c.l.b16 %v11614
    %v12285 = vunpack.c.h.b16 %v11614
    %v12286 = vunpack.c.l.b16 %v11615
    %v12287 = vunpack.c.h.b16 %v11615
    %v12288 = vunpack.c.l.b16 %v11616
    %v12289 = vunpack.c.h.b16 %v11616
    %v12290 = vunpack.c.l.b16 %v11617
    %v12291 = vunpack.c.h.b16 %v11617
    %v12292 = vunpack.c.l.b16 %v11618
    %v12293 = vunpack.c.h.b16 %v11618
    %v12294 = vunpack.c.l.b16 %v11619
    %v12295 = vunpack.c.h.b16 %v11619
    %v12296 = vunpack.c.l.b16 %v11620
    %v12297 = vunpack.c.h.b16 %v11620
    %v12298 = vunpack.c.l.b16 %v11621
    %v12299 = vunpack.c.h.b16 %v11621
    %v12300 = vunpack.c.l.b16 %v11622
    %v12301 = vunpack.c.h.b16 %v11622
    %v12302 = vunpack.c.l.b16 %v11623
    %v12303 = vunpack.c.h.b16 %v11623
    %v12304 = vunpack.c.l.b16 %v11624
    %v12305 = vunpack.c.h.b16 %v11624
    %v12306 = vunpack.c.l.b16 %v11625
    %v12307 = vunpack.c.h.b16 %v11625
    %v12308 = vunpack.c.l.b16 %v11626
    %v12309 = vunpack.c.h.b16 %v11626
    %v12310 = vunpack.c.l.b16 %v11627
    %v12311 = vunpack.c.h.b16 %v11627
    %v12312 = vunpack.c.l.b16 %v11628
    %v12313 = vunpack.c.h.b16 %v11628
    %v12314 = vunpack.c.l.b16 %v11629
    %v12315 = vunpack.c.h.b16 %v11629
    %v12316 = vunpack.c.l.b16 %v11630
    %v12317 = vunpack.c.h.b16 %v11630
    %v12318 = vunpack.c.l.b16 %v11631
    %v12319 = vunpack.c.h.b16 %v11631
    %v12320 = vunpack.c.l.b16 %v11632
    %v12321 = vunpack.c.h.b16 %v11632
    %v12322 = vunpack.c.l.b16 %v11633
    %v12323 = vunpack.c.h.b16 %v11633
    %v12324 = vunpack.c.l.b16 %v11634
    %v12325 = vunpack.c.h.b16 %v11634
    %v12326 = vunpack.c.l.b16 %v11635
    %v12327 = vunpack.c.h.b16 %v11635
    %v12328 = vunpack.c.l.b16 %v11636
    %v12329 = vunpack.c.h.b16 %v11636
    %v12330 = vunpack.c.l.b16 %v11637
    %v12331 = vunpack.c.h.b16 %v11637
    %v12332 = vunpack.c.l.b16 %v11638
    %v12333 = vunpack.c.h.b16 %v11638
    %v12334 = vunpack.c.l.b16 %v11639
    %v12335 = vunpack.c.h.b16 %v11639
    %v12336 = vunpack.c.l.b16 %v11640
    %v12337 = vunpack.c.h.b16 %v11640
    %v12338 = vunpack.c.l.b16 %v11641
    %v12339 = vunpack.c.h.b16 %v11641
    %v12340 = vunpack.c.l.b16 %v11642
    %v12341 = vunpack.c.h.b16 %v11642
    %v12342 = vunpack.c.l.b16 %v11643
    %v12343 = vunpack.c.h.b16 %v11643
    %v12344 = vunpack.c.l.b16 %v11644
    %v12345 = vunpack.c.h.b16 %v11644
    %v12346 = vunpack.c.l.b16 %v11645
    %v12347 = vunpack.c.h.b16 %v11645
    %v12348 = vunpack.c.l.b16 %v11646
    %v12349 = vunpack.c.h.b16 %v11646
    %v12350 = vunpack.c.l.b16 %v11647
    %v12351 = vunpack.c.h.b16 %v11647
    %v12352 = vunpack.c.l.b16 %v11648
    %v12353 = vunpack.c.h.b16 %v11648
    %v12354 = vunpack.c.l.b16 %v11649
    %v12355 = vunpack.c.h.b16 %v11649
    %v12356 = vunpack.c.l.b16 %v11650
    %v12357 = vunpack.c.h.b16 %v11650
    %v12358 = vunpack.c.l.b16 %v11651
    %v12359 = vunpack.c.h.b16 %v11651
    %v12360 = vunpack.c.l.b16 %v11652
    %v12361 = vunpack.c.h.b16 %v11652
    %v12362 = vunpack.c.l.b16 %v11653
    %v12363 = vunpack.c.h.b16 %v11653
    %v12364 = vunpack.c.l.b16 %v11654
    %v12365 = vunpack.c.h.b16 %v11654
    %v12366 = vunpack.c.l.b16 %v11655
    %v12367 = vunpack.c.h.b16 %v11655
    %v12368 = vunpack.c.l.b16 %v11656
    %v12369 = vunpack.c.h.b16 %v11656
    %v12370 = vunpack.c.l.b16 %v11657
    %v12371 = vunpack.c.h.b16 %v11657
    %v12372 = vunpack.c.l.b16 %v11658
    %v12373 = vunpack.c.h.b16 %v11658
    %v12374 = vunpack.c.l.b16 %v11659
    %v12375 = vunpack.c.h.b16 %v11659
    %v12376 = vunpack.c.l.b16 %v11660
    %v12377 = vunpack.c.h.b16 %v11660
    %v12378 = vunpack.c.l.b16 %v11661
    %v12379 = vunpack.c.h.b16 %v11661
    %v12380 = vunpack.c.l.b16 %v11662
    %v12381 = vunpack.c.h.b16 %v11662
    %v12382 = vunpack.c.l.b16 %v11663
    %v12383 = vunpack.c.h.b16 %v11663
    %v12384 = vunpack.c.l.b16 %v11664
    %v12385 = vunpack.c.h.b16 %v11664
    %v12386 = vunpack.c.l.b16 %v11665
    %v12387 = vunpack.c.h.b16 %v11665
    %v12388 = vunpack.c.l.b16 %v11666
    %v12389 = vunpack.c.h.b16 %v11666
    %v12390 = vunpack.c.l.b16 %v11667
    %v12391 = vunpack.c.h.b16 %v11667
    %v12392 = vunpack.c.l.b16 %v11668
    %v12393 = vunpack.c.h.b16 %v11668
    %v12394 = vunpack.c.l.b16 %v11669
    %v12395 = vunpack.c.h.b16 %v11669
    %v12396 = vunpack.c.l.b16 %v11670
    %v12397 = vunpack.c.h.b16 %v11670
    %v12398 = vunpack.c.l.b16 %v11671
    %v12399 = vunpack.c.h.b16 %v11671
    %v12400 = vunpack.c.l.b16 %v11672
    %v12401 = vunpack.c.h.b16 %v11672
    %v12402 = vunpack.c.l.b16 %v11673
    %v12403 = vunpack.c.h.b16 %v11673
    %v12404 = vunpack.c.l.b16 %v11674
    %v12405 = vunpack.c.h.b16 %v11674
    %v12406 = vunpack.c.l.b16 %v11675
    %v12407 = vunpack.c.h.b16 %v11675
    %v12408 = vunpack.c.l.b16 %v11676
    %v12409 = vunpack.c.h.b16 %v11676
    %v12410 = vunpack.c.l.b16 %v11677
    %v12411 = vunpack.c.h.b16 %v11677
    %v12412 = vunpack.c.l.b16 %v11678
    %v12413 = vunpack.c.h.b16 %v11678
    %v12414 = vunpack.c.l.b16 %v11679
    %v12415 = vunpack.c.h.b16 %v11679
    %v12416 = vunpack.c.l.b16 %v11680
    %v12417 = vunpack.c.h.b16 %v11680
    %v12418 = vunpack.c.l.b16 %v11681
    %v12419 = vunpack.c.h.b16 %v11681
    %v12420 = vunpack.c.l.b16 %v11682
    %v12421 = vunpack.c.h.b16 %v11682
    %v12422 = vunpack.c.l.b16 %v11683
    %v12423 = vunpack.c.h.b16 %v11683
    %v12424 = vunpack.c.l.b16 %v11684
    %v12425 = vunpack.c.h.b16 %v11684
    %v12426 = vunpack.c.l.b16 %v11685
    %v12427 = vunpack.c.h.b16 %v11685
    %v12428 = vunpack.c.l.b16 %v11686
    %v12429 = vunpack.c.h.b16 %v11686
    %v12430 = vunpack.c.l.b16 %v11687
    %v12431 = vunpack.c.h.b16 %v11687
    %v12432 = vunpack.c.l.b16 %v11688
    %v12433 = vunpack.c.h.b16 %v11688
    %v12434 = vunpack.c.l.b16 %v11689
    %v12435 = vunpack.c.h.b16 %v11689
    %v12436 = vunpack.c.l.b16 %v11690
    %v12437 = vunpack.c.h.b16 %v11690
    %v12438 = vunpack.c.l.b16 %v11691
    %v12439 = vunpack.c.h.b16 %v11691
    %v12440 = vunpack.c.l.b16 %v11692
    %v12441 = vunpack.c.h.b16 %v11692
    %v12442 = vunpack.c.l.b16 %v11693
    %v12443 = vunpack.c.h.b16 %v11693
    %v12444 = vunpack.c.l.b16 %v11694
    %v12445 = vunpack.c.h.b16 %v11694
    %v12446 = vunpack.c.l.b16 %v11695
    %v12447 = vunpack.c.h.b16 %v11695
    %v12448 = vunpack.c.l.b16 %v11696
    %v12449 = vunpack.c.h.b16 %v11696
    %v12450 = vunpack.c.l.b16 %v11697
    %v12451 = vunpack.c.h.b16 %v11697
    %v12452 = vunpack.c.l.b16 %v11698
    %v12453 = vunpack.c.h.b16 %v11698
    %v12454 = vunpack.c.l.b16 %v11699
    %v12455 = vunpack.c.h.b16 %v11699
    %v12456 = vunpack.c.l.b16 %v11700
    %v12457 = vunpack.c.h.b16 %v11700
    %v12458 = vunpack.c.l.b16 %v11701
    %v12459 = vunpack.c.h.b16 %v11701
    %v12460 = vunpack.c.l.b16 %v11702
    %v12461 = vunpack.c.h.b16 %v11702
    %v12462 = vunpack.c.l.b16 %v11703
    %v12463 = vunpack.c.h.b16 %v11703
    %v12464 = vunpack.c.l.b16 %v11704
    %v12465 = vunpack.c.h.b16 %v11704
    %v12466 = vunpack.c.l.b16 %v11705
    %v12467 = vunpack.c.h.b16 %v11705
    %v12468 = vunpack.c.l.b16 %v11706
    %v12469 = vunpack.c.h.b16 %v11706
    %v12470 = vunpack.c.l.b16 %v11707
    %v12471 = vunpack.c.h.b16 %v11707
    %v12472 = vunpack.c.l.b16 %v11708
    %v12473 = vunpack.c.h.b16 %v11708
    %v12474 = vunpack.c.l.b16 %v11709
    %v12475 = vunpack.c.h.b16 %v11709
    %v12476 = vunpack.c.l.b16 %v11710
    %v12477 = vunpack.c.h.b16 %v11710
    %v12478 = vunpack.c.l.b16 %v11711
    %v12479 = vunpack.c.h.b16 %v11711
    %v12480 = vunpack.c.l.b16 %v11712
    %v12481 = vunpack.c.h.b16 %v11712
    %v12482 = vunpack.c.l.b16 %v11713
    %v12483 = vunpack.c.h.b16 %v11713
    %v12484 = vunpack.c.l.b16 %v11714
    %v12485 = vunpack.c.h.b16 %v11714
    %v12486 = vunpack.c.l.b16 %v11715
    %v12487 = vunpack.c.h.b16 %v11715
    %v12488 = vunpack.c.l.b16 %v11716
    %v12489 = vunpack.c.h.b16 %v11716
    %v12490 = vunpack.c.l.b16 %v11717
    %v12491 = vunpack.c.h.b16 %v11717
    %v12492 = vunpack.c.l.b16 %v11718
    %v12493 = vunpack.c.h.b16 %v11718
    %v12494 = vunpack.c.l.b16 %v11719
    %v12495 = vunpack.c.h.b16 %v11719
    %v12496 = vunpack.c.l.b16 %v11720
    %v12497 = vunpack.c.h.b16 %v11720
    %v12498 = vunpack.c.l.b16 %v11721
    %v12499 = vunpack.c.h.b16 %v11721
    %v12500 = vunpack.c.l.b16 %v11722
    %v12501 = vunpack.c.h.b16 %v11722
    %v12502 = vunpack.c.l.b16 %v11723
    %v12503 = vunpack.c.h.b16 %v11723
    %v12504 = vunpack.c.l.b16 %v11724
    %v12505 = vunpack.c.h.b16 %v11724
    %v12506 = vunpack.c.l.b16 %v11725
    %v12507 = vunpack.c.h.b16 %v11725
    %v12508 = vunpack.c.l.b16 %v11726
    %v12509 = vunpack.c.h.b16 %v11726
    %v12510 = vunpack.c.l.b16 %v11727
    %v12511 = vunpack.c.h.b16 %v11727
    %v12512 = vunpack.c.l.b16 %v11728
    %v12513 = vunpack.c.h.b16 %v11728
    %v12514 = vunpack.c.l.b16 %v11729
    %v12515 = vunpack.c.h.b16 %v11729
    %v12516 = vunpack.c.l.b16 %v11730
    %v12517 = vunpack.c.h.b16 %v11730
    %v12518 = vunpack.c.l.b16 %v11731
    %v12519 = vunpack.c.h.b16 %v11731
    %v12520 = vunpack.c.l.b16 %v11732
    %v12521 = vunpack.c.h.b16 %v11732
    %v12522 = vunpack.c.l.b16 %v11733
    %v12523 = vunpack.c.h.b16 %v11733
    %v12524 = vpack.c.b16 %v12016, %v12012
    %v12525 = vpack.c.b16 %v12017, %v12013
    %v12526 = vpack.c.b16 %v12018, %v12014
    %v12527 = vpack.c.b16 %v12019, %v12015
    %v12528 = vpack.c.b16 %v12024, %v12020
    %v12529 = vpack.c.b16 %v12025, %v12021
    %v12530 = vpack.c.b16 %v12026, %v12022
    %v12531 = vpack.c.b16 %v12027, %v12023
    %v12532 = vpack.c.b16 %v12032, %v12028
    %v12533 = vpack.c.b16 %v12033, %v12029
    %v12534 = vpack.c.b16 %v12034, %v12030
    %v12535 = vpack.c.b16 %v12035, %v12031
    %v12536 = vpack.c.b16 %v12040, %v12036
    %v12537 = vpack.c.b16 %v12041, %v12037
    %v12538 = vpack.c.b16 %v12042, %v12038
    %v12539 = vpack.c.b16 %v12043, %v12039
    %v12540 = vpack.c.b16 %v12048, %v12044
    %v12541 = vpack.c.b16 %v12049, %v12045
    %v12542 = vpack.c.b16 %v12050, %v12046
    %v12543 = vpack.c.b16 %v12051, %v12047
    %v12544 = vpack.c.b16 %v12056, %v12052
    %v12545 = vpack.c.b16 %v12057, %v12053
    %v12546 = vpack.c.b16 %v12058, %v12054
    %v12547 = vpack.c.b16 %v12059, %v12055
    %v12548 = vpack.c.b16 %v12064, %v12060
    %v12549 = vpack.c.b16 %v12065, %v12061
    %v12550 = vpack.c.b16 %v12066, %v12062
    %v12551 = vpack.c.b16 %v12067, %v12063
    %v12552 = vpack.c.b16 %v12072, %v12068
    %v12553 = vpack.c.b16 %v12073, %v12069
    %v12554 = vpack.c.b16 %v12074, %v12070
    %v12555 = vpack.c.b16 %v12075, %v12071
    %v12556 = vpack.c.b16 %v12080, %v12076
    %v12557 = vpack.c.b16 %v12081, %v12077
    %v12558 = vpack.c.b16 %v12082, %v12078
    %v12559 = vpack.c.b16 %v12083, %v12079
    %v12560 = vpack.c.b16 %v12088, %v12084
    %v12561 = vpack.c.b16 %v12089, %v12085
    %v12562 = vpack.c.b16 %v12090, %v12086
    %v12563 = vpack.c.b16 %v12091, %v12087
    %v12564 = vpack.c.b16 %v12096, %v12092
    %v12565 = vpack.c.b16 %v12097, %v12093
    %v12566 = vpack.c.b16 %v12098, %v12094
    %v12567 = vpack.c.b16 %v12099, %v12095
    %v12568 = vpack.c.b16 %v12104, %v12100
    %v12569 = vpack.c.b16 %v12105, %v12101
    %v12570 = vpack.c.b16 %v12106, %v12102
    %v12571 = vpack.c.b16 %v12107, %v12103
    %v12572 = vpack.c.b16 %v12112, %v12108
    %v12573 = vpack.c.b16 %v12113, %v12109
    %v12574 = vpack.c.b16 %v12114, %v12110
    %v12575 = vpack.c.b16 %v12115, %v12111
    %v12576 = vpack.c.b16 %v12120, %v12116
    %v12577 = vpack.c.b16 %v12121, %v12117
    %v12578 = vpack.c.b16 %v12122, %v12118
    %v12579 = vpack.c.b16 %v12123, %v12119
    %v12580 = vpack.c.b16 %v12128, %v12124
    %v12581 = vpack.c.b16 %v12129, %v12125
    %v12582 = vpack.c.b16 %v12130, %v12126
    %v12583 = vpack.c.b16 %v12131, %v12127
    %v12584 = vpack.c.b16 %v12136, %v12132
    %v12585 = vpack.c.b16 %v12137, %v12133
    %v12586 = vpack.c.b16 %v12138, %v12134
    %v12587 = vpack.c.b16 %v12139, %v12135
    %v12588 = vpack.c.b16 %v12144, %v12140
    %v12589 = vpack.c.b16 %v12145, %v12141
    %v12590 = vpack.c.b16 %v12146, %v12142
    %v12591 = vpack.c.b16 %v12147, %v12143
    %v12592 = vpack.c.b16 %v12152, %v12148
    %v12593 = vpack.c.b16 %v12153, %v12149
    %v12594 = vpack.c.b16 %v12154, %v12150
    %v12595 = vpack.c.b16 %v12155, %v12151
    %v12596 = vpack.c.b16 %v12160, %v12156
    %v12597 = vpack.c.b16 %v12161, %v12157
    %v12598 = vpack.c.b16 %v12162, %v12158
    %v12599 = vpack.c.b16 %v12163, %v12159
    %v12600 = vpack.c.b16 %v12168, %v12164
    %v12601 = vpack.c.b16 %v12169, %v12165
    %v12602 = vpack.c.b16 %v12170, %v12166
    %v12603 = vpack.c.b16 %v12171, %v12167
    %v12604 = vpack.c.b16 %v12176, %v12172
    %v12605 = vpack.c.b16 %v12177, %v12173
    %v12606 = vpack.c.b16 %v12178, %v12174
    %v12607 = vpack.c.b16 %v12179, %v12175
    %v12608 = vpack.c.b16 %v12184, %v12180
    %v12609 = vpack.c.b16 %v12185, %v12181
    %v12610 = vpack.c.b16 %v12186, %v12182
    %v12611 = vpack.c.b16 %v12187, %v12183
    %v12612 = vpack.c.b16 %v12192, %v12188
    %v12613 = vpack.c.b16 %v12193, %v12189
    %v12614 = vpack.c.b16 %v12194, %v12190
    %v12615 = vpack.c.b16 %v12195, %v12191
    %v12616 = vpack.c.b16 %v12200, %v12196
    %v12617 = vpack.c.b16 %v12201, %v12197
    %v12618 = vpack.c.b16 %v12202, %v12198
    %v12619 = vpack.c.b16 %v12203, %v12199
    %v12620 = vpack.c.b16 %v12208, %v12204
    %v12621 = vpack.c.b16 %v12209, %v12205
    %v12622 = vpack.c.b16 %v12210, %v12206
    %v12623 = vpack.c.b16 %v12211, %v12207
    %v12624 = vpack.c.b16 %v12216, %v12212
    %v12625 = vpack.c.b16 %v12217, %v12213
    %v12626 = vpack.c.b16 %v12218, %v12214
    %v12627 = vpack.c.b16 %v12219, %v12215
    %v12628 = vpack.c.b16 %v12224, %v12220
    %v12629 = vpack.c.b16 %v12225, %v12221
    %v12630 = vpack.c.b16 %v12226, %v12222
    %v12631 = vpack.c.b16 %v12227, %v12223
    %v12632 = vpack.c.b16 %v12232, %v12228
    %v12633 = vpack.c.b16 %v12233, %v12229
    %v12634 = vpack.c.b16 %v12234, %v12230
    %v12635 = vpack.c.b16 %v12235, %v12231
    %v12636 = vpack.c.b16 %v12240, %v12236
    %v12637 = vpack.c.b16 %v12241, %v12237
    %v12638 = vpack.c.b16 %v12242, %v12238
    %v12639 = vpack.c.b16 %v12243, %v12239
    %v12640 = vpack.c.b16 %v12248, %v12244
    %v12641 = vpack.c.b16 %v12249, %v12245
    %v12642 = vpack.c.b16 %v12250, %v12246
    %v12643 = vpack.c.b16 %v12251, %v12247
    %v12644 = vpack.c.b16 %v12256, %v12252
    %v12645 = vpack.c.b16 %v12257, %v12253
    %v12646 = vpack.c.b16 %v12258, %v12254
    %v12647 = vpack.c.b16 %v12259, %v12255
    %v12648 = vpack.c.b16 %v12264, %v12260
    %v12649 = vpack.c.b16 %v12265, %v12261
    %v12650 = vpack.c.b16 %v12266, %v12262
    %v12651 = vpack.c.b16 %v12267, %v12263
    %v12652 = vpack.c.b16 %v12272, %v12268
    %v12653 = vpack.c.b16 %v12273, %v12269
    %v12654 = vpack.c.b16 %v12274, %v12270
    %v12655 = vpack.c.b16 %v12275, %v12271
    %v12656 = vpack.c.b16 %v12280, %v12276
    %v12657 = vpack.c.b16 %v12281, %v12277
    %v12658 = vpack.c.b16 %v12282, %v12278
    %v12659 = vpack.c.b16 %v12283, %v12279
    %v12660 = vpack.c.b16 %v12288, %v12284
    %v12661 = vpack.c.b16 %v12289, %v12285
    %v12662 = vpack.c.b16 %v12290, %v12286
    %v12663 = vpack.c.b16 %v12291, %v12287
    %v12664 = vpack.c.b16 %v12296, %v12292
    %v12665 = vpack.c.b16 %v12297, %v12293
    %v12666 = vpack.c.b16 %v12298, %v12294
    %v12667 = vpack.c.b16 %v12299, %v12295
    %v12668 = vpack.c.b16 %v12304, %v12300
    %v12669 = vpack.c.b16 %v12305, %v12301
    %v12670 = vpack.c.b16 %v12306, %v12302
    %v12671 = vpack.c.b16 %v12307, %v12303
    %v12672 = vpack.c.b16 %v12312, %v12308
    %v12673 = vpack.c.b16 %v12313, %v12309
    %v12674 = vpack.c.b16 %v12314, %v12310
    %v12675 = vpack.c.b16 %v12315, %v12311
    %v12676 = vpack.c.b16 %v12320, %v12316
    %v12677 = vpack.c.b16 %v12321, %v12317
    %v12678 = vpack.c.b16 %v12322, %v12318
    %v12679 = vpack.c.b16 %v12323, %v12319
    %v12680 = vpack.c.b16 %v12328, %v12324
    %v12681 = vpack.c.b16 %v12329, %v12325
    %v12682 = vpack.c.b16 %v12330, %v12326
    %v12683 = vpack.c.b16 %v12331, %v12327
    %v12684 = vpack.c.b16 %v12336, %v12332
    %v12685 = vpack.c.b16 %v12337, %v12333
    %v12686 = vpack.c.b16 %v12338, %v12334
    %v12687 = vpack.c.b16 %v12339, %v12335
    %v12688 = vpack.c.b16 %v12344, %v12340
    %v12689 = vpack.c.b16 %v12345, %v12341
    %v12690 = vpack.c.b16 %v12346, %v12342
    %v12691 = vpack.c.b16 %v12347, %v12343
    %v12692 = vpack.c.b16 %v12352, %v12348
    %v12693 = vpack.c.b16 %v12353, %v12349
    %v12694 = vpack.c.b16 %v12354, %v12350
    %v12695 = vpack.c.b16 %v12355, %v12351
    %v12696 = vpack.c.b16 %v12360, %v12356
    %v12697 = vpack.c.b16 %v12361, %v12357
    %v12698 = vpack.c.b16 %v12362, %v12358
    %v12699 = vpack.c.b16 %v12363, %v12359
    %v12700 = vpack.c.b16 %v12368, %v12364
    %v12701 = vpack.c.b16 %v12369, %v12365
    %v12702 = vpack.c.b16 %v12370, %v12366
    %v12703 = vpack.c.b16 %v12371, %v12367
    %v12704 = vpack.c.b16 %v12376, %v12372
    %v12705 = vpack.c.b16 %v12377, %v12373
    %v12706 = vpack.c.b16 %v12378, %v12374
    %v12707 = vpack.c.b16 %v12379, %v12375
    %v12708 = vpack.c.b16 %v12384, %v12380
    %v12709 = vpack.c.b16 %v12385, %v12381
    %v12710 = vpack.c.b16 %v12386, %v12382
    %v12711 = vpack.c.b16 %v12387, %v12383
    %v12712 = vpack.c.b16 %v12392, %v12388
    %v12713 = vpack.c.b16 %v12393, %v12389
    %v12714 = vpack.c.b16 %v12394, %v12390
    %v12715 = vpack.c.b16 %v12395, %v12391
    %v12716 = vpack.c.b16 %v12400, %v12396
    %v12717 = vpack.c.b16 %v12401, %v12397
    %v12718 = vpack.c.b16 %v12402, %v12398
    %v12719 = vpack.c.b16 %v12403, %v12399
    %v12720 = vpack.c.b16 %v12408, %v12404
    %v12721 = vpack.c.b16 %v12409, %v12405
    %v12722 = vpack.c.b16 %v12410, %v12406
    %v12723 = vpack.c.b16 %v12411, %v12407
    %v12724 = vpack.c.b16 %v12416, %v12412
    %v12725 = vpack.c.b16 %v12417, %v12413
    %v12726 = vpack.c.b16 %v12418, %v12414
    %v12727 = vpack.c.b16 %v12419, %v12415
    %v12728 = vpack.c.b16 %v12424, %v12420
    %v12729 = vpack.c.b16 %v12425, %v12421
    %v12730 = vpack.c.b16 %v12426, %v12422
    %v12731 = vpack.c.b16 %v12427, %v12423
    %v12732 = vpack.c.b16 %v12432, %v12428
    %v12733 = vpack.c.b16 %v12433, %v12429
    %v12734 = vpack.c.b16 %v12434, %v12430
    %v12735 = vpack.c.b16 %v12435, %v12431
    %v12736 = vpack.c.b16 %v12440, %v12436
    %v12737 = vpack.c.b16 %v12441, %v12437
    %v12738 = vpack.c.b16 %v12442, %v12438
    %v12739 = vpack.c.b16 %v12443, %v12439
    %v12740 = vpack.c.b16 %v12448, %v12444
    %v12741 = vpack.c.b16 %v12449, %v12445
    %v12742 = vpack.c.b16 %v12450, %v12446
    %v12743 = vpack.c.b16 %v12451, %v12447
    %v12744 = vpack.c.b16 %v12456, %v12452
    %v12745 = vpack.c.b16 %v12457, %v12453
    %v12746 = vpack.c.b16 %v12458, %v12454
    %v12747 = vpack.c.b16 %v12459, %v12455
    %v12748 = vpack.c.b16 %v12464, %v12460
    %v12749 = vpack.c.b16 %v12465, %v12461
    %v12750 = vpack.c.b16 %v12466, %v12462
    %v12751 = vpack.c.b16 %v12467, %v12463
    %v12752 = vpack.c.b16 %v12472, %v12468
    %v12753 = vpack.c.b16 %v12473, %v12469
    %v12754 = vpack.c.b16 %v12474, %v12470
    %v12755 = vpack.c.b16 %v12475, %v12471
    %v12756 = vpack.c.b16 %v12480, %v12476
    %v12757 = vpack.c.b16 %v12481, %v12477
    %v12758 = vpack.c.b16 %v12482, %v12478
    %v12759 = vpack.c.b16 %v12483, %v12479
    %v12760 = vpack.c.b16 %v12488, %v12484
    %v12761 = vpack.c.b16 %v12489, %v12485
    %v12762 = vpack.c.b16 %v12490, %v12486
    %v12763 = vpack.c.b16 %v12491, %v12487
    %v12764 = vpack.c.b16 %v12496, %v12492
    %v12765 = vpack.c.b16 %v12497, %v12493
    %v12766 = vpack.c.b16 %v12498, %v12494
    %v12767 = vpack.c.b16 %v12499, %v12495
    %v12768 = vpack.c.b16 %v12504, %v12500
    %v12769 = vpack.c.b16 %v12505, %v12501
    %v12770 = vpack.c.b16 %v12506, %v12502
    %v12771 = vpack.c.b16 %v12507, %v12503
    %v12772 = vpack.c.b16 %v12512, %v12508
    %v12773 = vpack.c.b16 %v12513, %v12509
    %v12774 = vpack.c.b16 %v12514, %v12510
    %v12775 = vpack.c.b16 %v12515, %v12511
    %v12776 = vpack.c.b16 %v12520, %v12516
    %v12777 = vpack.c.b16 %v12521, %v12517
    %v12778 = vpack.c.b16 %v12522, %v12518
    %v12779 = vpack.c.b16 %v12523, %v12519
    %13036 = vmatprep.subr.bf16.mxu0 %v12525
    %13037 = vmatpush1.bf16.msra.mxu0 %v12524
    %13038 = vmatprep.subr.bf16.mxu0 %v12529
    %13039 = vmatpush1.bf16.msra.mxu0 %v12528
    %13040 = vmatprep.subr.bf16.mxu0 %v12533
    %13041 = vmatpush1.bf16.msra.mxu0 %v12532
    %13042 = vmatprep.subr.bf16.mxu0 %v12537
    %13043 = vmatpush1.bf16.msra.mxu0 %v12536
    %13044 = vmatprep.subr.bf16.mxu0 %v12541
    %13045 = vmatpush1.bf16.msra.mxu0 %v12540
    %13046 = vmatprep.subr.bf16.mxu0 %v12545
    %13047 = vmatpush1.bf16.msra.mxu0 %v12544
    %13048 = vmatprep.subr.bf16.mxu0 %v12549
    %13049 = vmatpush1.bf16.msra.mxu0 %v12548
    %13050 = vmatprep.subr.bf16.mxu0 %v12553
    %13051 = vmatpush1.bf16.msra.mxu0 %v12552
    %13052 = vmatprep.subr.bf16.mxu0 %v12557
    %13053 = vmatpush1.bf16.msra.mxu0 %v12556
    %13054 = vmatprep.subr.bf16.mxu0 %v12561
    %13055 = vmatpush1.bf16.msra.mxu0 %v12560
    %13056 = vmatprep.subr.bf16.mxu0 %v12565
    %13057 = vmatpush1.bf16.msra.mxu0 %v12564
    %13058 = vmatprep.subr.bf16.mxu0 %v12569
    %13059 = vmatpush1.bf16.msra.mxu0 %v12568
    %13060 = vmatprep.subr.bf16.mxu0 %v12573
    %13061 = vmatpush1.bf16.msra.mxu0 %v12572
    %13062 = vmatprep.subr.bf16.mxu0 %v12577
    %13063 = vmatpush1.bf16.msra.mxu0 %v12576
    %13064 = vmatprep.subr.bf16.mxu0 %v12581
    %13065 = vmatpush1.bf16.msra.mxu0 %v12580
    %13066 = vmatprep.subr.bf16.mxu0 %v12585
    %13067 = vmatpush1.bf16.msra.mxu0 %v12584
    %13068 = vmatprep.mubr.bf16.mxu0 %v11471
    %13069 = vmatmul.mubr.bf16.gmra.mrb[0].mxu0 %v11470
    %v13070 = vpop.f32.mrb[0].mxu0
    %v13071 = vadd.f32 %v11739, %v13070
    %v13072 = vpop.f32.mrb[0].mxu0
    %v13073 = vadd.f32 %v11743, %v13072
    %v13074 = vpop.f32.mrb[0].mxu0
    %v13075 = vpop.f32.mrb[0].mxu0
    %13076 = vdwg.mxu0
    %13077 = vmatprep.subr.bf16.mxu0 %v12589
    %13078 = vmatpush1.bf16.msra.mxu0 %v12588
    %13079 = vmatprep.subr.bf16.mxu0 %v12593
    %13080 = vmatpush1.bf16.msra.mxu0 %v12592
    %13081 = vmatprep.subr.bf16.mxu0 %v12597
    %13082 = vmatpush1.bf16.msra.mxu0 %v12596
    %13083 = vmatprep.subr.bf16.mxu0 %v12601
    %13084 = vmatpush1.bf16.msra.mxu0 %v12600
    %13085 = vmatprep.subr.bf16.mxu0 %v12605
    %13086 = vmatpush1.bf16.msra.mxu0 %v12604
    %13087 = vmatprep.subr.bf16.mxu0 %v12609
    %13088 = vmatpush1.bf16.msra.mxu0 %v12608
    %13089 = vmatprep.subr.bf16.mxu0 %v12613
    %13090 = vmatpush1.bf16.msra.mxu0 %v12612
    %13091 = vmatprep.subr.bf16.mxu0 %v12617
    %13092 = vmatpush1.bf16.msra.mxu0 %v12616
    %13093 = vmatprep.subr.bf16.mxu0 %v12621
    %13094 = vmatpush1.bf16.msra.mxu0 %v12620
    %13095 = vmatprep.subr.bf16.mxu0 %v12625
    %13096 = vmatpush1.bf16.msra.mxu0 %v12624
    %13097 = vmatprep.subr.bf16.mxu0 %v12629
    %13098 = vmatpush1.bf16.msra.mxu0 %v12628
    %13099 = vmatprep.subr.bf16.mxu0 %v12633
    %13100 = vmatpush1.bf16.msra.mxu0 %v12632
    %13101 = vmatprep.subr.bf16.mxu0 %v12637
    %13102 = vmatpush1.bf16.msra.mxu0 %v12636
    %13103 = vmatprep.subr.bf16.mxu0 %v12641
    %13104 = vmatpush1.bf16.msra.mxu0 %v12640
    %13105 = vmatprep.subr.bf16.mxu0 %v12645
    %13106 = vmatpush1.bf16.msra.mxu0 %v12644
    %13107 = vmatprep.subr.bf16.mxu0 %v12649
    %13108 = vmatpush1.bf16.msra.mxu0 %v12648
    %13109 = vmatprep.mubr.bf16.mxu0 %v11473
    %13110 = vmatmul.mubr.bf16.gmra.mrb[0].mxu0 %v11472
    %v13111 = vpop.f32.mrb[0].mxu0
    %v13112 = vadd.f32 %v13071, %v13111
    %v13113 = vpop.f32.mrb[0].mxu0
    %v13114 = vadd.f32 %v13073, %v13113
    %v13115 = vpop.f32.mrb[0].mxu0
    %v13116 = vpop.f32.mrb[0].mxu0
    %13117 = vdwg.mxu0
    %13118 = vmatprep.subr.bf16.mxu0 %v12653
    %13119 = vmatpush1.bf16.msra.mxu0 %v12652
    %13120 = vmatprep.subr.bf16.mxu0 %v12657
    %13121 = vmatpush1.bf16.msra.mxu0 %v12656
    %13122 = vmatprep.subr.bf16.mxu0 %v12661
    %13123 = vmatpush1.bf16.msra.mxu0 %v12660
    %13124 = vmatprep.subr.bf16.mxu0 %v12665
    %13125 = vmatpush1.bf16.msra.mxu0 %v12664
    %13126 = vmatprep.subr.bf16.mxu0 %v12669
    %13127 = vmatpush1.bf16.msra.mxu0 %v12668
    %13128 = vmatprep.subr.bf16.mxu0 %v12673
    %13129 = vmatpush1.bf16.msra.mxu0 %v12672
    %13130 = vmatprep.subr.bf16.mxu0 %v12677
    %13131 = vmatpush1.bf16.msra.mxu0 %v12676
    %13132 = vmatprep.subr.bf16.mxu0 %v12681
    %13133 = vmatpush1.bf16.msra.mxu0 %v12680
    %13134 = vmatprep.subr.bf16.mxu0 %v12685
    %13135 = vmatpush1.bf16.msra.mxu0 %v12684
    %13136 = vmatprep.subr.bf16.mxu0 %v12689
    %13137 = vmatpush1.bf16.msra.mxu0 %v12688
    %13138 = vmatprep.subr.bf16.mxu0 %v12693
    %13139 = vmatpush1.bf16.msra.mxu0 %v12692
    %13140 = vmatprep.subr.bf16.mxu0 %v12697
    %13141 = vmatpush1.bf16.msra.mxu0 %v12696
    %13142 = vmatprep.subr.bf16.mxu0 %v12701
    %13143 = vmatpush1.bf16.msra.mxu0 %v12700
    %13144 = vmatprep.subr.bf16.mxu0 %v12705
    %13145 = vmatpush1.bf16.msra.mxu0 %v12704
    %13146 = vmatprep.subr.bf16.mxu0 %v12709
    %13147 = vmatpush1.bf16.msra.mxu0 %v12708
    %13148 = vmatprep.subr.bf16.mxu0 %v12713
    %13149 = vmatpush1.bf16.msra.mxu0 %v12712
    %13150 = vmatprep.mubr.bf16.mxu0 %v11475
    %13151 = vmatmul.mubr.bf16.gmra.mrb[0].mxu0 %v11474
    %v13152 = vpop.f32.mrb[0].mxu0
    %v13153 = vadd.f32 %v13112, %v13152
    %v13154 = vpop.f32.mrb[0].mxu0
    %v13155 = vadd.f32 %v13114, %v13154
    %v13156 = vpop.f32.mrb[0].mxu0
    %v13157 = vpop.f32.mrb[0].mxu0
    %13158 = vdwg.mxu0
    %13159 = vmatprep.subr.bf16.mxu0 %v12717
    %13160 = vmatpush1.bf16.msra.mxu0 %v12716
    %13161 = vmatprep.subr.bf16.mxu0 %v12721
    %13162 = vmatpush1.bf16.msra.mxu0 %v12720
    %13163 = vmatprep.subr.bf16.mxu0 %v12725
    %13164 = vmatpush1.bf16.msra.mxu0 %v12724
    %13165 = vmatprep.subr.bf16.mxu0 %v12729
    %13166 = vmatpush1.bf16.msra.mxu0 %v12728
    %13167 = vmatprep.subr.bf16.mxu0 %v12733
    %13168 = vmatpush1.bf16.msra.mxu0 %v12732
    %13169 = vmatprep.subr.bf16.mxu0 %v12737
    %13170 = vmatpush1.bf16.msra.mxu0 %v12736
    %13171 = vmatprep.subr.bf16.mxu0 %v12741
    %13172 = vmatpush1.bf16.msra.mxu0 %v12740
    %13173 = vmatprep.subr.bf16.mxu0 %v12745
    %13174 = vmatpush1.bf16.msra.mxu0 %v12744
    %13175 = vmatprep.subr.bf16.mxu0 %v12749
    %13176 = vmatpush1.bf16.msra.mxu0 %v12748
    %13177 = vmatprep.subr.bf16.mxu0 %v12753
    %13178 = vmatpush1.bf16.msra.mxu0 %v12752
    %13179 = vmatprep.subr.bf16.mxu0 %v12757
    %13180 = vmatpush1.bf16.msra.mxu0 %v12756
    %13181 = vmatprep.subr.bf16.mxu0 %v12761
    %13182 = vmatpush1.bf16.msra.mxu0 %v12760
    %13183 = vmatprep.subr.bf16.mxu0 %v12765
    %13184 = vmatpush1.bf16.msra.mxu0 %v12764
    %13185 = vmatprep.subr.bf16.mxu0 %v12769
    %13186 = vmatpush1.bf16.msra.mxu0 %v12768
    %13187 = vmatprep.subr.bf16.mxu0 %v12773
    %13188 = vmatpush1.bf16.msra.mxu0 %v12772
    %13189 = vmatprep.subr.bf16.mxu0 %v12777
    %13190 = vmatpush1.bf16.msra.mxu0 %v12776
    %13191 = vmatprep.mubr.bf16.mxu0 %v11477
    %13192 = vmatmul.mubr.bf16.gmra.mrb[0].mxu0 %v11476
    %v13193 = vpop.f32.mrb[0].mxu0
    %v13194 = vadd.f32 %v13153, %v13193
    %v13195 = vpop.f32.mrb[0].mxu0
    %v13196 = vadd.f32 %v13155, %v13195
    %v13197 = vpop.f32.mrb[0].mxu0
    %v13198 = vpop.f32.mrb[0].mxu0
    %13199 = vdwg.mxu0
    %13200 = vmatprep.subr.bf16.mxu0 %v12527
    %13201 = vmatpush1.bf16.msra.mxu0 %v12526
    %13202 = vmatprep.subr.bf16.mxu0 %v12531
    %13203 = vmatpush1.bf16.msra.mxu0 %v12530
    %13204 = vmatprep.subr.bf16.mxu0 %v12535
    %13205 = vmatpush1.bf16.msra.mxu0 %v12534
    %13206 = vmatprep.subr.bf16.mxu0 %v12539
    %13207 = vmatpush1.bf16.msra.mxu0 %v12538
    %13208 = vmatprep.subr.bf16.mxu0 %v12543
    %13209 = vmatpush1.bf16.msra.mxu0 %v12542
    %13210 = vmatprep.subr.bf16.mxu0 %v12547
    %13211 = vmatpush1.bf16.msra.mxu0 %v12546
    %13212 = vmatprep.subr.bf16.mxu0 %v12551
    %13213 = vmatpush1.bf16.msra.mxu0 %v12550
    %13214 = vmatprep.subr.bf16.mxu0 %v12555
    %13215 = vmatpush1.bf16.msra.mxu0 %v12554
    %13216 = vmatprep.subr.bf16.mxu0 %v12559
    %13217 = vmatpush1.bf16.msra.mxu0 %v12558
    %13218 = vmatprep.subr.bf16.mxu0 %v12563
    %13219 = vmatpush1.bf16.msra.mxu0 %v12562
    %13220 = vmatprep.subr.bf16.mxu0 %v12567
    %13221 = vmatpush1.bf16.msra.mxu0 %v12566
    %13222 = vmatprep.subr.bf16.mxu0 %v12571
    %13223 = vmatpush1.bf16.msra.mxu0 %v12570
    %13224 = vmatprep.subr.bf16.mxu0 %v12575
    %13225 = vmatpush1.bf16.msra.mxu0 %v12574
    %13226 = vmatprep.subr.bf16.mxu0 %v12579
    %13227 = vmatpush1.bf16.msra.mxu0 %v12578
    %13228 = vmatprep.subr.bf16.mxu0 %v12583
    %13229 = vmatpush1.bf16.msra.mxu0 %v12582
    %13230 = vmatprep.subr.bf16.mxu0 %v12587
    %13231 = vmatpush1.bf16.msra.mxu0 %v12586
    %13232 = vmatprep.mubr.bf16.mxu0 %v11471
    %13233 = vmatmul.mubr.bf16.gmra.mrb[0].mxu0 %v11470
    %v13234 = vpop.f32.mrb[0].mxu0
    %v13235 = vadd.f32 %v11747, %v13234
    %v13236 = vpop.f32.mrb[0].mxu0
    %v13237 = vadd.f32 %v11751, %v13236
    %v13238 = vpop.f32.mrb[0].mxu0
    %v13239 = vpop.f32.mrb[0].mxu0
    %13240 = vdwg.mxu0
    %13241 = vmatprep.subr.bf16.mxu0 %v12591
    %13242 = vmatpush1.bf16.msra.mxu0 %v12590
    %13243 = vmatprep.subr.bf16.mxu0 %v12595
    %13244 = vmatpush1.bf16.msra.mxu0 %v12594
    %13245 = vmatprep.subr.bf16.mxu0 %v12599
    %13246 = vmatpush1.bf16.msra.mxu0 %v12598
    %13247 = vmatprep.subr.bf16.mxu0 %v12603
    %13248 = vmatpush1.bf16.msra.mxu0 %v12602
    %13249 = vmatprep.subr.bf16.mxu0 %v12607
    %13250 = vmatpush1.bf16.msra.mxu0 %v12606
    %13251 = vmatprep.subr.bf16.mxu0 %v12611
    %13252 = vmatpush1.bf16.msra.mxu0 %v12610
    %13253 = vmatprep.subr.bf16.mxu0 %v12615
    %13254 = vmatpush1.bf16.msra.mxu0 %v12614
    %13255 = vmatprep.subr.bf16.mxu0 %v12619
    %13256 = vmatpush1.bf16.msra.mxu0 %v12618
    %13257 = vmatprep.subr.bf16.mxu0 %v12623
    %13258 = vmatpush1.bf16.msra.mxu0 %v12622
    %13259 = vmatprep.subr.bf16.mxu0 %v12627
    %13260 = vmatpush1.bf16.msra.mxu0 %v12626
    %13261 = vmatprep.subr.bf16.mxu0 %v12631
    %13262 = vmatpush1.bf16.msra.mxu0 %v12630
    %13263 = vmatprep.subr.bf16.mxu0 %v12635
    %13264 = vmatpush1.bf16.msra.mxu0 %v12634
    %13265 = vmatprep.subr.bf16.mxu0 %v12639
    %13266 = vmatpush1.bf16.msra.mxu0 %v12638
    %13267 = vmatprep.subr.bf16.mxu0 %v12643
    %13268 = vmatpush1.bf16.msra.mxu0 %v12642
    %13269 = vmatprep.subr.bf16.mxu0 %v12647
    %13270 = vmatpush1.bf16.msra.mxu0 %v12646
    %13271 = vmatprep.subr.bf16.mxu0 %v12651
    %13272 = vmatpush1.bf16.msra.mxu0 %v12650
    %13273 = vmatprep.mubr.bf16.mxu0 %v11473
    %13274 = vmatmul.mubr.bf16.gmra.mrb[0].mxu0 %v11472
    %v13275 = vpop.f32.mrb[0].mxu0
    %v13276 = vadd.f32 %v13235, %v13275
    %v13277 = vpop.f32.mrb[0].mxu0
    %v13278 = vadd.f32 %v13237, %v13277
    %v13279 = vpop.f32.mrb[0].mxu0
    %v13280 = vpop.f32.mrb[0].mxu0
    %13281 = vdwg.mxu0
    %13282 = vmatprep.subr.bf16.mxu0 %v12655
    %13283 = vmatpush1.bf16.msra.mxu0 %v12654
    %13284 = vmatprep.subr.bf16.mxu0 %v12659
    %13285 = vmatpush1.bf16.msra.mxu0 %v12658
    %13286 = vmatprep.subr.bf16.mxu0 %v12663
    %13287 = vmatpush1.bf16.msra.mxu0 %v12662
    %13288 = vmatprep.subr.bf16.mxu0 %v12667
    %13289 = vmatpush1.bf16.msra.mxu0 %v12666
    %13290 = vmatprep.subr.bf16.mxu0 %v12671
    %13291 = vmatpush1.bf16.msra.mxu0 %v12670
    %13292 = vmatprep.subr.bf16.mxu0 %v12675
    %13293 = vmatpush1.bf16.msra.mxu0 %v12674
    %13294 = vmatprep.subr.bf16.mxu0 %v12679
    %13295 = vmatpush1.bf16.msra.mxu0 %v12678
    %13296 = vmatprep.subr.bf16.mxu0 %v12683
    %13297 = vmatpush1.bf16.msra.mxu0 %v12682
    %13298 = vmatprep.subr.bf16.mxu0 %v12687
    %13299 = vmatpush1.bf16.msra.mxu0 %v12686
    %13300 = vmatprep.subr.bf16.mxu0 %v12691
    %13301 = vmatpush1.bf16.msra.mxu0 %v12690
    %13302 = vmatprep.subr.bf16.mxu0 %v12695
    %13303 = vmatpush1.bf16.msra.mxu0 %v12694
    %13304 = vmatprep.subr.bf16.mxu0 %v12699
    %13305 = vmatpush1.bf16.msra.mxu0 %v12698
    %13306 = vmatprep.subr.bf16.mxu0 %v12703
    %13307 = vmatpush1.bf16.msra.mxu0 %v12702
    %13308 = vmatprep.subr.bf16.mxu0 %v12707
    %13309 = vmatpush1.bf16.msra.mxu0 %v12706
    %13310 = vmatprep.subr.bf16.mxu0 %v12711
    %13311 = vmatpush1.bf16.msra.mxu0 %v12710
    %13312 = vmatprep.subr.bf16.mxu0 %v12715
    %13313 = vmatpush1.bf16.msra.mxu0 %v12714
    %13314 = vmatprep.mubr.bf16.mxu0 %v11475
    %13315 = vmatmul.mubr.bf16.gmra.mrb[0].mxu0 %v11474
    %v13316 = vpop.f32.mrb[0].mxu0
    %v13317 = vadd.f32 %v13276, %v13316
    %v13318 = vpop.f32.mrb[0].mxu0
    %v13319 = vadd.f32 %v13278, %v13318
    %v13320 = vpop.f32.mrb[0].mxu0
    %v13321 = vpop.f32.mrb[0].mxu0
    %13322 = vdwg.mxu0
    %13323 = vmatprep.subr.bf16.mxu0 %v12719
    %13324 = vmatpush1.bf16.msra.mxu0 %v12718
    %13325 = vmatprep.subr.bf16.mxu0 %v12723
    %13326 = vmatpush1.bf16.msra.mxu0 %v12722
    %13327 = vmatprep.subr.bf16.mxu0 %v12727
    %13328 = vmatpush1.bf16.msra.mxu0 %v12726
    %13329 = vmatprep.subr.bf16.mxu0 %v12731
    %13330 = vmatpush1.bf16.msra.mxu0 %v12730
    %13331 = vmatprep.subr.bf16.mxu0 %v12735
    %13332 = vmatpush1.bf16.msra.mxu0 %v12734
    %13333 = vmatprep.subr.bf16.mxu0 %v12739
    %13334 = vmatpush1.bf16.msra.mxu0 %v12738
    %13335 = vmatprep.subr.bf16.mxu0 %v12743
    %13336 = vmatpush1.bf16.msra.mxu0 %v12742
    %13337 = vmatprep.subr.bf16.mxu0 %v12747
    %13338 = vmatpush1.bf16.msra.mxu0 %v12746
    %13339 = vmatprep.subr.bf16.mxu0 %v12751
    %13340 = vmatpush1.bf16.msra.mxu0 %v12750
    %13341 = vmatprep.subr.bf16.mxu0 %v12755
    %13342 = vmatpush1.bf16.msra.mxu0 %v12754
    %13343 = vmatprep.subr.bf16.mxu0 %v12759
    %13344 = vmatpush1.bf16.msra.mxu0 %v12758
    %13345 = vmatprep.subr.bf16.mxu0 %v12763
    %13346 = vmatpush1.bf16.msra.mxu0 %v12762
    %13347 = vmatprep.subr.bf16.mxu0 %v12767
    %13348 = vmatpush1.bf16.msra.mxu0 %v12766
    %13349 = vmatprep.subr.bf16.mxu0 %v12771
    %13350 = vmatpush1.bf16.msra.mxu0 %v12770
    %13351 = vmatprep.subr.bf16.mxu0 %v12775
    %13352 = vmatpush1.bf16.msra.mxu0 %v12774
    %13353 = vmatprep.subr.bf16.mxu0 %v12779
    %13354 = vmatpush1.bf16.msra.mxu0 %v12778
    %13355 = vmatprep.mubr.bf16.mxu0 %v11477
    %13356 = vmatmul.mubr.bf16.gmra.mrb[0].mxu0 %v11476
    %v13357 = vpop.f32.mrb[0].mxu0
    %v13358 = vadd.f32 %v13317, %v13357
    %v13359 = vpop.f32.mrb[0].mxu0
    %v13360 = vadd.f32 %v13319, %v13359
    %v13361 = vpop.f32.mrb[0].mxu0
    %v13362 = vpop.f32.mrb[0].mxu0
    %13363 = vdwg.mxu0
    %v13364 = vmax.f32 %v13194, 0.0
    %v13365 = vmax.f32 %v13196, 0.0
    %v13366 = vmax.f32 %v13358, 0.0
    %v13367 = vmax.f32 %v13360, 0.0
    %v13368 = vpack.c.bf16 %v13364, %v13364
    %v13369 = vpack.c.bf16 %v13365, %v13365
    %v13370 = vpack.c.bf16 %v13366, %v13366
    %v13371 = vpack.c.bf16 %v13367, %v13367
    %v13372 = vld [vmem:[#allocation14] sm:$0xf]
    %v13373 = vld [vmem:[#allocation14 + $0x4] sm:$0xf]
    %v13374 = vld [vmem:[#allocation14 + $0x8] sm:$0xf]
    %v13375 = vld [vmem:[#allocation14 + $0xc] sm:$0xf]
    %v13376 = vld [vmem:[#allocation14 + $0x10] sm:$0xf]
    %v13377 = vld [vmem:[#allocation14 + $0x14] sm:$0xf]
    %v13378 = vld [vmem:[#allocation14 + $0x18] sm:$0xf]
    %v13379 = vld [vmem:[#allocation14 + $0x1c] sm:$0xf]
    %v13380 = vld [vmem:[#allocation14 + $0x20] sm:$0xf]
    %v13381 = vld [vmem:[#allocation14 + $0x24] sm:$0xf]
    %v13382 = vld [vmem:[#allocation14 + $0x28] sm:$0xf]
    %v13383 = vld [vmem:[#allocation14 + $0x2c] sm:$0xf]
    %v13384 = vld [vmem:[#allocation14 + $0x30] sm:$0xf]
    %v13385 = vld [vmem:[#allocation14 + $0x34] sm:$0xf]
    %v13386 = vld [vmem:[#allocation14 + $0x38] sm:$0xf]
    %v13387 = vld [vmem:[#allocation14 + $0x3c] sm:$0xf]
    %v13388 = vld [vmem:[#allocation14 + $0x40] sm:$0xf]
    %v13389 = vld [vmem:[#allocation14 + $0x44] sm:$0xf]
    %v13390 = vld [vmem:[#allocation14 + $0x48] sm:$0xf]
    %v13391 = vld [vmem:[#allocation14 + $0x4c] sm:$0xf]
    %v13392 = vld [vmem:[#allocation14 + $0x50] sm:$0xf]
    %v13393 = vld [vmem:[#allocation14 + $0x54] sm:$0xf]
    %v13394 = vld [vmem:[#allocation14 + $0x58] sm:$0xf]
    %v13395 = vld [vmem:[#allocation14 + $0x5c] sm:$0xf]
    %v13396 = vld [vmem:[#allocation14 + $0x60] sm:$0xf]
    %v13397 = vld [vmem:[#allocation14 + $0x64] sm:$0xf]
    %v13398 = vld [vmem:[#allocation14 + $0x68] sm:$0xf]
    %v13399 = vld [vmem:[#allocation14 + $0x6c] sm:$0xf]
    %v13400 = vld [vmem:[#allocation14 + $0x70] sm:$0xf]
    %v13401 = vld [vmem:[#allocation14 + $0x74] sm:$0xf]
    %v13402 = vld [vmem:[#allocation14 + $0x78] sm:$0xf]
    %v13403 = vld [vmem:[#allocation14 + $0x7c] sm:$0xf]
    %v13404 = vld [vmem:[#allocation14 + $0x80] sm:$0xf]
    %v13405 = vld [vmem:[#allocation14 + $0x84] sm:$0xf]
    %v13406 = vld [vmem:[#allocation14 + $0x88] sm:$0xf]
    %v13407 = vld [vmem:[#allocation14 + $0x8c] sm:$0xf]
    %v13408 = vld [vmem:[#allocation14 + $0x90] sm:$0xf]
    %v13409 = vld [vmem:[#allocation14 + $0x94] sm:$0xf]
    %v13410 = vld [vmem:[#allocation14 + $0x98] sm:$0xf]
    %v13411 = vld [vmem:[#allocation14 + $0x9c] sm:$0xf]
    %v13412 = vld [vmem:[#allocation14 + $0xa0] sm:$0xf]
    %v13413 = vld [vmem:[#allocation14 + $0xa4] sm:$0xf]
    %v13414 = vld [vmem:[#allocation14 + $0xa8] sm:$0xf]
    %v13415 = vld [vmem:[#allocation14 + $0xac] sm:$0xf]
    %v13416 = vld [vmem:[#allocation14 + $0xb0] sm:$0xf]
    %v13417 = vld [vmem:[#allocation14 + $0xb4] sm:$0xf]
    %v13418 = vld [vmem:[#allocation14 + $0xb8] sm:$0xf]
    %v13419 = vld [vmem:[#allocation14 + $0xbc] sm:$0xf]
    %v13420 = vld [vmem:[#allocation14 + $0xc0] sm:$0xf]
    %v13421 = vld [vmem:[#allocation14 + $0xc4] sm:$0xf]
    %v13422 = vld [vmem:[#allocation14 + $0xc8] sm:$0xf]
    %v13423 = vld [vmem:[#allocation14 + $0xcc] sm:$0xf]
    %v13424 = vld [vmem:[#allocation14 + $0xd0] sm:$0xf]
    %v13425 = vld [vmem:[#allocation14 + $0xd4] sm:$0xf]
    %v13426 = vld [vmem:[#allocation14 + $0xd8] sm:$0xf]
    %v13427 = vld [vmem:[#allocation14 + $0xdc] sm:$0xf]
    %v13428 = vld [vmem:[#allocation14 + $0xe0] sm:$0xf]
    %v13429 = vld [vmem:[#allocation14 + $0xe4] sm:$0xf]
    %v13430 = vld [vmem:[#allocation14 + $0xe8] sm:$0xf]
    %v13431 = vld [vmem:[#allocation14 + $0xec] sm:$0xf]
    %v13432 = vld [vmem:[#allocation14 + $0xf0] sm:$0xf]
    %v13433 = vld [vmem:[#allocation14 + $0xf4] sm:$0xf]
    %v13434 = vld [vmem:[#allocation14 + $0xf8] sm:$0xf]
    %v13435 = vld [vmem:[#allocation14 + $0xfc] sm:$0xf]
    %v13436 = vld [vmem:[#allocation16] sm:$0x1]
    %v13438 = vlaneseq
    %v13439 = vshrl.u32 %v13438, 7
    %v13440 = vsub.s32 0, %v13439
    %v13441 = vrot.slane %v13436, %v13440
    %v13507 = vunpack.c.l.b16 %v13372
    %v13508 = vunpack.c.l.b16 %v13373
    %v13509 = vunpack.c.l.b16 %v13374
    %v13510 = vunpack.c.l.b16 %v13375
    %v13511 = vunpack.c.l.b16 %v13376
    %v13512 = vunpack.c.l.b16 %v13377
    %v13513 = vunpack.c.l.b16 %v13378
    %v13514 = vunpack.c.l.b16 %v13379
    %v13515 = vunpack.c.l.b16 %v13380
    %v13516 = vunpack.c.l.b16 %v13381
    %v13517 = vunpack.c.l.b16 %v13382
    %v13518 = vunpack.c.l.b16 %v13383
    %v13519 = vunpack.c.l.b16 %v13384
    %v13520 = vunpack.c.l.b16 %v13385
    %v13521 = vunpack.c.l.b16 %v13386
    %v13522 = vunpack.c.l.b16 %v13387
    %v13523 = vunpack.c.l.b16 %v13388
    %v13524 = vunpack.c.l.b16 %v13389
    %v13525 = vunpack.c.l.b16 %v13390
    %v13526 = vunpack.c.l.b16 %v13391
    %v13527 = vunpack.c.l.b16 %v13392
    %v13528 = vunpack.c.l.b16 %v13393
    %v13529 = vunpack.c.l.b16 %v13394
    %v13530 = vunpack.c.l.b16 %v13395
    %v13531 = vunpack.c.l.b16 %v13396
    %v13532 = vunpack.c.l.b16 %v13397
    %v13533 = vunpack.c.l.b16 %v13398
    %v13534 = vunpack.c.l.b16 %v13399
    %v13535 = vunpack.c.l.b16 %v13400
    %v13536 = vunpack.c.l.b16 %v13401
    %v13537 = vunpack.c.l.b16 %v13402
    %v13538 = vunpack.c.l.b16 %v13403
    %v13539 = vunpack.c.l.b16 %v13404
    %v13540 = vunpack.c.l.b16 %v13405
    %v13541 = vunpack.c.l.b16 %v13406
    %v13542 = vunpack.c.l.b16 %v13407
    %v13543 = vunpack.c.l.b16 %v13408
    %v13544 = vunpack.c.l.b16 %v13409
    %v13545 = vunpack.c.l.b16 %v13410
    %v13546 = vunpack.c.l.b16 %v13411
    %v13547 = vunpack.c.l.b16 %v13412
    %v13548 = vunpack.c.l.b16 %v13413
    %v13549 = vunpack.c.l.b16 %v13414
    %v13550 = vunpack.c.l.b16 %v13415
    %v13551 = vunpack.c.l.b16 %v13416
    %v13552 = vunpack.c.l.b16 %v13417
    %v13553 = vunpack.c.l.b16 %v13418
    %v13554 = vunpack.c.l.b16 %v13419
    %v13555 = vunpack.c.l.b16 %v13420
    %v13556 = vunpack.c.l.b16 %v13421
    %v13557 = vunpack.c.l.b16 %v13422
    %v13558 = vunpack.c.l.b16 %v13423
    %v13559 = vunpack.c.l.b16 %v13424
    %v13560 = vunpack.c.l.b16 %v13425
    %v13561 = vunpack.c.l.b16 %v13426
    %v13562 = vunpack.c.l.b16 %v13427
    %v13563 = vunpack.c.l.b16 %v13428
    %v13564 = vunpack.c.l.b16 %v13429
    %v13565 = vunpack.c.l.b16 %v13430
    %v13566 = vunpack.c.l.b16 %v13431
    %v13567 = vunpack.c.l.b16 %v13432
    %v13568 = vunpack.c.l.b16 %v13433
    %v13569 = vunpack.c.l.b16 %v13434
    %v13570 = vunpack.c.l.b16 %v13435
    %v13571 = vpack.c.b16 %v13508, %v13507
    %v13572 = vpack.c.b16 %v13510, %v13509
    %v13573 = vpack.c.b16 %v13512, %v13511
    %v13574 = vpack.c.b16 %v13514, %v13513
    %v13575 = vpack.c.b16 %v13516, %v13515
    %v13576 = vpack.c.b16 %v13518, %v13517
    %v13577 = vpack.c.b16 %v13520, %v13519
    %v13578 = vpack.c.b16 %v13522, %v13521
    %v13579 = vpack.c.b16 %v13524, %v13523
    %v13580 = vpack.c.b16 %v13526, %v13525
    %v13581 = vpack.c.b16 %v13528, %v13527
    %v13582 = vpack.c.b16 %v13530, %v13529
    %v13583 = vpack.c.b16 %v13532, %v13531
    %v13584 = vpack.c.b16 %v13534, %v13533
    %v13585 = vpack.c.b16 %v13536, %v13535
    %v13586 = vpack.c.b16 %v13538, %v13537
    %v13587 = vpack.c.b16 %v13540, %v13539
    %v13588 = vpack.c.b16 %v13542, %v13541
    %v13589 = vpack.c.b16 %v13544, %v13543
    %v13590 = vpack.c.b16 %v13546, %v13545
    %v13591 = vpack.c.b16 %v13548, %v13547
    %v13592 = vpack.c.b16 %v13550, %v13549
    %v13593 = vpack.c.b16 %v13552, %v13551
    %v13594 = vpack.c.b16 %v13554, %v13553
    %v13595 = vpack.c.b16 %v13556, %v13555
    %v13596 = vpack.c.b16 %v13558, %v13557
    %v13597 = vpack.c.b16 %v13560, %v13559
    %v13598 = vpack.c.b16 %v13562, %v13561
    %v13599 = vpack.c.b16 %v13564, %v13563
    %v13600 = vpack.c.b16 %v13566, %v13565
    %v13601 = vpack.c.b16 %v13568, %v13567
    %v13602 = vpack.c.b16 %v13570, %v13569
    %13635 = vmatprep.subr.bf16.mxu0 0
    %13636 = vmatpush1.bf16.msra.mxu0 %v13571
    %13637 = vmatprep.subr.bf16.mxu0 0
    %13638 = vmatpush1.bf16.msra.mxu0 %v13572
    %13639 = vmatprep.subr.bf16.mxu0 0
    %13640 = vmatpush1.bf16.msra.mxu0 %v13573
    %13641 = vmatprep.subr.bf16.mxu0 0
    %13642 = vmatpush1.bf16.msra.mxu0 %v13574
    %13643 = vmatprep.subr.bf16.mxu0 0
    %13644 = vmatpush1.bf16.msra.mxu0 %v13575
    %13645 = vmatprep.subr.bf16.mxu0 0
    %13646 = vmatpush1.bf16.msra.mxu0 %v13576
    %13647 = vmatprep.subr.bf16.mxu0 0
    %13648 = vmatpush1.bf16.msra.mxu0 %v13577
    %13649 = vmatprep.subr.bf16.mxu0 0
    %13650 = vmatpush1.bf16.msra.mxu0 %v13578
    %13651 = vmatprep.subr.bf16.mxu0 0
    %13652 = vmatpush1.bf16.msra.mxu0 %v13579
    %13653 = vmatprep.subr.bf16.mxu0 0
    %13654 = vmatpush1.bf16.msra.mxu0 %v13580
    %13655 = vmatprep.subr.bf16.mxu0 0
    %13656 = vmatpush1.bf16.msra.mxu0 %v13581
    %13657 = vmatprep.subr.bf16.mxu0 0
    %13658 = vmatpush1.bf16.msra.mxu0 %v13582
    %13659 = vmatprep.subr.bf16.mxu0 0
    %13660 = vmatpush1.bf16.msra.mxu0 %v13583
    %13661 = vmatprep.subr.bf16.mxu0 0
    %13662 = vmatpush1.bf16.msra.mxu0 %v13584
    %13663 = vmatprep.subr.bf16.mxu0 0
    %13664 = vmatpush1.bf16.msra.mxu0 %v13585
    %13665 = vmatprep.subr.bf16.mxu0 0
    %13666 = vmatpush1.bf16.msra.mxu0 %v13586
    %13667 = vmatprep.mubr.bf16.mxu0 %v13369
    %13668 = vmatmul.mubr.bf16.gmra.mrb[0].mxu0 %v13368
    %v13669 = vpop.f32.mrb[0].mxu0
    %v13670 = vadd.f32 %v13441, %v13669
    %v13671 = vpop.f32.mrb[0].mxu0
    %v13672 = vpop.f32.mrb[0].mxu0
    %v13673 = vpop.f32.mrb[0].mxu0
    %13674 = vdwg.mxu0
    %13675 = vmatprep.subr.bf16.mxu0 0
    %13676 = vmatpush1.bf16.msra.mxu0 %v13587
    %13677 = vmatprep.subr.bf16.mxu0 0
    %13678 = vmatpush1.bf16.msra.mxu0 %v13588
    %13679 = vmatprep.subr.bf16.mxu0 0
    %13680 = vmatpush1.bf16.msra.mxu0 %v13589
    %13681 = vmatprep.subr.bf16.mxu0 0
    %13682 = vmatpush1.bf16.msra.mxu0 %v13590
    %13683 = vmatprep.subr.bf16.mxu0 0
    %13684 = vmatpush1.bf16.msra.mxu0 %v13591
    %13685 = vmatprep.subr.bf16.mxu0 0
    %13686 = vmatpush1.bf16.msra.mxu0 %v13592
    %13687 = vmatprep.subr.bf16.mxu0 0
    %13688 = vmatpush1.bf16.msra.mxu0 %v13593
    %13689 = vmatprep.subr.bf16.mxu0 0
    %13690 = vmatpush1.bf16.msra.mxu0 %v13594
    %13691 = vmatprep.subr.bf16.mxu0 0
    %13692 = vmatpush1.bf16.msra.mxu0 %v13595
    %13693 = vmatprep.subr.bf16.mxu0 0
    %13694 = vmatpush1.bf16.msra.mxu0 %v13596
    %13695 = vmatprep.subr.bf16.mxu0 0
    %13696 = vmatpush1.bf16.msra.mxu0 %v13597
    %13697 = vmatprep.subr.bf16.mxu0 0
    %13698 = vmatpush1.bf16.msra.mxu0 %v13598
    %13699 = vmatprep.subr.bf16.mxu0 0
    %13700 = vmatpush1.bf16.msra.mxu0 %v13599
    %13701 = vmatprep.subr.bf16.mxu0 0
    %13702 = vmatpush1.bf16.msra.mxu0 %v13600
    %13703 = vmatprep.subr.bf16.mxu0 0
    %13704 = vmatpush1.bf16.msra.mxu0 %v13601
    %13705 = vmatprep.subr.bf16.mxu0 0
    %13706 = vmatpush1.bf16.msra.mxu0 %v13602
    %13707 = vmatprep.mubr.bf16.mxu0 %v13371
    %13708 = vmatmul.mubr.bf16.gmra.mrb[0].mxu0 %v13370
    %v13709 = vpop.f32.mrb[0].mxu0
    %v13710 = vadd.f32 %v13670, %v13709
    %v13711 = vpop.f32.mrb[0].mxu0
    %v13712 = vpop.f32.mrb[0].mxu0
    %v13713 = vpop.f32.mrb[0].mxu0
    %13714 = vdwg.mxu0
    %13715 = vst [vmem:[#allocation17] sm:$0xff] %v13710
    // Predicated region
    $region74: #{classify_forward.1} parent=1 // pred_check
      _
    $region75: #{classify_forward.1} parent=1 // pred_check_branch
      %13717 = sbr.rel (0) target = $region77
    $region76: #{classify_forward.1} parent=1 // pred_region
      %s13719 = ssub.s32 128, 128
      %13720 = vsyncadd [#allocation4], %s13719
      %s13722 = sshll.u32 [#allocation17], 4
      %s13723 = int_to_ptr.vmem [resolvable:$true] %s13722
      %13725 = dma.vmem_to_hbm [thread:$0]  %s13723, 128, %s9, [#allocation4]
    $region77: #{classify_forward.1} parent=1 // pred_fallthru
      _
    // Predicated region
    $region78: #{classify_forward.1} parent=1 // pred_check
      _
    $region79: #{classify_forward.1} parent=1 // pred_check_branch
      %13727 = sbr.rel (0) target = $region81
    $region80: #{classify_forward.1} parent=1 // pred_region
      %13728 = dma.done [#allocation4], 128
    $region81: #{classify_forward.1} parent=1 // pred_fallthru
      _
    %13729 = vsyncpa [#allocation3], 1
    %13730 = vsyncpa [#allocation6], 1
    %13731 = vsyncpa [#allocation9], 1
    %13732 = vsyncpa [#allocation12], 1
    %13733 = vsyncpa [#allocation15], 1
    %13734 = vsyncpa [#allocation4], 1

</llo_original>
